<compile_context>
chip_gen: v5e
topology: v5e:2x2
jax: 0.10.0
libtpu: 0.0.40
codegen_flags: <defaults>
</compile_context>

<pallas_src>
import numpy as np

import jax
import jax.numpy as jnp
from jax.experimental import pallas as pl
from jax.experimental.pallas import tpu as pltpu


# Static network configuration (matches the PyTorch module).
H0 = W0 = 16           # input spatial size used in the test
C0, C1, C2 = 3, 16, 4  # channels: input, conv1 out, conv2 out
TC1, TC2 = 16, 3       # t_conv1 / t_conv2 output channels


# ---------------------------------------------------------------------------
# Host-side structural constants (0/1 matrices, built once with numpy).
# They are pure functions of the static spatial sizes, not of the data.
# ---------------------------------------------------------------------------
def _conv_masks(h, w):
    """(h*w, 9) f32; column t = 3*kh + kw is 1 where input pixel
    (r//w + kh - 1, r%w + kw - 1) lies inside the image (padding=1 conv)."""
    r = np.arange(h * w)
    hh, ww = r // w, r % w
    cols = []
    for kh in range(3):
        for kw in range(3):
            dh, dw = kh - 1, kw - 1
            cols.append((hh + dh >= 0) & (hh + dh < h) & (ww + dw >= 0) & (ww + dw < w))
    return np.stack(cols, axis=1).astype(np.float32)


def _pool_select(h, w):
    """(h//2 * w//2, h*w) 0/1 selection: output row (ho, wo) <- row (2ho, 2wo)."""
    ho, wo = h // 2, w // 2
    s = np.zeros((ho * wo, h * w), np.float32)
    j = np.arange(ho * wo)
    src = (2 * (j // wo)) * w + 2 * (j % wo)
    s[j, src] = 1.0
    return s


def _upsample_gather(h, w):
    """(4*h*w, h*w) 0/1 gather: output row (oh, ow) of the 2h x 2w grid
    <- input row (oh//2, ow//2)."""
    h2, w2 = 2 * h, 2 * w
    g = np.zeros((h2 * w2, h * w), np.float32)
    j = np.arange(h2 * w2)
    g[j, (j // w2 // 2) * w + (j % w2) // 2] = 1.0
    return g


def _phase_masks(h, w):
    """(4*h*w, 4) one-hot phase masks for a 2x2/stride-2 transposed conv:
    column p = 2*a + b is 1 where the output pixel phase is (a, b)."""
    h2, w2 = 2 * h, 2 * w
    j = np.arange(h2 * w2)
    a, b = (j // w2) % 2, j % 2
    pm = np.zeros((h2 * w2, 4), np.float32)
    pm[j, 2 * a + b] = 1.0
    return pm


# ---------------------------------------------------------------------------
# In-kernel building blocks (traced helpers; everything stays 2-D).
# ---------------------------------------------------------------------------
def _conv3x3_relu(x, w_ref, b_ref, m_ref, h, w, cin, cout):
    """x: (h*w, cin) f32 raster rows of one image.
    w_ref: (9*cin, cout) bf16, tap t = 3*kh+kw stacked along rows.
    9 shifted bf16 matmuls accumulated in f32, + bias + relu."""
    m = h * w
    p = w + 1                                     # max |row shift|
    pad = jnp.zeros((p, cin), jnp.float32)
    xp = jnp.concatenate([pad, x, pad], axis=0)   # zero "ring" padding (rows)
    acc = jnp.zeros((m, cout), jnp.float32)
    for kh in range(3):
        for kw in range(3):
            t = 3 * kh + kw
            off = (kh - 1) * w + (kw - 1)
            shifted = xp[p + off:p + off + m, :]          # (m, cin)
            mask = m_ref[:, t:t + 1]                      # (m, 1) border mask
            tap = w_ref[t * cin:(t + 1) * cin, :]         # (cin, cout) bf16
            acc += jnp.dot((shifted * mask).astype(jnp.bfloat16), tap,
                           preferred_element_type=jnp.float32)
    return jnp.maximum(acc + b_ref[...], 0.0)


def _maxpool2x2(y, s_ref, h, w, c):
    """y: (h*w, c) f32. max over 3 shifted copies, then 0/1 row selection."""
    m = h * w
    pad = jnp.zeros((w + 1, c), jnp.float32)
    yp = jnp.concatenate([y, pad], axis=0)
    z = y
    for off in (1, w, w + 1):
        z = jnp.maximum(z, yp[off:off + m, :])
    # selection matmul keeps only rows at (2*ho, 2*wo) -> pooled values
    return jnp.dot(s_ref[...], z, preferred_element_type=jnp.float32)


def _tconv2x2_s2(u, w_ref, b_ref, g_ref, pm_ref, cin, cout, act):
    """2x2 / stride-2 transposed conv.
    u: (h*w, cin); g_ref: (4*h*w, h*w) 0/1 upsample gather;
    pm_ref: (4*h*w, 4) one-hot phase; w_ref: (4*cin, cout) bf16 (phase-stacked)."""
    ug = jnp.dot(g_ref[...], u, preferred_element_type=jnp.float32)  # (mo, cin)
    ug_bf = ug.astype(jnp.bfloat16)
    mo = g_ref.shape[0]
    acc = jnp.zeros((mo, cout), jnp.float32)
    for p in range(4):
        tap = w_ref[p * cin:(p + 1) * cin, :]                        # bf16
        acc += pm_ref[:, p:p + 1] * jnp.dot(ug_bf, tap,
                                            preferred_element_type=jnp.float32)
    z = acc + b_ref[...]
    if act == "relu":
        return jnp.maximum(z, 0.0)
    # sigmoid: exp on the EUP + approx reciprocal (EUP slot, VALU-free)
    return pl.reciprocal(1.0 + jnp.exp(-z), approx=True)


# ---------------------------------------------------------------------------
# Single fused kernel: one grid step == one image of the batch.
# ---------------------------------------------------------------------------
def _autoencoder_kernel(x_ref,
                        w1_ref, b1_ref, m1_ref,
                        w2_ref, b2_ref, m2_ref,
                        s1_ref, s2_ref,
                        tw1_ref, tb1_ref, g1_ref, p1_ref,
                        tw2_ref, tb2_ref, g2_ref, p2_ref,
                        o_ref):
    h, w = H0, W0
    y = _conv3x3_relu(x_ref[...], w1_ref, b1_ref, m1_ref, h, w, C0, C1)     # (256, 16)
    y = _maxpool2x2(y, s1_ref, h, w, C1)                                    # (64, 16)
    y = _conv3x3_relu(y, w2_ref, b2_ref, m2_ref, h // 2, w // 2, C1, C2)    # (64, 4)
    y = _maxpool2x2(y, s2_ref, h // 2, w // 2, C2)                          # (16, 4)
    y = _tconv2x2_s2(y, tw1_ref, tb1_ref, g1_ref, p1_ref, C2, TC1, "relu")  # (64, 16)
    y = _tconv2x2_s2(y, tw2_ref, tb2_ref, g2_ref, p2_ref, TC1, TC2, "sigmoid")  # (256, 3)
    o_ref[...] = y


def conv_autoencoder_forward(x_nchw, params):
    n, c, h, w = x_nchw.shape
    assert (c, h, w) == (C0, H0, W0)
    m_img = h * w

    # NCHW -> per-image flattened NHWC rows (tiny one-off relayout in XLA).
    x2 = jnp.transpose(x_nchw, (0, 2, 3, 1)).reshape(n * m_img, C0).astype(jnp.float32)

    # Weights: stack taps / phases along rows; bf16 for the MXU (f32 accumulate).
    w1 = params["conv1_w"].transpose(2, 3, 1, 0).reshape(9 * C0, C1).astype(jnp.bfloat16)
    b1 = params["conv1_b"].reshape(1, C1).astype(jnp.float32)
    w2 = params["conv2_w"].transpose(2, 3, 1, 0).reshape(9 * C1, C2).astype(jnp.bfloat16)
    b2 = params["conv2_b"].reshape(1, C2).astype(jnp.float32)
    tw1 = params["t_conv1_w"].transpose(2, 3, 0, 1).reshape(4 * C2, TC1).astype(jnp.bfloat16)
    tb1 = params["t_conv1_b"].reshape(1, TC1).astype(jnp.float32)
    tw2 = params["t_conv2_w"].transpose(2, 3, 0, 1).reshape(4 * TC1, TC2).astype(jnp.bfloat16)
    tb2 = params["t_conv2_b"].reshape(1, TC2).astype(jnp.float32)

    # Structural 0/1 constants (per-image, ~150 KB total, batch-independent).
    m1 = _conv_masks(h, w)                  # (256, 9)
    m2 = _conv_masks(h // 2, w // 2)        # (64, 9)
    s1 = _pool_select(h, w)                 # (64, 256)
    s2 = _pool_select(h // 2, w // 2)       # (16, 64)
    g1 = _upsample_gather(h // 4, w // 4)   # (64, 16)
    p1 = _phase_masks(h // 4, w // 4)       # (64, 4)
    g2 = _upsample_gather(h // 2, w // 2)   # (256, 64)
    p2 = _phase_masks(h // 2, w // 2)       # (256, 4)

    def _full(a):
        return pl.BlockSpec(a.shape, lambda i: (0, 0))

    out = pl.pallas_call(
        _autoencoder_kernel,
        out_shape=jax.ShapeDtypeStruct((n * m_img, TC2), jnp.float32),
        grid=(n,),
        in_specs=[
            pl.BlockSpec((m_img, C0), lambda i: (i, 0)),   # x: one image per step
            _full(w1), _full(b1), _full(m1),
            _full(w2), _full(b2), _full(m2),
            _full(s1), _full(s2),
            _full(tw1), _full(tb1), _full(g1), _full(p1),
            _full(tw2), _full(tb2), _full(g2), _full(p2),
        ],
        out_specs=pl.BlockSpec((m_img, TC2), lambda i: (i, 0)),
        compiler_params=pltpu.CompilerParams(
            dimension_semantics=("parallel",)),            # v7x: 2nd TC gets image #2
    )(x2, w1, b1, m1, w2, b2, m2, s1, s2, tw1, tb1, g1, p1, tw2, tb2, g2, p2)

    return jnp.transpose(out.reshape(n, h, w, TC2), (0, 3, 1, 2))  # back to NCHW


# ---------------------------------------------------------------------------
# Pure-JAX f32 reference (spec of the PyTorch module) for correctness check.
# ---------------------------------------------------------------------------
def ref_forward(x, params):
    def conv(x, w, b):
        dn = jax.lax.conv_dimension_numbers(x.shape, w.shape, ("NCHW", "OIHW", "NCHW"))
        y = jax.lax.conv_general_dilated(x, w, (1, 1), ((1, 1), (1, 1)), dimension_numbers=dn)
        return y + b[None, :, None, None]

    def pool(x):
        return jax.lax.reduce_window(x, -jnp.inf, jax.lax.max, (1, 1, 2, 2), (1, 1, 2, 2), "VALID")

    def t_conv(x, w, b):
        n, cin, h, wd = x.shape
        cout = w.shape[1]
        y = jnp.einsum("nihw,ioab->nohawb", x, w).reshape(n, cout, 2 * h, 2 * wd)
        return y + b[None, :, None, None]

    y = jax.nn.relu(conv(x, params["conv1_w"], params["conv1_b"]))
    y = pool(y)
    y = jax.nn.relu(conv(y, params["conv2_w"], params["conv2_b"]))
    y = pool(y)
    y = jax.nn.relu(t_conv(y, params["t_conv1_w"], params["t_conv1_b"]))
    y = jax.nn.sigmoid(t_conv(y, params["t_conv2_w"], params["t_conv2_b"]))
    return y


# ---------------------------------------------------------------------------
# Deterministic parameter init (PyTorch layouts: Conv2d OIHW, ConvTranspose2d IOHW)
# ---------------------------------------------------------------------------
def init_params(key):
    ks = jax.random.split(key, 8)

    def u(k, shape, fan_in):
        s = 1.0 / (fan_in ** 0.5)
        return jax.random.uniform(k, shape, jnp.float32, -s, s)

    return {
        "conv1_w": u(ks[0], (16, 3, 3, 3), 3 * 9),
        "conv1_b": u(ks[1], (16,), 3 * 9),
        "conv2_w": u(ks[2], (4, 16, 3, 3), 16 * 9),
        "conv2_b": u(ks[3], (4,), 16 * 9),
        "t_conv1_w": u(ks[4], (4, 16, 2, 2), 4 * 4),
        "t_conv1_b": u(ks[5], (16,), 4 * 4),
        "t_conv2_w": u(ks[6], (16, 3, 2, 2), 16 * 4),
        "t_conv2_b": u(ks[7], (3,), 16 * 4),
    }


if __name__ == "__main__":
    key = jax.random.PRNGKey(0)
    pkey, xkey = jax.random.split(key)
    params = init_params(pkey)

    # NCHW input consistent with the module: batch=2, 3 channels, 16x16 spatial.
    x = jax.random.uniform(xkey, (2, 3, 16, 16), jnp.float32)

    fwd = jax.jit(conv_autoencoder_forward)
    out = jax.block_until_ready(fwd(x, params))
    assert out.shape == (2, 3, 16, 16), out.shape

    # Tolerance accounts for bf16 MXU operands (f32 accumulate) and the
    # approximate EUP reciprocal in the sigmoid; structural errors would be >> this.
    ref = ref_forward(x, params)
    err = float(jnp.max(jnp.abs(out - ref)))
    assert err < 2e-2, f"max abs err {err}"

    print("KERNEL_OK")
</pallas_src>

<mosaic_0001>
module attributes {stable_mosaic.version = 11 : i64} {
  func.func @_autoencoder_kernel(%arg0: i32, %arg1: memref<256x3xf32, #tpu.memory_space<vmem>>, %arg2: memref<27x16xbf16, #tpu.memory_space<vmem>>, %arg3: memref<1x16xf32, #tpu.memory_space<vmem>>, %arg4: memref<256x9xf32, #tpu.memory_space<vmem>>, %arg5: memref<144x4xbf16, #tpu.memory_space<vmem>>, %arg6: memref<1x4xf32, #tpu.memory_space<vmem>>, %arg7: memref<64x9xf32, #tpu.memory_space<vmem>>, %arg8: memref<64x256xf32, #tpu.memory_space<vmem>>, %arg9: memref<16x64xf32, #tpu.memory_space<vmem>>, %arg10: memref<16x16xbf16, #tpu.memory_space<vmem>>, %arg11: memref<1x16xf32, #tpu.memory_space<vmem>>, %arg12: memref<64x16xf32, #tpu.memory_space<vmem>>, %arg13: memref<64x4xf32, #tpu.memory_space<vmem>>, %arg14: memref<64x3xbf16, #tpu.memory_space<vmem>>, %arg15: memref<1x3xf32, #tpu.memory_space<vmem>>, %arg16: memref<256x64xf32, #tpu.memory_space<vmem>>, %arg17: memref<256x4xf32, #tpu.memory_space<vmem>>, %arg18: memref<256x3xf32, #tpu.memory_space<vmem>>) attributes {dimension_semantics = [#tpu.dimension_semantics<parallel>], iteration_bounds = array<i64: 2>, scalar_prefetch = 0 : i64, scratch_operands = 0 : i64, tpu.core_type = #tpu.core_type<tc>, window_params = [{transform_indices = @transform_0, window_bounds = array<i64: 256, 3>}, {pipeline_mode = #tpu.pipeline_mode<synchronous>, transform_indices = @transform_1, window_bounds = array<i64: 27, 16>}, {pipeline_mode = #tpu.pipeline_mode<synchronous>, transform_indices = @transform_2, window_bounds = array<i64: 1, 16>}, {pipeline_mode = #tpu.pipeline_mode<synchronous>, transform_indices = @transform_3, window_bounds = array<i64: 256, 9>}, {pipeline_mode = #tpu.pipeline_mode<synchronous>, transform_indices = @transform_4, window_bounds = array<i64: 144, 4>}, {pipeline_mode = #tpu.pipeline_mode<synchronous>, transform_indices = @transform_5, window_bounds = array<i64: 1, 4>}, {pipeline_mode = #tpu.pipeline_mode<synchronous>, transform_indices = @transform_6, window_bounds = array<i64: 64, 9>}, {pipeline_mode = #tpu.pipeline_mode<synchronous>, transform_indices = @transform_7, window_bounds = array<i64: 64, 256>}, {pipeline_mode = #tpu.pipeline_mode<synchronous>, transform_indices = @transform_8, window_bounds = array<i64: 16, 64>}, {pipeline_mode = #tpu.pipeline_mode<synchronous>, transform_indices = @transform_9, window_bounds = array<i64: 16, 16>}, {pipeline_mode = #tpu.pipeline_mode<synchronous>, transform_indices = @transform_10, window_bounds = array<i64: 1, 16>}, {pipeline_mode = #tpu.pipeline_mode<synchronous>, transform_indices = @transform_11, window_bounds = array<i64: 64, 16>}, {pipeline_mode = #tpu.pipeline_mode<synchronous>, transform_indices = @transform_12, window_bounds = array<i64: 64, 4>}, {pipeline_mode = #tpu.pipeline_mode<synchronous>, transform_indices = @transform_13, window_bounds = array<i64: 64, 3>}, {pipeline_mode = #tpu.pipeline_mode<synchronous>, transform_indices = @transform_14, window_bounds = array<i64: 1, 3>}, {pipeline_mode = #tpu.pipeline_mode<synchronous>, transform_indices = @transform_15, window_bounds = array<i64: 256, 64>}, {pipeline_mode = #tpu.pipeline_mode<synchronous>, transform_indices = @transform_16, window_bounds = array<i64: 256, 4>}, {transform_indices = @transform_17, window_bounds = array<i64: 256, 3>}]} {
    %c0 = arith.constant 0 : index
    %c0_0 = arith.constant 0 : index
    %0 = vector.load %arg1[%c0, %c0_0] : memref<256x3xf32, #tpu.memory_space<vmem>>, vector<256x3xf32>
    %cst = arith.constant 0.000000e+00 : f32
    %1 = vector.broadcast %cst : f32 to vector<17x3xf32>
    %2 = tpu.concatenate %1, %0, %1 in 0 : vector<17x3xf32>, vector<256x3xf32>, vector<17x3xf32> -> vector<290x3xf32>
    %cst_1 = arith.constant 0.000000e+00 : f32
    %3 = vector.broadcast %cst_1 : f32 to vector<256x16xf32>
    %4 = vector.extract_strided_slice %2 {offsets = [0, 0], sizes = [256, 3], strides = [1, 1]} : vector<290x3xf32> to vector<256x3xf32>
    %c0_2 = arith.constant 0 : index
    %c0_3 = arith.constant 0 : index
    %5 = vector.load %arg4[%c0_2, %c0_3] : memref<256x9xf32, #tpu.memory_space<vmem>>, vector<256x1xf32>
    %c0_4 = arith.constant 0 : index
    %c0_5 = arith.constant 0 : index
    %6 = vector.load %arg2[%c0_4, %c0_5] : memref<27x16xbf16, #tpu.memory_space<vmem>>, vector<3x16xbf16>
    %7 = vector.broadcast %5 : vector<256x1xf32> to vector<256x3xf32>
    %8 = arith.mulf %4, %7 : vector<256x3xf32>
    %9 = arith.truncf %8 : vector<256x3xf32> to vector<256x3xbf16>
    %cst_6 = arith.constant dense<0.000000e+00> : vector<256x16xf32>
    %10 = tpu.matmul %9, %6, %cst_6 {dimension_numbers = #tpu.dot_dimension_numbers<[1], [0], [0], [1], [0, 0, 1, 1], [], []>} : vector<256x3xbf16>, vector<3x16xbf16>, vector<256x16xf32> -> vector<256x16xf32>
    %11 = arith.addf %3, %10 : vector<256x16xf32>
    %12 = vector.extract_strided_slice %2 {offsets = [1, 0], sizes = [256, 3], strides = [1, 1]} : vector<290x3xf32> to vector<256x3xf32>
    %c0_7 = arith.constant 0 : index
    %c1 = arith.constant 1 : index
    %13 = vector.load %arg4[%c0_7, %c1] : memref<256x9xf32, #tpu.memory_space<vmem>>, vector<256x1xf32>
    %c3 = arith.constant 3 : index
    %c0_8 = arith.constant 0 : index
    %14 = vector.load %arg2[%c3, %c0_8] : memref<27x16xbf16, #tpu.memory_space<vmem>>, vector<3x16xbf16>
    %15 = vector.broadcast %13 : vector<256x1xf32> to vector<256x3xf32>
    %16 = arith.mulf %12, %15 : vector<256x3xf32>
    %17 = arith.truncf %16 : vector<256x3xf32> to vector<256x3xbf16>
    %cst_9 = arith.constant dense<0.000000e+00> : vector<256x16xf32>
    %18 = tpu.matmul %17, %14, %cst_9 {dimension_numbers = #tpu.dot_dimension_numbers<[1], [0], [0], [1], [0, 0, 1, 1], [], []>} : vector<256x3xbf16>, vector<3x16xbf16>, vector<256x16xf32> -> vector<256x16xf32>
    %19 = arith.addf %11, %18 : vector<256x16xf32>
    %20 = vector.extract_strided_slice %2 {offsets = [2, 0], sizes = [256, 3], strides = [1, 1]} : vector<290x3xf32> to vector<256x3xf32>
    %c0_10 = arith.constant 0 : index
    %c2 = arith.constant 2 : index
    %21 = vector.load %arg4[%c0_10, %c2] : memref<256x9xf32, #tpu.memory_space<vmem>>, vector<256x1xf32>
    %c6 = arith.constant 6 : index
    %c0_11 = arith.constant 0 : index
    %22 = vector.load %arg2[%c6, %c0_11] : memref<27x16xbf16, #tpu.memory_space<vmem>>, vector<3x16xbf16>
    %23 = vector.broadcast %21 : vector<256x1xf32> to vector<256x3xf32>
    %24 = arith.mulf %20, %23 : vector<256x3xf32>
    %25 = arith.truncf %24 : vector<256x3xf32> to vector<256x3xbf16>
    %cst_12 = arith.constant dense<0.000000e+00> : vector<256x16xf32>
    %26 = tpu.matmul %25, %22, %cst_12 {dimension_numbers = #tpu.dot_dimension_numbers<[1], [0], [0], [1], [0, 0, 1, 1], [], []>} : vector<256x3xbf16>, vector<3x16xbf16>, vector<256x16xf32> -> vector<256x16xf32>
    %27 = arith.addf %19, %26 : vector<256x16xf32>
    %28 = vector.extract_strided_slice %2 {offsets = [16, 0], sizes = [256, 3], strides = [1, 1]} : vector<290x3xf32> to vector<256x3xf32>
    %c0_13 = arith.constant 0 : index
    %c3_14 = arith.constant 3 : index
    %29 = vector.load %arg4[%c0_13, %c3_14] : memref<256x9xf32, #tpu.memory_space<vmem>>, vector<256x1xf32>
    %c9 = arith.constant 9 : index
    %c0_15 = arith.constant 0 : index
    %30 = vector.load %arg2[%c9, %c0_15] : memref<27x16xbf16, #tpu.memory_space<vmem>>, vector<3x16xbf16>
    %31 = vector.broadcast %29 : vector<256x1xf32> to vector<256x3xf32>
    %32 = arith.mulf %28, %31 : vector<256x3xf32>
    %33 = arith.truncf %32 : vector<256x3xf32> to vector<256x3xbf16>
    %cst_16 = arith.constant dense<0.000000e+00> : vector<256x16xf32>
    %34 = tpu.matmul %33, %30, %cst_16 {dimension_numbers = #tpu.dot_dimension_numbers<[1], [0], [0], [1], [0, 0, 1, 1], [], []>} : vector<256x3xbf16>, vector<3x16xbf16>, vector<256x16xf32> -> vector<256x16xf32>
    %35 = arith.addf %27, %34 : vector<256x16xf32>
    %36 = vector.extract_strided_slice %2 {offsets = [17, 0], sizes = [256, 3], strides = [1, 1]} : vector<290x3xf32> to vector<256x3xf32>
    %c0_17 = arith.constant 0 : index
    %c4 = arith.constant 4 : index
    %37 = vector.load %arg4[%c0_17, %c4] : memref<256x9xf32, #tpu.memory_space<vmem>>, vector<256x1xf32>
    %c12 = arith.constant 12 : index
    %c0_18 = arith.constant 0 : index
    %38 = vector.load %arg2[%c12, %c0_18] : memref<27x16xbf16, #tpu.memory_space<vmem>>, vector<3x16xbf16>
    %39 = vector.broadcast %37 : vector<256x1xf32> to vector<256x3xf32>
    %40 = arith.mulf %36, %39 : vector<256x3xf32>
    %41 = arith.truncf %40 : vector<256x3xf32> to vector<256x3xbf16>
    %cst_19 = arith.constant dense<0.000000e+00> : vector<256x16xf32>
    %42 = tpu.matmul %41, %38, %cst_19 {dimension_numbers = #tpu.dot_dimension_numbers<[1], [0], [0], [1], [0, 0, 1, 1], [], []>} : vector<256x3xbf16>, vector<3x16xbf16>, vector<256x16xf32> -> vector<256x16xf32>
    %43 = arith.addf %35, %42 : vector<256x16xf32>
    %44 = vector.extract_strided_slice %2 {offsets = [18, 0], sizes = [256, 3], strides = [1, 1]} : vector<290x3xf32> to vector<256x3xf32>
    %c0_20 = arith.constant 0 : index
    %c5 = arith.constant 5 : index
    %45 = vector.load %arg4[%c0_20, %c5] : memref<256x9xf32, #tpu.memory_space<vmem>>, vector<256x1xf32>
    %c15 = arith.constant 15 : index
    %c0_21 = arith.constant 0 : index
    %46 = vector.load %arg2[%c15, %c0_21] : memref<27x16xbf16, #tpu.memory_space<vmem>>, vector<3x16xbf16>
    %47 = vector.broadcast %45 : vector<256x1xf32> to vector<256x3xf32>
    %48 = arith.mulf %44, %47 : vector<256x3xf32>
    %49 = arith.truncf %48 : vector<256x3xf32> to vector<256x3xbf16>
    %cst_22 = arith.constant dense<0.000000e+00> : vector<256x16xf32>
    %50 = tpu.matmul %49, %46, %cst_22 {dimension_numbers = #tpu.dot_dimension_numbers<[1], [0], [0], [1], [0, 0, 1, 1], [], []>} : vector<256x3xbf16>, vector<3x16xbf16>, vector<256x16xf32> -> vector<256x16xf32>
    %51 = arith.addf %43, %50 : vector<256x16xf32>
    %52 = vector.extract_strided_slice %2 {offsets = [32, 0], sizes = [256, 3], strides = [1, 1]} : vector<290x3xf32> to vector<256x3xf32>
    %c0_23 = arith.constant 0 : index
    %c6_24 = arith.constant 6 : index
    %53 = vector.load %arg4[%c0_23, %c6_24] : memref<256x9xf32, #tpu.memory_space<vmem>>, vector<256x1xf32>
    %c18 = arith.constant 18 : index
    %c0_25 = arith.constant 0 : index
    %54 = vector.load %arg2[%c18, %c0_25] : memref<27x16xbf16, #tpu.memory_space<vmem>>, vector<3x16xbf16>
    %55 = vector.broadcast %53 : vector<256x1xf32> to vector<256x3xf32>
    %56 = arith.mulf %52, %55 : vector<256x3xf32>
    %57 = arith.truncf %56 : vector<256x3xf32> to vector<256x3xbf16>
    %cst_26 = arith.constant dense<0.000000e+00> : vector<256x16xf32>
    %58 = tpu.matmul %57, %54, %cst_26 {dimension_numbers = #tpu.dot_dimension_numbers<[1], [0], [0], [1], [0, 0, 1, 1], [], []>} : vector<256x3xbf16>, vector<3x16xbf16>, vector<256x16xf32> -> vector<256x16xf32>
    %59 = arith.addf %51, %58 : vector<256x16xf32>
    %60 = vector.extract_strided_slice %2 {offsets = [33, 0], sizes = [256, 3], strides = [1, 1]} : vector<290x3xf32> to vector<256x3xf32>
    %c0_27 = arith.constant 0 : index
    %c7 = arith.constant 7 : index
    %61 = vector.load %arg4[%c0_27, %c7] : memref<256x9xf32, #tpu.memory_space<vmem>>, vector<256x1xf32>
    %c21 = arith.constant 21 : index
    %c0_28 = arith.constant 0 : index
    %62 = vector.load %arg2[%c21, %c0_28] : memref<27x16xbf16, #tpu.memory_space<vmem>>, vector<3x16xbf16>
    %63 = vector.broadcast %61 : vector<256x1xf32> to vector<256x3xf32>
    %64 = arith.mulf %60, %63 : vector<256x3xf32>
    %65 = arith.truncf %64 : vector<256x3xf32> to vector<256x3xbf16>
    %cst_29 = arith.constant dense<0.000000e+00> : vector<256x16xf32>
    %66 = tpu.matmul %65, %62, %cst_29 {dimension_numbers = #tpu.dot_dimension_numbers<[1], [0], [0], [1], [0, 0, 1, 1], [], []>} : vector<256x3xbf16>, vector<3x16xbf16>, vector<256x16xf32> -> vector<256x16xf32>
    %67 = arith.addf %59, %66 : vector<256x16xf32>
    %68 = vector.extract_strided_slice %2 {offsets = [34, 0], sizes = [256, 3], strides = [1, 1]} : vector<290x3xf32> to vector<256x3xf32>
    %c0_30 = arith.constant 0 : index
    %c8 = arith.constant 8 : index
    %69 = vector.load %arg4[%c0_30, %c8] : memref<256x9xf32, #tpu.memory_space<vmem>>, vector<256x1xf32>
    %c24 = arith.constant 24 : index
    %c0_31 = arith.constant 0 : index
    %70 = vector.load %arg2[%c24, %c0_31] : memref<27x16xbf16, #tpu.memory_space<vmem>>, vector<3x16xbf16>
    %71 = vector.broadcast %69 : vector<256x1xf32> to vector<256x3xf32>
    %72 = arith.mulf %68, %71 : vector<256x3xf32>
    %73 = arith.truncf %72 : vector<256x3xf32> to vector<256x3xbf16>
    %cst_32 = arith.constant dense<0.000000e+00> : vector<256x16xf32>
    %74 = tpu.matmul %73, %70, %cst_32 {dimension_numbers = #tpu.dot_dimension_numbers<[1], [0], [0], [1], [0, 0, 1, 1], [], []>} : vector<256x3xbf16>, vector<3x16xbf16>, vector<256x16xf32> -> vector<256x16xf32>
    %75 = arith.addf %67, %74 : vector<256x16xf32>
    %c0_33 = arith.constant 0 : index
    %c0_34 = arith.constant 0 : index
    %76 = vector.load %arg3[%c0_33, %c0_34] : memref<1x16xf32, #tpu.memory_space<vmem>>, vector<1x16xf32>
    %77 = vector.broadcast %76 : vector<1x16xf32> to vector<256x16xf32>
    %78 = arith.addf %75, %77 : vector<256x16xf32>
    %cst_35 = arith.constant 0.000000e+00 : f32
    %79 = vector.broadcast %cst_35 : f32 to vector<256x16xf32>
    %80 = arith.maximumf %78, %79 : vector<256x16xf32>
    %cst_36 = arith.constant 0.000000e+00 : f32
    %81 = vector.broadcast %cst_36 : f32 to vector<17x16xf32>
    %82 = tpu.concatenate %80, %81 in 0 : vector<256x16xf32>, vector<17x16xf32> -> vector<273x16xf32>
    %83 = vector.extract_strided_slice %82 {offsets = [1, 0], sizes = [256, 16], strides = [1, 1]} : vector<273x16xf32> to vector<256x16xf32>
    %84 = arith.maximumf %80, %83 : vector<256x16xf32>
    %85 = vector.extract_strided_slice %82 {offsets = [16, 0], sizes = [256, 16], strides = [1, 1]} : vector<273x16xf32> to vector<256x16xf32>
    %86 = arith.maximumf %84, %85 : vector<256x16xf32>
    %87 = vector.extract_strided_slice %82 {offsets = [17, 0], sizes = [256, 16], strides = [1, 1]} : vector<273x16xf32> to vector<256x16xf32>
    %88 = arith.maximumf %86, %87 : vector<256x16xf32>
    %c0_37 = arith.constant 0 : index
    %c0_38 = arith.constant 0 : index
    %89 = vector.load %arg8[%c0_37, %c0_38] : memref<64x256xf32, #tpu.memory_space<vmem>>, vector<64x256xf32>
    %cst_39 = arith.constant dense<0.000000e+00> : vector<64x16xf32>
    %90 = tpu.matmul %89, %88, %cst_39 {dimension_numbers = #tpu.dot_dimension_numbers<[1], [0], [0], [1], [0, 0, 1, 1], [], []>} : vector<64x256xf32>, vector<256x16xf32>, vector<64x16xf32> -> vector<64x16xf32>
    %cst_40 = arith.constant 0.000000e+00 : f32
    %91 = vector.broadcast %cst_40 : f32 to vector<9x16xf32>
    %92 = tpu.concatenate %91, %90, %91 in 0 : vector<9x16xf32>, vector<64x16xf32>, vector<9x16xf32> -> vector<82x16xf32>
    %cst_41 = arith.constant 0.000000e+00 : f32
    %93 = vector.broadcast %cst_41 : f32 to vector<64x4xf32>
    %94 = vector.extract_strided_slice %92 {offsets = [0, 0], sizes = [64, 16], strides = [1, 1]} : vector<82x16xf32> to vector<64x16xf32>
    %c0_42 = arith.constant 0 : index
    %c0_43 = arith.constant 0 : index
    %95 = vector.load %arg7[%c0_42, %c0_43] : memref<64x9xf32, #tpu.memory_space<vmem>>, vector<64x1xf32>
    %c0_44 = arith.constant 0 : index
    %c0_45 = arith.constant 0 : index
    %96 = vector.load %arg5[%c0_44, %c0_45] : memref<144x4xbf16, #tpu.memory_space<vmem>>, vector<16x4xbf16>
    %97 = vector.broadcast %95 : vector<64x1xf32> to vector<64x16xf32>
    %98 = arith.mulf %94, %97 : vector<64x16xf32>
    %99 = arith.truncf %98 : vector<64x16xf32> to vector<64x16xbf16>
    %cst_46 = arith.constant dense<0.000000e+00> : vector<64x4xf32>
    %100 = tpu.matmul %99, %96, %cst_46 {dimension_numbers = #tpu.dot_dimension_numbers<[1], [0], [0], [1], [0, 0, 1, 1], [], []>} : vector<64x16xbf16>, vector<16x4xbf16>, vector<64x4xf32> -> vector<64x4xf32>
    %101 = arith.addf %93, %100 : vector<64x4xf32>
    %102 = vector.extract_strided_slice %92 {offsets = [1, 0], sizes = [64, 16], strides = [1, 1]} : vector<82x16xf32> to vector<64x16xf32>
    %c0_47 = arith.constant 0 : index
    %c1_48 = arith.constant 1 : index
    %103 = vector.load %arg7[%c0_47, %c1_48] : memref<64x9xf32, #tpu.memory_space<vmem>>, vector<64x1xf32>
    %c16 = arith.constant 16 : index
    %c0_49 = arith.constant 0 : index
    %104 = vector.load %arg5[%c16, %c0_49] : memref<144x4xbf16, #tpu.memory_space<vmem>>, vector<16x4xbf16>
    %105 = vector.broadcast %103 : vector<64x1xf32> to vector<64x16xf32>
    %106 = arith.mulf %102, %105 : vector<64x16xf32>
    %107 = arith.truncf %106 : vector<64x16xf32> to vector<64x16xbf16>
    %cst_50 = arith.constant dense<0.000000e+00> : vector<64x4xf32>
    %108 = tpu.matmul %107, %104, %cst_50 {dimension_numbers = #tpu.dot_dimension_numbers<[1], [0], [0], [1], [0, 0, 1, 1], [], []>} : vector<64x16xbf16>, vector<16x4xbf16>, vector<64x4xf32> -> vector<64x4xf32>
    %109 = arith.addf %101, %108 : vector<64x4xf32>
    %110 = vector.extract_strided_slice %92 {offsets = [2, 0], sizes = [64, 16], strides = [1, 1]} : vector<82x16xf32> to vector<64x16xf32>
    %c0_51 = arith.constant 0 : index
    %c2_52 = arith.constant 2 : index
    %111 = vector.load %arg7[%c0_51, %c2_52] : memref<64x9xf32, #tpu.memory_space<vmem>>, vector<64x1xf32>
    %c32 = arith.constant 32 : index
    %c0_53 = arith.constant 0 : index
    %112 = vector.load %arg5[%c32, %c0_53] : memref<144x4xbf16, #tpu.memory_space<vmem>>, vector<16x4xbf16>
    %113 = vector.broadcast %111 : vector<64x1xf32> to vector<64x16xf32>
    %114 = arith.mulf %110, %113 : vector<64x16xf32>
    %115 = arith.truncf %114 : vector<64x16xf32> to vector<64x16xbf16>
    %cst_54 = arith.constant dense<0.000000e+00> : vector<64x4xf32>
    %116 = tpu.matmul %115, %112, %cst_54 {dimension_numbers = #tpu.dot_dimension_numbers<[1], [0], [0], [1], [0, 0, 1, 1], [], []>} : vector<64x16xbf16>, vector<16x4xbf16>, vector<64x4xf32> -> vector<64x4xf32>
    %117 = arith.addf %109, %116 : vector<64x4xf32>
    %118 = vector.extract_strided_slice %92 {offsets = [8, 0], sizes = [64, 16], strides = [1, 1]} : vector<82x16xf32> to vector<64x16xf32>
    %c0_55 = arith.constant 0 : index
    %c3_56 = arith.constant 3 : index
    %119 = vector.load %arg7[%c0_55, %c3_56] : memref<64x9xf32, #tpu.memory_space<vmem>>, vector<64x1xf32>
    %c48 = arith.constant 48 : index
    %c0_57 = arith.constant 0 : index
    %120 = vector.load %arg5[%c48, %c0_57] : memref<144x4xbf16, #tpu.memory_space<vmem>>, vector<16x4xbf16>
    %121 = vector.broadcast %119 : vector<64x1xf32> to vector<64x16xf32>
    %122 = arith.mulf %118, %121 : vector<64x16xf32>
    %123 = arith.truncf %122 : vector<64x16xf32> to vector<64x16xbf16>
    %cst_58 = arith.constant dense<0.000000e+00> : vector<64x4xf32>
    %124 = tpu.matmul %123, %120, %cst_58 {dimension_numbers = #tpu.dot_dimension_numbers<[1], [0], [0], [1], [0, 0, 1, 1], [], []>} : vector<64x16xbf16>, vector<16x4xbf16>, vector<64x4xf32> -> vector<64x4xf32>
    %125 = arith.addf %117, %124 : vector<64x4xf32>
    %126 = vector.extract_strided_slice %92 {offsets = [9, 0], sizes = [64, 16], strides = [1, 1]} : vector<82x16xf32> to vector<64x16xf32>
    %c0_59 = arith.constant 0 : index
    %c4_60 = arith.constant 4 : index
    %127 = vector.load %arg7[%c0_59, %c4_60] : memref<64x9xf32, #tpu.memory_space<vmem>>, vector<64x1xf32>
    %c64 = arith.constant 64 : index
    %c0_61 = arith.constant 0 : index
    %128 = vector.load %arg5[%c64, %c0_61] : memref<144x4xbf16, #tpu.memory_space<vmem>>, vector<16x4xbf16>
    %129 = vector.broadcast %127 : vector<64x1xf32> to vector<64x16xf32>
    %130 = arith.mulf %126, %129 : vector<64x16xf32>
    %131 = arith.truncf %130 : vector<64x16xf32> to vector<64x16xbf16>
    %cst_62 = arith.constant dense<0.000000e+00> : vector<64x4xf32>
    %132 = tpu.matmul %131, %128, %cst_62 {dimension_numbers = #tpu.dot_dimension_numbers<[1], [0], [0], [1], [0, 0, 1, 1], [], []>} : vector<64x16xbf16>, vector<16x4xbf16>, vector<64x4xf32> -> vector<64x4xf32>
    %133 = arith.addf %125, %132 : vector<64x4xf32>
    %134 = vector.extract_strided_slice %92 {offsets = [10, 0], sizes = [64, 16], strides = [1, 1]} : vector<82x16xf32> to vector<64x16xf32>
    %c0_63 = arith.constant 0 : index
    %c5_64 = arith.constant 5 : index
    %135 = vector.load %arg7[%c0_63, %c5_64] : memref<64x9xf32, #tpu.memory_space<vmem>>, vector<64x1xf32>
    %c80 = arith.constant 80 : index
    %c0_65 = arith.constant 0 : index
    %136 = vector.load %arg5[%c80, %c0_65] : memref<144x4xbf16, #tpu.memory_space<vmem>>, vector<16x4xbf16>
    %137 = vector.broadcast %135 : vector<64x1xf32> to vector<64x16xf32>
    %138 = arith.mulf %134, %137 : vector<64x16xf32>
    %139 = arith.truncf %138 : vector<64x16xf32> to vector<64x16xbf16>
    %cst_66 = arith.constant dense<0.000000e+00> : vector<64x4xf32>
    %140 = tpu.matmul %139, %136, %cst_66 {dimension_numbers = #tpu.dot_dimension_numbers<[1], [0], [0], [1], [0, 0, 1, 1], [], []>} : vector<64x16xbf16>, vector<16x4xbf16>, vector<64x4xf32> -> vector<64x4xf32>
    %141 = arith.addf %133, %140 : vector<64x4xf32>
    %142 = vector.extract_strided_slice %92 {offsets = [16, 0], sizes = [64, 16], strides = [1, 1]} : vector<82x16xf32> to vector<64x16xf32>
    %c0_67 = arith.constant 0 : index
    %c6_68 = arith.constant 6 : index
    %143 = vector.load %arg7[%c0_67, %c6_68] : memref<64x9xf32, #tpu.memory_space<vmem>>, vector<64x1xf32>
    %c96 = arith.constant 96 : index
    %c0_69 = arith.constant 0 : index
    %144 = vector.load %arg5[%c96, %c0_69] : memref<144x4xbf16, #tpu.memory_space<vmem>>, vector<16x4xbf16>
    %145 = vector.broadcast %143 : vector<64x1xf32> to vector<64x16xf32>
    %146 = arith.mulf %142, %145 : vector<64x16xf32>
    %147 = arith.truncf %146 : vector<64x16xf32> to vector<64x16xbf16>
    %cst_70 = arith.constant dense<0.000000e+00> : vector<64x4xf32>
    %148 = tpu.matmul %147, %144, %cst_70 {dimension_numbers = #tpu.dot_dimension_numbers<[1], [0], [0], [1], [0, 0, 1, 1], [], []>} : vector<64x16xbf16>, vector<16x4xbf16>, vector<64x4xf32> -> vector<64x4xf32>
    %149 = arith.addf %141, %148 : vector<64x4xf32>
    %150 = vector.extract_strided_slice %92 {offsets = [17, 0], sizes = [64, 16], strides = [1, 1]} : vector<82x16xf32> to vector<64x16xf32>
    %c0_71 = arith.constant 0 : index
    %c7_72 = arith.constant 7 : index
    %151 = vector.load %arg7[%c0_71, %c7_72] : memref<64x9xf32, #tpu.memory_space<vmem>>, vector<64x1xf32>
    %c112 = arith.constant 112 : index
    %c0_73 = arith.constant 0 : index
    %152 = vector.load %arg5[%c112, %c0_73] : memref<144x4xbf16, #tpu.memory_space<vmem>>, vector<16x4xbf16>
    %153 = vector.broadcast %151 : vector<64x1xf32> to vector<64x16xf32>
    %154 = arith.mulf %150, %153 : vector<64x16xf32>
    %155 = arith.truncf %154 : vector<64x16xf32> to vector<64x16xbf16>
    %cst_74 = arith.constant dense<0.000000e+00> : vector<64x4xf32>
    %156 = tpu.matmul %155, %152, %cst_74 {dimension_numbers = #tpu.dot_dimension_numbers<[1], [0], [0], [1], [0, 0, 1, 1], [], []>} : vector<64x16xbf16>, vector<16x4xbf16>, vector<64x4xf32> -> vector<64x4xf32>
    %157 = arith.addf %149, %156 : vector<64x4xf32>
    %158 = vector.extract_strided_slice %92 {offsets = [18, 0], sizes = [64, 16], strides = [1, 1]} : vector<82x16xf32> to vector<64x16xf32>
    %c0_75 = arith.constant 0 : index
    %c8_76 = arith.constant 8 : index
    %159 = vector.load %arg7[%c0_75, %c8_76] : memref<64x9xf32, #tpu.memory_space<vmem>>, vector<64x1xf32>
    %c128 = arith.constant 128 : index
    %c0_77 = arith.constant 0 : index
    %160 = vector.load %arg5[%c128, %c0_77] : memref<144x4xbf16, #tpu.memory_space<vmem>>, vector<16x4xbf16>
    %161 = vector.broadcast %159 : vector<64x1xf32> to vector<64x16xf32>
    %162 = arith.mulf %158, %161 : vector<64x16xf32>
    %163 = arith.truncf %162 : vector<64x16xf32> to vector<64x16xbf16>
    %cst_78 = arith.constant dense<0.000000e+00> : vector<64x4xf32>
    %164 = tpu.matmul %163, %160, %cst_78 {dimension_numbers = #tpu.dot_dimension_numbers<[1], [0], [0], [1], [0, 0, 1, 1], [], []>} : vector<64x16xbf16>, vector<16x4xbf16>, vector<64x4xf32> -> vector<64x4xf32>
    %165 = arith.addf %157, %164 : vector<64x4xf32>
    %c0_79 = arith.constant 0 : index
    %c0_80 = arith.constant 0 : index
    %166 = vector.load %arg6[%c0_79, %c0_80] : memref<1x4xf32, #tpu.memory_space<vmem>>, vector<1x4xf32>
    %167 = vector.broadcast %166 : vector<1x4xf32> to vector<64x4xf32>
    %168 = arith.addf %165, %167 : vector<64x4xf32>
    %cst_81 = arith.constant 0.000000e+00 : f32
    %169 = vector.broadcast %cst_81 : f32 to vector<64x4xf32>
    %170 = arith.maximumf %168, %169 : vector<64x4xf32>
    %cst_82 = arith.constant 0.000000e+00 : f32
    %171 = vector.broadcast %cst_82 : f32 to vector<9x4xf32>
    %172 = tpu.concatenate %170, %171 in 0 : vector<64x4xf32>, vector<9x4xf32> -> vector<73x4xf32>
    %173 = vector.extract_strided_slice %172 {offsets = [1, 0], sizes = [64, 4], strides = [1, 1]} : vector<73x4xf32> to vector<64x4xf32>
    %174 = arith.maximumf %170, %173 : vector<64x4xf32>
    %175 = vector.extract_strided_slice %172 {offsets = [8, 0], sizes = [64, 4], strides = [1, 1]} : vector<73x4xf32> to vector<64x4xf32>
    %176 = arith.maximumf %174, %175 : vector<64x4xf32>
    %177 = vector.extract_strided_slice %172 {offsets = [9, 0], sizes = [64, 4], strides = [1, 1]} : vector<73x4xf32> to vector<64x4xf32>
    %178 = arith.maximumf %176, %177 : vector<64x4xf32>
    %c0_83 = arith.constant 0 : index
    %c0_84 = arith.constant 0 : index
    %179 = vector.load %arg9[%c0_83, %c0_84] : memref<16x64xf32, #tpu.memory_space<vmem>>, vector<16x64xf32>
    %cst_85 = arith.constant dense<0.000000e+00> : vector<16x4xf32>
    %180 = tpu.matmul %179, %178, %cst_85 {dimension_numbers = #tpu.dot_dimension_numbers<[1], [0], [0], [1], [0, 0, 1, 1], [], []>} : vector<16x64xf32>, vector<64x4xf32>, vector<16x4xf32> -> vector<16x4xf32>
    %c0_86 = arith.constant 0 : index
    %c0_87 = arith.constant 0 : index
    %181 = vector.load %arg12[%c0_86, %c0_87] : memref<64x16xf32, #tpu.memory_space<vmem>>, vector<64x16xf32>
    %cst_88 = arith.constant dense<0.000000e+00> : vector<64x4xf32>
    %182 = tpu.matmul %181, %180, %cst_88 {dimension_numbers = #tpu.dot_dimension_numbers<[1], [0], [0], [1], [0, 0, 1, 1], [], []>} : vector<64x16xf32>, vector<16x4xf32>, vector<64x4xf32> -> vector<64x4xf32>
    %183 = arith.truncf %182 : vector<64x4xf32> to vector<64x4xbf16>
    %cst_89 = arith.constant 0.000000e+00 : f32
    %184 = vector.broadcast %cst_89 : f32 to vector<64x16xf32>
    %c0_90 = arith.constant 0 : index
    %c0_91 = arith.constant 0 : index
    %185 = vector.load %arg10[%c0_90, %c0_91] : memref<16x16xbf16, #tpu.memory_space<vmem>>, vector<4x16xbf16>
    %c0_92 = arith.constant 0 : index
    %c0_93 = arith.constant 0 : index
    %186 = vector.load %arg13[%c0_92, %c0_93] : memref<64x4xf32, #tpu.memory_space<vmem>>, vector<64x1xf32>
    %cst_94 = arith.constant dense<0.000000e+00> : vector<64x16xf32>
    %187 = tpu.matmul %183, %185, %cst_94 {dimension_numbers = #tpu.dot_dimension_numbers<[1], [0], [0], [1], [0, 0, 1, 1], [], []>} : vector<64x4xbf16>, vector<4x16xbf16>, vector<64x16xf32> -> vector<64x16xf32>
    %188 = vector.broadcast %186 : vector<64x1xf32> to vector<64x16xf32>
    %189 = arith.mulf %188, %187 : vector<64x16xf32>
    %190 = arith.addf %184, %189 : vector<64x16xf32>
    %c4_95 = arith.constant 4 : index
    %c0_96 = arith.constant 0 : index
    %191 = vector.load %arg10[%c4_95, %c0_96] : memref<16x16xbf16, #tpu.memory_space<vmem>>, vector<4x16xbf16>
    %c0_97 = arith.constant 0 : index
    %c1_98 = arith.constant 1 : index
    %192 = vector.load %arg13[%c0_97, %c1_98] : memref<64x4xf32, #tpu.memory_space<vmem>>, vector<64x1xf32>
    %cst_99 = arith.constant dense<0.000000e+00> : vector<64x16xf32>
    %193 = tpu.matmul %183, %191, %cst_99 {dimension_numbers = #tpu.dot_dimension_numbers<[1], [0], [0], [1], [0, 0, 1, 1], [], []>} : vector<64x4xbf16>, vector<4x16xbf16>, vector<64x16xf32> -> vector<64x16xf32>
    %194 = vector.broadcast %192 : vector<64x1xf32> to vector<64x16xf32>
    %195 = arith.mulf %194, %193 : vector<64x16xf32>
    %196 = arith.addf %190, %195 : vector<64x16xf32>
    %c8_100 = arith.constant 8 : index
    %c0_101 = arith.constant 0 : index
    %197 = vector.load %arg10[%c8_100, %c0_101] : memref<16x16xbf16, #tpu.memory_space<vmem>>, vector<4x16xbf16>
    %c0_102 = arith.constant 0 : index
    %c2_103 = arith.constant 2 : index
    %198 = vector.load %arg13[%c0_102, %c2_103] : memref<64x4xf32, #tpu.memory_space<vmem>>, vector<64x1xf32>
    %cst_104 = arith.constant dense<0.000000e+00> : vector<64x16xf32>
    %199 = tpu.matmul %183, %197, %cst_104 {dimension_numbers = #tpu.dot_dimension_numbers<[1], [0], [0], [1], [0, 0, 1, 1], [], []>} : vector<64x4xbf16>, vector<4x16xbf16>, vector<64x16xf32> -> vector<64x16xf32>
    %200 = vector.broadcast %198 : vector<64x1xf32> to vector<64x16xf32>
    %201 = arith.mulf %200, %199 : vector<64x16xf32>
    %202 = arith.addf %196, %201 : vector<64x16xf32>
    %c12_105 = arith.constant 12 : index
    %c0_106 = arith.constant 0 : index
    %203 = vector.load %arg10[%c12_105, %c0_106] : memref<16x16xbf16, #tpu.memory_space<vmem>>, vector<4x16xbf16>
    %c0_107 = arith.constant 0 : index
    %c3_108 = arith.constant 3 : index
    %204 = vector.load %arg13[%c0_107, %c3_108] : memref<64x4xf32, #tpu.memory_space<vmem>>, vector<64x1xf32>
    %cst_109 = arith.constant dense<0.000000e+00> : vector<64x16xf32>
    %205 = tpu.matmul %183, %203, %cst_109 {dimension_numbers = #tpu.dot_dimension_numbers<[1], [0], [0], [1], [0, 0, 1, 1], [], []>} : vector<64x4xbf16>, vector<4x16xbf16>, vector<64x16xf32> -> vector<64x16xf32>
    %206 = vector.broadcast %204 : vector<64x1xf32> to vector<64x16xf32>
    %207 = arith.mulf %206, %205 : vector<64x16xf32>
    %208 = arith.addf %202, %207 : vector<64x16xf32>
    %c0_110 = arith.constant 0 : index
    %c0_111 = arith.constant 0 : index
    %209 = vector.load %arg11[%c0_110, %c0_111] : memref<1x16xf32, #tpu.memory_space<vmem>>, vector<1x16xf32>
    %210 = vector.broadcast %209 : vector<1x16xf32> to vector<64x16xf32>
    %211 = arith.addf %208, %210 : vector<64x16xf32>
    %cst_112 = arith.constant 0.000000e+00 : f32
    %212 = vector.broadcast %cst_112 : f32 to vector<64x16xf32>
    %213 = arith.maximumf %211, %212 : vector<64x16xf32>
    %c0_113 = arith.constant 0 : index
    %c0_114 = arith.constant 0 : index
    %214 = vector.load %arg16[%c0_113, %c0_114] : memref<256x64xf32, #tpu.memory_space<vmem>>, vector<256x64xf32>
    %cst_115 = arith.constant dense<0.000000e+00> : vector<256x16xf32>
    %215 = tpu.matmul %214, %213, %cst_115 {dimension_numbers = #tpu.dot_dimension_numbers<[1], [0], [0], [1], [0, 0, 1, 1], [], []>} : vector<256x64xf32>, vector<64x16xf32>, vector<256x16xf32> -> vector<256x16xf32>
    %216 = arith.truncf %215 : vector<256x16xf32> to vector<256x16xbf16>
    %cst_116 = arith.constant 0.000000e+00 : f32
    %217 = vector.broadcast %cst_116 : f32 to vector<256x3xf32>
    %c0_117 = arith.constant 0 : index
    %c0_118 = arith.constant 0 : index
    %218 = vector.load %arg14[%c0_117, %c0_118] : memref<64x3xbf16, #tpu.memory_space<vmem>>, vector<16x3xbf16>
    %c0_119 = arith.constant 0 : index
    %c0_120 = arith.constant 0 : index
    %219 = vector.load %arg17[%c0_119, %c0_120] : memref<256x4xf32, #tpu.memory_space<vmem>>, vector<256x1xf32>
    %cst_121 = arith.constant dense<0.000000e+00> : vector<256x3xf32>
    %220 = tpu.matmul %216, %218, %cst_121 {dimension_numbers = #tpu.dot_dimension_numbers<[1], [0], [0], [1], [0, 0, 1, 1], [], []>} : vector<256x16xbf16>, vector<16x3xbf16>, vector<256x3xf32> -> vector<256x3xf32>
    %221 = vector.broadcast %219 : vector<256x1xf32> to vector<256x3xf32>
    %222 = arith.mulf %221, %220 : vector<256x3xf32>
    %223 = arith.addf %217, %222 : vector<256x3xf32>
    %c16_122 = arith.constant 16 : index
    %c0_123 = arith.constant 0 : index
    %224 = vector.load %arg14[%c16_122, %c0_123] : memref<64x3xbf16, #tpu.memory_space<vmem>>, vector<16x3xbf16>
    %c0_124 = arith.constant 0 : index
    %c1_125 = arith.constant 1 : index
    %225 = vector.load %arg17[%c0_124, %c1_125] : memref<256x4xf32, #tpu.memory_space<vmem>>, vector<256x1xf32>
    %cst_126 = arith.constant dense<0.000000e+00> : vector<256x3xf32>
    %226 = tpu.matmul %216, %224, %cst_126 {dimension_numbers = #tpu.dot_dimension_numbers<[1], [0], [0], [1], [0, 0, 1, 1], [], []>} : vector<256x16xbf16>, vector<16x3xbf16>, vector<256x3xf32> -> vector<256x3xf32>
    %227 = vector.broadcast %225 : vector<256x1xf32> to vector<256x3xf32>
    %228 = arith.mulf %227, %226 : vector<256x3xf32>
    %229 = arith.addf %223, %228 : vector<256x3xf32>
    %c32_127 = arith.constant 32 : index
    %c0_128 = arith.constant 0 : index
    %230 = vector.load %arg14[%c32_127, %c0_128] : memref<64x3xbf16, #tpu.memory_space<vmem>>, vector<16x3xbf16>
    %c0_129 = arith.constant 0 : index
    %c2_130 = arith.constant 2 : index
    %231 = vector.load %arg17[%c0_129, %c2_130] : memref<256x4xf32, #tpu.memory_space<vmem>>, vector<256x1xf32>
    %cst_131 = arith.constant dense<0.000000e+00> : vector<256x3xf32>
    %232 = tpu.matmul %216, %230, %cst_131 {dimension_numbers = #tpu.dot_dimension_numbers<[1], [0], [0], [1], [0, 0, 1, 1], [], []>} : vector<256x16xbf16>, vector<16x3xbf16>, vector<256x3xf32> -> vector<256x3xf32>
    %233 = vector.broadcast %231 : vector<256x1xf32> to vector<256x3xf32>
    %234 = arith.mulf %233, %232 : vector<256x3xf32>
    %235 = arith.addf %229, %234 : vector<256x3xf32>
    %c48_132 = arith.constant 48 : index
    %c0_133 = arith.constant 0 : index
    %236 = vector.load %arg14[%c48_132, %c0_133] : memref<64x3xbf16, #tpu.memory_space<vmem>>, vector<16x3xbf16>
    %c0_134 = arith.constant 0 : index
    %c3_135 = arith.constant 3 : index
    %237 = vector.load %arg17[%c0_134, %c3_135] : memref<256x4xf32, #tpu.memory_space<vmem>>, vector<256x1xf32>
    %cst_136 = arith.constant dense<0.000000e+00> : vector<256x3xf32>
    %238 = tpu.matmul %216, %236, %cst_136 {dimension_numbers = #tpu.dot_dimension_numbers<[1], [0], [0], [1], [0, 0, 1, 1], [], []>} : vector<256x16xbf16>, vector<16x3xbf16>, vector<256x3xf32> -> vector<256x3xf32>
    %239 = vector.broadcast %237 : vector<256x1xf32> to vector<256x3xf32>
    %240 = arith.mulf %239, %238 : vector<256x3xf32>
    %241 = arith.addf %235, %240 : vector<256x3xf32>
    %c0_137 = arith.constant 0 : index
    %c0_138 = arith.constant 0 : index
    %242 = vector.load %arg15[%c0_137, %c0_138] : memref<1x3xf32, #tpu.memory_space<vmem>>, vector<1x3xf32>
    %243 = vector.broadcast %242 : vector<1x3xf32> to vector<256x3xf32>
    %244 = arith.addf %241, %243 : vector<256x3xf32>
    %cst_139 = arith.constant 0.000000e+00 : f32
    %245 = vector.broadcast %cst_139 : f32 to vector<256x3xf32>
    %246 = arith.subf %245, %244 : vector<256x3xf32>
    %247 = math.exp %246 : vector<256x3xf32>
    %cst_140 = arith.constant 1.000000e+00 : f32
    %248 = vector.broadcast %cst_140 : f32 to vector<256x3xf32>
    %249 = arith.addf %248, %247 : vector<256x3xf32>
    %250 = tpu.reciprocal %249 {approx = true} : vector<256x3xf32> -> vector<256x3xf32>
    %c0_141 = arith.constant 0 : index
    %c0_142 = arith.constant 0 : index
    %251 = vector.load %arg18[%c0_141, %c0_142] : memref<256x3xf32, #tpu.memory_space<vmem>>, vector<256x3xf32>
    tpu.vector_store %arg18[%c0_141, %c0_142], %250 {strides = array<i32>} : memref<256x3xf32, #tpu.memory_space<vmem>>, vector<256x3xf32>,
    return
  }
  func.func @transform_0(%arg0: i32) -> (i32, i32) {
    %c0_i32 = arith.constant 0 : i32
    %c0_i32_0 = arith.constant 0 : i32
    return %arg0, %c0_i32 : i32, i32
  }
  func.func @transform_1(%arg0: i32) -> (i32, i32) {
    %c0_i32 = arith.constant 0 : i32
    %c0_i32_0 = arith.constant 0 : i32
    %c0_i32_1 = arith.constant 0 : i32
    return %c0_i32, %c0_i32_0 : i32, i32
  }
  func.func @transform_2(%arg0: i32) -> (i32, i32) {
    %c0_i32 = arith.constant 0 : i32
    %c0_i32_0 = arith.constant 0 : i32
    %c0_i32_1 = arith.constant 0 : i32
    return %c0_i32, %c0_i32_0 : i32, i32
  }
  func.func @transform_3(%arg0: i32) -> (i32, i32) {
    %c0_i32 = arith.constant 0 : i32
    %c0_i32_0 = arith.constant 0 : i32
    %c0_i32_1 = arith.constant 0 : i32
    return %c0_i32, %c0_i32_0 : i32, i32
  }
  func.func @transform_4(%arg0: i32) -> (i32, i32) {
    %c0_i32 = arith.constant 0 : i32
    %c0_i32_0 = arith.constant 0 : i32
    %c0_i32_1 = arith.constant 0 : i32
    return %c0_i32, %c0_i32_0 : i32, i32
  }
  func.func @transform_5(%arg0: i32) -> (i32, i32) {
    %c0_i32 = arith.constant 0 : i32
    %c0_i32_0 = arith.constant 0 : i32
    %c0_i32_1 = arith.constant 0 : i32
    return %c0_i32, %c0_i32_0 : i32, i32
  }
  func.func @transform_6(%arg0: i32) -> (i32, i32) {
    %c0_i32 = arith.constant 0 : i32
    %c0_i32_0 = arith.constant 0 : i32
    %c0_i32_1 = arith.constant 0 : i32
    return %c0_i32, %c0_i32_0 : i32, i32
  }
  func.func @transform_7(%arg0: i32) -> (i32, i32) {
    %c0_i32 = arith.constant 0 : i32
    %c0_i32_0 = arith.constant 0 : i32
    %c0_i32_1 = arith.constant 0 : i32
    return %c0_i32, %c0_i32_0 : i32, i32
  }
  func.func @transform_8(%arg0: i32) -> (i32, i32) {
    %c0_i32 = arith.constant 0 : i32
    %c0_i32_0 = arith.constant 0 : i32
    %c0_i32_1 = arith.constant 0 : i32
    return %c0_i32, %c0_i32_0 : i32, i32
  }
  func.func @transform_9(%arg0: i32) -> (i32, i32) {
    %c0_i32 = arith.constant 0 : i32
    %c0_i32_0 = arith.constant 0 : i32
    %c0_i32_1 = arith.constant 0 : i32
    return %c0_i32, %c0_i32_0 : i32, i32
  }
  func.func @transform_10(%arg0: i32) -> (i32, i32) {
    %c0_i32 = arith.constant 0 : i32
    %c0_i32_0 = arith.constant 0 : i32
    %c0_i32_1 = arith.constant 0 : i32
    return %c0_i32, %c0_i32_0 : i32, i32
  }
  func.func @transform_11(%arg0: i32) -> (i32, i32) {
    %c0_i32 = arith.constant 0 : i32
    %c0_i32_0 = arith.constant 0 : i32
    %c0_i32_1 = arith.constant 0 : i32
    return %c0_i32, %c0_i32_0 : i32, i32
  }
  func.func @transform_12(%arg0: i32) -> (i32, i32) {
    %c0_i32 = arith.constant 0 : i32
    %c0_i32_0 = arith.constant 0 : i32
    %c0_i32_1 = arith.constant 0 : i32
    return %c0_i32, %c0_i32_0 : i32, i32
  }
  func.func @transform_13(%arg0: i32) -> (i32, i32) {
    %c0_i32 = arith.constant 0 : i32
    %c0_i32_0 = arith.constant 0 : i32
    %c0_i32_1 = arith.constant 0 : i32
    return %c0_i32, %c0_i32_0 : i32, i32
  }
  func.func @transform_14(%arg0: i32) -> (i32, i32) {
    %c0_i32 = arith.constant 0 : i32
    %c0_i32_0 = arith.constant 0 : i32
    %c0_i32_1 = arith.constant 0 : i32
    return %c0_i32, %c0_i32_0 : i32, i32
  }
  func.func @transform_15(%arg0: i32) -> (i32, i32) {
    %c0_i32 = arith.constant 0 : i32
    %c0_i32_0 = arith.constant 0 : i32
    %c0_i32_1 = arith.constant 0 : i32
    return %c0_i32, %c0_i32_0 : i32, i32
  }
  func.func @transform_16(%arg0: i32) -> (i32, i32) {
    %c0_i32 = arith.constant 0 : i32
    %c0_i32_0 = arith.constant 0 : i32
    %c0_i32_1 = arith.constant 0 : i32
    return %c0_i32, %c0_i32_0 : i32, i32
  }
  func.func @transform_17(%arg0: i32) -> (i32, i32) {
    %c0_i32 = arith.constant 0 : i32
    %c0_i32_0 = arith.constant 0 : i32
    return %arg0, %c0_i32 : i32, i32
  }
}

</mosaic_0001>

<llo_original>
// kernel: conv_autoencoder_forward.1
$region0: #{conv_autoencoder_forward.1}
  #allocation0 [shape = 'u32[]', space=smem, size = 0x4, offset = 0x4, fixed_abs, tag = 'smem constant byte address 0x4 - core index']
  #allocation1 [shape = 'u32[72,128]{1,0:T(1,128)}', space=vmem, size = 0x9000, scoped, tag = 'internal scratch']
  %s0 = inlined_call_operand.vmem [shape: f32[512,3], index: 0, kind: input, shape index: {}]
  %s1 = inlined_call_operand.vmem [shape: bf16[27,16], index: 1, kind: input, shape index: {}]
  %s2 = inlined_call_operand.vmem [shape: f32[1,16], index: 2, kind: input, shape index: {}]
  %s3 = inlined_call_operand.hbm [shape: f32[256,9], index: 3, kind: input, shape index: {}]
  %s4 = inlined_call_operand.vmem [shape: bf16[144,4], index: 4, kind: input, shape index: {}]
  %s5 = inlined_call_operand.vmem [shape: f32[1,4], index: 5, kind: input, shape index: {}]
  %s6 = inlined_call_operand.hbm [shape: f32[64,9], index: 6, kind: input, shape index: {}]
  %s7 = inlined_call_operand.vmem [shape: f32[64,256], index: 7, kind: input, shape index: {}]
  %s8 = inlined_call_operand.vmem [shape: f32[16,64], index: 8, kind: input, shape index: {}]
  %s9 = inlined_call_operand.vmem [shape: bf16[16,16], index: 9, kind: input, shape index: {}]
  %s10 = inlined_call_operand.vmem [shape: f32[1,16], index: 10, kind: input, shape index: {}]
  %s11 = inlined_call_operand.vmem [shape: f32[64,16], index: 11, kind: input, shape index: {}]
  %s12 = inlined_call_operand.vmem [shape: f32[64,4], index: 12, kind: input, shape index: {}]
  %s13 = inlined_call_operand.vmem [shape: bf16[64,3], index: 13, kind: input, shape index: {}]
  %s14 = inlined_call_operand.vmem [shape: f32[1,3], index: 14, kind: input, shape index: {}]
  %s15 = inlined_call_operand.vmem [shape: f32[256,64], index: 15, kind: input, shape index: {}]
  %s16 = inlined_call_operand.vmem [shape: f32[256,4], index: 16, kind: input, shape index: {}]
  %s17 = inlined_call_operand.vmem [shape: f32[512,3], index: 17, kind: output, shape index: {}]
  %s18 = sld [smem:[#allocation0]]
  $region109: #{conv_autoencoder_forward.1} parent=0
    _
  %s20 = ssub.s32 1, %s18
  %s21 = scalar_select 0, %s20, %s18
  $region1: #{conv_autoencoder_forward.1} parent=0
    #allocation2 [shape = 'u8[131072]{0}', space=vmem, size = 0x20000, scoped, tag = 'input window, operand 3, single buffered']
    #allocation3 [shape = 's32[2]{0}', space=sflag, size = 0x8, scoped, tag = 'scoped memory for conv_autoencoder_forward.1']
    #allocation4 [shape = 'u8[32768]{0}', space=vmem, size = 0x8000, scoped, tag = 'input window, operand 6, single buffered']
    #allocation5 [shape = 's32[1]{0}', space=sflag, size = 0x4, scoped, tag = 'scoped memory for conv_autoencoder_forward.1']
    %22 = vsyncpa [#allocation3], 0
    %23 = vsyncpa [#allocation5], 0
    loop: start=0, step=1, limit=4
    $region2: #{conv_autoencoder_forward.1} parent=1 // loop_pre_header
      _
    $region3: #{conv_autoencoder_forward.1} parent=1 // loop_header
      %s25 = sphi 0, %s29
      %p26 = scmp.ge.s32.totalorder %s25, 4
      %s35 = sphi 0, %s37
      %s38 = sphi 0, %s35
      %s39 = sphi 0, %s38
      %s55 = sphi 0, %s39
      %s59 = sphi 0, %s59
      %s61 = sphi 0, %s59
      %s62 = sphi 0, %s61
      %s76 = sphi 0, %s62
      %s80 = sphi 0, %s80
      %s82 = sphi 0, %s80
      %s83 = sphi 0, %s82
      %s97 = sphi 0, %s83
      %s101 = sphi 0, %s101
      %s103 = sphi 0, %s101
      %s104 = sphi 0, %s103
      %s118 = sphi 0, %s104
      %s122 = sphi 0, %s122
      %s124 = sphi 0, %s122
      %s125 = sphi 0, %s124
      %s139 = sphi 0, %s125
      %s143 = sphi 0, %s143
      %s145 = sphi 0, %s143
      %s146 = sphi 0, %s145
      %s160 = sphi 0, %s146
      %s164 = sphi 0, %s164
      %s166 = sphi 0, %s164
      %s167 = sphi 0, %s166
      %s181 = sphi 0, %s167
      %s185 = sphi 0, %s185
      %s187 = sphi 0, %s185
      %s188 = sphi 0, %s187
      %s202 = sphi 0, %s188
      %s206 = sphi 0, %s206
      %s208 = sphi 0, %s206
      %s209 = sphi 0, %s208
      %s223 = sphi 0, %s209
      %s227 = sphi 0, %s227
      %s229 = sphi 0, %s227
      %s230 = sphi 0, %s229
      %s244 = sphi 0, %s230
      %s248 = sphi 0, %s248
      %s250 = sphi 0, %s248
      %s251 = sphi 0, %s250
      %s265 = sphi 0, %s251
      %s269 = sphi 0, %s269
      %s271 = sphi 0, %s269
      %s272 = sphi 0, %s271
      %s286 = sphi 0, %s272
      %s290 = sphi 0, %s290
      %s292 = sphi 0, %s290
      %s293 = sphi 0, %s292
      %s307 = sphi 0, %s293
      %s311 = sphi 0, %s311
      %s313 = sphi 0, %s311
      %s314 = sphi 0, %s313
      %s328 = sphi 0, %s314
      %s332 = sphi 0, %s332
      %s334 = sphi 0, %s332
      %s335 = sphi 0, %s334
      %s349 = sphi 0, %s335
      %s353 = sphi 0, %s353
      %s355 = sphi 0, %s353
      %s356 = sphi 0, %s355
      %s370 = sphi 0, %s356
      %s374 = sphi 0, %s374
      %s376 = sphi 0, %s374
      %s377 = sphi 0, %s376
      %s391 = sphi 0, %s377
      %s397 = sphi 0, %s399
      %s400 = sphi 0, %s397
      %s401 = sphi 0, %s400
      %s417 = sphi 0, %s401
    $region4: #{conv_autoencoder_forward.1} parent=1 // loop_header_branch
      %28 = sbr.rel (%p26) target = $region8
    $region5: #{conv_autoencoder_forward.1} parent=1 // loop_body
      %s30 = ssub.s32 %s25, 1
      %s31 = ssub.s32 %s25, 2
      %s32 = sadd.s32 %s25, 1
      %s33 = ssub.s32 %s25, %s32
      %p34 = scmp.eq.s32.totalorder %s33, 0
      %s36 = sadd.s32 %s35, 1
      %s37 = scalar_select %p34, %s35, %s36
      %p40 = pneg %p34
      %p41 = scmp.eq.s32.totalorder %s25, 1
      %p42 = por %p40, %p41
      %p43 = scmp.ne.s32.totalorder %s35, %s38
      %p44 = scmp.eq.s32.totalorder %s25, 0
      %p45 = por %p43, %p44
      %p46 = scmp.ne.s32.totalorder %s35, %s38
      %p47 = scmp.eq.s32.totalorder %s30, 1
      %p48 = por %p46, %p47
      %p49 = scmp.ne.s32.totalorder %s38, %s39
      %p50 = scmp.eq.s32.totalorder %s30, 0
      %p51 = por %p49, %p50
      %p52 = scmp.ne.s32.totalorder %s38, %s39
      %p53 = scmp.eq.s32.totalorder %s31, 1
      %p54 = por %p52, %p53
      %p56 = scmp.ne.s32.totalorder %s39, %s55
      %p57 = scmp.eq.s32.totalorder %s31, 0
      %p58 = por %p56, %p57
      %s60 = sadd.s32 %s59, 1
      %p63 = scmp.eq.s32.totalorder %s25, 1
      %p64 = scmp.ne.s32.totalorder %s59, %s61
      %p65 = scmp.eq.s32.totalorder %s25, 0
      %p66 = por %p64, %p65
      %p67 = scmp.ne.s32.totalorder %s59, %s61
      %p68 = scmp.eq.s32.totalorder %s30, 1
      %p69 = por %p67, %p68
      %p70 = scmp.ne.s32.totalorder %s61, %s62
      %p71 = scmp.eq.s32.totalorder %s30, 0
      %p72 = por %p70, %p71
      %p73 = scmp.ne.s32.totalorder %s61, %s62
      %p74 = scmp.eq.s32.totalorder %s31, 1
      %p75 = por %p73, %p74
      %p77 = scmp.ne.s32.totalorder %s62, %s76
      %p78 = scmp.eq.s32.totalorder %s31, 0
      %p79 = por %p77, %p78
      %s81 = sadd.s32 %s80, 1
      %p84 = scmp.eq.s32.totalorder %s25, 1
      %p85 = scmp.ne.s32.totalorder %s80, %s82
      %p86 = scmp.eq.s32.totalorder %s25, 0
      %p87 = por %p85, %p86
      %p88 = scmp.ne.s32.totalorder %s80, %s82
      %p89 = scmp.eq.s32.totalorder %s30, 1
      %p90 = por %p88, %p89
      %p91 = scmp.ne.s32.totalorder %s82, %s83
      %p92 = scmp.eq.s32.totalorder %s30, 0
      %p93 = por %p91, %p92
      %p94 = scmp.ne.s32.totalorder %s82, %s83
      %p95 = scmp.eq.s32.totalorder %s31, 1
      %p96 = por %p94, %p95
      %p98 = scmp.ne.s32.totalorder %s83, %s97
      %p99 = scmp.eq.s32.totalorder %s31, 0
      %p100 = por %p98, %p99
      %s102 = sadd.s32 %s101, 1
      %p105 = scmp.eq.s32.totalorder %s25, 1
      %p106 = scmp.ne.s32.totalorder %s101, %s103
      %p107 = scmp.eq.s32.totalorder %s25, 0
      %p108 = por %p106, %p107
      %p109 = scmp.ne.s32.totalorder %s101, %s103
      %p110 = scmp.eq.s32.totalorder %s30, 1
      %p111 = por %p109, %p110
      %p112 = scmp.ne.s32.totalorder %s103, %s104
      %p113 = scmp.eq.s32.totalorder %s30, 0
      %p114 = por %p112, %p113
      %p115 = scmp.ne.s32.totalorder %s103, %s104
      %p116 = scmp.eq.s32.totalorder %s31, 1
      %p117 = por %p115, %p116
      %p119 = scmp.ne.s32.totalorder %s104, %s118
      %p120 = scmp.eq.s32.totalorder %s31, 0
      %p121 = por %p119, %p120
      %s123 = sadd.s32 %s122, 1
      %p126 = scmp.eq.s32.totalorder %s25, 1
      %p127 = scmp.ne.s32.totalorder %s122, %s124
      %p128 = scmp.eq.s32.totalorder %s25, 0
      %p129 = por %p127, %p128
      %p130 = scmp.ne.s32.totalorder %s122, %s124
      %p131 = scmp.eq.s32.totalorder %s30, 1
      %p132 = por %p130, %p131
      %p133 = scmp.ne.s32.totalorder %s124, %s125
      %p134 = scmp.eq.s32.totalorder %s30, 0
      %p135 = por %p133, %p134
      %p136 = scmp.ne.s32.totalorder %s124, %s125
      %p137 = scmp.eq.s32.totalorder %s31, 1
      %p138 = por %p136, %p137
      %p140 = scmp.ne.s32.totalorder %s125, %s139
      %p141 = scmp.eq.s32.totalorder %s31, 0
      %p142 = por %p140, %p141
      %s144 = sadd.s32 %s143, 1
      %p147 = scmp.eq.s32.totalorder %s25, 1
      %p148 = scmp.ne.s32.totalorder %s143, %s145
      %p149 = scmp.eq.s32.totalorder %s25, 0
      %p150 = por %p148, %p149
      %p151 = scmp.ne.s32.totalorder %s143, %s145
      %p152 = scmp.eq.s32.totalorder %s30, 1
      %p153 = por %p151, %p152
      %p154 = scmp.ne.s32.totalorder %s145, %s146
      %p155 = scmp.eq.s32.totalorder %s30, 0
      %p156 = por %p154, %p155
      %p157 = scmp.ne.s32.totalorder %s145, %s146
      %p158 = scmp.eq.s32.totalorder %s31, 1
      %p159 = por %p157, %p158
      %p161 = scmp.ne.s32.totalorder %s146, %s160
      %p162 = scmp.eq.s32.totalorder %s31, 0
      %p163 = por %p161, %p162
      %s165 = sadd.s32 %s164, 1
      %p168 = scmp.eq.s32.totalorder %s25, 1
      %p169 = scmp.ne.s32.totalorder %s164, %s166
      %p170 = scmp.eq.s32.totalorder %s25, 0
      %p171 = por %p169, %p170
      %p172 = scmp.ne.s32.totalorder %s164, %s166
      %p173 = scmp.eq.s32.totalorder %s30, 1
      %p174 = por %p172, %p173
      %p175 = scmp.ne.s32.totalorder %s166, %s167
      %p176 = scmp.eq.s32.totalorder %s30, 0
      %p177 = por %p175, %p176
      %p178 = scmp.ne.s32.totalorder %s166, %s167
      %p179 = scmp.eq.s32.totalorder %s31, 1
      %p180 = por %p178, %p179
      %p182 = scmp.ne.s32.totalorder %s167, %s181
      %p183 = scmp.eq.s32.totalorder %s31, 0
      %p184 = por %p182, %p183
      %s186 = sadd.s32 %s185, 1
      %p189 = scmp.eq.s32.totalorder %s25, 1
      %p190 = scmp.ne.s32.totalorder %s185, %s187
      %p191 = scmp.eq.s32.totalorder %s25, 0
      %p192 = por %p190, %p191
      %p193 = scmp.ne.s32.totalorder %s185, %s187
      %p194 = scmp.eq.s32.totalorder %s30, 1
      %p195 = por %p193, %p194
      %p196 = scmp.ne.s32.totalorder %s187, %s188
      %p197 = scmp.eq.s32.totalorder %s30, 0
      %p198 = por %p196, %p197
      %p199 = scmp.ne.s32.totalorder %s187, %s188
      %p200 = scmp.eq.s32.totalorder %s31, 1
      %p201 = por %p199, %p200
      %p203 = scmp.ne.s32.totalorder %s188, %s202
      %p204 = scmp.eq.s32.totalorder %s31, 0
      %p205 = por %p203, %p204
      %s207 = sadd.s32 %s206, 1
      %p210 = scmp.eq.s32.totalorder %s25, 1
      %p211 = scmp.ne.s32.totalorder %s206, %s208
      %p212 = scmp.eq.s32.totalorder %s25, 0
      %p213 = por %p211, %p212
      %p214 = scmp.ne.s32.totalorder %s206, %s208
      %p215 = scmp.eq.s32.totalorder %s30, 1
      %p216 = por %p214, %p215
      %p217 = scmp.ne.s32.totalorder %s208, %s209
      %p218 = scmp.eq.s32.totalorder %s30, 0
      %p219 = por %p217, %p218
      %p220 = scmp.ne.s32.totalorder %s208, %s209
      %p221 = scmp.eq.s32.totalorder %s31, 1
      %p222 = por %p220, %p221
      %p224 = scmp.ne.s32.totalorder %s209, %s223
      %p225 = scmp.eq.s32.totalorder %s31, 0
      %p226 = por %p224, %p225
      %s228 = sadd.s32 %s227, 1
      %p231 = scmp.eq.s32.totalorder %s25, 1
      %p232 = scmp.ne.s32.totalorder %s227, %s229
      %p233 = scmp.eq.s32.totalorder %s25, 0
      %p234 = por %p232, %p233
      %p235 = scmp.ne.s32.totalorder %s227, %s229
      %p236 = scmp.eq.s32.totalorder %s30, 1
      %p237 = por %p235, %p236
      %p238 = scmp.ne.s32.totalorder %s229, %s230
      %p239 = scmp.eq.s32.totalorder %s30, 0
      %p240 = por %p238, %p239
      %p241 = scmp.ne.s32.totalorder %s229, %s230
      %p242 = scmp.eq.s32.totalorder %s31, 1
      %p243 = por %p241, %p242
      %p245 = scmp.ne.s32.totalorder %s230, %s244
      %p246 = scmp.eq.s32.totalorder %s31, 0
      %p247 = por %p245, %p246
      %s249 = sadd.s32 %s248, 1
      %p252 = scmp.eq.s32.totalorder %s25, 1
      %p253 = scmp.ne.s32.totalorder %s248, %s250
      %p254 = scmp.eq.s32.totalorder %s25, 0
      %p255 = por %p253, %p254
      %p256 = scmp.ne.s32.totalorder %s248, %s250
      %p257 = scmp.eq.s32.totalorder %s30, 1
      %p258 = por %p256, %p257
      %p259 = scmp.ne.s32.totalorder %s250, %s251
      %p260 = scmp.eq.s32.totalorder %s30, 0
      %p261 = por %p259, %p260
      %p262 = scmp.ne.s32.totalorder %s250, %s251
      %p263 = scmp.eq.s32.totalorder %s31, 1
      %p264 = por %p262, %p263
      %p266 = scmp.ne.s32.totalorder %s251, %s265
      %p267 = scmp.eq.s32.totalorder %s31, 0
      %p268 = por %p266, %p267
      %s270 = sadd.s32 %s269, 1
      %p273 = scmp.eq.s32.totalorder %s25, 1
      %p274 = scmp.ne.s32.totalorder %s269, %s271
      %p275 = scmp.eq.s32.totalorder %s25, 0
      %p276 = por %p274, %p275
      %p277 = scmp.ne.s32.totalorder %s269, %s271
      %p278 = scmp.eq.s32.totalorder %s30, 1
      %p279 = por %p277, %p278
      %p280 = scmp.ne.s32.totalorder %s271, %s272
      %p281 = scmp.eq.s32.totalorder %s30, 0
      %p282 = por %p280, %p281
      %p283 = scmp.ne.s32.totalorder %s271, %s272
      %p284 = scmp.eq.s32.totalorder %s31, 1
      %p285 = por %p283, %p284
      %p287 = scmp.ne.s32.totalorder %s272, %s286
      %p288 = scmp.eq.s32.totalorder %s31, 0
      %p289 = por %p287, %p288
      %s291 = sadd.s32 %s290, 1
      %p294 = scmp.eq.s32.totalorder %s25, 1
      %p295 = scmp.ne.s32.totalorder %s290, %s292
      %p296 = scmp.eq.s32.totalorder %s25, 0
      %p297 = por %p295, %p296
      %p298 = scmp.ne.s32.totalorder %s290, %s292
      %p299 = scmp.eq.s32.totalorder %s30, 1
      %p300 = por %p298, %p299
      %p301 = scmp.ne.s32.totalorder %s292, %s293
      %p302 = scmp.eq.s32.totalorder %s30, 0
      %p303 = por %p301, %p302
      %p304 = scmp.ne.s32.totalorder %s292, %s293
      %p305 = scmp.eq.s32.totalorder %s31, 1
      %p306 = por %p304, %p305
      %p308 = scmp.ne.s32.totalorder %s293, %s307
      %p309 = scmp.eq.s32.totalorder %s31, 0
      %p310 = por %p308, %p309
      %s312 = sadd.s32 %s311, 1
      %p315 = scmp.eq.s32.totalorder %s25, 1
      %p316 = scmp.ne.s32.totalorder %s311, %s313
      %p317 = scmp.eq.s32.totalorder %s25, 0
      %p318 = por %p316, %p317
      %p319 = scmp.ne.s32.totalorder %s311, %s313
      %p320 = scmp.eq.s32.totalorder %s30, 1
      %p321 = por %p319, %p320
      %p322 = scmp.ne.s32.totalorder %s313, %s314
      %p323 = scmp.eq.s32.totalorder %s30, 0
      %p324 = por %p322, %p323
      %p325 = scmp.ne.s32.totalorder %s313, %s314
      %p326 = scmp.eq.s32.totalorder %s31, 1
      %p327 = por %p325, %p326
      %p329 = scmp.ne.s32.totalorder %s314, %s328
      %p330 = scmp.eq.s32.totalorder %s31, 0
      %p331 = por %p329, %p330
      %s333 = sadd.s32 %s332, 1
      %p336 = scmp.eq.s32.totalorder %s25, 1
      %p337 = scmp.ne.s32.totalorder %s332, %s334
      %p338 = scmp.eq.s32.totalorder %s25, 0
      %p339 = por %p337, %p338
      %p340 = scmp.ne.s32.totalorder %s332, %s334
      %p341 = scmp.eq.s32.totalorder %s30, 1
      %p342 = por %p340, %p341
      %p343 = scmp.ne.s32.totalorder %s334, %s335
      %p344 = scmp.eq.s32.totalorder %s30, 0
      %p345 = por %p343, %p344
      %p346 = scmp.ne.s32.totalorder %s334, %s335
      %p347 = scmp.eq.s32.totalorder %s31, 1
      %p348 = por %p346, %p347
      %p350 = scmp.ne.s32.totalorder %s335, %s349
      %p351 = scmp.eq.s32.totalorder %s31, 0
      %p352 = por %p350, %p351
      %s354 = sadd.s32 %s353, 1
      %p357 = scmp.eq.s32.totalorder %s25, 1
      %p358 = scmp.ne.s32.totalorder %s353, %s355
      %p359 = scmp.eq.s32.totalorder %s25, 0
      %p360 = por %p358, %p359
      %p361 = scmp.ne.s32.totalorder %s353, %s355
      %p362 = scmp.eq.s32.totalorder %s30, 1
      %p363 = por %p361, %p362
      %p364 = scmp.ne.s32.totalorder %s355, %s356
      %p365 = scmp.eq.s32.totalorder %s30, 0
      %p366 = por %p364, %p365
      %p367 = scmp.ne.s32.totalorder %s355, %s356
      %p368 = scmp.eq.s32.totalorder %s31, 1
      %p369 = por %p367, %p368
      %p371 = scmp.ne.s32.totalorder %s356, %s370
      %p372 = scmp.eq.s32.totalorder %s31, 0
      %p373 = por %p371, %p372
      %s375 = sadd.s32 %s374, 1
      %p378 = scmp.eq.s32.totalorder %s25, 1
      %p379 = scmp.ne.s32.totalorder %s374, %s376
      %p380 = scmp.eq.s32.totalorder %s25, 0
      %p381 = por %p379, %p380
      %p382 = scmp.ne.s32.totalorder %s374, %s376
      %p383 = scmp.eq.s32.totalorder %s30, 1
      %p384 = por %p382, %p383
      %p385 = scmp.ne.s32.totalorder %s376, %s377
      %p386 = scmp.eq.s32.totalorder %s30, 0
      %p387 = por %p385, %p386
      %p388 = scmp.ne.s32.totalorder %s376, %s377
      %p389 = scmp.eq.s32.totalorder %s31, 1
      %p390 = por %p388, %p389
      %p392 = scmp.ne.s32.totalorder %s377, %s391
      %p393 = scmp.eq.s32.totalorder %s31, 0
      %p394 = por %p392, %p393
      %s395 = ssub.s32 %s25, %s32
      %p396 = scmp.eq.s32.totalorder %s395, 0
      %s398 = sadd.s32 %s397, 1
      %s399 = scalar_select %p396, %s397, %s398
      %p402 = pneg %p396
      %p403 = scmp.eq.s32.totalorder %s25, 1
      %p404 = por %p402, %p403
      %p405 = scmp.ne.s32.totalorder %s397, %s400
      %p406 = scmp.eq.s32.totalorder %s25, 0
      %p407 = por %p405, %p406
      %p408 = scmp.ne.s32.totalorder %s397, %s400
      %p409 = scmp.eq.s32.totalorder %s30, 1
      %p410 = por %p408, %p409
      %p411 = scmp.ne.s32.totalorder %s400, %s401
      %p412 = scmp.eq.s32.totalorder %s30, 0
      %p413 = por %p411, %p412
      %p414 = scmp.ne.s32.totalorder %s400, %s401
      %p415 = scmp.eq.s32.totalorder %s31, 1
      %p416 = por %p414, %p415
      %p418 = scmp.ne.s32.totalorder %s401, %s417
      %p419 = scmp.eq.s32.totalorder %s31, 0
      %p420 = por %p418, %p419
      %p421 = scmp.le.s32.totalorder 1, %s25
      %p422 = scmp.lt.s32.totalorder %s25, 3
      %p423 = pnand %p421, %p422
      %p424 = pneg %p423
      // Predicated region
      $region9: #{conv_autoencoder_forward.1} parent=5 // pred_check
        _
      $region10: #{conv_autoencoder_forward.1} parent=5 // pred_check_branch
        %426 = sbr.rel (%p423) target = $region12
      $region11: #{conv_autoencoder_forward.1} parent=5 // pred_region
        %s427 = ssub.s32 %s25, 1
        // Predicated region
        $region13: #{conv_autoencoder_forward.1} parent=11 // pred_check
          %p428 = pneg %p72
        $region14: #{conv_autoencoder_forward.1} parent=11 // pred_check_branch
          %430 = sbr.rel (%p428) target = $region16
        $region15: #{conv_autoencoder_forward.1} parent=11 // pred_region
          _
        $region16: #{conv_autoencoder_forward.1} parent=11 // pred_fallthru
          _
        // Predicated region
        $region17: #{conv_autoencoder_forward.1} parent=11 // pred_check
          %p431 = pneg %p93
        $region18: #{conv_autoencoder_forward.1} parent=11 // pred_check_branch
          %433 = sbr.rel (%p431) target = $region20
        $region19: #{conv_autoencoder_forward.1} parent=11 // pred_region
          _
        $region20: #{conv_autoencoder_forward.1} parent=11 // pred_fallthru
          _
        // Predicated region
        $region21: #{conv_autoencoder_forward.1} parent=11 // pred_check
          %p434 = pneg %p114
        $region22: #{conv_autoencoder_forward.1} parent=11 // pred_check_branch
          %436 = sbr.rel (%p434) target = $region24
        $region23: #{conv_autoencoder_forward.1} parent=11 // pred_region
          %438 = vsyncadd [#allocation3], 0
          %s439 = sshll.u32 %s3, 4
          %s440 = int_to_ptr.hbm [resolvable:$true] %s439
          %s441 = sshll.u32 [#allocation2], 4
          %s442 = int_to_ptr.vmem [resolvable:$true] %s441
          %447 = dma.hbm_to_vmem [thread:$0]  %s440, 4096, %s442, [#allocation3], 128, 128, 8
        $region24: #{conv_autoencoder_forward.1} parent=11 // pred_fallthru
          _
        // Predicated region
        $region25: #{conv_autoencoder_forward.1} parent=11 // pred_check
          %p448 = pneg %p135
        $region26: #{conv_autoencoder_forward.1} parent=11 // pred_check_branch
          %450 = sbr.rel (%p448) target = $region28
        $region27: #{conv_autoencoder_forward.1} parent=11 // pred_region
          _
        $region28: #{conv_autoencoder_forward.1} parent=11 // pred_fallthru
          _
        // Predicated region
        $region29: #{conv_autoencoder_forward.1} parent=11 // pred_check
          %p451 = pneg %p156
        $region30: #{conv_autoencoder_forward.1} parent=11 // pred_check_branch
          %453 = sbr.rel (%p451) target = $region32
        $region31: #{conv_autoencoder_forward.1} parent=11 // pred_region
          _
        $region32: #{conv_autoencoder_forward.1} parent=11 // pred_fallthru
          _
        // Predicated region
        $region33: #{conv_autoencoder_forward.1} parent=11 // pred_check
          %p454 = pneg %p177
        $region34: #{conv_autoencoder_forward.1} parent=11 // pred_check_branch
          %456 = sbr.rel (%p454) target = $region36
        $region35: #{conv_autoencoder_forward.1} parent=11 // pred_region
          %458 = vsyncadd [#allocation5], 0
          %s459 = sshll.u32 %s6, 4
          %s460 = int_to_ptr.hbm [resolvable:$true] %s459
          %s461 = sshll.u32 [#allocation4], 4
          %s462 = int_to_ptr.vmem [resolvable:$true] %s461
          %467 = dma.hbm_to_vmem [thread:$0]  %s460, 1024, %s462, [#allocation5], 128, 128, 8
        $region36: #{conv_autoencoder_forward.1} parent=11 // pred_fallthru
          _
        // Predicated region
        $region37: #{conv_autoencoder_forward.1} parent=11 // pred_check
          %p468 = pneg %p198
        $region38: #{conv_autoencoder_forward.1} parent=11 // pred_check_branch
          %470 = sbr.rel (%p468) target = $region40
        $region39: #{conv_autoencoder_forward.1} parent=11 // pred_region
          _
        $region40: #{conv_autoencoder_forward.1} parent=11 // pred_fallthru
          _
        // Predicated region
        $region41: #{conv_autoencoder_forward.1} parent=11 // pred_check
          %p471 = pneg %p219
        $region42: #{conv_autoencoder_forward.1} parent=11 // pred_check_branch
          %473 = sbr.rel (%p471) target = $region44
        $region43: #{conv_autoencoder_forward.1} parent=11 // pred_region
          _
        $region44: #{conv_autoencoder_forward.1} parent=11 // pred_fallthru
          _
        // Predicated region
        $region45: #{conv_autoencoder_forward.1} parent=11 // pred_check
          %p474 = pneg %p240
        $region46: #{conv_autoencoder_forward.1} parent=11 // pred_check_branch
          %476 = sbr.rel (%p474) target = $region48
        $region47: #{conv_autoencoder_forward.1} parent=11 // pred_region
          _
        $region48: #{conv_autoencoder_forward.1} parent=11 // pred_fallthru
          _
        // Predicated region
        $region49: #{conv_autoencoder_forward.1} parent=11 // pred_check
          %p477 = pneg %p261
        $region50: #{conv_autoencoder_forward.1} parent=11 // pred_check_branch
          %479 = sbr.rel (%p477) target = $region52
        $region51: #{conv_autoencoder_forward.1} parent=11 // pred_region
          _
        $region52: #{conv_autoencoder_forward.1} parent=11 // pred_fallthru
          _
        // Predicated region
        $region53: #{conv_autoencoder_forward.1} parent=11 // pred_check
          %p480 = pneg %p282
        $region54: #{conv_autoencoder_forward.1} parent=11 // pred_check_branch
          %482 = sbr.rel (%p480) target = $region56
        $region55: #{conv_autoencoder_forward.1} parent=11 // pred_region
          _
        $region56: #{conv_autoencoder_forward.1} parent=11 // pred_fallthru
          _
        // Predicated region
        $region57: #{conv_autoencoder_forward.1} parent=11 // pred_check
          %p483 = pneg %p303
        $region58: #{conv_autoencoder_forward.1} parent=11 // pred_check_branch
          %485 = sbr.rel (%p483) target = $region60
        $region59: #{conv_autoencoder_forward.1} parent=11 // pred_region
          _
        $region60: #{conv_autoencoder_forward.1} parent=11 // pred_fallthru
          _
        // Predicated region
        $region61: #{conv_autoencoder_forward.1} parent=11 // pred_check
          %p486 = pneg %p324
        $region62: #{conv_autoencoder_forward.1} parent=11 // pred_check_branch
          %488 = sbr.rel (%p486) target = $region64
        $region63: #{conv_autoencoder_forward.1} parent=11 // pred_region
          _
        $region64: #{conv_autoencoder_forward.1} parent=11 // pred_fallthru
          _
        // Predicated region
        $region65: #{conv_autoencoder_forward.1} parent=11 // pred_check
          %p489 = pneg %p345
        $region66: #{conv_autoencoder_forward.1} parent=11 // pred_check_branch
          %491 = sbr.rel (%p489) target = $region68
        $region67: #{conv_autoencoder_forward.1} parent=11 // pred_region
          _
        $region68: #{conv_autoencoder_forward.1} parent=11 // pred_fallthru
          _
        // Predicated region
        $region69: #{conv_autoencoder_forward.1} parent=11 // pred_check
          %p492 = pneg %p366
        $region70: #{conv_autoencoder_forward.1} parent=11 // pred_check_branch
          %494 = sbr.rel (%p492) target = $region72
        $region71: #{conv_autoencoder_forward.1} parent=11 // pred_region
          _
        $region72: #{conv_autoencoder_forward.1} parent=11 // pred_fallthru
          _
        // Predicated region
        $region73: #{conv_autoencoder_forward.1} parent=11 // pred_check
          %p495 = pneg %p387
        $region74: #{conv_autoencoder_forward.1} parent=11 // pred_check_branch
          %497 = sbr.rel (%p495) target = $region76
        $region75: #{conv_autoencoder_forward.1} parent=11 // pred_region
          _
        $region76: #{conv_autoencoder_forward.1} parent=11 // pred_fallthru
          _
      $region12: #{conv_autoencoder_forward.1} parent=5 // pred_fallthru
        _
      %p498 = scmp.lt.s32.totalorder %s25, 2
      // Predicated region
      $region77: #{conv_autoencoder_forward.1} parent=5 // pred_check
        %p499 = pneg %p498
      $region78: #{conv_autoencoder_forward.1} parent=5 // pred_check_branch
        %501 = sbr.rel (%p499) target = $region80
      $region79: #{conv_autoencoder_forward.1} parent=5 // pred_region
        // Predicated region
        $region81: #{conv_autoencoder_forward.1} parent=79 // pred_check
          %p502 = pneg %p45
        $region82: #{conv_autoencoder_forward.1} parent=79 // pred_check_branch
          %504 = sbr.rel (%p502) target = $region84
        $region83: #{conv_autoencoder_forward.1} parent=79 // pred_region
          %s505 = smul.u32 32, %s25
          %p506 = scmp.lt.s32.totalorder %s505, 63
          %s507 = scalar_select %p506, %s505, 63
          %s508 = smul.addr %s507, 8
          %s509 = scalar_lea.vmem %s0, %s508
          %s510 = smul.u32 32, %s25
        $region84: #{conv_autoencoder_forward.1} parent=79 // pred_fallthru
          _
      $region80: #{conv_autoencoder_forward.1} parent=5 // pred_fallthru
        _
      %p511 = scmp.le.s32.totalorder 1, %s25
      %p512 = scmp.lt.s32.totalorder %s25, 3
      %p513 = pnand %p511, %p512
      %p514 = pneg %p513
      // Predicated region
      $region85: #{conv_autoencoder_forward.1} parent=5 // pred_check
        _
      $region86: #{conv_autoencoder_forward.1} parent=5 // pred_check_branch
        %516 = sbr.rel (%p513) target = $region88
      $region87: #{conv_autoencoder_forward.1} parent=5 // pred_region
        %s517 = ssub.s32 %s25, 1
        // Predicated region
        $region89: #{conv_autoencoder_forward.1} parent=87 // pred_check
          %p518 = pneg %p114
        $region90: #{conv_autoencoder_forward.1} parent=87 // pred_check_branch
          %520 = sbr.rel (%p518) target = $region92
        $region91: #{conv_autoencoder_forward.1} parent=87 // pred_region
          %522 = dma.done [#allocation3], 4096
        $region92: #{conv_autoencoder_forward.1} parent=87 // pred_fallthru
          _
        // Predicated region
        $region93: #{conv_autoencoder_forward.1} parent=87 // pred_check
          %p523 = pneg %p177
        $region94: #{conv_autoencoder_forward.1} parent=87 // pred_check_branch
          %525 = sbr.rel (%p523) target = $region96
        $region95: #{conv_autoencoder_forward.1} parent=87 // pred_region
          %527 = dma.done [#allocation5], 1024
        $region96: #{conv_autoencoder_forward.1} parent=87 // pred_fallthru
          _
        %s528 = smul.u32 32, %s30
        %p529 = scmp.lt.s32.totalorder %s528, 63
        %s530 = scalar_select %p529, %s528, 63
        %s531 = smul.addr %s530, 8
        %s532 = scalar_lea.vmem %s0, %s531
        %p533 = pneg %p51
        %p534 = pneg %p48
        %p535 = pneg %p72
        %p536 = pneg %p69
        %p537 = pneg %p93
        %p538 = pneg %p90
        %p539 = pneg %p114
        %p540 = pneg %p111
        %p541 = pneg %p135
        %p542 = pneg %p132
        %p543 = pneg %p156
        %p544 = pneg %p153
        %p545 = pneg %p177
        %p546 = pneg %p174
        %p547 = pneg %p198
        %p548 = pneg %p195
        %p549 = pneg %p219
        %p550 = pneg %p216
        %p551 = pneg %p240
        %p552 = pneg %p237
        %p553 = pneg %p261
        %p554 = pneg %p258
        %p555 = pneg %p282
        %p556 = pneg %p279
        %p557 = pneg %p303
        %p558 = pneg %p300
        %p559 = pneg %p324
        %p560 = pneg %p321
        %p561 = pneg %p345
        %p562 = pneg %p342
        %p563 = pneg %p366
        %p564 = pneg %p363
        %p565 = pneg %p387
        %p566 = pneg %p384
        %p567 = pneg %p413
        %p568 = pneg %p410
        %s569 = smul.u32 32, %s30
        %p570 = scmp.lt.s32.totalorder %s569, 63
        %s571 = scalar_select %p570, %s569, 63
        %s572 = smul.addr %s571, 8
        %s573 = scalar_lea.vmem %s17, %s572
        %s574 = smul.u32 32, %s30
        %p575 = scmp.lt.s32.totalorder %s574, 63
        %s576 = scalar_select %p575, %s574, 63
        %s577 = smul.addr %s576, 8
        %s578 = scalar_lea.vmem %s0, %s577
        %s579 = smul.u32 32, %s30
        %s580 = smul.u32 32, %s30
        %p581 = scmp.lt.s32.totalorder %s580, 63
        %s582 = scalar_select %p581, %s580, 63
        %s583 = smul.addr %s582, 8
        %s584 = scalar_lea.vmem %s17, %s583
        %s585 = smul.u32 32, %s30
        %v587 = vld [vmem:[%s578] sm:$0xff]
        %v588 = vld [vmem:[%s578 + $0x8] sm:$0xff]
        %v589 = vld [vmem:[%s578 + $0x10] sm:$0xff]
        %v590 = vld [vmem:[%s578 + $0x18] sm:$0xff]
        %v591 = vld [vmem:[%s578 + $0x20] sm:$0xff]
        %v592 = vld [vmem:[%s578 + $0x28] sm:$0xff]
        %v593 = vld [vmem:[%s578 + $0x30] sm:$0xff]
        %v594 = vld [vmem:[%s578 + $0x38] sm:$0xff]
        %v595 = vld [vmem:[%s578 + $0x40] sm:$0xff]
        %v596 = vld [vmem:[%s578 + $0x48] sm:$0xff]
        %v597 = vld [vmem:[%s578 + $0x50] sm:$0xff]
        %v598 = vld [vmem:[%s578 + $0x58] sm:$0xff]
        %v599 = vld [vmem:[%s578 + $0x60] sm:$0xff]
        %v600 = vld [vmem:[%s578 + $0x68] sm:$0xff]
        %v601 = vld [vmem:[%s578 + $0x70] sm:$0xff]
        %v602 = vld [vmem:[%s578 + $0x78] sm:$0xff]
        %v603 = vld [vmem:[%s578 + $0x80] sm:$0xff]
        %v604 = vld [vmem:[%s578 + $0x88] sm:$0xff]
        %v605 = vld [vmem:[%s578 + $0x90] sm:$0xff]
        %v606 = vld [vmem:[%s578 + $0x98] sm:$0xff]
        %v607 = vld [vmem:[%s578 + $0xa0] sm:$0xff]
        %v608 = vld [vmem:[%s578 + $0xa8] sm:$0xff]
        %v609 = vld [vmem:[%s578 + $0xb0] sm:$0xff]
        %v610 = vld [vmem:[%s578 + $0xb8] sm:$0xff]
        %v611 = vld [vmem:[%s578 + $0xc0] sm:$0xff]
        %v612 = vld [vmem:[%s578 + $0xc8] sm:$0xff]
        %v613 = vld [vmem:[%s578 + $0xd0] sm:$0xff]
        %v614 = vld [vmem:[%s578 + $0xd8] sm:$0xff]
        %v615 = vld [vmem:[%s578 + $0xe0] sm:$0xff]
        %v616 = vld [vmem:[%s578 + $0xe8] sm:$0xff]
        %v617 = vld [vmem:[%s578 + $0xf0] sm:$0xff]
        %v618 = vld [vmem:[%s578 + $0xf8] sm:$0xff]
        %vm651 = vcmask 1040384
        %v652 = vrot.slane %v587, 7
        %v653 = vrot.slane %v588, 7
        %v654 = vsel %vm651, %v652, %v653
        %v655 = vrot.slane %v589, 7
        %v656 = vsel %vm651, %v653, %v655
        %v657 = vrot.slane %v590, 7
        %v658 = vsel %vm651, %v655, %v657
        %v659 = vrot.slane %v591, 7
        %v660 = vsel %vm651, %v657, %v659
        %v661 = vrot.slane %v592, 7
        %v662 = vsel %vm651, %v659, %v661
        %v663 = vrot.slane %v593, 7
        %v664 = vsel %vm651, %v661, %v663
        %v665 = vrot.slane %v594, 7
        %v666 = vsel %vm651, %v663, %v665
        %v667 = vrot.slane %v595, 7
        %v668 = vsel %vm651, %v665, %v667
        %v669 = vrot.slane %v596, 7
        %v670 = vsel %vm651, %v667, %v669
        %v671 = vrot.slane %v597, 7
        %v672 = vsel %vm651, %v669, %v671
        %v673 = vrot.slane %v598, 7
        %v674 = vsel %vm651, %v671, %v673
        %v675 = vrot.slane %v599, 7
        %v676 = vsel %vm651, %v673, %v675
        %v677 = vrot.slane %v600, 7
        %v678 = vsel %vm651, %v675, %v677
        %v679 = vrot.slane %v601, 7
        %v680 = vsel %vm651, %v677, %v679
        %v681 = vrot.slane %v602, 7
        %v682 = vsel %vm651, %v679, %v681
        %v683 = vrot.slane %v603, 7
        %v684 = vsel %vm651, %v681, %v683
        %v685 = vrot.slane %v604, 7
        %v686 = vsel %vm651, %v683, %v685
        %v687 = vrot.slane %v605, 7
        %v688 = vsel %vm651, %v685, %v687
        %v689 = vrot.slane %v606, 7
        %v690 = vsel %vm651, %v687, %v689
        %v691 = vrot.slane %v607, 7
        %v692 = vsel %vm651, %v689, %v691
        %v693 = vrot.slane %v608, 7
        %v694 = vsel %vm651, %v691, %v693
        %v695 = vrot.slane %v609, 7
        %v696 = vsel %vm651, %v693, %v695
        %v697 = vrot.slane %v610, 7
        %v698 = vsel %vm651, %v695, %v697
        %v699 = vrot.slane %v611, 7
        %v700 = vsel %vm651, %v697, %v699
        %v701 = vrot.slane %v612, 7
        %v702 = vsel %vm651, %v699, %v701
        %v703 = vrot.slane %v613, 7
        %v704 = vsel %vm651, %v701, %v703
        %v705 = vrot.slane %v614, 7
        %v706 = vsel %vm651, %v703, %v705
        %v707 = vrot.slane %v615, 7
        %v708 = vsel %vm651, %v705, %v707
        %v709 = vrot.slane %v616, 7
        %v710 = vsel %vm651, %v707, %v709
        %v711 = vrot.slane %v617, 7
        %v712 = vsel %vm651, %v709, %v711
        %v713 = vrot.slane %v618, 7
        %v714 = vsel %vm651, %v711, %v713
        %v748 = vsel %vm651, 0.0, %v652
        %v749 = vsel %vm651, %v713, 0.0
        %v750 = vld [vmem:[#allocation2] sm:$0xff]
        %v751 = vld [vmem:[#allocation2 + $0x8] sm:$0xff]
        %v752 = vld [vmem:[#allocation2 + $0x10] sm:$0xff]
        %v753 = vld [vmem:[#allocation2 + $0x18] sm:$0xff]
        %v754 = vld [vmem:[#allocation2 + $0x20] sm:$0xff]
        %v755 = vld [vmem:[#allocation2 + $0x28] sm:$0xff]
        %v756 = vld [vmem:[#allocation2 + $0x30] sm:$0xff]
        %v757 = vld [vmem:[#allocation2 + $0x38] sm:$0xff]
        %v758 = vld [vmem:[#allocation2 + $0x40] sm:$0xff]
        %v759 = vld [vmem:[#allocation2 + $0x48] sm:$0xff]
        %v760 = vld [vmem:[#allocation2 + $0x50] sm:$0xff]
        %v761 = vld [vmem:[#allocation2 + $0x58] sm:$0xff]
        %v762 = vld [vmem:[#allocation2 + $0x60] sm:$0xff]
        %v763 = vld [vmem:[#allocation2 + $0x68] sm:$0xff]
        %v764 = vld [vmem:[#allocation2 + $0x70] sm:$0xff]
        %v765 = vld [vmem:[#allocation2 + $0x78] sm:$0xff]
        %v766 = vld [vmem:[#allocation2 + $0x80] sm:$0xff]
        %v767 = vld [vmem:[#allocation2 + $0x88] sm:$0xff]
        %v768 = vld [vmem:[#allocation2 + $0x90] sm:$0xff]
        %v769 = vld [vmem:[#allocation2 + $0x98] sm:$0xff]
        %v770 = vld [vmem:[#allocation2 + $0xa0] sm:$0xff]
        %v771 = vld [vmem:[#allocation2 + $0xa8] sm:$0xff]
        %v772 = vld [vmem:[#allocation2 + $0xb0] sm:$0xff]
        %v773 = vld [vmem:[#allocation2 + $0xb8] sm:$0xff]
        %v774 = vld [vmem:[#allocation2 + $0xc0] sm:$0xff]
        %v775 = vld [vmem:[#allocation2 + $0xc8] sm:$0xff]
        %v776 = vld [vmem:[#allocation2 + $0xd0] sm:$0xff]
        %v777 = vld [vmem:[#allocation2 + $0xd8] sm:$0xff]
        %v778 = vld [vmem:[#allocation2 + $0xe0] sm:$0xff]
        %v779 = vld [vmem:[#allocation2 + $0xe8] sm:$0xff]
        %v780 = vld [vmem:[#allocation2 + $0xf0] sm:$0xff]
        %v781 = vld [vmem:[#allocation2 + $0xf8] sm:$0xff]
        %v782 = vld [vmem:[%s1] sm:$0x3]
        %784 = vset.pattern.permute.xlu0 0
        %785 = vperm.xlu0 %784, %v750
        %v786 = vpop.permute.xlu0 %785
        %789 = vset.pattern.permute.xlu0 0
        %790 = vperm.xlu0 %789, %v751
        %v791 = vpop.permute.xlu0 %790
        %794 = vset.pattern.permute.xlu0 0
        %795 = vperm.xlu0 %794, %v752
        %v796 = vpop.permute.xlu0 %795
        %799 = vset.pattern.permute.xlu0 0
        %800 = vperm.xlu0 %799, %v753
        %v801 = vpop.permute.xlu0 %800
        %804 = vset.pattern.permute.xlu0 0
        %805 = vperm.xlu0 %804, %v754
        %v806 = vpop.permute.xlu0 %805
        %809 = vset.pattern.permute.xlu0 0
        %810 = vperm.xlu0 %809, %v755
        %v811 = vpop.permute.xlu0 %810
        %814 = vset.pattern.permute.xlu0 0
        %815 = vperm.xlu0 %814, %v756
        %v816 = vpop.permute.xlu0 %815
        %819 = vset.pattern.permute.xlu0 0
        %820 = vperm.xlu0 %819, %v757
        %v821 = vpop.permute.xlu0 %820
        %824 = vset.pattern.permute.xlu0 0
        %825 = vperm.xlu0 %824, %v758
        %v826 = vpop.permute.xlu0 %825
        %829 = vset.pattern.permute.xlu0 0
        %830 = vperm.xlu0 %829, %v759
        %v831 = vpop.permute.xlu0 %830
        %834 = vset.pattern.permute.xlu0 0
        %835 = vperm.xlu0 %834, %v760
        %v836 = vpop.permute.xlu0 %835
        %839 = vset.pattern.permute.xlu0 0
        %840 = vperm.xlu0 %839, %v761
        %v841 = vpop.permute.xlu0 %840
        %844 = vset.pattern.permute.xlu0 0
        %845 = vperm.xlu0 %844, %v762
        %v846 = vpop.permute.xlu0 %845
        %849 = vset.pattern.permute.xlu0 0
        %850 = vperm.xlu0 %849, %v763
        %v851 = vpop.permute.xlu0 %850
        %854 = vset.pattern.permute.xlu0 0
        %855 = vperm.xlu0 %854, %v764
        %v856 = vpop.permute.xlu0 %855
        %859 = vset.pattern.permute.xlu0 0
        %860 = vperm.xlu0 %859, %v765
        %v861 = vpop.permute.xlu0 %860
        %864 = vset.pattern.permute.xlu0 0
        %865 = vperm.xlu0 %864, %v766
        %v866 = vpop.permute.xlu0 %865
        %869 = vset.pattern.permute.xlu0 0
        %870 = vperm.xlu0 %869, %v767
        %v871 = vpop.permute.xlu0 %870
        %874 = vset.pattern.permute.xlu0 0
        %875 = vperm.xlu0 %874, %v768
        %v876 = vpop.permute.xlu0 %875
        %879 = vset.pattern.permute.xlu0 0
        %880 = vperm.xlu0 %879, %v769
        %v881 = vpop.permute.xlu0 %880
        %884 = vset.pattern.permute.xlu0 0
        %885 = vperm.xlu0 %884, %v770
        %v886 = vpop.permute.xlu0 %885
        %889 = vset.pattern.permute.xlu0 0
        %890 = vperm.xlu0 %889, %v771
        %v891 = vpop.permute.xlu0 %890
        %894 = vset.pattern.permute.xlu0 0
        %895 = vperm.xlu0 %894, %v772
        %v896 = vpop.permute.xlu0 %895
        %899 = vset.pattern.permute.xlu0 0
        %900 = vperm.xlu0 %899, %v773
        %v901 = vpop.permute.xlu0 %900
        %904 = vset.pattern.permute.xlu0 0
        %905 = vperm.xlu0 %904, %v774
        %v906 = vpop.permute.xlu0 %905
        %909 = vset.pattern.permute.xlu0 0
        %910 = vperm.xlu0 %909, %v775
        %v911 = vpop.permute.xlu0 %910
        %914 = vset.pattern.permute.xlu0 0
        %915 = vperm.xlu0 %914, %v776
        %v916 = vpop.permute.xlu0 %915
        %919 = vset.pattern.permute.xlu0 0
        %920 = vperm.xlu0 %919, %v777
        %v921 = vpop.permute.xlu0 %920
        %924 = vset.pattern.permute.xlu0 0
        %925 = vperm.xlu0 %924, %v778
        %v926 = vpop.permute.xlu0 %925
        %929 = vset.pattern.permute.xlu0 0
        %930 = vperm.xlu0 %929, %v779
        %v931 = vpop.permute.xlu0 %930
        %934 = vset.pattern.permute.xlu0 0
        %935 = vperm.xlu0 %934, %v780
        %v936 = vpop.permute.xlu0 %935
        %939 = vset.pattern.permute.xlu0 0
        %940 = vperm.xlu0 %939, %v781
        %v941 = vpop.permute.xlu0 %940
        %v943 = vmul.f32 %v786, 0.0
        %v944 = vmul.f32 %v791, 0.0
        %v945 = vmul.f32 %v748, %v796
        %v946 = vmul.f32 %v654, %v801
        %v947 = vmul.f32 %v656, %v806
        %v948 = vmul.f32 %v658, %v811
        %v949 = vmul.f32 %v660, %v816
        %v950 = vmul.f32 %v662, %v821
        %v951 = vmul.f32 %v664, %v826
        %v952 = vmul.f32 %v666, %v831
        %v953 = vmul.f32 %v668, %v836
        %v954 = vmul.f32 %v670, %v841
        %v955 = vmul.f32 %v672, %v846
        %v956 = vmul.f32 %v674, %v851
        %v957 = vmul.f32 %v676, %v856
        %v958 = vmul.f32 %v678, %v861
        %v959 = vmul.f32 %v680, %v866
        %v960 = vmul.f32 %v682, %v871
        %v961 = vmul.f32 %v684, %v876
        %v962 = vmul.f32 %v686, %v881
        %v963 = vmul.f32 %v688, %v886
        %v964 = vmul.f32 %v690, %v891
        %v965 = vmul.f32 %v692, %v896
        %v966 = vmul.f32 %v694, %v901
        %v967 = vmul.f32 %v696, %v906
        %v968 = vmul.f32 %v698, %v911
        %v969 = vmul.f32 %v700, %v916
        %v970 = vmul.f32 %v702, %v921
        %v971 = vmul.f32 %v704, %v926
        %v972 = vmul.f32 %v706, %v931
        %v973 = vmul.f32 %v708, %v936
        %v974 = vmul.f32 %v710, %v941
        %v975 = vpack.c.bf16 %v944, %v943
        %v976 = vpack.c.bf16 %v946, %v945
        %v977 = vpack.c.bf16 %v948, %v947
        %v978 = vpack.c.bf16 %v950, %v949
        %v979 = vpack.c.bf16 %v952, %v951
        %v980 = vpack.c.bf16 %v954, %v953
        %v981 = vpack.c.bf16 %v956, %v955
        %v982 = vpack.c.bf16 %v958, %v957
        %v983 = vpack.c.bf16 %v960, %v959
        %v984 = vpack.c.bf16 %v962, %v961
        %v985 = vpack.c.bf16 %v964, %v963
        %v986 = vpack.c.bf16 %v966, %v965
        %v987 = vpack.c.bf16 %v968, %v967
        %v988 = vpack.c.bf16 %v970, %v969
        %v989 = vpack.c.bf16 %v972, %v971
        %v990 = vpack.c.bf16 %v974, %v973
        %v991 = vld [vmem:[%s1] sm:$0x6]
        %992 = vset.pattern.permute.xlu0 1
        %993 = vperm.xlu0 %992, %v750
        %v994 = vpop.permute.xlu0 %993
        %995 = vset.pattern.permute.xlu0 1
        %996 = vperm.xlu0 %995, %v751
        %v997 = vpop.permute.xlu0 %996
        %998 = vset.pattern.permute.xlu0 1
        %999 = vperm.xlu0 %998, %v752
        %v1000 = vpop.permute.xlu0 %999
        %1001 = vset.pattern.permute.xlu0 1
        %1002 = vperm.xlu0 %1001, %v753
        %v1003 = vpop.permute.xlu0 %1002
        %1004 = vset.pattern.permute.xlu0 1
        %1005 = vperm.xlu0 %1004, %v754
        %v1006 = vpop.permute.xlu0 %1005
        %1007 = vset.pattern.permute.xlu0 1
        %1008 = vperm.xlu0 %1007, %v755
        %v1009 = vpop.permute.xlu0 %1008
        %1010 = vset.pattern.permute.xlu0 1
        %1011 = vperm.xlu0 %1010, %v756
        %v1012 = vpop.permute.xlu0 %1011
        %1013 = vset.pattern.permute.xlu0 1
        %1014 = vperm.xlu0 %1013, %v757
        %v1015 = vpop.permute.xlu0 %1014
        %1016 = vset.pattern.permute.xlu0 1
        %1017 = vperm.xlu0 %1016, %v758
        %v1018 = vpop.permute.xlu0 %1017
        %1019 = vset.pattern.permute.xlu0 1
        %1020 = vperm.xlu0 %1019, %v759
        %v1021 = vpop.permute.xlu0 %1020
        %1022 = vset.pattern.permute.xlu0 1
        %1023 = vperm.xlu0 %1022, %v760
        %v1024 = vpop.permute.xlu0 %1023
        %1025 = vset.pattern.permute.xlu0 1
        %1026 = vperm.xlu0 %1025, %v761
        %v1027 = vpop.permute.xlu0 %1026
        %1028 = vset.pattern.permute.xlu0 1
        %1029 = vperm.xlu0 %1028, %v762
        %v1030 = vpop.permute.xlu0 %1029
        %1031 = vset.pattern.permute.xlu0 1
        %1032 = vperm.xlu0 %1031, %v763
        %v1033 = vpop.permute.xlu0 %1032
        %1034 = vset.pattern.permute.xlu0 1
        %1035 = vperm.xlu0 %1034, %v764
        %v1036 = vpop.permute.xlu0 %1035
        %1037 = vset.pattern.permute.xlu0 1
        %1038 = vperm.xlu0 %1037, %v765
        %v1039 = vpop.permute.xlu0 %1038
        %1040 = vset.pattern.permute.xlu0 1
        %1041 = vperm.xlu0 %1040, %v766
        %v1042 = vpop.permute.xlu0 %1041
        %1043 = vset.pattern.permute.xlu0 1
        %1044 = vperm.xlu0 %1043, %v767
        %v1045 = vpop.permute.xlu0 %1044
        %1046 = vset.pattern.permute.xlu0 1
        %1047 = vperm.xlu0 %1046, %v768
        %v1048 = vpop.permute.xlu0 %1047
        %1049 = vset.pattern.permute.xlu0 1
        %1050 = vperm.xlu0 %1049, %v769
        %v1051 = vpop.permute.xlu0 %1050
        %1052 = vset.pattern.permute.xlu0 1
        %1053 = vperm.xlu0 %1052, %v770
        %v1054 = vpop.permute.xlu0 %1053
        %1055 = vset.pattern.permute.xlu0 1
        %1056 = vperm.xlu0 %1055, %v771
        %v1057 = vpop.permute.xlu0 %1056
        %1058 = vset.pattern.permute.xlu0 1
        %1059 = vperm.xlu0 %1058, %v772
        %v1060 = vpop.permute.xlu0 %1059
        %1061 = vset.pattern.permute.xlu0 1
        %1062 = vperm.xlu0 %1061, %v773
        %v1063 = vpop.permute.xlu0 %1062
        %1064 = vset.pattern.permute.xlu0 1
        %1065 = vperm.xlu0 %1064, %v774
        %v1066 = vpop.permute.xlu0 %1065
        %1067 = vset.pattern.permute.xlu0 1
        %1068 = vperm.xlu0 %1067, %v775
        %v1069 = vpop.permute.xlu0 %1068
        %1070 = vset.pattern.permute.xlu0 1
        %1071 = vperm.xlu0 %1070, %v776
        %v1072 = vpop.permute.xlu0 %1071
        %1073 = vset.pattern.permute.xlu0 1
        %1074 = vperm.xlu0 %1073, %v777
        %v1075 = vpop.permute.xlu0 %1074
        %1076 = vset.pattern.permute.xlu0 1
        %1077 = vperm.xlu0 %1076, %v778
        %v1078 = vpop.permute.xlu0 %1077
        %1079 = vset.pattern.permute.xlu0 1
        %1080 = vperm.xlu0 %1079, %v779
        %v1081 = vpop.permute.xlu0 %1080
        %1082 = vset.pattern.permute.xlu0 1
        %1083 = vperm.xlu0 %1082, %v780
        %v1084 = vpop.permute.xlu0 %1083
        %1085 = vset.pattern.permute.xlu0 1
        %1086 = vperm.xlu0 %1085, %v781
        %v1087 = vpop.permute.xlu0 %1086
        %v1088 = vrot.slane %v994, 7
        %v1089 = vrot.slane %v997, 7
        %v1090 = vsel %vm651, %v1088, %v1089
        %v1091 = vrot.slane %v1000, 7
        %v1092 = vsel %vm651, %v1089, %v1091
        %v1093 = vrot.slane %v1003, 7
        %v1094 = vsel %vm651, %v1091, %v1093
        %v1095 = vrot.slane %v1006, 7
        %v1096 = vsel %vm651, %v1093, %v1095
        %v1097 = vrot.slane %v1009, 7
        %v1098 = vsel %vm651, %v1095, %v1097
        %v1099 = vrot.slane %v1012, 7
        %v1100 = vsel %vm651, %v1097, %v1099
        %v1101 = vrot.slane %v1015, 7
        %v1102 = vsel %vm651, %v1099, %v1101
        %v1103 = vrot.slane %v1018, 7
        %v1104 = vsel %vm651, %v1101, %v1103
        %v1105 = vrot.slane %v1021, 7
        %v1106 = vsel %vm651, %v1103, %v1105
        %v1107 = vrot.slane %v1024, 7
        %v1108 = vsel %vm651, %v1105, %v1107
        %v1109 = vrot.slane %v1027, 7
        %v1110 = vsel %vm651, %v1107, %v1109
        %v1111 = vrot.slane %v1030, 7
        %v1112 = vsel %vm651, %v1109, %v1111
        %v1113 = vrot.slane %v1033, 7
        %v1114 = vsel %vm651, %v1111, %v1113
        %v1115 = vrot.slane %v1036, 7
        %v1116 = vsel %vm651, %v1113, %v1115
        %v1117 = vrot.slane %v1039, 7
        %v1118 = vsel %vm651, %v1115, %v1117
        %v1119 = vrot.slane %v1042, 7
        %v1120 = vsel %vm651, %v1117, %v1119
        %v1121 = vrot.slane %v1045, 7
        %v1122 = vsel %vm651, %v1119, %v1121
        %v1123 = vrot.slane %v1048, 7
        %v1124 = vsel %vm651, %v1121, %v1123
        %v1125 = vrot.slane %v1051, 7
        %v1126 = vsel %vm651, %v1123, %v1125
        %v1127 = vrot.slane %v1054, 7
        %v1128 = vsel %vm651, %v1125, %v1127
        %v1129 = vrot.slane %v1057, 7
        %v1130 = vsel %vm651, %v1127, %v1129
        %v1131 = vrot.slane %v1060, 7
        %v1132 = vsel %vm651, %v1129, %v1131
        %v1133 = vrot.slane %v1063, 7
        %v1134 = vsel %vm651, %v1131, %v1133
        %v1135 = vrot.slane %v1066, 7
        %v1136 = vsel %vm651, %v1133, %v1135
        %v1137 = vrot.slane %v1069, 7
        %v1138 = vsel %vm651, %v1135, %v1137
        %v1139 = vrot.slane %v1072, 7
        %v1140 = vsel %vm651, %v1137, %v1139
        %v1141 = vrot.slane %v1075, 7
        %v1142 = vsel %vm651, %v1139, %v1141
        %v1143 = vrot.slane %v1078, 7
        %v1144 = vsel %vm651, %v1141, %v1143
        %v1145 = vrot.slane %v1081, 7
        %v1146 = vsel %vm651, %v1143, %v1145
        %v1147 = vrot.slane %v1084, 7
        %v1148 = vsel %vm651, %v1145, %v1147
        %v1149 = vrot.slane %v1087, 7
        %v1150 = vsel %vm651, %v1147, %v1149
        %v1184 = vmul.f32 %v1088, 0.0
        %v1185 = vmul.f32 %v1090, 0.0
        %v1186 = vmul.f32 %v748, %v1092
        %v1187 = vmul.f32 %v654, %v1094
        %v1188 = vmul.f32 %v656, %v1096
        %v1189 = vmul.f32 %v658, %v1098
        %v1190 = vmul.f32 %v660, %v1100
        %v1191 = vmul.f32 %v662, %v1102
        %v1192 = vmul.f32 %v664, %v1104
        %v1193 = vmul.f32 %v666, %v1106
        %v1194 = vmul.f32 %v668, %v1108
        %v1195 = vmul.f32 %v670, %v1110
        %v1196 = vmul.f32 %v672, %v1112
        %v1197 = vmul.f32 %v674, %v1114
        %v1198 = vmul.f32 %v676, %v1116
        %v1199 = vmul.f32 %v678, %v1118
        %v1200 = vmul.f32 %v680, %v1120
        %v1201 = vmul.f32 %v682, %v1122
        %v1202 = vmul.f32 %v684, %v1124
        %v1203 = vmul.f32 %v686, %v1126
        %v1204 = vmul.f32 %v688, %v1128
        %v1205 = vmul.f32 %v690, %v1130
        %v1206 = vmul.f32 %v692, %v1132
        %v1207 = vmul.f32 %v694, %v1134
        %v1208 = vmul.f32 %v696, %v1136
        %v1209 = vmul.f32 %v698, %v1138
        %v1210 = vmul.f32 %v700, %v1140
        %v1211 = vmul.f32 %v702, %v1142
        %v1212 = vmul.f32 %v704, %v1144
        %v1213 = vmul.f32 %v706, %v1146
        %v1214 = vmul.f32 %v708, %v1148
        %v1215 = vmul.f32 %v710, %v1150
        %v1216 = vmul.f32 %v712, %v1149
        %v1217 = vpack.c.bf16 %v1185, %v1184
        %v1218 = vpack.c.bf16 %v1187, %v1186
        %v1219 = vpack.c.bf16 %v1189, %v1188
        %v1220 = vpack.c.bf16 %v1191, %v1190
        %v1221 = vpack.c.bf16 %v1193, %v1192
        %v1222 = vpack.c.bf16 %v1195, %v1194
        %v1223 = vpack.c.bf16 %v1197, %v1196
        %v1224 = vpack.c.bf16 %v1199, %v1198
        %v1225 = vpack.c.bf16 %v1201, %v1200
        %v1226 = vpack.c.bf16 %v1203, %v1202
        %v1227 = vpack.c.bf16 %v1205, %v1204
        %v1228 = vpack.c.bf16 %v1207, %v1206
        %v1229 = vpack.c.bf16 %v1209, %v1208
        %v1230 = vpack.c.bf16 %v1211, %v1210
        %v1231 = vpack.c.bf16 %v1213, %v1212
        %v1232 = vpack.c.bf16 %v1215, %v1214
        %v1233 = vpack.c.bf16 %v1216, %v1216
        %vm1234 = vsmask.f32 7424
        %v1236 = vshrl.u32 %v1217, 16
        %v1238 = vshll.u32 %v1217, 16
        %v1240 = vrot.slane %v1238, 1
        %v1241 = vor.u32 %v1236, %v1240
        %v1243 = vshll.u32 %v1218, 16
        %v1245 = vrot.slane %v1243, 1
        %v1246 = vsel %vm1234, %v1241, %v1245
        %v1247 = vshrl.u32 %v1218, 16
        %v1249 = vor.u32 %v1247, %v1245
        %v1251 = vshll.u32 %v1219, 16
        %v1253 = vrot.slane %v1251, 1
        %v1254 = vsel %vm1234, %v1249, %v1253
        %v1255 = vshrl.u32 %v1219, 16
        %v1257 = vor.u32 %v1255, %v1253
        %v1259 = vshll.u32 %v1220, 16
        %v1261 = vrot.slane %v1259, 1
        %v1262 = vsel %vm1234, %v1257, %v1261
        %v1263 = vshrl.u32 %v1220, 16
        %v1265 = vor.u32 %v1263, %v1261
        %v1267 = vshll.u32 %v1221, 16
        %v1269 = vrot.slane %v1267, 1
        %v1270 = vsel %vm1234, %v1265, %v1269
        %v1271 = vshrl.u32 %v1221, 16
        %v1273 = vor.u32 %v1271, %v1269
        %v1275 = vshll.u32 %v1222, 16
        %v1277 = vrot.slane %v1275, 1
        %v1278 = vsel %vm1234, %v1273, %v1277
        %v1279 = vshrl.u32 %v1222, 16
        %v1281 = vor.u32 %v1279, %v1277
        %v1283 = vshll.u32 %v1223, 16
        %v1285 = vrot.slane %v1283, 1
        %v1286 = vsel %vm1234, %v1281, %v1285
        %v1287 = vshrl.u32 %v1223, 16
        %v1289 = vor.u32 %v1287, %v1285
        %v1291 = vshll.u32 %v1224, 16
        %v1293 = vrot.slane %v1291, 1
        %v1294 = vsel %vm1234, %v1289, %v1293
        %v1295 = vshrl.u32 %v1224, 16
        %v1297 = vor.u32 %v1295, %v1293
        %v1299 = vshll.u32 %v1225, 16
        %v1301 = vrot.slane %v1299, 1
        %v1302 = vsel %vm1234, %v1297, %v1301
        %v1303 = vshrl.u32 %v1225, 16
        %v1305 = vor.u32 %v1303, %v1301
        %v1307 = vshll.u32 %v1226, 16
        %v1309 = vrot.slane %v1307, 1
        %v1310 = vsel %vm1234, %v1305, %v1309
        %v1311 = vshrl.u32 %v1226, 16
        %v1313 = vor.u32 %v1311, %v1309
        %v1315 = vshll.u32 %v1227, 16
        %v1317 = vrot.slane %v1315, 1
        %v1318 = vsel %vm1234, %v1313, %v1317
        %v1319 = vshrl.u32 %v1227, 16
        %v1321 = vor.u32 %v1319, %v1317
        %v1323 = vshll.u32 %v1228, 16
        %v1325 = vrot.slane %v1323, 1
        %v1326 = vsel %vm1234, %v1321, %v1325
        %v1327 = vshrl.u32 %v1228, 16
        %v1329 = vor.u32 %v1327, %v1325
        %v1331 = vshll.u32 %v1229, 16
        %v1333 = vrot.slane %v1331, 1
        %v1334 = vsel %vm1234, %v1329, %v1333
        %v1335 = vshrl.u32 %v1229, 16
        %v1337 = vor.u32 %v1335, %v1333
        %v1339 = vshll.u32 %v1230, 16
        %v1341 = vrot.slane %v1339, 1
        %v1342 = vsel %vm1234, %v1337, %v1341
        %v1343 = vshrl.u32 %v1230, 16
        %v1345 = vor.u32 %v1343, %v1341
        %v1347 = vshll.u32 %v1231, 16
        %v1349 = vrot.slane %v1347, 1
        %v1350 = vsel %vm1234, %v1345, %v1349
        %v1351 = vshrl.u32 %v1231, 16
        %v1353 = vor.u32 %v1351, %v1349
        %v1355 = vshll.u32 %v1232, 16
        %v1357 = vrot.slane %v1355, 1
        %v1358 = vsel %vm1234, %v1353, %v1357
        %v1359 = vshrl.u32 %v1232, 16
        %v1361 = vor.u32 %v1359, %v1357
        %v1363 = vshll.u32 %v1233, 16
        %v1365 = vrot.slane %v1363, 1
        %v1366 = vsel %vm1234, %v1361, %v1365
        %v1368 = vunpack.c.l.b16 %v991
        %v1369 = vpack.c.b16 %v1368, %v1368
        %v1371 = vshrl.u32 %v1369, 16
        %v1373 = vrot.slane %v1371, 1
        %v1374 = vshll.u32 %v1369, 16
        %v1376 = vrot.slane %v1374, 2
        %v1377 = vor.u32 %v1373, %v1376
        %vm1378 = vcmask 23552
        %v1380 = vsel %vm1378, %v1246, 0
        %v1383 = vsel %vm1378, %v1254, 0
        %v1386 = vsel %vm1378, %v1262, 0
        %v1389 = vsel %vm1378, %v1270, 0
        %v1392 = vsel %vm1378, %v1278, 0
        %v1395 = vsel %vm1378, %v1286, 0
        %v1398 = vsel %vm1378, %v1294, 0
        %v1401 = vsel %vm1378, %v1302, 0
        %v1404 = vsel %vm1378, %v1310, 0
        %v1407 = vsel %vm1378, %v1318, 0
        %v1410 = vsel %vm1378, %v1326, 0
        %v1413 = vsel %vm1378, %v1334, 0
        %v1416 = vsel %vm1378, %v1342, 0
        %v1419 = vsel %vm1378, %v1350, 0
        %v1422 = vsel %vm1378, %v1358, 0
        %v1425 = vsel %vm1378, %v1366, 0
        %vm1427 = vcmask 1041408
        %v1428 = vsel %vm651, 4294967295, 65535
        %v1429 = vsel %vm1427, %v1428, 0
        %v1431 = vand.u32 %v1377, %v1429
        %1433 = vmatpush.bf16.msra.mxu0 0
        %1434 = vmatpush.bf16.msra.mxu0 0
        %1435 = vmatpush.bf16.msra.mxu0 0
        %1436 = vmatpush.bf16.msra.mxu0 0
        %1437 = vmatpush.bf16.msra.mxu0 0
        %1438 = vmatpush.bf16.msra.mxu0 0
        %1439 = vmatpush.bf16.msra.mxu0 0
        %1440 = vmatpush.bf16.msra.mxu0 %v1431
        %1441 = vmatmul.bf16.gmra.mxu0 %v1380
        %v1442 = vpop.f32.mrf.mxu0
        %v1443 = vadd.f32 0.0, %v1442
        %v1444 = vpop.f32.mrf.mxu0
        %v1445 = vadd.f32 0.0, %v1444
        %1446 = vmatmul.bf16.gmra.mxu0 %v1383
        %v1447 = vpop.f32.mrf.mxu0
        %v1448 = vadd.f32 0.0, %v1447
        %v1449 = vpop.f32.mrf.mxu0
        %v1450 = vadd.f32 0.0, %v1449
        %1451 = vmatmul.bf16.gmra.mxu0 %v1386
        %v1452 = vpop.f32.mrf.mxu0
        %v1453 = vadd.f32 0.0, %v1452
        %v1454 = vpop.f32.mrf.mxu0
        %v1455 = vadd.f32 0.0, %v1454
        %1456 = vmatmul.bf16.gmra.mxu0 %v1389
        %v1457 = vpop.f32.mrf.mxu0
        %v1458 = vadd.f32 0.0, %v1457
        %v1459 = vpop.f32.mrf.mxu0
        %v1460 = vadd.f32 0.0, %v1459
        %1461 = vmatmul.bf16.gmra.mxu0 %v1392
        %v1462 = vpop.f32.mrf.mxu0
        %v1463 = vadd.f32 0.0, %v1462
        %v1464 = vpop.f32.mrf.mxu0
        %v1465 = vadd.f32 0.0, %v1464
        %1466 = vmatmul.bf16.gmra.mxu0 %v1395
        %v1467 = vpop.f32.mrf.mxu0
        %v1468 = vadd.f32 0.0, %v1467
        %v1469 = vpop.f32.mrf.mxu0
        %v1470 = vadd.f32 0.0, %v1469
        %1471 = vmatmul.bf16.gmra.mxu0 %v1398
        %v1472 = vpop.f32.mrf.mxu0
        %v1473 = vadd.f32 0.0, %v1472
        %v1474 = vpop.f32.mrf.mxu0
        %v1475 = vadd.f32 0.0, %v1474
        %1476 = vmatmul.bf16.gmra.mxu0 %v1401
        %v1477 = vpop.f32.mrf.mxu0
        %v1478 = vadd.f32 0.0, %v1477
        %v1479 = vpop.f32.mrf.mxu0
        %v1480 = vadd.f32 0.0, %v1479
        %1481 = vmatmul.bf16.gmra.mxu0 %v1404
        %v1482 = vpop.f32.mrf.mxu0
        %v1483 = vadd.f32 0.0, %v1482
        %v1484 = vpop.f32.mrf.mxu0
        %v1485 = vadd.f32 0.0, %v1484
        %1486 = vmatmul.bf16.gmra.mxu0 %v1407
        %v1487 = vpop.f32.mrf.mxu0
        %v1488 = vadd.f32 0.0, %v1487
        %v1489 = vpop.f32.mrf.mxu0
        %v1490 = vadd.f32 0.0, %v1489
        %1491 = vmatmul.bf16.gmra.mxu0 %v1410
        %v1492 = vpop.f32.mrf.mxu0
        %v1493 = vadd.f32 0.0, %v1492
        %v1494 = vpop.f32.mrf.mxu0
        %v1495 = vadd.f32 0.0, %v1494
        %1496 = vmatmul.bf16.gmra.mxu0 %v1413
        %v1497 = vpop.f32.mrf.mxu0
        %v1498 = vadd.f32 0.0, %v1497
        %v1499 = vpop.f32.mrf.mxu0
        %v1500 = vadd.f32 0.0, %v1499
        %1501 = vmatmul.bf16.gmra.mxu0 %v1416
        %v1502 = vpop.f32.mrf.mxu0
        %v1503 = vadd.f32 0.0, %v1502
        %v1504 = vpop.f32.mrf.mxu0
        %v1505 = vadd.f32 0.0, %v1504
        %1506 = vmatmul.bf16.gmra.mxu0 %v1419
        %v1507 = vpop.f32.mrf.mxu0
        %v1508 = vadd.f32 0.0, %v1507
        %v1509 = vpop.f32.mrf.mxu0
        %v1510 = vadd.f32 0.0, %v1509
        %1511 = vmatmul.bf16.gmra.mxu0 %v1422
        %v1512 = vpop.f32.mrf.mxu0
        %v1513 = vadd.f32 0.0, %v1512
        %v1514 = vpop.f32.mrf.mxu0
        %v1515 = vadd.f32 0.0, %v1514
        %1516 = vmatmul.bf16.gmra.mxu0 %v1425
        %v1517 = vpop.f32.mrf.mxu0
        %v1518 = vadd.f32 0.0, %v1517
        %v1519 = vpop.f32.mrf.mxu0
        %v1520 = vadd.f32 0.0, %v1519
        %1521 = vdwg.mxu0
        %v1523 = vsel %vm1378, %v975, 0
        %v1526 = vsel %vm1378, %v976, 0
        %v1529 = vsel %vm1378, %v977, 0
        %v1532 = vsel %vm1378, %v978, 0
        %v1535 = vsel %vm1378, %v979, 0
        %v1538 = vsel %vm1378, %v980, 0
        %v1541 = vsel %vm1378, %v981, 0
        %v1544 = vsel %vm1378, %v982, 0
        %v1547 = vsel %vm1378, %v983, 0
        %v1550 = vsel %vm1378, %v984, 0
        %v1553 = vsel %vm1378, %v985, 0
        %v1556 = vsel %vm1378, %v986, 0
        %v1559 = vsel %vm1378, %v987, 0
        %v1562 = vsel %vm1378, %v988, 0
        %v1565 = vsel %vm1378, %v989, 0
        %v1568 = vsel %vm1378, %v990, 0
        %v1571 = vand.u32 %v782, %v1429
        %1573 = vmatpush.bf16.msra.mxu0 0
        %1574 = vmatpush.bf16.msra.mxu0 0
        %1575 = vmatpush.bf16.msra.mxu0 0
        %1576 = vmatpush.bf16.msra.mxu0 0
        %1577 = vmatpush.bf16.msra.mxu0 0
        %1578 = vmatpush.bf16.msra.mxu0 0
        %1579 = vmatpush.bf16.msra.mxu0 0
        %1580 = vmatpush.bf16.msra.mxu0 %v1571
        %1581 = vmatmul.bf16.gmra.mxu0 %v1523
        %v1582 = vpop.f32.mrf.mxu0
        %v1583 = vadd.f32 %v1443, %v1582
        %v1584 = vpop.f32.mrf.mxu0
        %v1585 = vadd.f32 %v1445, %v1584
        %1586 = vmatmul.bf16.gmra.mxu0 %v1526
        %v1587 = vpop.f32.mrf.mxu0
        %v1588 = vadd.f32 %v1448, %v1587
        %v1589 = vpop.f32.mrf.mxu0
        %v1590 = vadd.f32 %v1450, %v1589
        %1591 = vmatmul.bf16.gmra.mxu0 %v1529
        %v1592 = vpop.f32.mrf.mxu0
        %v1593 = vadd.f32 %v1453, %v1592
        %v1594 = vpop.f32.mrf.mxu0
        %v1595 = vadd.f32 %v1455, %v1594
        %1596 = vmatmul.bf16.gmra.mxu0 %v1532
        %v1597 = vpop.f32.mrf.mxu0
        %v1598 = vadd.f32 %v1458, %v1597
        %v1599 = vpop.f32.mrf.mxu0
        %v1600 = vadd.f32 %v1460, %v1599
        %1601 = vmatmul.bf16.gmra.mxu0 %v1535
        %v1602 = vpop.f32.mrf.mxu0
        %v1603 = vadd.f32 %v1463, %v1602
        %v1604 = vpop.f32.mrf.mxu0
        %v1605 = vadd.f32 %v1465, %v1604
        %1606 = vmatmul.bf16.gmra.mxu0 %v1538
        %v1607 = vpop.f32.mrf.mxu0
        %v1608 = vadd.f32 %v1468, %v1607
        %v1609 = vpop.f32.mrf.mxu0
        %v1610 = vadd.f32 %v1470, %v1609
        %1611 = vmatmul.bf16.gmra.mxu0 %v1541
        %v1612 = vpop.f32.mrf.mxu0
        %v1613 = vadd.f32 %v1473, %v1612
        %v1614 = vpop.f32.mrf.mxu0
        %v1615 = vadd.f32 %v1475, %v1614
        %1616 = vmatmul.bf16.gmra.mxu0 %v1544
        %v1617 = vpop.f32.mrf.mxu0
        %v1618 = vadd.f32 %v1478, %v1617
        %v1619 = vpop.f32.mrf.mxu0
        %v1620 = vadd.f32 %v1480, %v1619
        %1621 = vmatmul.bf16.gmra.mxu0 %v1547
        %v1622 = vpop.f32.mrf.mxu0
        %v1623 = vadd.f32 %v1483, %v1622
        %v1624 = vpop.f32.mrf.mxu0
        %v1625 = vadd.f32 %v1485, %v1624
        %1626 = vmatmul.bf16.gmra.mxu0 %v1550
        %v1627 = vpop.f32.mrf.mxu0
        %v1628 = vadd.f32 %v1488, %v1627
        %v1629 = vpop.f32.mrf.mxu0
        %v1630 = vadd.f32 %v1490, %v1629
        %1631 = vmatmul.bf16.gmra.mxu0 %v1553
        %v1632 = vpop.f32.mrf.mxu0
        %v1633 = vadd.f32 %v1493, %v1632
        %v1634 = vpop.f32.mrf.mxu0
        %v1635 = vadd.f32 %v1495, %v1634
        %1636 = vmatmul.bf16.gmra.mxu0 %v1556
        %v1637 = vpop.f32.mrf.mxu0
        %v1638 = vadd.f32 %v1498, %v1637
        %v1639 = vpop.f32.mrf.mxu0
        %v1640 = vadd.f32 %v1500, %v1639
        %1641 = vmatmul.bf16.gmra.mxu0 %v1559
        %v1642 = vpop.f32.mrf.mxu0
        %v1643 = vadd.f32 %v1503, %v1642
        %v1644 = vpop.f32.mrf.mxu0
        %v1645 = vadd.f32 %v1505, %v1644
        %1646 = vmatmul.bf16.gmra.mxu0 %v1562
        %v1647 = vpop.f32.mrf.mxu0
        %v1648 = vadd.f32 %v1508, %v1647
        %v1649 = vpop.f32.mrf.mxu0
        %v1650 = vadd.f32 %v1510, %v1649
        %1651 = vmatmul.bf16.gmra.mxu0 %v1565
        %v1652 = vpop.f32.mrf.mxu0
        %v1653 = vadd.f32 %v1513, %v1652
        %v1654 = vpop.f32.mrf.mxu0
        %v1655 = vadd.f32 %v1515, %v1654
        %1656 = vmatmul.bf16.gmra.mxu0 %v1568
        %v1657 = vpop.f32.mrf.mxu0
        %v1658 = vadd.f32 %v1518, %v1657
        %v1659 = vpop.f32.mrf.mxu0
        %v1660 = vadd.f32 %v1520, %v1659
        %1661 = vdwg.mxu0
        %v1662 = vld [vmem:[%s1] sm:$0x8]
        %v1663 = vld [vmem:[%s1 + $0x4] sm:$0x1]
        %1664 = vset.pattern.permute.xlu0 2
        %1665 = vperm.xlu0 %1664, %v750
        %v1666 = vpop.permute.xlu0 %1665
        %1667 = vset.pattern.permute.xlu0 2
        %1668 = vperm.xlu0 %1667, %v751
        %v1669 = vpop.permute.xlu0 %1668
        %1670 = vset.pattern.permute.xlu0 2
        %1671 = vperm.xlu0 %1670, %v752
        %v1672 = vpop.permute.xlu0 %1671
        %1673 = vset.pattern.permute.xlu0 2
        %1674 = vperm.xlu0 %1673, %v753
        %v1675 = vpop.permute.xlu0 %1674
        %1676 = vset.pattern.permute.xlu0 2
        %1677 = vperm.xlu0 %1676, %v754
        %v1678 = vpop.permute.xlu0 %1677
        %1679 = vset.pattern.permute.xlu0 2
        %1680 = vperm.xlu0 %1679, %v755
        %v1681 = vpop.permute.xlu0 %1680
        %1682 = vset.pattern.permute.xlu0 2
        %1683 = vperm.xlu0 %1682, %v756
        %v1684 = vpop.permute.xlu0 %1683
        %1685 = vset.pattern.permute.xlu0 2
        %1686 = vperm.xlu0 %1685, %v757
        %v1687 = vpop.permute.xlu0 %1686
        %1688 = vset.pattern.permute.xlu0 2
        %1689 = vperm.xlu0 %1688, %v758
        %v1690 = vpop.permute.xlu0 %1689
        %1691 = vset.pattern.permute.xlu0 2
        %1692 = vperm.xlu0 %1691, %v759
        %v1693 = vpop.permute.xlu0 %1692
        %1694 = vset.pattern.permute.xlu0 2
        %1695 = vperm.xlu0 %1694, %v760
        %v1696 = vpop.permute.xlu0 %1695
        %1697 = vset.pattern.permute.xlu0 2
        %1698 = vperm.xlu0 %1697, %v761
        %v1699 = vpop.permute.xlu0 %1698
        %1700 = vset.pattern.permute.xlu0 2
        %1701 = vperm.xlu0 %1700, %v762
        %v1702 = vpop.permute.xlu0 %1701
        %1703 = vset.pattern.permute.xlu0 2
        %1704 = vperm.xlu0 %1703, %v763
        %v1705 = vpop.permute.xlu0 %1704
        %1706 = vset.pattern.permute.xlu0 2
        %1707 = vperm.xlu0 %1706, %v764
        %v1708 = vpop.permute.xlu0 %1707
        %1709 = vset.pattern.permute.xlu0 2
        %1710 = vperm.xlu0 %1709, %v765
        %v1711 = vpop.permute.xlu0 %1710
        %1712 = vset.pattern.permute.xlu0 2
        %1713 = vperm.xlu0 %1712, %v766
        %v1714 = vpop.permute.xlu0 %1713
        %1715 = vset.pattern.permute.xlu0 2
        %1716 = vperm.xlu0 %1715, %v767
        %v1717 = vpop.permute.xlu0 %1716
        %1718 = vset.pattern.permute.xlu0 2
        %1719 = vperm.xlu0 %1718, %v768
        %v1720 = vpop.permute.xlu0 %1719
        %1721 = vset.pattern.permute.xlu0 2
        %1722 = vperm.xlu0 %1721, %v769
        %v1723 = vpop.permute.xlu0 %1722
        %1724 = vset.pattern.permute.xlu0 2
        %1725 = vperm.xlu0 %1724, %v770
        %v1726 = vpop.permute.xlu0 %1725
        %1727 = vset.pattern.permute.xlu0 2
        %1728 = vperm.xlu0 %1727, %v771
        %v1729 = vpop.permute.xlu0 %1728
        %1730 = vset.pattern.permute.xlu0 2
        %1731 = vperm.xlu0 %1730, %v772
        %v1732 = vpop.permute.xlu0 %1731
        %1733 = vset.pattern.permute.xlu0 2
        %1734 = vperm.xlu0 %1733, %v773
        %v1735 = vpop.permute.xlu0 %1734
        %1736 = vset.pattern.permute.xlu0 2
        %1737 = vperm.xlu0 %1736, %v774
        %v1738 = vpop.permute.xlu0 %1737
        %1739 = vset.pattern.permute.xlu0 2
        %1740 = vperm.xlu0 %1739, %v775
        %v1741 = vpop.permute.xlu0 %1740
        %1742 = vset.pattern.permute.xlu0 2
        %1743 = vperm.xlu0 %1742, %v776
        %v1744 = vpop.permute.xlu0 %1743
        %1745 = vset.pattern.permute.xlu0 2
        %1746 = vperm.xlu0 %1745, %v777
        %v1747 = vpop.permute.xlu0 %1746
        %1748 = vset.pattern.permute.xlu0 2
        %1749 = vperm.xlu0 %1748, %v778
        %v1750 = vpop.permute.xlu0 %1749
        %1751 = vset.pattern.permute.xlu0 2
        %1752 = vperm.xlu0 %1751, %v779
        %v1753 = vpop.permute.xlu0 %1752
        %1754 = vset.pattern.permute.xlu0 2
        %1755 = vperm.xlu0 %1754, %v780
        %v1756 = vpop.permute.xlu0 %1755
        %1757 = vset.pattern.permute.xlu0 2
        %1758 = vperm.xlu0 %1757, %v781
        %v1759 = vpop.permute.xlu0 %1758
        %v1760 = vrot.slane %v1666, 6
        %v1761 = vrot.slane %v1669, 6
        %v1762 = vsel %vm1427, %v1760, %v1761
        %v1763 = vrot.slane %v1672, 6
        %v1764 = vsel %vm1427, %v1761, %v1763
        %v1765 = vrot.slane %v1675, 6
        %v1766 = vsel %vm1427, %v1763, %v1765
        %v1767 = vrot.slane %v1678, 6
        %v1768 = vsel %vm1427, %v1765, %v1767
        %v1769 = vrot.slane %v1681, 6
        %v1770 = vsel %vm1427, %v1767, %v1769
        %v1771 = vrot.slane %v1684, 6
        %v1772 = vsel %vm1427, %v1769, %v1771
        %v1773 = vrot.slane %v1687, 6
        %v1774 = vsel %vm1427, %v1771, %v1773
        %v1775 = vrot.slane %v1690, 6
        %v1776 = vsel %vm1427, %v1773, %v1775
        %v1777 = vrot.slane %v1693, 6
        %v1778 = vsel %vm1427, %v1775, %v1777
        %v1779 = vrot.slane %v1696, 6
        %v1780 = vsel %vm1427, %v1777, %v1779
        %v1781 = vrot.slane %v1699, 6
        %v1782 = vsel %vm1427, %v1779, %v1781
        %v1783 = vrot.slane %v1702, 6
        %v1784 = vsel %vm1427, %v1781, %v1783
        %v1785 = vrot.slane %v1705, 6
        %v1786 = vsel %vm1427, %v1783, %v1785
        %v1787 = vrot.slane %v1708, 6
        %v1788 = vsel %vm1427, %v1785, %v1787
        %v1789 = vrot.slane %v1711, 6
        %v1790 = vsel %vm1427, %v1787, %v1789
        %v1791 = vrot.slane %v1714, 6
        %v1792 = vsel %vm1427, %v1789, %v1791
        %v1793 = vrot.slane %v1717, 6
        %v1794 = vsel %vm1427, %v1791, %v1793
        %v1795 = vrot.slane %v1720, 6
        %v1796 = vsel %vm1427, %v1793, %v1795
        %v1797 = vrot.slane %v1723, 6
        %v1798 = vsel %vm1427, %v1795, %v1797
        %v1799 = vrot.slane %v1726, 6
        %v1800 = vsel %vm1427, %v1797, %v1799
        %v1801 = vrot.slane %v1729, 6
        %v1802 = vsel %vm1427, %v1799, %v1801
        %v1803 = vrot.slane %v1732, 6
        %v1804 = vsel %vm1427, %v1801, %v1803
        %v1805 = vrot.slane %v1735, 6
        %v1806 = vsel %vm1427, %v1803, %v1805
        %v1807 = vrot.slane %v1738, 6
        %v1808 = vsel %vm1427, %v1805, %v1807
        %v1809 = vrot.slane %v1741, 6
        %v1810 = vsel %vm1427, %v1807, %v1809
        %v1811 = vrot.slane %v1744, 6
        %v1812 = vsel %vm1427, %v1809, %v1811
        %v1813 = vrot.slane %v1747, 6
        %v1814 = vsel %vm1427, %v1811, %v1813
        %v1815 = vrot.slane %v1750, 6
        %v1816 = vsel %vm1427, %v1813, %v1815
        %v1817 = vrot.slane %v1753, 6
        %v1818 = vsel %vm1427, %v1815, %v1817
        %v1819 = vrot.slane %v1756, 6
        %v1820 = vsel %vm1427, %v1817, %v1819
        %v1821 = vrot.slane %v1759, 6
        %v1822 = vsel %vm1427, %v1819, %v1821
        %v1856 = vmul.f32 %v1760, 0.0
        %v1857 = vmul.f32 %v1762, 0.0
        %v1858 = vmul.f32 %v748, %v1764
        %v1859 = vmul.f32 %v654, %v1766
        %v1860 = vmul.f32 %v656, %v1768
        %v1861 = vmul.f32 %v658, %v1770
        %v1862 = vmul.f32 %v660, %v1772
        %v1863 = vmul.f32 %v662, %v1774
        %v1864 = vmul.f32 %v664, %v1776
        %v1865 = vmul.f32 %v666, %v1778
        %v1866 = vmul.f32 %v668, %v1780
        %v1867 = vmul.f32 %v670, %v1782
        %v1868 = vmul.f32 %v672, %v1784
        %v1869 = vmul.f32 %v674, %v1786
        %v1870 = vmul.f32 %v676, %v1788
        %v1871 = vmul.f32 %v678, %v1790
        %v1872 = vmul.f32 %v680, %v1792
        %v1873 = vmul.f32 %v682, %v1794
        %v1874 = vmul.f32 %v684, %v1796
        %v1875 = vmul.f32 %v686, %v1798
        %v1876 = vmul.f32 %v688, %v1800
        %v1877 = vmul.f32 %v690, %v1802
        %v1878 = vmul.f32 %v692, %v1804
        %v1879 = vmul.f32 %v694, %v1806
        %v1880 = vmul.f32 %v696, %v1808
        %v1881 = vmul.f32 %v698, %v1810
        %v1882 = vmul.f32 %v700, %v1812
        %v1883 = vmul.f32 %v702, %v1814
        %v1884 = vmul.f32 %v704, %v1816
        %v1885 = vmul.f32 %v706, %v1818
        %v1886 = vmul.f32 %v708, %v1820
        %v1887 = vmul.f32 %v710, %v1822
        %v1888 = vmul.f32 %v712, %v1821
        %v1889 = vpack.c.bf16 %v1857, %v1856
        %v1890 = vpack.c.bf16 %v1859, %v1858
        %v1891 = vpack.c.bf16 %v1861, %v1860
        %v1892 = vpack.c.bf16 %v1863, %v1862
        %v1893 = vpack.c.bf16 %v1865, %v1864
        %v1894 = vpack.c.bf16 %v1867, %v1866
        %v1895 = vpack.c.bf16 %v1869, %v1868
        %v1896 = vpack.c.bf16 %v1871, %v1870
        %v1897 = vpack.c.bf16 %v1873, %v1872
        %v1898 = vpack.c.bf16 %v1875, %v1874
        %v1899 = vpack.c.bf16 %v1877, %v1876
        %v1900 = vpack.c.bf16 %v1879, %v1878
        %v1901 = vpack.c.bf16 %v1881, %v1880
        %v1902 = vpack.c.bf16 %v1883, %v1882
        %v1903 = vpack.c.bf16 %v1885, %v1884
        %v1904 = vpack.c.bf16 %v1887, %v1886
        %v1905 = vpack.c.bf16 %v1888, %v1888
        %vm1923 = vcmask 1046528
        %v1924 = vrot.slane %v1889, 1
        %v1925 = vrot.slane %v1890, 1
        %v1926 = vsel %vm1923, %v1924, %v1925
        %v1927 = vrot.slane %v1891, 1
        %v1928 = vsel %vm1923, %v1925, %v1927
        %v1929 = vrot.slane %v1892, 1
        %v1930 = vsel %vm1923, %v1927, %v1929
        %v1931 = vrot.slane %v1893, 1
        %v1932 = vsel %vm1923, %v1929, %v1931
        %v1933 = vrot.slane %v1894, 1
        %v1934 = vsel %vm1923, %v1931, %v1933
        %v1935 = vrot.slane %v1895, 1
        %v1936 = vsel %vm1923, %v1933, %v1935
        %v1937 = vrot.slane %v1896, 1
        %v1938 = vsel %vm1923, %v1935, %v1937
        %v1939 = vrot.slane %v1897, 1
        %v1940 = vsel %vm1923, %v1937, %v1939
        %v1941 = vrot.slane %v1898, 1
        %v1942 = vsel %vm1923, %v1939, %v1941
        %v1943 = vrot.slane %v1899, 1
        %v1944 = vsel %vm1923, %v1941, %v1943
        %v1945 = vrot.slane %v1900, 1
        %v1946 = vsel %vm1923, %v1943, %v1945
        %v1947 = vrot.slane %v1901, 1
        %v1948 = vsel %vm1923, %v1945, %v1947
        %v1949 = vrot.slane %v1902, 1
        %v1950 = vsel %vm1923, %v1947, %v1949
        %v1951 = vrot.slane %v1903, 1
        %v1952 = vsel %vm1923, %v1949, %v1951
        %v1953 = vrot.slane %v1904, 1
        %v1954 = vsel %vm1923, %v1951, %v1953
        %v1955 = vrot.slane %v1905, 1
        %v1956 = vsel %vm1923, %v1953, %v1955
        %v1959 = vunpack.c.l.b16 %v1662
        %v1960 = vunpack.c.l.b16 %v1663
        %v1961 = vpack.c.b16 %v1960, %v1959
        %v1962 = vrot.slane %v1961, 3
        %v1964 = vsel %vm1378, %v1926, 0
        %v1967 = vsel %vm1378, %v1928, 0
        %v1970 = vsel %vm1378, %v1930, 0
        %v1973 = vsel %vm1378, %v1932, 0
        %v1976 = vsel %vm1378, %v1934, 0
        %v1979 = vsel %vm1378, %v1936, 0
        %v1982 = vsel %vm1378, %v1938, 0
        %v1985 = vsel %vm1378, %v1940, 0
        %v1988 = vsel %vm1378, %v1942, 0
        %v1991 = vsel %vm1378, %v1944, 0
        %v1994 = vsel %vm1378, %v1946, 0
        %v1997 = vsel %vm1378, %v1948, 0
        %v2000 = vsel %vm1378, %v1950, 0
        %v2003 = vsel %vm1378, %v1952, 0
        %v2006 = vsel %vm1378, %v1954, 0
        %v2009 = vsel %vm1378, %v1956, 0
        %v2012 = vand.u32 %v1962, %v1429
        %2014 = vmatpush.bf16.msra.mxu0 0
        %2015 = vmatpush.bf16.msra.mxu0 0
        %2016 = vmatpush.bf16.msra.mxu0 0
        %2017 = vmatpush.bf16.msra.mxu0 0
        %2018 = vmatpush.bf16.msra.mxu0 0
        %2019 = vmatpush.bf16.msra.mxu0 0
        %2020 = vmatpush.bf16.msra.mxu0 0
        %2021 = vmatpush.bf16.msra.mxu0 %v2012
        %2022 = vmatmul.bf16.gmra.mxu0 %v1964
        %v2023 = vpop.f32.mrf.mxu0
        %v2024 = vadd.f32 0.0, %v2023
        %v2025 = vpop.f32.mrf.mxu0
        %v2026 = vadd.f32 0.0, %v2025
        %2027 = vmatmul.bf16.gmra.mxu0 %v1967
        %v2028 = vpop.f32.mrf.mxu0
        %v2029 = vadd.f32 0.0, %v2028
        %v2030 = vpop.f32.mrf.mxu0
        %v2031 = vadd.f32 0.0, %v2030
        %2032 = vmatmul.bf16.gmra.mxu0 %v1970
        %v2033 = vpop.f32.mrf.mxu0
        %v2034 = vadd.f32 0.0, %v2033
        %v2035 = vpop.f32.mrf.mxu0
        %v2036 = vadd.f32 0.0, %v2035
        %2037 = vmatmul.bf16.gmra.mxu0 %v1973
        %v2038 = vpop.f32.mrf.mxu0
        %v2039 = vadd.f32 0.0, %v2038
        %v2040 = vpop.f32.mrf.mxu0
        %v2041 = vadd.f32 0.0, %v2040
        %2042 = vmatmul.bf16.gmra.mxu0 %v1976
        %v2043 = vpop.f32.mrf.mxu0
        %v2044 = vadd.f32 0.0, %v2043
        %v2045 = vpop.f32.mrf.mxu0
        %v2046 = vadd.f32 0.0, %v2045
        %2047 = vmatmul.bf16.gmra.mxu0 %v1979
        %v2048 = vpop.f32.mrf.mxu0
        %v2049 = vadd.f32 0.0, %v2048
        %v2050 = vpop.f32.mrf.mxu0
        %v2051 = vadd.f32 0.0, %v2050
        %2052 = vmatmul.bf16.gmra.mxu0 %v1982
        %v2053 = vpop.f32.mrf.mxu0
        %v2054 = vadd.f32 0.0, %v2053
        %v2055 = vpop.f32.mrf.mxu0
        %v2056 = vadd.f32 0.0, %v2055
        %2057 = vmatmul.bf16.gmra.mxu0 %v1985
        %v2058 = vpop.f32.mrf.mxu0
        %v2059 = vadd.f32 0.0, %v2058
        %v2060 = vpop.f32.mrf.mxu0
        %v2061 = vadd.f32 0.0, %v2060
        %2062 = vmatmul.bf16.gmra.mxu0 %v1988
        %v2063 = vpop.f32.mrf.mxu0
        %v2064 = vadd.f32 0.0, %v2063
        %v2065 = vpop.f32.mrf.mxu0
        %v2066 = vadd.f32 0.0, %v2065
        %2067 = vmatmul.bf16.gmra.mxu0 %v1991
        %v2068 = vpop.f32.mrf.mxu0
        %v2069 = vadd.f32 0.0, %v2068
        %v2070 = vpop.f32.mrf.mxu0
        %v2071 = vadd.f32 0.0, %v2070
        %2072 = vmatmul.bf16.gmra.mxu0 %v1994
        %v2073 = vpop.f32.mrf.mxu0
        %v2074 = vadd.f32 0.0, %v2073
        %v2075 = vpop.f32.mrf.mxu0
        %v2076 = vadd.f32 0.0, %v2075
        %2077 = vmatmul.bf16.gmra.mxu0 %v1997
        %v2078 = vpop.f32.mrf.mxu0
        %v2079 = vadd.f32 0.0, %v2078
        %v2080 = vpop.f32.mrf.mxu0
        %v2081 = vadd.f32 0.0, %v2080
        %2082 = vmatmul.bf16.gmra.mxu0 %v2000
        %v2083 = vpop.f32.mrf.mxu0
        %v2084 = vadd.f32 0.0, %v2083
        %v2085 = vpop.f32.mrf.mxu0
        %v2086 = vadd.f32 0.0, %v2085
        %2087 = vmatmul.bf16.gmra.mxu0 %v2003
        %v2088 = vpop.f32.mrf.mxu0
        %v2089 = vadd.f32 0.0, %v2088
        %v2090 = vpop.f32.mrf.mxu0
        %v2091 = vadd.f32 0.0, %v2090
        %2092 = vmatmul.bf16.gmra.mxu0 %v2006
        %v2093 = vpop.f32.mrf.mxu0
        %v2094 = vadd.f32 0.0, %v2093
        %v2095 = vpop.f32.mrf.mxu0
        %v2096 = vadd.f32 0.0, %v2095
        %2097 = vmatmul.bf16.gmra.mxu0 %v2009
        %v2098 = vpop.f32.mrf.mxu0
        %v2099 = vadd.f32 0.0, %v2098
        %v2100 = vpop.f32.mrf.mxu0
        %v2101 = vadd.f32 0.0, %v2100
        %2102 = vdwg.mxu0
        %v2103 = vadd.f32 %v1583, %v2024
        %v2104 = vadd.f32 %v1585, %v2026
        %v2105 = vadd.f32 %v1588, %v2029
        %v2106 = vadd.f32 %v1590, %v2031
        %v2107 = vadd.f32 %v1593, %v2034
        %v2108 = vadd.f32 %v1595, %v2036
        %v2109 = vadd.f32 %v1598, %v2039
        %v2110 = vadd.f32 %v1600, %v2041
        %v2111 = vadd.f32 %v1603, %v2044
        %v2112 = vadd.f32 %v1605, %v2046
        %v2113 = vadd.f32 %v1608, %v2049
        %v2114 = vadd.f32 %v1610, %v2051
        %v2115 = vadd.f32 %v1613, %v2054
        %v2116 = vadd.f32 %v1615, %v2056
        %v2117 = vadd.f32 %v1618, %v2059
        %v2118 = vadd.f32 %v1620, %v2061
        %v2119 = vadd.f32 %v1623, %v2064
        %v2120 = vadd.f32 %v1625, %v2066
        %v2121 = vadd.f32 %v1628, %v2069
        %v2122 = vadd.f32 %v1630, %v2071
        %v2123 = vadd.f32 %v1633, %v2074
        %v2124 = vadd.f32 %v1635, %v2076
        %v2125 = vadd.f32 %v1638, %v2079
        %v2126 = vadd.f32 %v1640, %v2081
        %v2127 = vadd.f32 %v1643, %v2084
        %v2128 = vadd.f32 %v1645, %v2086
        %v2129 = vadd.f32 %v1648, %v2089
        %v2130 = vadd.f32 %v1650, %v2091
        %v2131 = vadd.f32 %v1653, %v2094
        %v2132 = vadd.f32 %v1655, %v2096
        %v2133 = vadd.f32 %v1658, %v2099
        %v2134 = vadd.f32 %v1660, %v2101
        %v2135 = vld [vmem:[%s1 + $0x4] sm:$0x3]
        %2136 = vset.pattern.permute.xlu0 3
        %2137 = vperm.xlu0 %2136, %v750
        %v2138 = vpop.permute.xlu0 %2137
        %2140 = vset.pattern.permute.xlu0 3
        %2141 = vperm.xlu0 %2140, %v751
        %v2142 = vpop.permute.xlu0 %2141
        %2144 = vset.pattern.permute.xlu0 3
        %2145 = vperm.xlu0 %2144, %v752
        %v2146 = vpop.permute.xlu0 %2145
        %2148 = vset.pattern.permute.xlu0 3
        %2149 = vperm.xlu0 %2148, %v753
        %v2150 = vpop.permute.xlu0 %2149
        %2152 = vset.pattern.permute.xlu0 3
        %2153 = vperm.xlu0 %2152, %v754
        %v2154 = vpop.permute.xlu0 %2153
        %2156 = vset.pattern.permute.xlu0 3
        %2157 = vperm.xlu0 %2156, %v755
        %v2158 = vpop.permute.xlu0 %2157
        %2160 = vset.pattern.permute.xlu0 3
        %2161 = vperm.xlu0 %2160, %v756
        %v2162 = vpop.permute.xlu0 %2161
        %2164 = vset.pattern.permute.xlu0 3
        %2165 = vperm.xlu0 %2164, %v757
        %v2166 = vpop.permute.xlu0 %2165
        %2168 = vset.pattern.permute.xlu0 3
        %2169 = vperm.xlu0 %2168, %v758
        %v2170 = vpop.permute.xlu0 %2169
        %2172 = vset.pattern.permute.xlu0 3
        %2173 = vperm.xlu0 %2172, %v759
        %v2174 = vpop.permute.xlu0 %2173
        %2176 = vset.pattern.permute.xlu0 3
        %2177 = vperm.xlu0 %2176, %v760
        %v2178 = vpop.permute.xlu0 %2177
        %2180 = vset.pattern.permute.xlu0 3
        %2181 = vperm.xlu0 %2180, %v761
        %v2182 = vpop.permute.xlu0 %2181
        %2184 = vset.pattern.permute.xlu0 3
        %2185 = vperm.xlu0 %2184, %v762
        %v2186 = vpop.permute.xlu0 %2185
        %2188 = vset.pattern.permute.xlu0 3
        %2189 = vperm.xlu0 %2188, %v763
        %v2190 = vpop.permute.xlu0 %2189
        %2192 = vset.pattern.permute.xlu0 3
        %2193 = vperm.xlu0 %2192, %v764
        %v2194 = vpop.permute.xlu0 %2193
        %2196 = vset.pattern.permute.xlu0 3
        %2197 = vperm.xlu0 %2196, %v765
        %v2198 = vpop.permute.xlu0 %2197
        %2200 = vset.pattern.permute.xlu0 3
        %2201 = vperm.xlu0 %2200, %v766
        %v2202 = vpop.permute.xlu0 %2201
        %2204 = vset.pattern.permute.xlu0 3
        %2205 = vperm.xlu0 %2204, %v767
        %v2206 = vpop.permute.xlu0 %2205
        %2208 = vset.pattern.permute.xlu0 3
        %2209 = vperm.xlu0 %2208, %v768
        %v2210 = vpop.permute.xlu0 %2209
        %2212 = vset.pattern.permute.xlu0 3
        %2213 = vperm.xlu0 %2212, %v769
        %v2214 = vpop.permute.xlu0 %2213
        %2216 = vset.pattern.permute.xlu0 3
        %2217 = vperm.xlu0 %2216, %v770
        %v2218 = vpop.permute.xlu0 %2217
        %2220 = vset.pattern.permute.xlu0 3
        %2221 = vperm.xlu0 %2220, %v771
        %v2222 = vpop.permute.xlu0 %2221
        %2224 = vset.pattern.permute.xlu0 3
        %2225 = vperm.xlu0 %2224, %v772
        %v2226 = vpop.permute.xlu0 %2225
        %2228 = vset.pattern.permute.xlu0 3
        %2229 = vperm.xlu0 %2228, %v773
        %v2230 = vpop.permute.xlu0 %2229
        %2232 = vset.pattern.permute.xlu0 3
        %2233 = vperm.xlu0 %2232, %v774
        %v2234 = vpop.permute.xlu0 %2233
        %2236 = vset.pattern.permute.xlu0 3
        %2237 = vperm.xlu0 %2236, %v775
        %v2238 = vpop.permute.xlu0 %2237
        %2240 = vset.pattern.permute.xlu0 3
        %2241 = vperm.xlu0 %2240, %v776
        %v2242 = vpop.permute.xlu0 %2241
        %2244 = vset.pattern.permute.xlu0 3
        %2245 = vperm.xlu0 %2244, %v777
        %v2246 = vpop.permute.xlu0 %2245
        %2248 = vset.pattern.permute.xlu0 3
        %2249 = vperm.xlu0 %2248, %v778
        %v2250 = vpop.permute.xlu0 %2249
        %2252 = vset.pattern.permute.xlu0 3
        %2253 = vperm.xlu0 %2252, %v779
        %v2254 = vpop.permute.xlu0 %2253
        %2256 = vset.pattern.permute.xlu0 3
        %2257 = vperm.xlu0 %2256, %v780
        %v2258 = vpop.permute.xlu0 %2257
        %2260 = vset.pattern.permute.xlu0 3
        %2261 = vperm.xlu0 %2260, %v781
        %v2262 = vpop.permute.xlu0 %2261
        %v2264 = vmul.f32 %v748, %v2138
        %v2265 = vmul.f32 %v654, %v2142
        %v2266 = vmul.f32 %v656, %v2146
        %v2267 = vmul.f32 %v658, %v2150
        %v2268 = vmul.f32 %v660, %v2154
        %v2269 = vmul.f32 %v662, %v2158
        %v2270 = vmul.f32 %v664, %v2162
        %v2271 = vmul.f32 %v666, %v2166
        %v2272 = vmul.f32 %v668, %v2170
        %v2273 = vmul.f32 %v670, %v2174
        %v2274 = vmul.f32 %v672, %v2178
        %v2275 = vmul.f32 %v674, %v2182
        %v2276 = vmul.f32 %v676, %v2186
        %v2277 = vmul.f32 %v678, %v2190
        %v2278 = vmul.f32 %v680, %v2194
        %v2279 = vmul.f32 %v682, %v2198
        %v2280 = vmul.f32 %v684, %v2202
        %v2281 = vmul.f32 %v686, %v2206
        %v2282 = vmul.f32 %v688, %v2210
        %v2283 = vmul.f32 %v690, %v2214
        %v2284 = vmul.f32 %v692, %v2218
        %v2285 = vmul.f32 %v694, %v2222
        %v2286 = vmul.f32 %v696, %v2226
        %v2287 = vmul.f32 %v698, %v2230
        %v2288 = vmul.f32 %v700, %v2234
        %v2289 = vmul.f32 %v702, %v2238
        %v2290 = vmul.f32 %v704, %v2242
        %v2291 = vmul.f32 %v706, %v2246
        %v2292 = vmul.f32 %v708, %v2250
        %v2293 = vmul.f32 %v710, %v2254
        %v2294 = vmul.f32 %v712, %v2258
        %v2295 = vmul.f32 %v714, %v2262
        %v2296 = vpack.c.bf16 %v2265, %v2264
        %v2297 = vpack.c.bf16 %v2267, %v2266
        %v2298 = vpack.c.bf16 %v2269, %v2268
        %v2299 = vpack.c.bf16 %v2271, %v2270
        %v2300 = vpack.c.bf16 %v2273, %v2272
        %v2301 = vpack.c.bf16 %v2275, %v2274
        %v2302 = vpack.c.bf16 %v2277, %v2276
        %v2303 = vpack.c.bf16 %v2279, %v2278
        %v2304 = vpack.c.bf16 %v2281, %v2280
        %v2305 = vpack.c.bf16 %v2283, %v2282
        %v2306 = vpack.c.bf16 %v2285, %v2284
        %v2307 = vpack.c.bf16 %v2287, %v2286
        %v2308 = vpack.c.bf16 %v2289, %v2288
        %v2309 = vpack.c.bf16 %v2291, %v2290
        %v2310 = vpack.c.bf16 %v2293, %v2292
        %v2311 = vpack.c.bf16 %v2295, %v2294
        %v2313 = vunpack.c.l.b16 %v2135
        %v2314 = vpack.c.b16 %v2313, %v2313
        %v2316 = vshrl.u32 %v2314, 16
        %v2318 = vshll.u32 %v2314, 16
        %v2320 = vrot.slane %v2318, 1
        %v2321 = vor.u32 %v2316, %v2320
        %v2323 = vsel %vm1378, %v2296, 0
        %v2326 = vsel %vm1378, %v2297, 0
        %v2329 = vsel %vm1378, %v2298, 0
        %v2332 = vsel %vm1378, %v2299, 0
        %v2335 = vsel %vm1378, %v2300, 0
        %v2338 = vsel %vm1378, %v2301, 0
        %v2341 = vsel %vm1378, %v2302, 0
        %v2344 = vsel %vm1378, %v2303, 0
        %v2347 = vsel %vm1378, %v2304, 0
        %v2350 = vsel %vm1378, %v2305, 0
        %v2353 = vsel %vm1378, %v2306, 0
        %v2356 = vsel %vm1378, %v2307, 0
        %v2359 = vsel %vm1378, %v2308, 0
        %v2362 = vsel %vm1378, %v2309, 0
        %v2365 = vsel %vm1378, %v2310, 0
        %v2368 = vsel %vm1378, %v2311, 0
        %v2371 = vand.u32 %v2321, %v1429
        %2373 = vmatpush.bf16.msra.mxu0 0
        %2374 = vmatpush.bf16.msra.mxu0 0
        %2375 = vmatpush.bf16.msra.mxu0 0
        %2376 = vmatpush.bf16.msra.mxu0 0
        %2377 = vmatpush.bf16.msra.mxu0 0
        %2378 = vmatpush.bf16.msra.mxu0 0
        %2379 = vmatpush.bf16.msra.mxu0 0
        %2380 = vmatpush.bf16.msra.mxu0 %v2371
        %2381 = vmatmul.bf16.gmra.mxu0 %v2323
        %v2382 = vpop.f32.mrf.mxu0
        %v2383 = vadd.f32 0.0, %v2382
        %v2384 = vpop.f32.mrf.mxu0
        %v2385 = vadd.f32 0.0, %v2384
        %2386 = vmatmul.bf16.gmra.mxu0 %v2326
        %v2387 = vpop.f32.mrf.mxu0
        %v2388 = vadd.f32 0.0, %v2387
        %v2389 = vpop.f32.mrf.mxu0
        %v2390 = vadd.f32 0.0, %v2389
        %2391 = vmatmul.bf16.gmra.mxu0 %v2329
        %v2392 = vpop.f32.mrf.mxu0
        %v2393 = vadd.f32 0.0, %v2392
        %v2394 = vpop.f32.mrf.mxu0
        %v2395 = vadd.f32 0.0, %v2394
        %2396 = vmatmul.bf16.gmra.mxu0 %v2332
        %v2397 = vpop.f32.mrf.mxu0
        %v2398 = vadd.f32 0.0, %v2397
        %v2399 = vpop.f32.mrf.mxu0
        %v2400 = vadd.f32 0.0, %v2399
        %2401 = vmatmul.bf16.gmra.mxu0 %v2335
        %v2402 = vpop.f32.mrf.mxu0
        %v2403 = vadd.f32 0.0, %v2402
        %v2404 = vpop.f32.mrf.mxu0
        %v2405 = vadd.f32 0.0, %v2404
        %2406 = vmatmul.bf16.gmra.mxu0 %v2338
        %v2407 = vpop.f32.mrf.mxu0
        %v2408 = vadd.f32 0.0, %v2407
        %v2409 = vpop.f32.mrf.mxu0
        %v2410 = vadd.f32 0.0, %v2409
        %2411 = vmatmul.bf16.gmra.mxu0 %v2341
        %v2412 = vpop.f32.mrf.mxu0
        %v2413 = vadd.f32 0.0, %v2412
        %v2414 = vpop.f32.mrf.mxu0
        %v2415 = vadd.f32 0.0, %v2414
        %2416 = vmatmul.bf16.gmra.mxu0 %v2344
        %v2417 = vpop.f32.mrf.mxu0
        %v2418 = vadd.f32 0.0, %v2417
        %v2419 = vpop.f32.mrf.mxu0
        %v2420 = vadd.f32 0.0, %v2419
        %2421 = vmatmul.bf16.gmra.mxu0 %v2347
        %v2422 = vpop.f32.mrf.mxu0
        %v2423 = vadd.f32 0.0, %v2422
        %v2424 = vpop.f32.mrf.mxu0
        %v2425 = vadd.f32 0.0, %v2424
        %2426 = vmatmul.bf16.gmra.mxu0 %v2350
        %v2427 = vpop.f32.mrf.mxu0
        %v2428 = vadd.f32 0.0, %v2427
        %v2429 = vpop.f32.mrf.mxu0
        %v2430 = vadd.f32 0.0, %v2429
        %2431 = vmatmul.bf16.gmra.mxu0 %v2353
        %v2432 = vpop.f32.mrf.mxu0
        %v2433 = vadd.f32 0.0, %v2432
        %v2434 = vpop.f32.mrf.mxu0
        %v2435 = vadd.f32 0.0, %v2434
        %2436 = vmatmul.bf16.gmra.mxu0 %v2356
        %v2437 = vpop.f32.mrf.mxu0
        %v2438 = vadd.f32 0.0, %v2437
        %v2439 = vpop.f32.mrf.mxu0
        %v2440 = vadd.f32 0.0, %v2439
        %2441 = vmatmul.bf16.gmra.mxu0 %v2359
        %v2442 = vpop.f32.mrf.mxu0
        %v2443 = vadd.f32 0.0, %v2442
        %v2444 = vpop.f32.mrf.mxu0
        %v2445 = vadd.f32 0.0, %v2444
        %2446 = vmatmul.bf16.gmra.mxu0 %v2362
        %v2447 = vpop.f32.mrf.mxu0
        %v2448 = vadd.f32 0.0, %v2447
        %v2449 = vpop.f32.mrf.mxu0
        %v2450 = vadd.f32 0.0, %v2449
        %2451 = vmatmul.bf16.gmra.mxu0 %v2365
        %v2452 = vpop.f32.mrf.mxu0
        %v2453 = vadd.f32 0.0, %v2452
        %v2454 = vpop.f32.mrf.mxu0
        %v2455 = vadd.f32 0.0, %v2454
        %2456 = vmatmul.bf16.gmra.mxu0 %v2368
        %v2457 = vpop.f32.mrf.mxu0
        %v2458 = vadd.f32 0.0, %v2457
        %v2459 = vpop.f32.mrf.mxu0
        %v2460 = vadd.f32 0.0, %v2459
        %2461 = vdwg.mxu0
        %v2462 = vadd.f32 %v2103, %v2383
        %v2463 = vadd.f32 %v2104, %v2385
        %v2464 = vadd.f32 %v2105, %v2388
        %v2465 = vadd.f32 %v2106, %v2390
        %v2466 = vadd.f32 %v2107, %v2393
        %v2467 = vadd.f32 %v2108, %v2395
        %v2468 = vadd.f32 %v2109, %v2398
        %v2469 = vadd.f32 %v2110, %v2400
        %v2470 = vadd.f32 %v2111, %v2403
        %v2471 = vadd.f32 %v2112, %v2405
        %v2472 = vadd.f32 %v2113, %v2408
        %v2473 = vadd.f32 %v2114, %v2410
        %v2474 = vadd.f32 %v2115, %v2413
        %v2475 = vadd.f32 %v2116, %v2415
        %v2476 = vadd.f32 %v2117, %v2418
        %v2477 = vadd.f32 %v2118, %v2420
        %v2478 = vadd.f32 %v2119, %v2423
        %v2479 = vadd.f32 %v2120, %v2425
        %v2480 = vadd.f32 %v2121, %v2428
        %v2481 = vadd.f32 %v2122, %v2430
        %v2482 = vadd.f32 %v2123, %v2433
        %v2483 = vadd.f32 %v2124, %v2435
        %v2484 = vadd.f32 %v2125, %v2438
        %v2485 = vadd.f32 %v2126, %v2440
        %v2486 = vadd.f32 %v2127, %v2443
        %v2487 = vadd.f32 %v2128, %v2445
        %v2488 = vadd.f32 %v2129, %v2448
        %v2489 = vadd.f32 %v2130, %v2450
        %v2490 = vadd.f32 %v2131, %v2453
        %v2491 = vadd.f32 %v2132, %v2455
        %v2492 = vadd.f32 %v2133, %v2458
        %v2493 = vadd.f32 %v2134, %v2460
        %v2494 = vld [vmem:[%s1 + $0x4] sm:$0xc]
        %2495 = vset.pattern.permute.xlu0 4
        %2496 = vperm.xlu0 %2495, %v750
        %v2497 = vpop.permute.xlu0 %2496
        %2498 = vset.pattern.permute.xlu0 4
        %2499 = vperm.xlu0 %2498, %v751
        %v2500 = vpop.permute.xlu0 %2499
        %2501 = vset.pattern.permute.xlu0 4
        %2502 = vperm.xlu0 %2501, %v752
        %v2503 = vpop.permute.xlu0 %2502
        %2504 = vset.pattern.permute.xlu0 4
        %2505 = vperm.xlu0 %2504, %v753
        %v2506 = vpop.permute.xlu0 %2505
        %2507 = vset.pattern.permute.xlu0 4
        %2508 = vperm.xlu0 %2507, %v754
        %v2509 = vpop.permute.xlu0 %2508
        %2510 = vset.pattern.permute.xlu0 4
        %2511 = vperm.xlu0 %2510, %v755
        %v2512 = vpop.permute.xlu0 %2511
        %2513 = vset.pattern.permute.xlu0 4
        %2514 = vperm.xlu0 %2513, %v756
        %v2515 = vpop.permute.xlu0 %2514
        %2516 = vset.pattern.permute.xlu0 4
        %2517 = vperm.xlu0 %2516, %v757
        %v2518 = vpop.permute.xlu0 %2517
        %2519 = vset.pattern.permute.xlu0 4
        %2520 = vperm.xlu0 %2519, %v758
        %v2521 = vpop.permute.xlu0 %2520
        %2522 = vset.pattern.permute.xlu0 4
        %2523 = vperm.xlu0 %2522, %v759
        %v2524 = vpop.permute.xlu0 %2523
        %2525 = vset.pattern.permute.xlu0 4
        %2526 = vperm.xlu0 %2525, %v760
        %v2527 = vpop.permute.xlu0 %2526
        %2528 = vset.pattern.permute.xlu0 4
        %2529 = vperm.xlu0 %2528, %v761
        %v2530 = vpop.permute.xlu0 %2529
        %2531 = vset.pattern.permute.xlu0 4
        %2532 = vperm.xlu0 %2531, %v762
        %v2533 = vpop.permute.xlu0 %2532
        %2534 = vset.pattern.permute.xlu0 4
        %2535 = vperm.xlu0 %2534, %v763
        %v2536 = vpop.permute.xlu0 %2535
        %2537 = vset.pattern.permute.xlu0 4
        %2538 = vperm.xlu0 %2537, %v764
        %v2539 = vpop.permute.xlu0 %2538
        %2540 = vset.pattern.permute.xlu0 4
        %2541 = vperm.xlu0 %2540, %v765
        %v2542 = vpop.permute.xlu0 %2541
        %2543 = vset.pattern.permute.xlu0 4
        %2544 = vperm.xlu0 %2543, %v766
        %v2545 = vpop.permute.xlu0 %2544
        %2546 = vset.pattern.permute.xlu0 4
        %2547 = vperm.xlu0 %2546, %v767
        %v2548 = vpop.permute.xlu0 %2547
        %2549 = vset.pattern.permute.xlu0 4
        %2550 = vperm.xlu0 %2549, %v768
        %v2551 = vpop.permute.xlu0 %2550
        %2552 = vset.pattern.permute.xlu0 4
        %2553 = vperm.xlu0 %2552, %v769
        %v2554 = vpop.permute.xlu0 %2553
        %2555 = vset.pattern.permute.xlu0 4
        %2556 = vperm.xlu0 %2555, %v770
        %v2557 = vpop.permute.xlu0 %2556
        %2558 = vset.pattern.permute.xlu0 4
        %2559 = vperm.xlu0 %2558, %v771
        %v2560 = vpop.permute.xlu0 %2559
        %2561 = vset.pattern.permute.xlu0 4
        %2562 = vperm.xlu0 %2561, %v772
        %v2563 = vpop.permute.xlu0 %2562
        %2564 = vset.pattern.permute.xlu0 4
        %2565 = vperm.xlu0 %2564, %v773
        %v2566 = vpop.permute.xlu0 %2565
        %2567 = vset.pattern.permute.xlu0 4
        %2568 = vperm.xlu0 %2567, %v774
        %v2569 = vpop.permute.xlu0 %2568
        %2570 = vset.pattern.permute.xlu0 4
        %2571 = vperm.xlu0 %2570, %v775
        %v2572 = vpop.permute.xlu0 %2571
        %2573 = vset.pattern.permute.xlu0 4
        %2574 = vperm.xlu0 %2573, %v776
        %v2575 = vpop.permute.xlu0 %2574
        %2576 = vset.pattern.permute.xlu0 4
        %2577 = vperm.xlu0 %2576, %v777
        %v2578 = vpop.permute.xlu0 %2577
        %2579 = vset.pattern.permute.xlu0 4
        %2580 = vperm.xlu0 %2579, %v778
        %v2581 = vpop.permute.xlu0 %2580
        %2582 = vset.pattern.permute.xlu0 4
        %2583 = vperm.xlu0 %2582, %v779
        %v2584 = vpop.permute.xlu0 %2583
        %2585 = vset.pattern.permute.xlu0 4
        %2586 = vperm.xlu0 %2585, %v780
        %v2587 = vpop.permute.xlu0 %2586
        %2588 = vset.pattern.permute.xlu0 4
        %2589 = vperm.xlu0 %2588, %v781
        %v2590 = vpop.permute.xlu0 %2589
        %v2591 = vrot.slane %v2497, 7
        %v2592 = vrot.slane %v2500, 7
        %v2593 = vsel %vm651, %v2591, %v2592
        %v2594 = vrot.slane %v2503, 7
        %v2595 = vsel %vm651, %v2592, %v2594
        %v2596 = vrot.slane %v2506, 7
        %v2597 = vsel %vm651, %v2594, %v2596
        %v2598 = vrot.slane %v2509, 7
        %v2599 = vsel %vm651, %v2596, %v2598
        %v2600 = vrot.slane %v2512, 7
        %v2601 = vsel %vm651, %v2598, %v2600
        %v2602 = vrot.slane %v2515, 7
        %v2603 = vsel %vm651, %v2600, %v2602
        %v2604 = vrot.slane %v2518, 7
        %v2605 = vsel %vm651, %v2602, %v2604
        %v2606 = vrot.slane %v2521, 7
        %v2607 = vsel %vm651, %v2604, %v2606
        %v2608 = vrot.slane %v2524, 7
        %v2609 = vsel %vm651, %v2606, %v2608
        %v2610 = vrot.slane %v2527, 7
        %v2611 = vsel %vm651, %v2608, %v2610
        %v2612 = vrot.slane %v2530, 7
        %v2613 = vsel %vm651, %v2610, %v2612
        %v2614 = vrot.slane %v2533, 7
        %v2615 = vsel %vm651, %v2612, %v2614
        %v2616 = vrot.slane %v2536, 7
        %v2617 = vsel %vm651, %v2614, %v2616
        %v2618 = vrot.slane %v2539, 7
        %v2619 = vsel %vm651, %v2616, %v2618
        %v2620 = vrot.slane %v2542, 7
        %v2621 = vsel %vm651, %v2618, %v2620
        %v2622 = vrot.slane %v2545, 7
        %v2623 = vsel %vm651, %v2620, %v2622
        %v2624 = vrot.slane %v2548, 7
        %v2625 = vsel %vm651, %v2622, %v2624
        %v2626 = vrot.slane %v2551, 7
        %v2627 = vsel %vm651, %v2624, %v2626
        %v2628 = vrot.slane %v2554, 7
        %v2629 = vsel %vm651, %v2626, %v2628
        %v2630 = vrot.slane %v2557, 7
        %v2631 = vsel %vm651, %v2628, %v2630
        %v2632 = vrot.slane %v2560, 7
        %v2633 = vsel %vm651, %v2630, %v2632
        %v2634 = vrot.slane %v2563, 7
        %v2635 = vsel %vm651, %v2632, %v2634
        %v2636 = vrot.slane %v2566, 7
        %v2637 = vsel %vm651, %v2634, %v2636
        %v2638 = vrot.slane %v2569, 7
        %v2639 = vsel %vm651, %v2636, %v2638
        %v2640 = vrot.slane %v2572, 7
        %v2641 = vsel %vm651, %v2638, %v2640
        %v2642 = vrot.slane %v2575, 7
        %v2643 = vsel %vm651, %v2640, %v2642
        %v2644 = vrot.slane %v2578, 7
        %v2645 = vsel %vm651, %v2642, %v2644
        %v2646 = vrot.slane %v2581, 7
        %v2647 = vsel %vm651, %v2644, %v2646
        %v2648 = vrot.slane %v2584, 7
        %v2649 = vsel %vm651, %v2646, %v2648
        %v2650 = vrot.slane %v2587, 7
        %v2651 = vsel %vm651, %v2648, %v2650
        %v2652 = vrot.slane %v2590, 7
        %v2653 = vsel %vm651, %v2650, %v2652
        %v2687 = vmul.f32 %v748, %v2591
        %v2688 = vmul.f32 %v654, %v2593
        %v2689 = vmul.f32 %v656, %v2595
        %v2690 = vmul.f32 %v658, %v2597
        %v2691 = vmul.f32 %v660, %v2599
        %v2692 = vmul.f32 %v662, %v2601
        %v2693 = vmul.f32 %v664, %v2603
        %v2694 = vmul.f32 %v666, %v2605
        %v2695 = vmul.f32 %v668, %v2607
        %v2696 = vmul.f32 %v670, %v2609
        %v2697 = vmul.f32 %v672, %v2611
        %v2698 = vmul.f32 %v674, %v2613
        %v2699 = vmul.f32 %v676, %v2615
        %v2700 = vmul.f32 %v678, %v2617
        %v2701 = vmul.f32 %v680, %v2619
        %v2702 = vmul.f32 %v682, %v2621
        %v2703 = vmul.f32 %v684, %v2623
        %v2704 = vmul.f32 %v686, %v2625
        %v2705 = vmul.f32 %v688, %v2627
        %v2706 = vmul.f32 %v690, %v2629
        %v2707 = vmul.f32 %v692, %v2631
        %v2708 = vmul.f32 %v694, %v2633
        %v2709 = vmul.f32 %v696, %v2635
        %v2710 = vmul.f32 %v698, %v2637
        %v2711 = vmul.f32 %v700, %v2639
        %v2712 = vmul.f32 %v702, %v2641
        %v2713 = vmul.f32 %v704, %v2643
        %v2714 = vmul.f32 %v706, %v2645
        %v2715 = vmul.f32 %v708, %v2647
        %v2716 = vmul.f32 %v710, %v2649
        %v2717 = vmul.f32 %v712, %v2651
        %v2718 = vmul.f32 %v714, %v2653
        %v2719 = vmul.f32 %v749, %v2652
        %v2720 = vpack.c.bf16 %v2688, %v2687
        %v2721 = vpack.c.bf16 %v2690, %v2689
        %v2722 = vpack.c.bf16 %v2692, %v2691
        %v2723 = vpack.c.bf16 %v2694, %v2693
        %v2724 = vpack.c.bf16 %v2696, %v2695
        %v2725 = vpack.c.bf16 %v2698, %v2697
        %v2726 = vpack.c.bf16 %v2700, %v2699
        %v2727 = vpack.c.bf16 %v2702, %v2701
        %v2728 = vpack.c.bf16 %v2704, %v2703
        %v2729 = vpack.c.bf16 %v2706, %v2705
        %v2730 = vpack.c.bf16 %v2708, %v2707
        %v2731 = vpack.c.bf16 %v2710, %v2709
        %v2732 = vpack.c.bf16 %v2712, %v2711
        %v2733 = vpack.c.bf16 %v2714, %v2713
        %v2734 = vpack.c.bf16 %v2716, %v2715
        %v2735 = vpack.c.bf16 %v2718, %v2717
        %v2736 = vpack.c.bf16 %v2719, %v2719
        %v2738 = vshrl.u32 %v2720, 16
        %v2740 = vshll.u32 %v2720, 16
        %v2742 = vrot.slane %v2740, 1
        %v2743 = vor.u32 %v2738, %v2742
        %v2745 = vshll.u32 %v2721, 16
        %v2747 = vrot.slane %v2745, 1
        %v2748 = vsel %vm1234, %v2743, %v2747
        %v2749 = vshrl.u32 %v2721, 16
        %v2751 = vor.u32 %v2749, %v2747
        %v2753 = vshll.u32 %v2722, 16
        %v2755 = vrot.slane %v2753, 1
        %v2756 = vsel %vm1234, %v2751, %v2755
        %v2757 = vshrl.u32 %v2722, 16
        %v2759 = vor.u32 %v2757, %v2755
        %v2761 = vshll.u32 %v2723, 16
        %v2763 = vrot.slane %v2761, 1
        %v2764 = vsel %vm1234, %v2759, %v2763
        %v2765 = vshrl.u32 %v2723, 16
        %v2767 = vor.u32 %v2765, %v2763
        %v2769 = vshll.u32 %v2724, 16
        %v2771 = vrot.slane %v2769, 1
        %v2772 = vsel %vm1234, %v2767, %v2771
        %v2773 = vshrl.u32 %v2724, 16
        %v2775 = vor.u32 %v2773, %v2771
        %v2777 = vshll.u32 %v2725, 16
        %v2779 = vrot.slane %v2777, 1
        %v2780 = vsel %vm1234, %v2775, %v2779
        %v2781 = vshrl.u32 %v2725, 16
        %v2783 = vor.u32 %v2781, %v2779
        %v2785 = vshll.u32 %v2726, 16
        %v2787 = vrot.slane %v2785, 1
        %v2788 = vsel %vm1234, %v2783, %v2787
        %v2789 = vshrl.u32 %v2726, 16
        %v2791 = vor.u32 %v2789, %v2787
        %v2793 = vshll.u32 %v2727, 16
        %v2795 = vrot.slane %v2793, 1
        %v2796 = vsel %vm1234, %v2791, %v2795
        %v2797 = vshrl.u32 %v2727, 16
        %v2799 = vor.u32 %v2797, %v2795
        %v2801 = vshll.u32 %v2728, 16
        %v2803 = vrot.slane %v2801, 1
        %v2804 = vsel %vm1234, %v2799, %v2803
        %v2805 = vshrl.u32 %v2728, 16
        %v2807 = vor.u32 %v2805, %v2803
        %v2809 = vshll.u32 %v2729, 16
        %v2811 = vrot.slane %v2809, 1
        %v2812 = vsel %vm1234, %v2807, %v2811
        %v2813 = vshrl.u32 %v2729, 16
        %v2815 = vor.u32 %v2813, %v2811
        %v2817 = vshll.u32 %v2730, 16
        %v2819 = vrot.slane %v2817, 1
        %v2820 = vsel %vm1234, %v2815, %v2819
        %v2821 = vshrl.u32 %v2730, 16
        %v2823 = vor.u32 %v2821, %v2819
        %v2825 = vshll.u32 %v2731, 16
        %v2827 = vrot.slane %v2825, 1
        %v2828 = vsel %vm1234, %v2823, %v2827
        %v2829 = vshrl.u32 %v2731, 16
        %v2831 = vor.u32 %v2829, %v2827
        %v2833 = vshll.u32 %v2732, 16
        %v2835 = vrot.slane %v2833, 1
        %v2836 = vsel %vm1234, %v2831, %v2835
        %v2837 = vshrl.u32 %v2732, 16
        %v2839 = vor.u32 %v2837, %v2835
        %v2841 = vshll.u32 %v2733, 16
        %v2843 = vrot.slane %v2841, 1
        %v2844 = vsel %vm1234, %v2839, %v2843
        %v2845 = vshrl.u32 %v2733, 16
        %v2847 = vor.u32 %v2845, %v2843
        %v2849 = vshll.u32 %v2734, 16
        %v2851 = vrot.slane %v2849, 1
        %v2852 = vsel %vm1234, %v2847, %v2851
        %v2853 = vshrl.u32 %v2734, 16
        %v2855 = vor.u32 %v2853, %v2851
        %v2857 = vshll.u32 %v2735, 16
        %v2859 = vrot.slane %v2857, 1
        %v2860 = vsel %vm1234, %v2855, %v2859
        %v2861 = vshrl.u32 %v2735, 16
        %v2863 = vor.u32 %v2861, %v2859
        %v2865 = vshll.u32 %v2736, 16
        %v2867 = vrot.slane %v2865, 1
        %v2868 = vsel %vm1234, %v2863, %v2867
        %v2870 = vunpack.c.l.b16 %v2494
        %v2871 = vpack.c.b16 %v2870, %v2870
        %v2872 = vrot.slane %v2871, 2
        %v2874 = vsel %vm1378, %v2748, 0
        %v2877 = vsel %vm1378, %v2756, 0
        %v2880 = vsel %vm1378, %v2764, 0
        %v2883 = vsel %vm1378, %v2772, 0
        %v2886 = vsel %vm1378, %v2780, 0
        %v2889 = vsel %vm1378, %v2788, 0
        %v2892 = vsel %vm1378, %v2796, 0
        %v2895 = vsel %vm1378, %v2804, 0
        %v2898 = vsel %vm1378, %v2812, 0
        %v2901 = vsel %vm1378, %v2820, 0
        %v2904 = vsel %vm1378, %v2828, 0
        %v2907 = vsel %vm1378, %v2836, 0
        %v2910 = vsel %vm1378, %v2844, 0
        %v2913 = vsel %vm1378, %v2852, 0
        %v2916 = vsel %vm1378, %v2860, 0
        %v2919 = vsel %vm1378, %v2868, 0
        %v2922 = vand.u32 %v2872, %v1429
        %2924 = vmatpush.bf16.msra.mxu0 0
        %2925 = vmatpush.bf16.msra.mxu0 0
        %2926 = vmatpush.bf16.msra.mxu0 0
        %2927 = vmatpush.bf16.msra.mxu0 0
        %2928 = vmatpush.bf16.msra.mxu0 0
        %2929 = vmatpush.bf16.msra.mxu0 0
        %2930 = vmatpush.bf16.msra.mxu0 0
        %2931 = vmatpush.bf16.msra.mxu0 %v2922
        %2932 = vmatmul.bf16.gmra.mxu0 %v2874
        %v2933 = vpop.f32.mrf.mxu0
        %v2934 = vadd.f32 0.0, %v2933
        %v2935 = vpop.f32.mrf.mxu0
        %v2936 = vadd.f32 0.0, %v2935
        %2937 = vmatmul.bf16.gmra.mxu0 %v2877
        %v2938 = vpop.f32.mrf.mxu0
        %v2939 = vadd.f32 0.0, %v2938
        %v2940 = vpop.f32.mrf.mxu0
        %v2941 = vadd.f32 0.0, %v2940
        %2942 = vmatmul.bf16.gmra.mxu0 %v2880
        %v2943 = vpop.f32.mrf.mxu0
        %v2944 = vadd.f32 0.0, %v2943
        %v2945 = vpop.f32.mrf.mxu0
        %v2946 = vadd.f32 0.0, %v2945
        %2947 = vmatmul.bf16.gmra.mxu0 %v2883
        %v2948 = vpop.f32.mrf.mxu0
        %v2949 = vadd.f32 0.0, %v2948
        %v2950 = vpop.f32.mrf.mxu0
        %v2951 = vadd.f32 0.0, %v2950
        %2952 = vmatmul.bf16.gmra.mxu0 %v2886
        %v2953 = vpop.f32.mrf.mxu0
        %v2954 = vadd.f32 0.0, %v2953
        %v2955 = vpop.f32.mrf.mxu0
        %v2956 = vadd.f32 0.0, %v2955
        %2957 = vmatmul.bf16.gmra.mxu0 %v2889
        %v2958 = vpop.f32.mrf.mxu0
        %v2959 = vadd.f32 0.0, %v2958
        %v2960 = vpop.f32.mrf.mxu0
        %v2961 = vadd.f32 0.0, %v2960
        %2962 = vmatmul.bf16.gmra.mxu0 %v2892
        %v2963 = vpop.f32.mrf.mxu0
        %v2964 = vadd.f32 0.0, %v2963
        %v2965 = vpop.f32.mrf.mxu0
        %v2966 = vadd.f32 0.0, %v2965
        %2967 = vmatmul.bf16.gmra.mxu0 %v2895
        %v2968 = vpop.f32.mrf.mxu0
        %v2969 = vadd.f32 0.0, %v2968
        %v2970 = vpop.f32.mrf.mxu0
        %v2971 = vadd.f32 0.0, %v2970
        %2972 = vmatmul.bf16.gmra.mxu0 %v2898
        %v2973 = vpop.f32.mrf.mxu0
        %v2974 = vadd.f32 0.0, %v2973
        %v2975 = vpop.f32.mrf.mxu0
        %v2976 = vadd.f32 0.0, %v2975
        %2977 = vmatmul.bf16.gmra.mxu0 %v2901
        %v2978 = vpop.f32.mrf.mxu0
        %v2979 = vadd.f32 0.0, %v2978
        %v2980 = vpop.f32.mrf.mxu0
        %v2981 = vadd.f32 0.0, %v2980
        %2982 = vmatmul.bf16.gmra.mxu0 %v2904
        %v2983 = vpop.f32.mrf.mxu0
        %v2984 = vadd.f32 0.0, %v2983
        %v2985 = vpop.f32.mrf.mxu0
        %v2986 = vadd.f32 0.0, %v2985
        %2987 = vmatmul.bf16.gmra.mxu0 %v2907
        %v2988 = vpop.f32.mrf.mxu0
        %v2989 = vadd.f32 0.0, %v2988
        %v2990 = vpop.f32.mrf.mxu0
        %v2991 = vadd.f32 0.0, %v2990
        %2992 = vmatmul.bf16.gmra.mxu0 %v2910
        %v2993 = vpop.f32.mrf.mxu0
        %v2994 = vadd.f32 0.0, %v2993
        %v2995 = vpop.f32.mrf.mxu0
        %v2996 = vadd.f32 0.0, %v2995
        %2997 = vmatmul.bf16.gmra.mxu0 %v2913
        %v2998 = vpop.f32.mrf.mxu0
        %v2999 = vadd.f32 0.0, %v2998
        %v3000 = vpop.f32.mrf.mxu0
        %v3001 = vadd.f32 0.0, %v3000
        %3002 = vmatmul.bf16.gmra.mxu0 %v2916
        %v3003 = vpop.f32.mrf.mxu0
        %v3004 = vadd.f32 0.0, %v3003
        %v3005 = vpop.f32.mrf.mxu0
        %v3006 = vadd.f32 0.0, %v3005
        %3007 = vmatmul.bf16.gmra.mxu0 %v2919
        %v3008 = vpop.f32.mrf.mxu0
        %v3009 = vadd.f32 0.0, %v3008
        %v3010 = vpop.f32.mrf.mxu0
        %v3011 = vadd.f32 0.0, %v3010
        %3012 = vdwg.mxu0
        %v3013 = vadd.f32 %v2462, %v2934
        %v3014 = vadd.f32 %v2463, %v2936
        %v3015 = vadd.f32 %v2464, %v2939
        %v3016 = vadd.f32 %v2465, %v2941
        %v3017 = vadd.f32 %v2466, %v2944
        %v3018 = vadd.f32 %v2467, %v2946
        %v3019 = vadd.f32 %v2468, %v2949
        %v3020 = vadd.f32 %v2469, %v2951
        %v3021 = vadd.f32 %v2470, %v2954
        %v3022 = vadd.f32 %v2471, %v2956
        %v3023 = vadd.f32 %v2472, %v2959
        %v3024 = vadd.f32 %v2473, %v2961
        %v3025 = vadd.f32 %v2474, %v2964
        %v3026 = vadd.f32 %v2475, %v2966
        %v3027 = vadd.f32 %v2476, %v2969
        %v3028 = vadd.f32 %v2477, %v2971
        %v3029 = vadd.f32 %v2478, %v2974
        %v3030 = vadd.f32 %v2479, %v2976
        %v3031 = vadd.f32 %v2480, %v2979
        %v3032 = vadd.f32 %v2481, %v2981
        %v3033 = vadd.f32 %v2482, %v2984
        %v3034 = vadd.f32 %v2483, %v2986
        %v3035 = vadd.f32 %v2484, %v2989
        %v3036 = vadd.f32 %v2485, %v2991
        %v3037 = vadd.f32 %v2486, %v2994
        %v3038 = vadd.f32 %v2487, %v2996
        %v3039 = vadd.f32 %v2488, %v2999
        %v3040 = vadd.f32 %v2489, %v3001
        %v3041 = vadd.f32 %v2490, %v3004
        %v3042 = vadd.f32 %v2491, %v3006
        %v3043 = vadd.f32 %v2492, %v3009
        %v3044 = vadd.f32 %v2493, %v3011
        %v3045 = vld [vmem:[%s1 + $0x4] sm:$0x8]
        %v3046 = vld [vmem:[%s1 + $0x8] sm:$0x1]
        %3047 = vset.pattern.permute.xlu0 5
        %3048 = vperm.xlu0 %3047, %v750
        %v3049 = vpop.permute.xlu0 %3048
        %3050 = vset.pattern.permute.xlu0 5
        %3051 = vperm.xlu0 %3050, %v751
        %v3052 = vpop.permute.xlu0 %3051
        %3053 = vset.pattern.permute.xlu0 5
        %3054 = vperm.xlu0 %3053, %v752
        %v3055 = vpop.permute.xlu0 %3054
        %3056 = vset.pattern.permute.xlu0 5
        %3057 = vperm.xlu0 %3056, %v753
        %v3058 = vpop.permute.xlu0 %3057
        %3059 = vset.pattern.permute.xlu0 5
        %3060 = vperm.xlu0 %3059, %v754
        %v3061 = vpop.permute.xlu0 %3060
        %3062 = vset.pattern.permute.xlu0 5
        %3063 = vperm.xlu0 %3062, %v755
        %v3064 = vpop.permute.xlu0 %3063
        %3065 = vset.pattern.permute.xlu0 5
        %3066 = vperm.xlu0 %3065, %v756
        %v3067 = vpop.permute.xlu0 %3066
        %3068 = vset.pattern.permute.xlu0 5
        %3069 = vperm.xlu0 %3068, %v757
        %v3070 = vpop.permute.xlu0 %3069
        %3071 = vset.pattern.permute.xlu0 5
        %3072 = vperm.xlu0 %3071, %v758
        %v3073 = vpop.permute.xlu0 %3072
        %3074 = vset.pattern.permute.xlu0 5
        %3075 = vperm.xlu0 %3074, %v759
        %v3076 = vpop.permute.xlu0 %3075
        %3077 = vset.pattern.permute.xlu0 5
        %3078 = vperm.xlu0 %3077, %v760
        %v3079 = vpop.permute.xlu0 %3078
        %3080 = vset.pattern.permute.xlu0 5
        %3081 = vperm.xlu0 %3080, %v761
        %v3082 = vpop.permute.xlu0 %3081
        %3083 = vset.pattern.permute.xlu0 5
        %3084 = vperm.xlu0 %3083, %v762
        %v3085 = vpop.permute.xlu0 %3084
        %3086 = vset.pattern.permute.xlu0 5
        %3087 = vperm.xlu0 %3086, %v763
        %v3088 = vpop.permute.xlu0 %3087
        %3089 = vset.pattern.permute.xlu0 5
        %3090 = vperm.xlu0 %3089, %v764
        %v3091 = vpop.permute.xlu0 %3090
        %3092 = vset.pattern.permute.xlu0 5
        %3093 = vperm.xlu0 %3092, %v765
        %v3094 = vpop.permute.xlu0 %3093
        %3095 = vset.pattern.permute.xlu0 5
        %3096 = vperm.xlu0 %3095, %v766
        %v3097 = vpop.permute.xlu0 %3096
        %3098 = vset.pattern.permute.xlu0 5
        %3099 = vperm.xlu0 %3098, %v767
        %v3100 = vpop.permute.xlu0 %3099
        %3101 = vset.pattern.permute.xlu0 5
        %3102 = vperm.xlu0 %3101, %v768
        %v3103 = vpop.permute.xlu0 %3102
        %3104 = vset.pattern.permute.xlu0 5
        %3105 = vperm.xlu0 %3104, %v769
        %v3106 = vpop.permute.xlu0 %3105
        %3107 = vset.pattern.permute.xlu0 5
        %3108 = vperm.xlu0 %3107, %v770
        %v3109 = vpop.permute.xlu0 %3108
        %3110 = vset.pattern.permute.xlu0 5
        %3111 = vperm.xlu0 %3110, %v771
        %v3112 = vpop.permute.xlu0 %3111
        %3113 = vset.pattern.permute.xlu0 5
        %3114 = vperm.xlu0 %3113, %v772
        %v3115 = vpop.permute.xlu0 %3114
        %3116 = vset.pattern.permute.xlu0 5
        %3117 = vperm.xlu0 %3116, %v773
        %v3118 = vpop.permute.xlu0 %3117
        %3119 = vset.pattern.permute.xlu0 5
        %3120 = vperm.xlu0 %3119, %v774
        %v3121 = vpop.permute.xlu0 %3120
        %3122 = vset.pattern.permute.xlu0 5
        %3123 = vperm.xlu0 %3122, %v775
        %v3124 = vpop.permute.xlu0 %3123
        %3125 = vset.pattern.permute.xlu0 5
        %3126 = vperm.xlu0 %3125, %v776
        %v3127 = vpop.permute.xlu0 %3126
        %3128 = vset.pattern.permute.xlu0 5
        %3129 = vperm.xlu0 %3128, %v777
        %v3130 = vpop.permute.xlu0 %3129
        %3131 = vset.pattern.permute.xlu0 5
        %3132 = vperm.xlu0 %3131, %v778
        %v3133 = vpop.permute.xlu0 %3132
        %3134 = vset.pattern.permute.xlu0 5
        %3135 = vperm.xlu0 %3134, %v779
        %v3136 = vpop.permute.xlu0 %3135
        %3137 = vset.pattern.permute.xlu0 5
        %3138 = vperm.xlu0 %3137, %v780
        %v3139 = vpop.permute.xlu0 %3138
        %3140 = vset.pattern.permute.xlu0 5
        %3141 = vperm.xlu0 %3140, %v781
        %v3142 = vpop.permute.xlu0 %3141
        %v3143 = vrot.slane %v3049, 6
        %v3144 = vrot.slane %v3052, 6
        %v3145 = vsel %vm1427, %v3143, %v3144
        %v3146 = vrot.slane %v3055, 6
        %v3147 = vsel %vm1427, %v3144, %v3146
        %v3148 = vrot.slane %v3058, 6
        %v3149 = vsel %vm1427, %v3146, %v3148
        %v3150 = vrot.slane %v3061, 6
        %v3151 = vsel %vm1427, %v3148, %v3150
        %v3152 = vrot.slane %v3064, 6
        %v3153 = vsel %vm1427, %v3150, %v3152
        %v3154 = vrot.slane %v3067, 6
        %v3155 = vsel %vm1427, %v3152, %v3154
        %v3156 = vrot.slane %v3070, 6
        %v3157 = vsel %vm1427, %v3154, %v3156
        %v3158 = vrot.slane %v3073, 6
        %v3159 = vsel %vm1427, %v3156, %v3158
        %v3160 = vrot.slane %v3076, 6
        %v3161 = vsel %vm1427, %v3158, %v3160
        %v3162 = vrot.slane %v3079, 6
        %v3163 = vsel %vm1427, %v3160, %v3162
        %v3164 = vrot.slane %v3082, 6
        %v3165 = vsel %vm1427, %v3162, %v3164
        %v3166 = vrot.slane %v3085, 6
        %v3167 = vsel %vm1427, %v3164, %v3166
        %v3168 = vrot.slane %v3088, 6
        %v3169 = vsel %vm1427, %v3166, %v3168
        %v3170 = vrot.slane %v3091, 6
        %v3171 = vsel %vm1427, %v3168, %v3170
        %v3172 = vrot.slane %v3094, 6
        %v3173 = vsel %vm1427, %v3170, %v3172
        %v3174 = vrot.slane %v3097, 6
        %v3175 = vsel %vm1427, %v3172, %v3174
        %v3176 = vrot.slane %v3100, 6
        %v3177 = vsel %vm1427, %v3174, %v3176
        %v3178 = vrot.slane %v3103, 6
        %v3179 = vsel %vm1427, %v3176, %v3178
        %v3180 = vrot.slane %v3106, 6
        %v3181 = vsel %vm1427, %v3178, %v3180
        %v3182 = vrot.slane %v3109, 6
        %v3183 = vsel %vm1427, %v3180, %v3182
        %v3184 = vrot.slane %v3112, 6
        %v3185 = vsel %vm1427, %v3182, %v3184
        %v3186 = vrot.slane %v3115, 6
        %v3187 = vsel %vm1427, %v3184, %v3186
        %v3188 = vrot.slane %v3118, 6
        %v3189 = vsel %vm1427, %v3186, %v3188
        %v3190 = vrot.slane %v3121, 6
        %v3191 = vsel %vm1427, %v3188, %v3190
        %v3192 = vrot.slane %v3124, 6
        %v3193 = vsel %vm1427, %v3190, %v3192
        %v3194 = vrot.slane %v3127, 6
        %v3195 = vsel %vm1427, %v3192, %v3194
        %v3196 = vrot.slane %v3130, 6
        %v3197 = vsel %vm1427, %v3194, %v3196
        %v3198 = vrot.slane %v3133, 6
        %v3199 = vsel %vm1427, %v3196, %v3198
        %v3200 = vrot.slane %v3136, 6
        %v3201 = vsel %vm1427, %v3198, %v3200
        %v3202 = vrot.slane %v3139, 6
        %v3203 = vsel %vm1427, %v3200, %v3202
        %v3204 = vrot.slane %v3142, 6
        %v3205 = vsel %vm1427, %v3202, %v3204
        %v3239 = vmul.f32 %v748, %v3143
        %v3240 = vmul.f32 %v654, %v3145
        %v3241 = vmul.f32 %v656, %v3147
        %v3242 = vmul.f32 %v658, %v3149
        %v3243 = vmul.f32 %v660, %v3151
        %v3244 = vmul.f32 %v662, %v3153
        %v3245 = vmul.f32 %v664, %v3155
        %v3246 = vmul.f32 %v666, %v3157
        %v3247 = vmul.f32 %v668, %v3159
        %v3248 = vmul.f32 %v670, %v3161
        %v3249 = vmul.f32 %v672, %v3163
        %v3250 = vmul.f32 %v674, %v3165
        %v3251 = vmul.f32 %v676, %v3167
        %v3252 = vmul.f32 %v678, %v3169
        %v3253 = vmul.f32 %v680, %v3171
        %v3254 = vmul.f32 %v682, %v3173
        %v3255 = vmul.f32 %v684, %v3175
        %v3256 = vmul.f32 %v686, %v3177
        %v3257 = vmul.f32 %v688, %v3179
        %v3258 = vmul.f32 %v690, %v3181
        %v3259 = vmul.f32 %v692, %v3183
        %v3260 = vmul.f32 %v694, %v3185
        %v3261 = vmul.f32 %v696, %v3187
        %v3262 = vmul.f32 %v698, %v3189
        %v3263 = vmul.f32 %v700, %v3191
        %v3264 = vmul.f32 %v702, %v3193
        %v3265 = vmul.f32 %v704, %v3195
        %v3266 = vmul.f32 %v706, %v3197
        %v3267 = vmul.f32 %v708, %v3199
        %v3268 = vmul.f32 %v710, %v3201
        %v3269 = vmul.f32 %v712, %v3203
        %v3270 = vmul.f32 %v714, %v3205
        %v3271 = vmul.f32 %v749, %v3204
        %v3272 = vpack.c.bf16 %v3240, %v3239
        %v3273 = vpack.c.bf16 %v3242, %v3241
        %v3274 = vpack.c.bf16 %v3244, %v3243
        %v3275 = vpack.c.bf16 %v3246, %v3245
        %v3276 = vpack.c.bf16 %v3248, %v3247
        %v3277 = vpack.c.bf16 %v3250, %v3249
        %v3278 = vpack.c.bf16 %v3252, %v3251
        %v3279 = vpack.c.bf16 %v3254, %v3253
        %v3280 = vpack.c.bf16 %v3256, %v3255
        %v3281 = vpack.c.bf16 %v3258, %v3257
        %v3282 = vpack.c.bf16 %v3260, %v3259
        %v3283 = vpack.c.bf16 %v3262, %v3261
        %v3284 = vpack.c.bf16 %v3264, %v3263
        %v3285 = vpack.c.bf16 %v3266, %v3265
        %v3286 = vpack.c.bf16 %v3268, %v3267
        %v3287 = vpack.c.bf16 %v3270, %v3269
        %v3288 = vpack.c.bf16 %v3271, %v3271
        %v3306 = vrot.slane %v3272, 1
        %v3307 = vrot.slane %v3273, 1
        %v3308 = vsel %vm1923, %v3306, %v3307
        %v3309 = vrot.slane %v3274, 1
        %v3310 = vsel %vm1923, %v3307, %v3309
        %v3311 = vrot.slane %v3275, 1
        %v3312 = vsel %vm1923, %v3309, %v3311
        %v3313 = vrot.slane %v3276, 1
        %v3314 = vsel %vm1923, %v3311, %v3313
        %v3315 = vrot.slane %v3277, 1
        %v3316 = vsel %vm1923, %v3313, %v3315
        %v3317 = vrot.slane %v3278, 1
        %v3318 = vsel %vm1923, %v3315, %v3317
        %v3319 = vrot.slane %v3279, 1
        %v3320 = vsel %vm1923, %v3317, %v3319
        %v3321 = vrot.slane %v3280, 1
        %v3322 = vsel %vm1923, %v3319, %v3321
        %v3323 = vrot.slane %v3281, 1
        %v3324 = vsel %vm1923, %v3321, %v3323
        %v3325 = vrot.slane %v3282, 1
        %v3326 = vsel %vm1923, %v3323, %v3325
        %v3327 = vrot.slane %v3283, 1
        %v3328 = vsel %vm1923, %v3325, %v3327
        %v3329 = vrot.slane %v3284, 1
        %v3330 = vsel %vm1923, %v3327, %v3329
        %v3331 = vrot.slane %v3285, 1
        %v3332 = vsel %vm1923, %v3329, %v3331
        %v3333 = vrot.slane %v3286, 1
        %v3334 = vsel %vm1923, %v3331, %v3333
        %v3335 = vrot.slane %v3287, 1
        %v3336 = vsel %vm1923, %v3333, %v3335
        %v3337 = vrot.slane %v3288, 1
        %v3338 = vsel %vm1923, %v3335, %v3337
        %v3341 = vunpack.c.l.b16 %v3045
        %v3342 = vunpack.c.l.b16 %v3046
        %v3343 = vpack.c.b16 %v3342, %v3341
        %v3345 = vshrl.u32 %v3343, 16
        %v3347 = vrot.slane %v3345, 3
        %v3348 = vshll.u32 %v3343, 16
        %v3350 = vrot.slane %v3348, 4
        %v3351 = vor.u32 %v3347, %v3350
        %v3353 = vsel %vm1378, %v3308, 0
        %v3356 = vsel %vm1378, %v3310, 0
        %v3359 = vsel %vm1378, %v3312, 0
        %v3362 = vsel %vm1378, %v3314, 0
        %v3365 = vsel %vm1378, %v3316, 0
        %v3368 = vsel %vm1378, %v3318, 0
        %v3371 = vsel %vm1378, %v3320, 0
        %v3374 = vsel %vm1378, %v3322, 0
        %v3377 = vsel %vm1378, %v3324, 0
        %v3380 = vsel %vm1378, %v3326, 0
        %v3383 = vsel %vm1378, %v3328, 0
        %v3386 = vsel %vm1378, %v3330, 0
        %v3389 = vsel %vm1378, %v3332, 0
        %v3392 = vsel %vm1378, %v3334, 0
        %v3395 = vsel %vm1378, %v3336, 0
        %v3398 = vsel %vm1378, %v3338, 0
        %v3401 = vand.u32 %v3351, %v1429
        %3403 = vmatpush.bf16.msra.mxu0 0
        %3404 = vmatpush.bf16.msra.mxu0 0
        %3405 = vmatpush.bf16.msra.mxu0 0
        %3406 = vmatpush.bf16.msra.mxu0 0
        %3407 = vmatpush.bf16.msra.mxu0 0
        %3408 = vmatpush.bf16.msra.mxu0 0
        %3409 = vmatpush.bf16.msra.mxu0 0
        %3410 = vmatpush.bf16.msra.mxu0 %v3401
        %3411 = vmatmul.bf16.gmra.mxu0 %v3353
        %v3412 = vpop.f32.mrf.mxu0
        %v3413 = vadd.f32 0.0, %v3412
        %v3414 = vpop.f32.mrf.mxu0
        %v3415 = vadd.f32 0.0, %v3414
        %3416 = vmatmul.bf16.gmra.mxu0 %v3356
        %v3417 = vpop.f32.mrf.mxu0
        %v3418 = vadd.f32 0.0, %v3417
        %v3419 = vpop.f32.mrf.mxu0
        %v3420 = vadd.f32 0.0, %v3419
        %3421 = vmatmul.bf16.gmra.mxu0 %v3359
        %v3422 = vpop.f32.mrf.mxu0
        %v3423 = vadd.f32 0.0, %v3422
        %v3424 = vpop.f32.mrf.mxu0
        %v3425 = vadd.f32 0.0, %v3424
        %3426 = vmatmul.bf16.gmra.mxu0 %v3362
        %v3427 = vpop.f32.mrf.mxu0
        %v3428 = vadd.f32 0.0, %v3427
        %v3429 = vpop.f32.mrf.mxu0
        %v3430 = vadd.f32 0.0, %v3429
        %3431 = vmatmul.bf16.gmra.mxu0 %v3365
        %v3432 = vpop.f32.mrf.mxu0
        %v3433 = vadd.f32 0.0, %v3432
        %v3434 = vpop.f32.mrf.mxu0
        %v3435 = vadd.f32 0.0, %v3434
        %3436 = vmatmul.bf16.gmra.mxu0 %v3368
        %v3437 = vpop.f32.mrf.mxu0
        %v3438 = vadd.f32 0.0, %v3437
        %v3439 = vpop.f32.mrf.mxu0
        %v3440 = vadd.f32 0.0, %v3439
        %3441 = vmatmul.bf16.gmra.mxu0 %v3371
        %v3442 = vpop.f32.mrf.mxu0
        %v3443 = vadd.f32 0.0, %v3442
        %v3444 = vpop.f32.mrf.mxu0
        %v3445 = vadd.f32 0.0, %v3444
        %3446 = vmatmul.bf16.gmra.mxu0 %v3374
        %v3447 = vpop.f32.mrf.mxu0
        %v3448 = vadd.f32 0.0, %v3447
        %v3449 = vpop.f32.mrf.mxu0
        %v3450 = vadd.f32 0.0, %v3449
        %3451 = vmatmul.bf16.gmra.mxu0 %v3377
        %v3452 = vpop.f32.mrf.mxu0
        %v3453 = vadd.f32 0.0, %v3452
        %v3454 = vpop.f32.mrf.mxu0
        %v3455 = vadd.f32 0.0, %v3454
        %3456 = vmatmul.bf16.gmra.mxu0 %v3380
        %v3457 = vpop.f32.mrf.mxu0
        %v3458 = vadd.f32 0.0, %v3457
        %v3459 = vpop.f32.mrf.mxu0
        %v3460 = vadd.f32 0.0, %v3459
        %3461 = vmatmul.bf16.gmra.mxu0 %v3383
        %v3462 = vpop.f32.mrf.mxu0
        %v3463 = vadd.f32 0.0, %v3462
        %v3464 = vpop.f32.mrf.mxu0
        %v3465 = vadd.f32 0.0, %v3464
        %3466 = vmatmul.bf16.gmra.mxu0 %v3386
        %v3467 = vpop.f32.mrf.mxu0
        %v3468 = vadd.f32 0.0, %v3467
        %v3469 = vpop.f32.mrf.mxu0
        %v3470 = vadd.f32 0.0, %v3469
        %3471 = vmatmul.bf16.gmra.mxu0 %v3389
        %v3472 = vpop.f32.mrf.mxu0
        %v3473 = vadd.f32 0.0, %v3472
        %v3474 = vpop.f32.mrf.mxu0
        %v3475 = vadd.f32 0.0, %v3474
        %3476 = vmatmul.bf16.gmra.mxu0 %v3392
        %v3477 = vpop.f32.mrf.mxu0
        %v3478 = vadd.f32 0.0, %v3477
        %v3479 = vpop.f32.mrf.mxu0
        %v3480 = vadd.f32 0.0, %v3479
        %3481 = vmatmul.bf16.gmra.mxu0 %v3395
        %v3482 = vpop.f32.mrf.mxu0
        %v3483 = vadd.f32 0.0, %v3482
        %v3484 = vpop.f32.mrf.mxu0
        %v3485 = vadd.f32 0.0, %v3484
        %3486 = vmatmul.bf16.gmra.mxu0 %v3398
        %v3487 = vpop.f32.mrf.mxu0
        %v3488 = vadd.f32 0.0, %v3487
        %v3489 = vpop.f32.mrf.mxu0
        %v3490 = vadd.f32 0.0, %v3489
        %3491 = vdwg.mxu0
        %v3492 = vadd.f32 %v3013, %v3413
        %v3493 = vadd.f32 %v3014, %v3415
        %v3494 = vadd.f32 %v3015, %v3418
        %v3495 = vadd.f32 %v3016, %v3420
        %v3496 = vadd.f32 %v3017, %v3423
        %v3497 = vadd.f32 %v3018, %v3425
        %v3498 = vadd.f32 %v3019, %v3428
        %v3499 = vadd.f32 %v3020, %v3430
        %v3500 = vadd.f32 %v3021, %v3433
        %v3501 = vadd.f32 %v3022, %v3435
        %v3502 = vadd.f32 %v3023, %v3438
        %v3503 = vadd.f32 %v3024, %v3440
        %v3504 = vadd.f32 %v3025, %v3443
        %v3505 = vadd.f32 %v3026, %v3445
        %v3506 = vadd.f32 %v3027, %v3448
        %v3507 = vadd.f32 %v3028, %v3450
        %v3508 = vadd.f32 %v3029, %v3453
        %v3509 = vadd.f32 %v3030, %v3455
        %v3510 = vadd.f32 %v3031, %v3458
        %v3511 = vadd.f32 %v3032, %v3460
        %v3512 = vadd.f32 %v3033, %v3463
        %v3513 = vadd.f32 %v3034, %v3465
        %v3514 = vadd.f32 %v3035, %v3468
        %v3515 = vadd.f32 %v3036, %v3470
        %v3516 = vadd.f32 %v3037, %v3473
        %v3517 = vadd.f32 %v3038, %v3475
        %v3518 = vadd.f32 %v3039, %v3478
        %v3519 = vadd.f32 %v3040, %v3480
        %v3520 = vadd.f32 %v3041, %v3483
        %v3521 = vadd.f32 %v3042, %v3485
        %v3522 = vadd.f32 %v3043, %v3488
        %v3523 = vadd.f32 %v3044, %v3490
        %v3524 = vld [vmem:[%s1 + $0x8] sm:$0x6]
        %3525 = vset.pattern.permute.xlu0 6
        %3526 = vperm.xlu0 %3525, %v750
        %v3527 = vpop.permute.xlu0 %3526
        %3529 = vset.pattern.permute.xlu0 6
        %3530 = vperm.xlu0 %3529, %v751
        %v3531 = vpop.permute.xlu0 %3530
        %3533 = vset.pattern.permute.xlu0 6
        %3534 = vperm.xlu0 %3533, %v752
        %v3535 = vpop.permute.xlu0 %3534
        %3537 = vset.pattern.permute.xlu0 6
        %3538 = vperm.xlu0 %3537, %v753
        %v3539 = vpop.permute.xlu0 %3538
        %3541 = vset.pattern.permute.xlu0 6
        %3542 = vperm.xlu0 %3541, %v754
        %v3543 = vpop.permute.xlu0 %3542
        %3545 = vset.pattern.permute.xlu0 6
        %3546 = vperm.xlu0 %3545, %v755
        %v3547 = vpop.permute.xlu0 %3546
        %3549 = vset.pattern.permute.xlu0 6
        %3550 = vperm.xlu0 %3549, %v756
        %v3551 = vpop.permute.xlu0 %3550
        %3553 = vset.pattern.permute.xlu0 6
        %3554 = vperm.xlu0 %3553, %v757
        %v3555 = vpop.permute.xlu0 %3554
        %3557 = vset.pattern.permute.xlu0 6
        %3558 = vperm.xlu0 %3557, %v758
        %v3559 = vpop.permute.xlu0 %3558
        %3561 = vset.pattern.permute.xlu0 6
        %3562 = vperm.xlu0 %3561, %v759
        %v3563 = vpop.permute.xlu0 %3562
        %3565 = vset.pattern.permute.xlu0 6
        %3566 = vperm.xlu0 %3565, %v760
        %v3567 = vpop.permute.xlu0 %3566
        %3569 = vset.pattern.permute.xlu0 6
        %3570 = vperm.xlu0 %3569, %v761
        %v3571 = vpop.permute.xlu0 %3570
        %3573 = vset.pattern.permute.xlu0 6
        %3574 = vperm.xlu0 %3573, %v762
        %v3575 = vpop.permute.xlu0 %3574
        %3577 = vset.pattern.permute.xlu0 6
        %3578 = vperm.xlu0 %3577, %v763
        %v3579 = vpop.permute.xlu0 %3578
        %3581 = vset.pattern.permute.xlu0 6
        %3582 = vperm.xlu0 %3581, %v764
        %v3583 = vpop.permute.xlu0 %3582
        %3585 = vset.pattern.permute.xlu0 6
        %3586 = vperm.xlu0 %3585, %v765
        %v3587 = vpop.permute.xlu0 %3586
        %3589 = vset.pattern.permute.xlu0 6
        %3590 = vperm.xlu0 %3589, %v766
        %v3591 = vpop.permute.xlu0 %3590
        %3593 = vset.pattern.permute.xlu0 6
        %3594 = vperm.xlu0 %3593, %v767
        %v3595 = vpop.permute.xlu0 %3594
        %3597 = vset.pattern.permute.xlu0 6
        %3598 = vperm.xlu0 %3597, %v768
        %v3599 = vpop.permute.xlu0 %3598
        %3601 = vset.pattern.permute.xlu0 6
        %3602 = vperm.xlu0 %3601, %v769
        %v3603 = vpop.permute.xlu0 %3602
        %3605 = vset.pattern.permute.xlu0 6
        %3606 = vperm.xlu0 %3605, %v770
        %v3607 = vpop.permute.xlu0 %3606
        %3609 = vset.pattern.permute.xlu0 6
        %3610 = vperm.xlu0 %3609, %v771
        %v3611 = vpop.permute.xlu0 %3610
        %3613 = vset.pattern.permute.xlu0 6
        %3614 = vperm.xlu0 %3613, %v772
        %v3615 = vpop.permute.xlu0 %3614
        %3617 = vset.pattern.permute.xlu0 6
        %3618 = vperm.xlu0 %3617, %v773
        %v3619 = vpop.permute.xlu0 %3618
        %3621 = vset.pattern.permute.xlu0 6
        %3622 = vperm.xlu0 %3621, %v774
        %v3623 = vpop.permute.xlu0 %3622
        %3625 = vset.pattern.permute.xlu0 6
        %3626 = vperm.xlu0 %3625, %v775
        %v3627 = vpop.permute.xlu0 %3626
        %3629 = vset.pattern.permute.xlu0 6
        %3630 = vperm.xlu0 %3629, %v776
        %v3631 = vpop.permute.xlu0 %3630
        %3633 = vset.pattern.permute.xlu0 6
        %3634 = vperm.xlu0 %3633, %v777
        %v3635 = vpop.permute.xlu0 %3634
        %3637 = vset.pattern.permute.xlu0 6
        %3638 = vperm.xlu0 %3637, %v778
        %v3639 = vpop.permute.xlu0 %3638
        %3641 = vset.pattern.permute.xlu0 6
        %3642 = vperm.xlu0 %3641, %v779
        %v3643 = vpop.permute.xlu0 %3642
        %3645 = vset.pattern.permute.xlu0 6
        %3646 = vperm.xlu0 %3645, %v780
        %v3647 = vpop.permute.xlu0 %3646
        %3649 = vset.pattern.permute.xlu0 6
        %3650 = vperm.xlu0 %3649, %v781
        %v3651 = vpop.permute.xlu0 %3650
        %v3653 = vmul.f32 %v656, %v3527
        %v3654 = vmul.f32 %v658, %v3531
        %v3655 = vmul.f32 %v660, %v3535
        %v3656 = vmul.f32 %v662, %v3539
        %v3657 = vmul.f32 %v664, %v3543
        %v3658 = vmul.f32 %v666, %v3547
        %v3659 = vmul.f32 %v668, %v3551
        %v3660 = vmul.f32 %v670, %v3555
        %v3661 = vmul.f32 %v672, %v3559
        %v3662 = vmul.f32 %v674, %v3563
        %v3663 = vmul.f32 %v676, %v3567
        %v3664 = vmul.f32 %v678, %v3571
        %v3665 = vmul.f32 %v680, %v3575
        %v3666 = vmul.f32 %v682, %v3579
        %v3667 = vmul.f32 %v684, %v3583
        %v3668 = vmul.f32 %v686, %v3587
        %v3669 = vmul.f32 %v688, %v3591
        %v3670 = vmul.f32 %v690, %v3595
        %v3671 = vmul.f32 %v692, %v3599
        %v3672 = vmul.f32 %v694, %v3603
        %v3673 = vmul.f32 %v696, %v3607
        %v3674 = vmul.f32 %v698, %v3611
        %v3675 = vmul.f32 %v700, %v3615
        %v3676 = vmul.f32 %v702, %v3619
        %v3677 = vmul.f32 %v704, %v3623
        %v3678 = vmul.f32 %v706, %v3627
        %v3679 = vmul.f32 %v708, %v3631
        %v3680 = vmul.f32 %v710, %v3635
        %v3681 = vmul.f32 %v712, %v3639
        %v3682 = vmul.f32 %v714, %v3643
        %v3683 = vmul.f32 %v749, %v3647
        %v3684 = vmul.f32 %v3651, 0.0
        %v3685 = vpack.c.bf16 %v3654, %v3653
        %v3686 = vpack.c.bf16 %v3656, %v3655
        %v3687 = vpack.c.bf16 %v3658, %v3657
        %v3688 = vpack.c.bf16 %v3660, %v3659
        %v3689 = vpack.c.bf16 %v3662, %v3661
        %v3690 = vpack.c.bf16 %v3664, %v3663
        %v3691 = vpack.c.bf16 %v3666, %v3665
        %v3692 = vpack.c.bf16 %v3668, %v3667
        %v3693 = vpack.c.bf16 %v3670, %v3669
        %v3694 = vpack.c.bf16 %v3672, %v3671
        %v3695 = vpack.c.bf16 %v3674, %v3673
        %v3696 = vpack.c.bf16 %v3676, %v3675
        %v3697 = vpack.c.bf16 %v3678, %v3677
        %v3698 = vpack.c.bf16 %v3680, %v3679
        %v3699 = vpack.c.bf16 %v3682, %v3681
        %v3700 = vpack.c.bf16 %v3684, %v3683
        %v3702 = vunpack.c.l.b16 %v3524
        %v3703 = vpack.c.b16 %v3702, %v3702
        %v3704 = vrot.slane %v3703, 1
        %v3706 = vsel %vm1378, %v3685, 0
        %v3709 = vsel %vm1378, %v3686, 0
        %v3712 = vsel %vm1378, %v3687, 0
        %v3715 = vsel %vm1378, %v3688, 0
        %v3718 = vsel %vm1378, %v3689, 0
        %v3721 = vsel %vm1378, %v3690, 0
        %v3724 = vsel %vm1378, %v3691, 0
        %v3727 = vsel %vm1378, %v3692, 0
        %v3730 = vsel %vm1378, %v3693, 0
        %v3733 = vsel %vm1378, %v3694, 0
        %v3736 = vsel %vm1378, %v3695, 0
        %v3739 = vsel %vm1378, %v3696, 0
        %v3742 = vsel %vm1378, %v3697, 0
        %v3745 = vsel %vm1378, %v3698, 0
        %v3748 = vsel %vm1378, %v3699, 0
        %v3751 = vsel %vm1378, %v3700, 0
        %v3754 = vand.u32 %v3704, %v1429
        %3756 = vmatpush.bf16.msra.mxu0 0
        %3757 = vmatpush.bf16.msra.mxu0 0
        %3758 = vmatpush.bf16.msra.mxu0 0
        %3759 = vmatpush.bf16.msra.mxu0 0
        %3760 = vmatpush.bf16.msra.mxu0 0
        %3761 = vmatpush.bf16.msra.mxu0 0
        %3762 = vmatpush.bf16.msra.mxu0 0
        %3763 = vmatpush.bf16.msra.mxu0 %v3754
        %3764 = vmatmul.bf16.gmra.mxu0 %v3706
        %v3765 = vpop.f32.mrf.mxu0
        %v3766 = vadd.f32 0.0, %v3765
        %v3767 = vpop.f32.mrf.mxu0
        %v3768 = vadd.f32 0.0, %v3767
        %3769 = vmatmul.bf16.gmra.mxu0 %v3709
        %v3770 = vpop.f32.mrf.mxu0
        %v3771 = vadd.f32 0.0, %v3770
        %v3772 = vpop.f32.mrf.mxu0
        %v3773 = vadd.f32 0.0, %v3772
        %3774 = vmatmul.bf16.gmra.mxu0 %v3712
        %v3775 = vpop.f32.mrf.mxu0
        %v3776 = vadd.f32 0.0, %v3775
        %v3777 = vpop.f32.mrf.mxu0
        %v3778 = vadd.f32 0.0, %v3777
        %3779 = vmatmul.bf16.gmra.mxu0 %v3715
        %v3780 = vpop.f32.mrf.mxu0
        %v3781 = vadd.f32 0.0, %v3780
        %v3782 = vpop.f32.mrf.mxu0
        %v3783 = vadd.f32 0.0, %v3782
        %3784 = vmatmul.bf16.gmra.mxu0 %v3718
        %v3785 = vpop.f32.mrf.mxu0
        %v3786 = vadd.f32 0.0, %v3785
        %v3787 = vpop.f32.mrf.mxu0
        %v3788 = vadd.f32 0.0, %v3787
        %3789 = vmatmul.bf16.gmra.mxu0 %v3721
        %v3790 = vpop.f32.mrf.mxu0
        %v3791 = vadd.f32 0.0, %v3790
        %v3792 = vpop.f32.mrf.mxu0
        %v3793 = vadd.f32 0.0, %v3792
        %3794 = vmatmul.bf16.gmra.mxu0 %v3724
        %v3795 = vpop.f32.mrf.mxu0
        %v3796 = vadd.f32 0.0, %v3795
        %v3797 = vpop.f32.mrf.mxu0
        %v3798 = vadd.f32 0.0, %v3797
        %3799 = vmatmul.bf16.gmra.mxu0 %v3727
        %v3800 = vpop.f32.mrf.mxu0
        %v3801 = vadd.f32 0.0, %v3800
        %v3802 = vpop.f32.mrf.mxu0
        %v3803 = vadd.f32 0.0, %v3802
        %3804 = vmatmul.bf16.gmra.mxu0 %v3730
        %v3805 = vpop.f32.mrf.mxu0
        %v3806 = vadd.f32 0.0, %v3805
        %v3807 = vpop.f32.mrf.mxu0
        %v3808 = vadd.f32 0.0, %v3807
        %3809 = vmatmul.bf16.gmra.mxu0 %v3733
        %v3810 = vpop.f32.mrf.mxu0
        %v3811 = vadd.f32 0.0, %v3810
        %v3812 = vpop.f32.mrf.mxu0
        %v3813 = vadd.f32 0.0, %v3812
        %3814 = vmatmul.bf16.gmra.mxu0 %v3736
        %v3815 = vpop.f32.mrf.mxu0
        %v3816 = vadd.f32 0.0, %v3815
        %v3817 = vpop.f32.mrf.mxu0
        %v3818 = vadd.f32 0.0, %v3817
        %3819 = vmatmul.bf16.gmra.mxu0 %v3739
        %v3820 = vpop.f32.mrf.mxu0
        %v3821 = vadd.f32 0.0, %v3820
        %v3822 = vpop.f32.mrf.mxu0
        %v3823 = vadd.f32 0.0, %v3822
        %3824 = vmatmul.bf16.gmra.mxu0 %v3742
        %v3825 = vpop.f32.mrf.mxu0
        %v3826 = vadd.f32 0.0, %v3825
        %v3827 = vpop.f32.mrf.mxu0
        %v3828 = vadd.f32 0.0, %v3827
        %3829 = vmatmul.bf16.gmra.mxu0 %v3745
        %v3830 = vpop.f32.mrf.mxu0
        %v3831 = vadd.f32 0.0, %v3830
        %v3832 = vpop.f32.mrf.mxu0
        %v3833 = vadd.f32 0.0, %v3832
        %3834 = vmatmul.bf16.gmra.mxu0 %v3748
        %v3835 = vpop.f32.mrf.mxu0
        %v3836 = vadd.f32 0.0, %v3835
        %v3837 = vpop.f32.mrf.mxu0
        %v3838 = vadd.f32 0.0, %v3837
        %3839 = vmatmul.bf16.gmra.mxu0 %v3751
        %v3840 = vpop.f32.mrf.mxu0
        %v3841 = vadd.f32 0.0, %v3840
        %v3842 = vpop.f32.mrf.mxu0
        %v3843 = vadd.f32 0.0, %v3842
        %3844 = vdwg.mxu0
        %v3845 = vadd.f32 %v3492, %v3766
        %v3846 = vadd.f32 %v3493, %v3768
        %v3847 = vadd.f32 %v3494, %v3771
        %v3848 = vadd.f32 %v3495, %v3773
        %v3849 = vadd.f32 %v3496, %v3776
        %v3850 = vadd.f32 %v3497, %v3778
        %v3851 = vadd.f32 %v3498, %v3781
        %v3852 = vadd.f32 %v3499, %v3783
        %v3853 = vadd.f32 %v3500, %v3786
        %v3854 = vadd.f32 %v3501, %v3788
        %v3855 = vadd.f32 %v3502, %v3791
        %v3856 = vadd.f32 %v3503, %v3793
        %v3857 = vadd.f32 %v3504, %v3796
        %v3858 = vadd.f32 %v3505, %v3798
        %v3859 = vadd.f32 %v3506, %v3801
        %v3860 = vadd.f32 %v3507, %v3803
        %v3861 = vadd.f32 %v3508, %v3806
        %v3862 = vadd.f32 %v3509, %v3808
        %v3863 = vadd.f32 %v3510, %v3811
        %v3864 = vadd.f32 %v3511, %v3813
        %v3865 = vadd.f32 %v3512, %v3816
        %v3866 = vadd.f32 %v3513, %v3818
        %v3867 = vadd.f32 %v3514, %v3821
        %v3868 = vadd.f32 %v3515, %v3823
        %v3869 = vadd.f32 %v3516, %v3826
        %v3870 = vadd.f32 %v3517, %v3828
        %v3871 = vadd.f32 %v3518, %v3831
        %v3872 = vadd.f32 %v3519, %v3833
        %v3873 = vadd.f32 %v3520, %v3836
        %v3874 = vadd.f32 %v3521, %v3838
        %v3875 = vadd.f32 %v3522, %v3841
        %v3876 = vadd.f32 %v3523, %v3843
        %v3877 = vld [vmem:[%s1 + $0x8] sm:$0xc]
        %3878 = vset.pattern.permute.xlu0 7
        %3879 = vperm.xlu0 %3878, %v750
        %v3880 = vpop.permute.xlu0 %3879
        %3881 = vset.pattern.permute.xlu0 7
        %3882 = vperm.xlu0 %3881, %v751
        %v3883 = vpop.permute.xlu0 %3882
        %3884 = vset.pattern.permute.xlu0 7
        %3885 = vperm.xlu0 %3884, %v752
        %v3886 = vpop.permute.xlu0 %3885
        %3887 = vset.pattern.permute.xlu0 7
        %3888 = vperm.xlu0 %3887, %v753
        %v3889 = vpop.permute.xlu0 %3888
        %3890 = vset.pattern.permute.xlu0 7
        %3891 = vperm.xlu0 %3890, %v754
        %v3892 = vpop.permute.xlu0 %3891
        %3893 = vset.pattern.permute.xlu0 7
        %3894 = vperm.xlu0 %3893, %v755
        %v3895 = vpop.permute.xlu0 %3894
        %3896 = vset.pattern.permute.xlu0 7
        %3897 = vperm.xlu0 %3896, %v756
        %v3898 = vpop.permute.xlu0 %3897
        %3899 = vset.pattern.permute.xlu0 7
        %3900 = vperm.xlu0 %3899, %v757
        %v3901 = vpop.permute.xlu0 %3900
        %3902 = vset.pattern.permute.xlu0 7
        %3903 = vperm.xlu0 %3902, %v758
        %v3904 = vpop.permute.xlu0 %3903
        %3905 = vset.pattern.permute.xlu0 7
        %3906 = vperm.xlu0 %3905, %v759
        %v3907 = vpop.permute.xlu0 %3906
        %3908 = vset.pattern.permute.xlu0 7
        %3909 = vperm.xlu0 %3908, %v760
        %v3910 = vpop.permute.xlu0 %3909
        %3911 = vset.pattern.permute.xlu0 7
        %3912 = vperm.xlu0 %3911, %v761
        %v3913 = vpop.permute.xlu0 %3912
        %3914 = vset.pattern.permute.xlu0 7
        %3915 = vperm.xlu0 %3914, %v762
        %v3916 = vpop.permute.xlu0 %3915
        %3917 = vset.pattern.permute.xlu0 7
        %3918 = vperm.xlu0 %3917, %v763
        %v3919 = vpop.permute.xlu0 %3918
        %3920 = vset.pattern.permute.xlu0 7
        %3921 = vperm.xlu0 %3920, %v764
        %v3922 = vpop.permute.xlu0 %3921
        %3923 = vset.pattern.permute.xlu0 7
        %3924 = vperm.xlu0 %3923, %v765
        %v3925 = vpop.permute.xlu0 %3924
        %3926 = vset.pattern.permute.xlu0 7
        %3927 = vperm.xlu0 %3926, %v766
        %v3928 = vpop.permute.xlu0 %3927
        %3929 = vset.pattern.permute.xlu0 7
        %3930 = vperm.xlu0 %3929, %v767
        %v3931 = vpop.permute.xlu0 %3930
        %3932 = vset.pattern.permute.xlu0 7
        %3933 = vperm.xlu0 %3932, %v768
        %v3934 = vpop.permute.xlu0 %3933
        %3935 = vset.pattern.permute.xlu0 7
        %3936 = vperm.xlu0 %3935, %v769
        %v3937 = vpop.permute.xlu0 %3936
        %3938 = vset.pattern.permute.xlu0 7
        %3939 = vperm.xlu0 %3938, %v770
        %v3940 = vpop.permute.xlu0 %3939
        %3941 = vset.pattern.permute.xlu0 7
        %3942 = vperm.xlu0 %3941, %v771
        %v3943 = vpop.permute.xlu0 %3942
        %3944 = vset.pattern.permute.xlu0 7
        %3945 = vperm.xlu0 %3944, %v772
        %v3946 = vpop.permute.xlu0 %3945
        %3947 = vset.pattern.permute.xlu0 7
        %3948 = vperm.xlu0 %3947, %v773
        %v3949 = vpop.permute.xlu0 %3948
        %3950 = vset.pattern.permute.xlu0 7
        %3951 = vperm.xlu0 %3950, %v774
        %v3952 = vpop.permute.xlu0 %3951
        %3953 = vset.pattern.permute.xlu0 7
        %3954 = vperm.xlu0 %3953, %v775
        %v3955 = vpop.permute.xlu0 %3954
        %3956 = vset.pattern.permute.xlu0 7
        %3957 = vperm.xlu0 %3956, %v776
        %v3958 = vpop.permute.xlu0 %3957
        %3959 = vset.pattern.permute.xlu0 7
        %3960 = vperm.xlu0 %3959, %v777
        %v3961 = vpop.permute.xlu0 %3960
        %3962 = vset.pattern.permute.xlu0 7
        %3963 = vperm.xlu0 %3962, %v778
        %v3964 = vpop.permute.xlu0 %3963
        %3965 = vset.pattern.permute.xlu0 7
        %3966 = vperm.xlu0 %3965, %v779
        %v3967 = vpop.permute.xlu0 %3966
        %3968 = vset.pattern.permute.xlu0 7
        %3969 = vperm.xlu0 %3968, %v780
        %v3970 = vpop.permute.xlu0 %3969
        %3971 = vset.pattern.permute.xlu0 7
        %3972 = vperm.xlu0 %3971, %v781
        %v3973 = vpop.permute.xlu0 %3972
        %v3974 = vrot.slane %v3880, 7
        %v3975 = vrot.slane %v3883, 7
        %v3976 = vsel %vm651, %v3974, %v3975
        %v3977 = vrot.slane %v3886, 7
        %v3978 = vsel %vm651, %v3975, %v3977
        %v3979 = vrot.slane %v3889, 7
        %v3980 = vsel %vm651, %v3977, %v3979
        %v3981 = vrot.slane %v3892, 7
        %v3982 = vsel %vm651, %v3979, %v3981
        %v3983 = vrot.slane %v3895, 7
        %v3984 = vsel %vm651, %v3981, %v3983
        %v3985 = vrot.slane %v3898, 7
        %v3986 = vsel %vm651, %v3983, %v3985
        %v3987 = vrot.slane %v3901, 7
        %v3988 = vsel %vm651, %v3985, %v3987
        %v3989 = vrot.slane %v3904, 7
        %v3990 = vsel %vm651, %v3987, %v3989
        %v3991 = vrot.slane %v3907, 7
        %v3992 = vsel %vm651, %v3989, %v3991
        %v3993 = vrot.slane %v3910, 7
        %v3994 = vsel %vm651, %v3991, %v3993
        %v3995 = vrot.slane %v3913, 7
        %v3996 = vsel %vm651, %v3993, %v3995
        %v3997 = vrot.slane %v3916, 7
        %v3998 = vsel %vm651, %v3995, %v3997
        %v3999 = vrot.slane %v3919, 7
        %v4000 = vsel %vm651, %v3997, %v3999
        %v4001 = vrot.slane %v3922, 7
        %v4002 = vsel %vm651, %v3999, %v4001
        %v4003 = vrot.slane %v3925, 7
        %v4004 = vsel %vm651, %v4001, %v4003
        %v4005 = vrot.slane %v3928, 7
        %v4006 = vsel %vm651, %v4003, %v4005
        %v4007 = vrot.slane %v3931, 7
        %v4008 = vsel %vm651, %v4005, %v4007
        %v4009 = vrot.slane %v3934, 7
        %v4010 = vsel %vm651, %v4007, %v4009
        %v4011 = vrot.slane %v3937, 7
        %v4012 = vsel %vm651, %v4009, %v4011
        %v4013 = vrot.slane %v3940, 7
        %v4014 = vsel %vm651, %v4011, %v4013
        %v4015 = vrot.slane %v3943, 7
        %v4016 = vsel %vm651, %v4013, %v4015
        %v4017 = vrot.slane %v3946, 7
        %v4018 = vsel %vm651, %v4015, %v4017
        %v4019 = vrot.slane %v3949, 7
        %v4020 = vsel %vm651, %v4017, %v4019
        %v4021 = vrot.slane %v3952, 7
        %v4022 = vsel %vm651, %v4019, %v4021
        %v4023 = vrot.slane %v3955, 7
        %v4024 = vsel %vm651, %v4021, %v4023
        %v4025 = vrot.slane %v3958, 7
        %v4026 = vsel %vm651, %v4023, %v4025
        %v4027 = vrot.slane %v3961, 7
        %v4028 = vsel %vm651, %v4025, %v4027
        %v4029 = vrot.slane %v3964, 7
        %v4030 = vsel %vm651, %v4027, %v4029
        %v4031 = vrot.slane %v3967, 7
        %v4032 = vsel %vm651, %v4029, %v4031
        %v4033 = vrot.slane %v3970, 7
        %v4034 = vsel %vm651, %v4031, %v4033
        %v4035 = vrot.slane %v3973, 7
        %v4036 = vsel %vm651, %v4033, %v4035
        %v4070 = vmul.f32 %v656, %v3974
        %v4071 = vmul.f32 %v658, %v3976
        %v4072 = vmul.f32 %v660, %v3978
        %v4073 = vmul.f32 %v662, %v3980
        %v4074 = vmul.f32 %v664, %v3982
        %v4075 = vmul.f32 %v666, %v3984
        %v4076 = vmul.f32 %v668, %v3986
        %v4077 = vmul.f32 %v670, %v3988
        %v4078 = vmul.f32 %v672, %v3990
        %v4079 = vmul.f32 %v674, %v3992
        %v4080 = vmul.f32 %v676, %v3994
        %v4081 = vmul.f32 %v678, %v3996
        %v4082 = vmul.f32 %v680, %v3998
        %v4083 = vmul.f32 %v682, %v4000
        %v4084 = vmul.f32 %v684, %v4002
        %v4085 = vmul.f32 %v686, %v4004
        %v4086 = vmul.f32 %v688, %v4006
        %v4087 = vmul.f32 %v690, %v4008
        %v4088 = vmul.f32 %v692, %v4010
        %v4089 = vmul.f32 %v694, %v4012
        %v4090 = vmul.f32 %v696, %v4014
        %v4091 = vmul.f32 %v698, %v4016
        %v4092 = vmul.f32 %v700, %v4018
        %v4093 = vmul.f32 %v702, %v4020
        %v4094 = vmul.f32 %v704, %v4022
        %v4095 = vmul.f32 %v706, %v4024
        %v4096 = vmul.f32 %v708, %v4026
        %v4097 = vmul.f32 %v710, %v4028
        %v4098 = vmul.f32 %v712, %v4030
        %v4099 = vmul.f32 %v714, %v4032
        %v4100 = vmul.f32 %v749, %v4034
        %v4101 = vmul.f32 %v4036, 0.0
        %v4102 = vmul.f32 %v4035, 0.0
        %v4103 = vpack.c.bf16 %v4071, %v4070
        %v4104 = vpack.c.bf16 %v4073, %v4072
        %v4105 = vpack.c.bf16 %v4075, %v4074
        %v4106 = vpack.c.bf16 %v4077, %v4076
        %v4107 = vpack.c.bf16 %v4079, %v4078
        %v4108 = vpack.c.bf16 %v4081, %v4080
        %v4109 = vpack.c.bf16 %v4083, %v4082
        %v4110 = vpack.c.bf16 %v4085, %v4084
        %v4111 = vpack.c.bf16 %v4087, %v4086
        %v4112 = vpack.c.bf16 %v4089, %v4088
        %v4113 = vpack.c.bf16 %v4091, %v4090
        %v4114 = vpack.c.bf16 %v4093, %v4092
        %v4115 = vpack.c.bf16 %v4095, %v4094
        %v4116 = vpack.c.bf16 %v4097, %v4096
        %v4117 = vpack.c.bf16 %v4099, %v4098
        %v4118 = vpack.c.bf16 %v4101, %v4100
        %v4119 = vpack.c.bf16 %v4102, %v4102
        %v4121 = vshrl.u32 %v4103, 16
        %v4123 = vshll.u32 %v4103, 16
        %v4125 = vrot.slane %v4123, 1
        %v4126 = vor.u32 %v4121, %v4125
        %v4128 = vshll.u32 %v4104, 16
        %v4130 = vrot.slane %v4128, 1
        %v4131 = vsel %vm1234, %v4126, %v4130
        %v4132 = vshrl.u32 %v4104, 16
        %v4134 = vor.u32 %v4132, %v4130
        %v4136 = vshll.u32 %v4105, 16
        %v4138 = vrot.slane %v4136, 1
        %v4139 = vsel %vm1234, %v4134, %v4138
        %v4140 = vshrl.u32 %v4105, 16
        %v4142 = vor.u32 %v4140, %v4138
        %v4144 = vshll.u32 %v4106, 16
        %v4146 = vrot.slane %v4144, 1
        %v4147 = vsel %vm1234, %v4142, %v4146
        %v4148 = vshrl.u32 %v4106, 16
        %v4150 = vor.u32 %v4148, %v4146
        %v4152 = vshll.u32 %v4107, 16
        %v4154 = vrot.slane %v4152, 1
        %v4155 = vsel %vm1234, %v4150, %v4154
        %v4156 = vshrl.u32 %v4107, 16
        %v4158 = vor.u32 %v4156, %v4154
        %v4160 = vshll.u32 %v4108, 16
        %v4162 = vrot.slane %v4160, 1
        %v4163 = vsel %vm1234, %v4158, %v4162
        %v4164 = vshrl.u32 %v4108, 16
        %v4166 = vor.u32 %v4164, %v4162
        %v4168 = vshll.u32 %v4109, 16
        %v4170 = vrot.slane %v4168, 1
        %v4171 = vsel %vm1234, %v4166, %v4170
        %v4172 = vshrl.u32 %v4109, 16
        %v4174 = vor.u32 %v4172, %v4170
        %v4176 = vshll.u32 %v4110, 16
        %v4178 = vrot.slane %v4176, 1
        %v4179 = vsel %vm1234, %v4174, %v4178
        %v4180 = vshrl.u32 %v4110, 16
        %v4182 = vor.u32 %v4180, %v4178
        %v4184 = vshll.u32 %v4111, 16
        %v4186 = vrot.slane %v4184, 1
        %v4187 = vsel %vm1234, %v4182, %v4186
        %v4188 = vshrl.u32 %v4111, 16
        %v4190 = vor.u32 %v4188, %v4186
        %v4192 = vshll.u32 %v4112, 16
        %v4194 = vrot.slane %v4192, 1
        %v4195 = vsel %vm1234, %v4190, %v4194
        %v4196 = vshrl.u32 %v4112, 16
        %v4198 = vor.u32 %v4196, %v4194
        %v4200 = vshll.u32 %v4113, 16
        %v4202 = vrot.slane %v4200, 1
        %v4203 = vsel %vm1234, %v4198, %v4202
        %v4204 = vshrl.u32 %v4113, 16
        %v4206 = vor.u32 %v4204, %v4202
        %v4208 = vshll.u32 %v4114, 16
        %v4210 = vrot.slane %v4208, 1
        %v4211 = vsel %vm1234, %v4206, %v4210
        %v4212 = vshrl.u32 %v4114, 16
        %v4214 = vor.u32 %v4212, %v4210
        %v4216 = vshll.u32 %v4115, 16
        %v4218 = vrot.slane %v4216, 1
        %v4219 = vsel %vm1234, %v4214, %v4218
        %v4220 = vshrl.u32 %v4115, 16
        %v4222 = vor.u32 %v4220, %v4218
        %v4224 = vshll.u32 %v4116, 16
        %v4226 = vrot.slane %v4224, 1
        %v4227 = vsel %vm1234, %v4222, %v4226
        %v4228 = vshrl.u32 %v4116, 16
        %v4230 = vor.u32 %v4228, %v4226
        %v4232 = vshll.u32 %v4117, 16
        %v4234 = vrot.slane %v4232, 1
        %v4235 = vsel %vm1234, %v4230, %v4234
        %v4236 = vshrl.u32 %v4117, 16
        %v4238 = vor.u32 %v4236, %v4234
        %v4240 = vshll.u32 %v4118, 16
        %v4242 = vrot.slane %v4240, 1
        %v4243 = vsel %vm1234, %v4238, %v4242
        %v4244 = vshrl.u32 %v4118, 16
        %v4246 = vor.u32 %v4244, %v4242
        %v4248 = vshll.u32 %v4119, 16
        %v4250 = vrot.slane %v4248, 1
        %v4251 = vsel %vm1234, %v4246, %v4250
        %v4253 = vunpack.c.l.b16 %v3877
        %v4254 = vpack.c.b16 %v4253, %v4253
        %v4256 = vshrl.u32 %v4254, 16
        %v4258 = vrot.slane %v4256, 2
        %v4259 = vshll.u32 %v4254, 16
        %v4261 = vrot.slane %v4259, 3
        %v4262 = vor.u32 %v4258, %v4261
        %v4264 = vsel %vm1378, %v4131, 0
        %v4267 = vsel %vm1378, %v4139, 0
        %v4270 = vsel %vm1378, %v4147, 0
        %v4273 = vsel %vm1378, %v4155, 0
        %v4276 = vsel %vm1378, %v4163, 0
        %v4279 = vsel %vm1378, %v4171, 0
        %v4282 = vsel %vm1378, %v4179, 0
        %v4285 = vsel %vm1378, %v4187, 0
        %v4288 = vsel %vm1378, %v4195, 0
        %v4291 = vsel %vm1378, %v4203, 0
        %v4294 = vsel %vm1378, %v4211, 0
        %v4297 = vsel %vm1378, %v4219, 0
        %v4300 = vsel %vm1378, %v4227, 0
        %v4303 = vsel %vm1378, %v4235, 0
        %v4306 = vsel %vm1378, %v4243, 0
        %v4309 = vsel %vm1378, %v4251, 0
        %v4312 = vand.u32 %v4262, %v1429
        %4314 = vmatpush.bf16.msra.mxu0 0
        %4315 = vmatpush.bf16.msra.mxu0 0
        %4316 = vmatpush.bf16.msra.mxu0 0
        %4317 = vmatpush.bf16.msra.mxu0 0
        %4318 = vmatpush.bf16.msra.mxu0 0
        %4319 = vmatpush.bf16.msra.mxu0 0
        %4320 = vmatpush.bf16.msra.mxu0 0
        %4321 = vmatpush.bf16.msra.mxu0 %v4312
        %4322 = vmatmul.bf16.gmra.mxu0 %v4264
        %v4323 = vpop.f32.mrf.mxu0
        %v4324 = vadd.f32 0.0, %v4323
        %v4325 = vpop.f32.mrf.mxu0
        %v4326 = vadd.f32 0.0, %v4325
        %4327 = vmatmul.bf16.gmra.mxu0 %v4267
        %v4328 = vpop.f32.mrf.mxu0
        %v4329 = vadd.f32 0.0, %v4328
        %v4330 = vpop.f32.mrf.mxu0
        %v4331 = vadd.f32 0.0, %v4330
        %4332 = vmatmul.bf16.gmra.mxu0 %v4270
        %v4333 = vpop.f32.mrf.mxu0
        %v4334 = vadd.f32 0.0, %v4333
        %v4335 = vpop.f32.mrf.mxu0
        %v4336 = vadd.f32 0.0, %v4335
        %4337 = vmatmul.bf16.gmra.mxu0 %v4273
        %v4338 = vpop.f32.mrf.mxu0
        %v4339 = vadd.f32 0.0, %v4338
        %v4340 = vpop.f32.mrf.mxu0
        %v4341 = vadd.f32 0.0, %v4340
        %4342 = vmatmul.bf16.gmra.mxu0 %v4276
        %v4343 = vpop.f32.mrf.mxu0
        %v4344 = vadd.f32 0.0, %v4343
        %v4345 = vpop.f32.mrf.mxu0
        %v4346 = vadd.f32 0.0, %v4345
        %4347 = vmatmul.bf16.gmra.mxu0 %v4279
        %v4348 = vpop.f32.mrf.mxu0
        %v4349 = vadd.f32 0.0, %v4348
        %v4350 = vpop.f32.mrf.mxu0
        %v4351 = vadd.f32 0.0, %v4350
        %4352 = vmatmul.bf16.gmra.mxu0 %v4282
        %v4353 = vpop.f32.mrf.mxu0
        %v4354 = vadd.f32 0.0, %v4353
        %v4355 = vpop.f32.mrf.mxu0
        %v4356 = vadd.f32 0.0, %v4355
        %4357 = vmatmul.bf16.gmra.mxu0 %v4285
        %v4358 = vpop.f32.mrf.mxu0
        %v4359 = vadd.f32 0.0, %v4358
        %v4360 = vpop.f32.mrf.mxu0
        %v4361 = vadd.f32 0.0, %v4360
        %4362 = vmatmul.bf16.gmra.mxu0 %v4288
        %v4363 = vpop.f32.mrf.mxu0
        %v4364 = vadd.f32 0.0, %v4363
        %v4365 = vpop.f32.mrf.mxu0
        %v4366 = vadd.f32 0.0, %v4365
        %4367 = vmatmul.bf16.gmra.mxu0 %v4291
        %v4368 = vpop.f32.mrf.mxu0
        %v4369 = vadd.f32 0.0, %v4368
        %v4370 = vpop.f32.mrf.mxu0
        %v4371 = vadd.f32 0.0, %v4370
        %4372 = vmatmul.bf16.gmra.mxu0 %v4294
        %v4373 = vpop.f32.mrf.mxu0
        %v4374 = vadd.f32 0.0, %v4373
        %v4375 = vpop.f32.mrf.mxu0
        %v4376 = vadd.f32 0.0, %v4375
        %4377 = vmatmul.bf16.gmra.mxu0 %v4297
        %v4378 = vpop.f32.mrf.mxu0
        %v4379 = vadd.f32 0.0, %v4378
        %v4380 = vpop.f32.mrf.mxu0
        %v4381 = vadd.f32 0.0, %v4380
        %4382 = vmatmul.bf16.gmra.mxu0 %v4300
        %v4383 = vpop.f32.mrf.mxu0
        %v4384 = vadd.f32 0.0, %v4383
        %v4385 = vpop.f32.mrf.mxu0
        %v4386 = vadd.f32 0.0, %v4385
        %4387 = vmatmul.bf16.gmra.mxu0 %v4303
        %v4388 = vpop.f32.mrf.mxu0
        %v4389 = vadd.f32 0.0, %v4388
        %v4390 = vpop.f32.mrf.mxu0
        %v4391 = vadd.f32 0.0, %v4390
        %4392 = vmatmul.bf16.gmra.mxu0 %v4306
        %v4393 = vpop.f32.mrf.mxu0
        %v4394 = vadd.f32 0.0, %v4393
        %v4395 = vpop.f32.mrf.mxu0
        %v4396 = vadd.f32 0.0, %v4395
        %4397 = vmatmul.bf16.gmra.mxu0 %v4309
        %v4398 = vpop.f32.mrf.mxu0
        %v4399 = vadd.f32 0.0, %v4398
        %v4400 = vpop.f32.mrf.mxu0
        %v4401 = vadd.f32 0.0, %v4400
        %4402 = vdwg.mxu0
        %v4403 = vadd.f32 %v3845, %v4324
        %v4404 = vadd.f32 %v3846, %v4326
        %v4405 = vadd.f32 %v3847, %v4329
        %v4406 = vadd.f32 %v3848, %v4331
        %v4407 = vadd.f32 %v3849, %v4334
        %v4408 = vadd.f32 %v3850, %v4336
        %v4409 = vadd.f32 %v3851, %v4339
        %v4410 = vadd.f32 %v3852, %v4341
        %v4411 = vadd.f32 %v3853, %v4344
        %v4412 = vadd.f32 %v3854, %v4346
        %v4413 = vadd.f32 %v3855, %v4349
        %v4414 = vadd.f32 %v3856, %v4351
        %v4415 = vadd.f32 %v3857, %v4354
        %v4416 = vadd.f32 %v3858, %v4356
        %v4417 = vadd.f32 %v3859, %v4359
        %v4418 = vadd.f32 %v3860, %v4361
        %v4419 = vadd.f32 %v3861, %v4364
        %v4420 = vadd.f32 %v3862, %v4366
        %v4421 = vadd.f32 %v3863, %v4369
        %v4422 = vadd.f32 %v3864, %v4371
        %v4423 = vadd.f32 %v3865, %v4374
        %v4424 = vadd.f32 %v3866, %v4376
        %v4425 = vadd.f32 %v3867, %v4379
        %v4426 = vadd.f32 %v3868, %v4381
        %v4427 = vadd.f32 %v3869, %v4384
        %v4428 = vadd.f32 %v3870, %v4386
        %v4429 = vadd.f32 %v3871, %v4389
        %v4430 = vadd.f32 %v3872, %v4391
        %v4431 = vadd.f32 %v3873, %v4394
        %v4432 = vadd.f32 %v3874, %v4396
        %v4433 = vadd.f32 %v3875, %v4399
        %v4434 = vadd.f32 %v3876, %v4401
        %v4435 = vld [vmem:[%s1 + $0xc] sm:$0x3]
        %4436 = vset.pattern.permute.xlu0 8
        %4437 = vperm.xlu0 %4436, %v750
        %v4438 = vpop.permute.xlu0 %4437
        %4439 = vset.pattern.permute.xlu0 8
        %4440 = vperm.xlu0 %4439, %v751
        %v4441 = vpop.permute.xlu0 %4440
        %4442 = vset.pattern.permute.xlu0 8
        %4443 = vperm.xlu0 %4442, %v752
        %v4444 = vpop.permute.xlu0 %4443
        %4445 = vset.pattern.permute.xlu0 8
        %4446 = vperm.xlu0 %4445, %v753
        %v4447 = vpop.permute.xlu0 %4446
        %4448 = vset.pattern.permute.xlu0 8
        %4449 = vperm.xlu0 %4448, %v754
        %v4450 = vpop.permute.xlu0 %4449
        %4451 = vset.pattern.permute.xlu0 8
        %4452 = vperm.xlu0 %4451, %v755
        %v4453 = vpop.permute.xlu0 %4452
        %4454 = vset.pattern.permute.xlu0 8
        %4455 = vperm.xlu0 %4454, %v756
        %v4456 = vpop.permute.xlu0 %4455
        %4457 = vset.pattern.permute.xlu0 8
        %4458 = vperm.xlu0 %4457, %v757
        %v4459 = vpop.permute.xlu0 %4458
        %4460 = vset.pattern.permute.xlu0 8
        %4461 = vperm.xlu0 %4460, %v758
        %v4462 = vpop.permute.xlu0 %4461
        %4463 = vset.pattern.permute.xlu0 8
        %4464 = vperm.xlu0 %4463, %v759
        %v4465 = vpop.permute.xlu0 %4464
        %4466 = vset.pattern.permute.xlu0 8
        %4467 = vperm.xlu0 %4466, %v760
        %v4468 = vpop.permute.xlu0 %4467
        %4469 = vset.pattern.permute.xlu0 8
        %4470 = vperm.xlu0 %4469, %v761
        %v4471 = vpop.permute.xlu0 %4470
        %4472 = vset.pattern.permute.xlu0 8
        %4473 = vperm.xlu0 %4472, %v762
        %v4474 = vpop.permute.xlu0 %4473
        %4475 = vset.pattern.permute.xlu0 8
        %4476 = vperm.xlu0 %4475, %v763
        %v4477 = vpop.permute.xlu0 %4476
        %4478 = vset.pattern.permute.xlu0 8
        %4479 = vperm.xlu0 %4478, %v764
        %v4480 = vpop.permute.xlu0 %4479
        %4481 = vset.pattern.permute.xlu0 8
        %4482 = vperm.xlu0 %4481, %v765
        %v4483 = vpop.permute.xlu0 %4482
        %4484 = vset.pattern.permute.xlu0 8
        %4485 = vperm.xlu0 %4484, %v766
        %v4486 = vpop.permute.xlu0 %4485
        %4487 = vset.pattern.permute.xlu0 8
        %4488 = vperm.xlu0 %4487, %v767
        %v4489 = vpop.permute.xlu0 %4488
        %4490 = vset.pattern.permute.xlu0 8
        %4491 = vperm.xlu0 %4490, %v768
        %v4492 = vpop.permute.xlu0 %4491
        %4493 = vset.pattern.permute.xlu0 8
        %4494 = vperm.xlu0 %4493, %v769
        %v4495 = vpop.permute.xlu0 %4494
        %4496 = vset.pattern.permute.xlu0 8
        %4497 = vperm.xlu0 %4496, %v770
        %v4498 = vpop.permute.xlu0 %4497
        %4499 = vset.pattern.permute.xlu0 8
        %4500 = vperm.xlu0 %4499, %v771
        %v4501 = vpop.permute.xlu0 %4500
        %4502 = vset.pattern.permute.xlu0 8
        %4503 = vperm.xlu0 %4502, %v772
        %v4504 = vpop.permute.xlu0 %4503
        %4505 = vset.pattern.permute.xlu0 8
        %4506 = vperm.xlu0 %4505, %v773
        %v4507 = vpop.permute.xlu0 %4506
        %4508 = vset.pattern.permute.xlu0 8
        %4509 = vperm.xlu0 %4508, %v774
        %v4510 = vpop.permute.xlu0 %4509
        %4511 = vset.pattern.permute.xlu0 8
        %4512 = vperm.xlu0 %4511, %v775
        %v4513 = vpop.permute.xlu0 %4512
        %4514 = vset.pattern.permute.xlu0 8
        %4515 = vperm.xlu0 %4514, %v776
        %v4516 = vpop.permute.xlu0 %4515
        %4517 = vset.pattern.permute.xlu0 8
        %4518 = vperm.xlu0 %4517, %v777
        %v4519 = vpop.permute.xlu0 %4518
        %4520 = vset.pattern.permute.xlu0 8
        %4521 = vperm.xlu0 %4520, %v778
        %v4522 = vpop.permute.xlu0 %4521
        %4523 = vset.pattern.permute.xlu0 8
        %4524 = vperm.xlu0 %4523, %v779
        %v4525 = vpop.permute.xlu0 %4524
        %4526 = vset.pattern.permute.xlu0 8
        %4527 = vperm.xlu0 %4526, %v780
        %v4528 = vpop.permute.xlu0 %4527
        %4529 = vset.pattern.permute.xlu0 8
        %4530 = vperm.xlu0 %4529, %v781
        %v4531 = vpop.permute.xlu0 %4530
        %v4532 = vrot.slane %v4438, 6
        %v4533 = vrot.slane %v4441, 6
        %v4534 = vsel %vm1427, %v4532, %v4533
        %v4535 = vrot.slane %v4444, 6
        %v4536 = vsel %vm1427, %v4533, %v4535
        %v4537 = vrot.slane %v4447, 6
        %v4538 = vsel %vm1427, %v4535, %v4537
        %v4539 = vrot.slane %v4450, 6
        %v4540 = vsel %vm1427, %v4537, %v4539
        %v4541 = vrot.slane %v4453, 6
        %v4542 = vsel %vm1427, %v4539, %v4541
        %v4543 = vrot.slane %v4456, 6
        %v4544 = vsel %vm1427, %v4541, %v4543
        %v4545 = vrot.slane %v4459, 6
        %v4546 = vsel %vm1427, %v4543, %v4545
        %v4547 = vrot.slane %v4462, 6
        %v4548 = vsel %vm1427, %v4545, %v4547
        %v4549 = vrot.slane %v4465, 6
        %v4550 = vsel %vm1427, %v4547, %v4549
        %v4551 = vrot.slane %v4468, 6
        %v4552 = vsel %vm1427, %v4549, %v4551
        %v4553 = vrot.slane %v4471, 6
        %v4554 = vsel %vm1427, %v4551, %v4553
        %v4555 = vrot.slane %v4474, 6
        %v4556 = vsel %vm1427, %v4553, %v4555
        %v4557 = vrot.slane %v4477, 6
        %v4558 = vsel %vm1427, %v4555, %v4557
        %v4559 = vrot.slane %v4480, 6
        %v4560 = vsel %vm1427, %v4557, %v4559
        %v4561 = vrot.slane %v4483, 6
        %v4562 = vsel %vm1427, %v4559, %v4561
        %v4563 = vrot.slane %v4486, 6
        %v4564 = vsel %vm1427, %v4561, %v4563
        %v4565 = vrot.slane %v4489, 6
        %v4566 = vsel %vm1427, %v4563, %v4565
        %v4567 = vrot.slane %v4492, 6
        %v4568 = vsel %vm1427, %v4565, %v4567
        %v4569 = vrot.slane %v4495, 6
        %v4570 = vsel %vm1427, %v4567, %v4569
        %v4571 = vrot.slane %v4498, 6
        %v4572 = vsel %vm1427, %v4569, %v4571
        %v4573 = vrot.slane %v4501, 6
        %v4574 = vsel %vm1427, %v4571, %v4573
        %v4575 = vrot.slane %v4504, 6
        %v4576 = vsel %vm1427, %v4573, %v4575
        %v4577 = vrot.slane %v4507, 6
        %v4578 = vsel %vm1427, %v4575, %v4577
        %v4579 = vrot.slane %v4510, 6
        %v4580 = vsel %vm1427, %v4577, %v4579
        %v4581 = vrot.slane %v4513, 6
        %v4582 = vsel %vm1427, %v4579, %v4581
        %v4583 = vrot.slane %v4516, 6
        %v4584 = vsel %vm1427, %v4581, %v4583
        %v4585 = vrot.slane %v4519, 6
        %v4586 = vsel %vm1427, %v4583, %v4585
        %v4587 = vrot.slane %v4522, 6
        %v4588 = vsel %vm1427, %v4585, %v4587
        %v4589 = vrot.slane %v4525, 6
        %v4590 = vsel %vm1427, %v4587, %v4589
        %v4591 = vrot.slane %v4528, 6
        %v4592 = vsel %vm1427, %v4589, %v4591
        %v4593 = vrot.slane %v4531, 6
        %v4594 = vsel %vm1427, %v4591, %v4593
        %v4628 = vmul.f32 %v656, %v4532
        %v4629 = vmul.f32 %v658, %v4534
        %v4630 = vmul.f32 %v660, %v4536
        %v4631 = vmul.f32 %v662, %v4538
        %v4632 = vmul.f32 %v664, %v4540
        %v4633 = vmul.f32 %v666, %v4542
        %v4634 = vmul.f32 %v668, %v4544
        %v4635 = vmul.f32 %v670, %v4546
        %v4636 = vmul.f32 %v672, %v4548
        %v4637 = vmul.f32 %v674, %v4550
        %v4638 = vmul.f32 %v676, %v4552
        %v4639 = vmul.f32 %v678, %v4554
        %v4640 = vmul.f32 %v680, %v4556
        %v4641 = vmul.f32 %v682, %v4558
        %v4642 = vmul.f32 %v684, %v4560
        %v4643 = vmul.f32 %v686, %v4562
        %v4644 = vmul.f32 %v688, %v4564
        %v4645 = vmul.f32 %v690, %v4566
        %v4646 = vmul.f32 %v692, %v4568
        %v4647 = vmul.f32 %v694, %v4570
        %v4648 = vmul.f32 %v696, %v4572
        %v4649 = vmul.f32 %v698, %v4574
        %v4650 = vmul.f32 %v700, %v4576
        %v4651 = vmul.f32 %v702, %v4578
        %v4652 = vmul.f32 %v704, %v4580
        %v4653 = vmul.f32 %v706, %v4582
        %v4654 = vmul.f32 %v708, %v4584
        %v4655 = vmul.f32 %v710, %v4586
        %v4656 = vmul.f32 %v712, %v4588
        %v4657 = vmul.f32 %v714, %v4590
        %v4658 = vmul.f32 %v749, %v4592
        %v4659 = vmul.f32 %v4594, 0.0
        %v4660 = vmul.f32 %v4593, 0.0
        %v4661 = vpack.c.bf16 %v4629, %v4628
        %v4662 = vpack.c.bf16 %v4631, %v4630
        %v4663 = vpack.c.bf16 %v4633, %v4632
        %v4664 = vpack.c.bf16 %v4635, %v4634
        %v4665 = vpack.c.bf16 %v4637, %v4636
        %v4666 = vpack.c.bf16 %v4639, %v4638
        %v4667 = vpack.c.bf16 %v4641, %v4640
        %v4668 = vpack.c.bf16 %v4643, %v4642
        %v4669 = vpack.c.bf16 %v4645, %v4644
        %v4670 = vpack.c.bf16 %v4647, %v4646
        %v4671 = vpack.c.bf16 %v4649, %v4648
        %v4672 = vpack.c.bf16 %v4651, %v4650
        %v4673 = vpack.c.bf16 %v4653, %v4652
        %v4674 = vpack.c.bf16 %v4655, %v4654
        %v4675 = vpack.c.bf16 %v4657, %v4656
        %v4676 = vpack.c.bf16 %v4659, %v4658
        %v4677 = vpack.c.bf16 %v4660, %v4660
        %v4695 = vrot.slane %v4661, 1
        %v4696 = vrot.slane %v4662, 1
        %v4697 = vsel %vm1923, %v4695, %v4696
        %v4698 = vrot.slane %v4663, 1
        %v4699 = vsel %vm1923, %v4696, %v4698
        %v4700 = vrot.slane %v4664, 1
        %v4701 = vsel %vm1923, %v4698, %v4700
        %v4702 = vrot.slane %v4665, 1
        %v4703 = vsel %vm1923, %v4700, %v4702
        %v4704 = vrot.slane %v4666, 1
        %v4705 = vsel %vm1923, %v4702, %v4704
        %v4706 = vrot.slane %v4667, 1
        %v4707 = vsel %vm1923, %v4704, %v4706
        %v4708 = vrot.slane %v4668, 1
        %v4709 = vsel %vm1923, %v4706, %v4708
        %v4710 = vrot.slane %v4669, 1
        %v4711 = vsel %vm1923, %v4708, %v4710
        %v4712 = vrot.slane %v4670, 1
        %v4713 = vsel %vm1923, %v4710, %v4712
        %v4714 = vrot.slane %v4671, 1
        %v4715 = vsel %vm1923, %v4712, %v4714
        %v4716 = vrot.slane %v4672, 1
        %v4717 = vsel %vm1923, %v4714, %v4716
        %v4718 = vrot.slane %v4673, 1
        %v4719 = vsel %vm1923, %v4716, %v4718
        %v4720 = vrot.slane %v4674, 1
        %v4721 = vsel %vm1923, %v4718, %v4720
        %v4722 = vrot.slane %v4675, 1
        %v4723 = vsel %vm1923, %v4720, %v4722
        %v4724 = vrot.slane %v4676, 1
        %v4725 = vsel %vm1923, %v4722, %v4724
        %v4726 = vrot.slane %v4677, 1
        %v4727 = vsel %vm1923, %v4724, %v4726
        %v4729 = vsel %vm1378, %v4697, 0
        %v4732 = vsel %vm1378, %v4699, 0
        %v4735 = vsel %vm1378, %v4701, 0
        %v4738 = vsel %vm1378, %v4703, 0
        %v4741 = vsel %vm1378, %v4705, 0
        %v4744 = vsel %vm1378, %v4707, 0
        %v4747 = vsel %vm1378, %v4709, 0
        %v4750 = vsel %vm1378, %v4711, 0
        %v4753 = vsel %vm1378, %v4713, 0
        %v4756 = vsel %vm1378, %v4715, 0
        %v4759 = vsel %vm1378, %v4717, 0
        %v4762 = vsel %vm1378, %v4719, 0
        %v4765 = vsel %vm1378, %v4721, 0
        %v4768 = vsel %vm1378, %v4723, 0
        %v4771 = vsel %vm1378, %v4725, 0
        %v4774 = vsel %vm1378, %v4727, 0
        %v4777 = vand.u32 %v4435, %v1429
        %4779 = vmatpush.bf16.msra.mxu0 0
        %4780 = vmatpush.bf16.msra.mxu0 0
        %4781 = vmatpush.bf16.msra.mxu0 0
        %4782 = vmatpush.bf16.msra.mxu0 0
        %4783 = vmatpush.bf16.msra.mxu0 0
        %4784 = vmatpush.bf16.msra.mxu0 0
        %4785 = vmatpush.bf16.msra.mxu0 0
        %4786 = vmatpush.bf16.msra.mxu0 %v4777
        %4787 = vmatmul.bf16.gmra.mxu0 %v4729
        %v4788 = vpop.f32.mrf.mxu0
        %v4789 = vadd.f32 0.0, %v4788
        %v4790 = vpop.f32.mrf.mxu0
        %v4791 = vadd.f32 0.0, %v4790
        %4792 = vmatmul.bf16.gmra.mxu0 %v4732
        %v4793 = vpop.f32.mrf.mxu0
        %v4794 = vadd.f32 0.0, %v4793
        %v4795 = vpop.f32.mrf.mxu0
        %v4796 = vadd.f32 0.0, %v4795
        %4797 = vmatmul.bf16.gmra.mxu0 %v4735
        %v4798 = vpop.f32.mrf.mxu0
        %v4799 = vadd.f32 0.0, %v4798
        %v4800 = vpop.f32.mrf.mxu0
        %v4801 = vadd.f32 0.0, %v4800
        %4802 = vmatmul.bf16.gmra.mxu0 %v4738
        %v4803 = vpop.f32.mrf.mxu0
        %v4804 = vadd.f32 0.0, %v4803
        %v4805 = vpop.f32.mrf.mxu0
        %v4806 = vadd.f32 0.0, %v4805
        %4807 = vmatmul.bf16.gmra.mxu0 %v4741
        %v4808 = vpop.f32.mrf.mxu0
        %v4809 = vadd.f32 0.0, %v4808
        %v4810 = vpop.f32.mrf.mxu0
        %v4811 = vadd.f32 0.0, %v4810
        %4812 = vmatmul.bf16.gmra.mxu0 %v4744
        %v4813 = vpop.f32.mrf.mxu0
        %v4814 = vadd.f32 0.0, %v4813
        %v4815 = vpop.f32.mrf.mxu0
        %v4816 = vadd.f32 0.0, %v4815
        %4817 = vmatmul.bf16.gmra.mxu0 %v4747
        %v4818 = vpop.f32.mrf.mxu0
        %v4819 = vadd.f32 0.0, %v4818
        %v4820 = vpop.f32.mrf.mxu0
        %v4821 = vadd.f32 0.0, %v4820
        %4822 = vmatmul.bf16.gmra.mxu0 %v4750
        %v4823 = vpop.f32.mrf.mxu0
        %v4824 = vadd.f32 0.0, %v4823
        %v4825 = vpop.f32.mrf.mxu0
        %v4826 = vadd.f32 0.0, %v4825
        %4827 = vmatmul.bf16.gmra.mxu0 %v4753
        %v4828 = vpop.f32.mrf.mxu0
        %v4829 = vadd.f32 0.0, %v4828
        %v4830 = vpop.f32.mrf.mxu0
        %v4831 = vadd.f32 0.0, %v4830
        %4832 = vmatmul.bf16.gmra.mxu0 %v4756
        %v4833 = vpop.f32.mrf.mxu0
        %v4834 = vadd.f32 0.0, %v4833
        %v4835 = vpop.f32.mrf.mxu0
        %v4836 = vadd.f32 0.0, %v4835
        %4837 = vmatmul.bf16.gmra.mxu0 %v4759
        %v4838 = vpop.f32.mrf.mxu0
        %v4839 = vadd.f32 0.0, %v4838
        %v4840 = vpop.f32.mrf.mxu0
        %v4841 = vadd.f32 0.0, %v4840
        %4842 = vmatmul.bf16.gmra.mxu0 %v4762
        %v4843 = vpop.f32.mrf.mxu0
        %v4844 = vadd.f32 0.0, %v4843
        %v4845 = vpop.f32.mrf.mxu0
        %v4846 = vadd.f32 0.0, %v4845
        %4847 = vmatmul.bf16.gmra.mxu0 %v4765
        %v4848 = vpop.f32.mrf.mxu0
        %v4849 = vadd.f32 0.0, %v4848
        %v4850 = vpop.f32.mrf.mxu0
        %v4851 = vadd.f32 0.0, %v4850
        %4852 = vmatmul.bf16.gmra.mxu0 %v4768
        %v4853 = vpop.f32.mrf.mxu0
        %v4854 = vadd.f32 0.0, %v4853
        %v4855 = vpop.f32.mrf.mxu0
        %v4856 = vadd.f32 0.0, %v4855
        %4857 = vmatmul.bf16.gmra.mxu0 %v4771
        %v4858 = vpop.f32.mrf.mxu0
        %v4859 = vadd.f32 0.0, %v4858
        %v4860 = vpop.f32.mrf.mxu0
        %v4861 = vadd.f32 0.0, %v4860
        %4862 = vmatmul.bf16.gmra.mxu0 %v4774
        %v4863 = vpop.f32.mrf.mxu0
        %v4864 = vadd.f32 0.0, %v4863
        %v4865 = vpop.f32.mrf.mxu0
        %v4866 = vadd.f32 0.0, %v4865
        %4867 = vdwg.mxu0
        %v4868 = vadd.f32 %v4403, %v4789
        %v4869 = vadd.f32 %v4404, %v4791
        %v4870 = vadd.f32 %v4405, %v4794
        %v4871 = vadd.f32 %v4406, %v4796
        %v4872 = vadd.f32 %v4407, %v4799
        %v4873 = vadd.f32 %v4408, %v4801
        %v4874 = vadd.f32 %v4409, %v4804
        %v4875 = vadd.f32 %v4410, %v4806
        %v4876 = vadd.f32 %v4411, %v4809
        %v4877 = vadd.f32 %v4412, %v4811
        %v4878 = vadd.f32 %v4413, %v4814
        %v4879 = vadd.f32 %v4414, %v4816
        %v4880 = vadd.f32 %v4415, %v4819
        %v4881 = vadd.f32 %v4416, %v4821
        %v4882 = vadd.f32 %v4417, %v4824
        %v4883 = vadd.f32 %v4418, %v4826
        %v4884 = vadd.f32 %v4419, %v4829
        %v4885 = vadd.f32 %v4420, %v4831
        %v4886 = vadd.f32 %v4421, %v4834
        %v4887 = vadd.f32 %v4422, %v4836
        %v4888 = vadd.f32 %v4423, %v4839
        %v4889 = vadd.f32 %v4424, %v4841
        %v4890 = vadd.f32 %v4425, %v4844
        %v4891 = vadd.f32 %v4426, %v4846
        %v4892 = vadd.f32 %v4427, %v4849
        %v4893 = vadd.f32 %v4428, %v4851
        %v4894 = vadd.f32 %v4429, %v4854
        %v4895 = vadd.f32 %v4430, %v4856
        %v4896 = vadd.f32 %v4431, %v4859
        %v4897 = vadd.f32 %v4432, %v4861
        %v4898 = vadd.f32 %v4433, %v4864
        %v4899 = vadd.f32 %v4434, %v4866
        %v4900 = vld [vmem:[%s2] sm:$0x1]
        %v4902 = vperm.slane %v4900, 0
        %v4904 = vadd.f32 %v4868, %v4902
        %v4905 = vadd.f32 %v4869, %v4902
        %v4906 = vadd.f32 %v4870, %v4902
        %v4907 = vadd.f32 %v4871, %v4902
        %v4908 = vadd.f32 %v4872, %v4902
        %v4909 = vadd.f32 %v4873, %v4902
        %v4910 = vadd.f32 %v4874, %v4902
        %v4911 = vadd.f32 %v4875, %v4902
        %v4912 = vadd.f32 %v4876, %v4902
        %v4913 = vadd.f32 %v4877, %v4902
        %v4914 = vadd.f32 %v4878, %v4902
        %v4915 = vadd.f32 %v4879, %v4902
        %v4916 = vadd.f32 %v4880, %v4902
        %v4917 = vadd.f32 %v4881, %v4902
        %v4918 = vadd.f32 %v4882, %v4902
        %v4919 = vadd.f32 %v4883, %v4902
        %v4920 = vadd.f32 %v4884, %v4902
        %v4921 = vadd.f32 %v4885, %v4902
        %v4922 = vadd.f32 %v4886, %v4902
        %v4923 = vadd.f32 %v4887, %v4902
        %v4924 = vadd.f32 %v4888, %v4902
        %v4925 = vadd.f32 %v4889, %v4902
        %v4926 = vadd.f32 %v4890, %v4902
        %v4927 = vadd.f32 %v4891, %v4902
        %v4928 = vadd.f32 %v4892, %v4902
        %v4929 = vadd.f32 %v4893, %v4902
        %v4930 = vadd.f32 %v4894, %v4902
        %v4931 = vadd.f32 %v4895, %v4902
        %v4932 = vadd.f32 %v4896, %v4902
        %v4933 = vadd.f32 %v4897, %v4902
        %v4934 = vadd.f32 %v4898, %v4902
        %v4935 = vadd.f32 %v4899, %v4902
        %v4936 = vmax.f32 %v4904, 0.0
        %v4937 = vmax.f32 %v4905, 0.0
        %v4938 = vmax.f32 %v4906, 0.0
        %v4939 = vmax.f32 %v4907, 0.0
        %v4940 = vmax.f32 %v4908, 0.0
        %v4941 = vmax.f32 %v4909, 0.0
        %v4942 = vmax.f32 %v4910, 0.0
        %v4943 = vmax.f32 %v4911, 0.0
        %v4944 = vmax.f32 %v4912, 0.0
        %v4945 = vmax.f32 %v4913, 0.0
        %v4946 = vmax.f32 %v4914, 0.0
        %v4947 = vmax.f32 %v4915, 0.0
        %v4948 = vmax.f32 %v4916, 0.0
        %v4949 = vmax.f32 %v4917, 0.0
        %v4950 = vmax.f32 %v4918, 0.0
        %v4951 = vmax.f32 %v4919, 0.0
        %v4952 = vmax.f32 %v4920, 0.0
        %v4953 = vmax.f32 %v4921, 0.0
        %v4954 = vmax.f32 %v4922, 0.0
        %v4955 = vmax.f32 %v4923, 0.0
        %v4956 = vmax.f32 %v4924, 0.0
        %v4957 = vmax.f32 %v4925, 0.0
        %v4958 = vmax.f32 %v4926, 0.0
        %v4959 = vmax.f32 %v4927, 0.0
        %v4960 = vmax.f32 %v4928, 0.0
        %v4961 = vmax.f32 %v4929, 0.0
        %v4962 = vmax.f32 %v4930, 0.0
        %v4963 = vmax.f32 %v4931, 0.0
        %v4964 = vmax.f32 %v4932, 0.0
        %v4965 = vmax.f32 %v4933, 0.0
        %v4966 = vmax.f32 %v4934, 0.0
        %v4967 = vmax.f32 %v4935, 0.0
        %vm5001 = vcmask 1046528
        %v5002 = vrot.slane %v4936, 1
        %v5003 = vrot.slane %v4937, 1
        %v5004 = vsel %vm5001, %v5002, %v5003
        %v5005 = vrot.slane %v4938, 1
        %v5006 = vsel %vm5001, %v5003, %v5005
        %v5007 = vrot.slane %v4939, 1
        %v5008 = vsel %vm5001, %v5005, %v5007
        %v5009 = vrot.slane %v4940, 1
        %v5010 = vsel %vm5001, %v5007, %v5009
        %v5011 = vrot.slane %v4941, 1
        %v5012 = vsel %vm5001, %v5009, %v5011
        %v5013 = vrot.slane %v4942, 1
        %v5014 = vsel %vm5001, %v5011, %v5013
        %v5015 = vrot.slane %v4943, 1
        %v5016 = vsel %vm5001, %v5013, %v5015
        %v5017 = vrot.slane %v4944, 1
        %v5018 = vsel %vm5001, %v5015, %v5017
        %v5019 = vrot.slane %v4945, 1
        %v5020 = vsel %vm5001, %v5017, %v5019
        %v5021 = vrot.slane %v4946, 1
        %v5022 = vsel %vm5001, %v5019, %v5021
        %v5023 = vrot.slane %v4947, 1
        %v5024 = vsel %vm5001, %v5021, %v5023
        %v5025 = vrot.slane %v4948, 1
        %v5026 = vsel %vm5001, %v5023, %v5025
        %v5027 = vrot.slane %v4949, 1
        %v5028 = vsel %vm5001, %v5025, %v5027
        %v5029 = vrot.slane %v4950, 1
        %v5030 = vsel %vm5001, %v5027, %v5029
        %v5031 = vrot.slane %v4951, 1
        %v5032 = vsel %vm5001, %v5029, %v5031
        %v5033 = vrot.slane %v4952, 1
        %v5034 = vsel %vm5001, %v5031, %v5033
        %v5035 = vrot.slane %v4953, 1
        %v5036 = vsel %vm5001, %v5033, %v5035
        %v5037 = vrot.slane %v4954, 1
        %v5038 = vsel %vm5001, %v5035, %v5037
        %v5039 = vrot.slane %v4955, 1
        %v5040 = vsel %vm5001, %v5037, %v5039
        %v5041 = vrot.slane %v4956, 1
        %v5042 = vsel %vm5001, %v5039, %v5041
        %v5043 = vrot.slane %v4957, 1
        %v5044 = vsel %vm5001, %v5041, %v5043
        %v5045 = vrot.slane %v4958, 1
        %v5046 = vsel %vm5001, %v5043, %v5045
        %v5047 = vrot.slane %v4959, 1
        %v5048 = vsel %vm5001, %v5045, %v5047
        %v5049 = vrot.slane %v4960, 1
        %v5050 = vsel %vm5001, %v5047, %v5049
        %v5051 = vrot.slane %v4961, 1
        %v5052 = vsel %vm5001, %v5049, %v5051
        %v5053 = vrot.slane %v4962, 1
        %v5054 = vsel %vm5001, %v5051, %v5053
        %v5055 = vrot.slane %v4963, 1
        %v5056 = vsel %vm5001, %v5053, %v5055
        %v5057 = vrot.slane %v4964, 1
        %v5058 = vsel %vm5001, %v5055, %v5057
        %v5059 = vrot.slane %v4965, 1
        %v5060 = vsel %vm5001, %v5057, %v5059
        %v5061 = vrot.slane %v4966, 1
        %v5062 = vsel %vm5001, %v5059, %v5061
        %v5063 = vrot.slane %v4967, 1
        %v5064 = vsel %vm5001, %v5061, %v5063
        %v5065 = vrot.slane 0.0, 1
        %v5066 = vsel %vm5001, %v5063, %v5065
        %v5099 = vmax.f32 %v4936, %v5004
        %v5100 = vmax.f32 %v4937, %v5006
        %v5101 = vmax.f32 %v4938, %v5008
        %v5102 = vmax.f32 %v4939, %v5010
        %v5103 = vmax.f32 %v4940, %v5012
        %v5104 = vmax.f32 %v4941, %v5014
        %v5105 = vmax.f32 %v4942, %v5016
        %v5106 = vmax.f32 %v4943, %v5018
        %v5107 = vmax.f32 %v4944, %v5020
        %v5108 = vmax.f32 %v4945, %v5022
        %v5109 = vmax.f32 %v4946, %v5024
        %v5110 = vmax.f32 %v4947, %v5026
        %v5111 = vmax.f32 %v4948, %v5028
        %v5112 = vmax.f32 %v4949, %v5030
        %v5113 = vmax.f32 %v4950, %v5032
        %v5114 = vmax.f32 %v4951, %v5034
        %v5115 = vmax.f32 %v4952, %v5036
        %v5116 = vmax.f32 %v4953, %v5038
        %v5117 = vmax.f32 %v4954, %v5040
        %v5118 = vmax.f32 %v4955, %v5042
        %v5119 = vmax.f32 %v4956, %v5044
        %v5120 = vmax.f32 %v4957, %v5046
        %v5121 = vmax.f32 %v4958, %v5048
        %v5122 = vmax.f32 %v4959, %v5050
        %v5123 = vmax.f32 %v4960, %v5052
        %v5124 = vmax.f32 %v4961, %v5054
        %v5125 = vmax.f32 %v4962, %v5056
        %v5126 = vmax.f32 %v4963, %v5058
        %v5127 = vmax.f32 %v4964, %v5060
        %v5128 = vmax.f32 %v4965, %v5062
        %v5129 = vmax.f32 %v4966, %v5064
        %v5130 = vmax.f32 %v4967, %v5066
        %v5131 = vmax.f32 %v5099, %v4938
        %v5132 = vmax.f32 %v5100, %v4939
        %v5133 = vmax.f32 %v5101, %v4940
        %v5134 = vmax.f32 %v5102, %v4941
        %v5135 = vmax.f32 %v5103, %v4942
        %v5136 = vmax.f32 %v5104, %v4943
        %v5137 = vmax.f32 %v5105, %v4944
        %v5138 = vmax.f32 %v5106, %v4945
        %v5139 = vmax.f32 %v5107, %v4946
        %v5140 = vmax.f32 %v5108, %v4947
        %v5141 = vmax.f32 %v5109, %v4948
        %v5142 = vmax.f32 %v5110, %v4949
        %v5143 = vmax.f32 %v5111, %v4950
        %v5144 = vmax.f32 %v5112, %v4951
        %v5145 = vmax.f32 %v5113, %v4952
        %v5146 = vmax.f32 %v5114, %v4953
        %v5147 = vmax.f32 %v5115, %v4954
        %v5148 = vmax.f32 %v5116, %v4955
        %v5149 = vmax.f32 %v5117, %v4956
        %v5150 = vmax.f32 %v5118, %v4957
        %v5151 = vmax.f32 %v5119, %v4958
        %v5152 = vmax.f32 %v5120, %v4959
        %v5153 = vmax.f32 %v5121, %v4960
        %v5154 = vmax.f32 %v5122, %v4961
        %v5155 = vmax.f32 %v5123, %v4962
        %v5156 = vmax.f32 %v5124, %v4963
        %v5157 = vmax.f32 %v5125, %v4964
        %v5158 = vmax.f32 %v5126, %v4965
        %v5159 = vmax.f32 %v5127, %v4966
        %v5160 = vmax.f32 %v5128, %v4967
        %v5161 = vmax.f32 %v5129, 0.0
        %v5162 = vmax.f32 %v5130, 0.0
        %v5163 = vsel %vm5001, %v5065, %v5065
        %v5165 = vmax.f32 %v5131, %v5008
        %v5166 = vmax.f32 %v5132, %v5010
        %v5167 = vmax.f32 %v5133, %v5012
        %v5168 = vmax.f32 %v5134, %v5014
        %v5169 = vmax.f32 %v5135, %v5016
        %v5170 = vmax.f32 %v5136, %v5018
        %v5171 = vmax.f32 %v5137, %v5020
        %v5172 = vmax.f32 %v5138, %v5022
        %v5173 = vmax.f32 %v5139, %v5024
        %v5174 = vmax.f32 %v5140, %v5026
        %v5175 = vmax.f32 %v5141, %v5028
        %v5176 = vmax.f32 %v5142, %v5030
        %v5177 = vmax.f32 %v5143, %v5032
        %v5178 = vmax.f32 %v5144, %v5034
        %v5179 = vmax.f32 %v5145, %v5036
        %v5180 = vmax.f32 %v5146, %v5038
        %v5181 = vmax.f32 %v5147, %v5040
        %v5182 = vmax.f32 %v5148, %v5042
        %v5183 = vmax.f32 %v5149, %v5044
        %v5184 = vmax.f32 %v5150, %v5046
        %v5185 = vmax.f32 %v5151, %v5048
        %v5186 = vmax.f32 %v5152, %v5050
        %v5187 = vmax.f32 %v5153, %v5052
        %v5188 = vmax.f32 %v5154, %v5054
        %v5189 = vmax.f32 %v5155, %v5056
        %v5190 = vmax.f32 %v5156, %v5058
        %v5191 = vmax.f32 %v5157, %v5060
        %v5192 = vmax.f32 %v5158, %v5062
        %v5193 = vmax.f32 %v5159, %v5064
        %v5194 = vmax.f32 %v5160, %v5066
        %v5195 = vmax.f32 %v5161, %v5163
        %v5196 = vmax.f32 %v5162, %v5163
        %v5197 = vld [vmem:[%s7] sm:$0xff]
        %v5198 = vld [vmem:[%s7 + $0x8] sm:$0xff]
        %v5199 = vld [vmem:[%s7 + $0x10] sm:$0xff]
        %v5200 = vld [vmem:[%s7 + $0x18] sm:$0xff]
        %v5201 = vld [vmem:[%s7 + $0x20] sm:$0xff]
        %v5202 = vld [vmem:[%s7 + $0x28] sm:$0xff]
        %v5203 = vld [vmem:[%s7 + $0x30] sm:$0xff]
        %v5204 = vld [vmem:[%s7 + $0x38] sm:$0xff]
        %v5205 = vld [vmem:[%s7 + $0x40] sm:$0xff]
        %v5206 = vld [vmem:[%s7 + $0x48] sm:$0xff]
        %v5207 = vld [vmem:[%s7 + $0x50] sm:$0xff]
        %v5208 = vld [vmem:[%s7 + $0x58] sm:$0xff]
        %v5209 = vld [vmem:[%s7 + $0x60] sm:$0xff]
        %v5210 = vld [vmem:[%s7 + $0x68] sm:$0xff]
        %v5211 = vld [vmem:[%s7 + $0x70] sm:$0xff]
        %v5212 = vld [vmem:[%s7 + $0x78] sm:$0xff]
        %5213 = vmatpush.msra.mxu0 %v5180
        %5214 = vmatpush.msra.mxu0 %v5179
        %5215 = vmatpush.msra.mxu0 %v5178
        %5216 = vmatpush.msra.mxu0 %v5177
        %5217 = vmatpush.msra.mxu0 %v5176
        %5218 = vmatpush.msra.mxu0 %v5175
        %5219 = vmatpush.msra.mxu0 %v5174
        %5220 = vmatpush.msra.mxu0 %v5173
        %5221 = vmatpush.msra.mxu0 %v5172
        %5222 = vmatpush.msra.mxu0 %v5171
        %5223 = vmatpush.msra.mxu0 %v5170
        %5224 = vmatpush.msra.mxu0 %v5169
        %5225 = vmatpush.msra.mxu0 %v5168
        %5226 = vmatpush.msra.mxu0 %v5167
        %5227 = vmatpush.msra.mxu0 %v5166
        %5228 = vmatpush.msra.mxu0 %v5165
        %5229 = vmatmul.f32.gmra.mxu0 %v5197
        %v5230 = vpop.f32.mrf.mxu0
        %v5231 = vadd.f32 0.0, %v5230
        %5232 = vmatmul.f32.gmra.mxu0 %v5199
        %v5233 = vpop.f32.mrf.mxu0
        %v5234 = vadd.f32 0.0, %v5233
        %5235 = vmatmul.f32.gmra.mxu0 %v5201
        %v5236 = vpop.f32.mrf.mxu0
        %v5237 = vadd.f32 0.0, %v5236
        %5238 = vmatmul.f32.gmra.mxu0 %v5203
        %v5239 = vpop.f32.mrf.mxu0
        %v5240 = vadd.f32 0.0, %v5239
        %5241 = vmatmul.f32.gmra.mxu0 %v5205
        %v5242 = vpop.f32.mrf.mxu0
        %v5243 = vadd.f32 0.0, %v5242
        %5244 = vmatmul.f32.gmra.mxu0 %v5207
        %v5245 = vpop.f32.mrf.mxu0
        %v5246 = vadd.f32 0.0, %v5245
        %5247 = vmatmul.f32.gmra.mxu0 %v5209
        %v5248 = vpop.f32.mrf.mxu0
        %v5249 = vadd.f32 0.0, %v5248
        %5250 = vmatmul.f32.gmra.mxu0 %v5211
        %v5251 = vpop.f32.mrf.mxu0
        %v5252 = vadd.f32 0.0, %v5251
        %5253 = vdwg.mxu0
        %5254 = vmatpush.msra.mxu0 %v5196
        %5255 = vmatpush.msra.mxu0 %v5195
        %5256 = vmatpush.msra.mxu0 %v5194
        %5257 = vmatpush.msra.mxu0 %v5193
        %5258 = vmatpush.msra.mxu0 %v5192
        %5259 = vmatpush.msra.mxu0 %v5191
        %5260 = vmatpush.msra.mxu0 %v5190
        %5261 = vmatpush.msra.mxu0 %v5189
        %5262 = vmatpush.msra.mxu0 %v5188
        %5263 = vmatpush.msra.mxu0 %v5187
        %5264 = vmatpush.msra.mxu0 %v5186
        %5265 = vmatpush.msra.mxu0 %v5185
        %5266 = vmatpush.msra.mxu0 %v5184
        %5267 = vmatpush.msra.mxu0 %v5183
        %5268 = vmatpush.msra.mxu0 %v5182
        %5269 = vmatpush.msra.mxu0 %v5181
        %5270 = vmatmul.f32.gmra.mxu0 %v5198
        %v5271 = vpop.f32.mrf.mxu0
        %v5272 = vadd.f32 %v5231, %v5271
        %5273 = vmatmul.f32.gmra.mxu0 %v5200
        %v5274 = vpop.f32.mrf.mxu0
        %v5275 = vadd.f32 %v5234, %v5274
        %5276 = vmatmul.f32.gmra.mxu0 %v5202
        %v5277 = vpop.f32.mrf.mxu0
        %v5278 = vadd.f32 %v5237, %v5277
        %5279 = vmatmul.f32.gmra.mxu0 %v5204
        %v5280 = vpop.f32.mrf.mxu0
        %v5281 = vadd.f32 %v5240, %v5280
        %5282 = vmatmul.f32.gmra.mxu0 %v5206
        %v5283 = vpop.f32.mrf.mxu0
        %v5284 = vadd.f32 %v5243, %v5283
        %5285 = vmatmul.f32.gmra.mxu0 %v5208
        %v5286 = vpop.f32.mrf.mxu0
        %v5287 = vadd.f32 %v5246, %v5286
        %5288 = vmatmul.f32.gmra.mxu0 %v5210
        %v5289 = vpop.f32.mrf.mxu0
        %v5290 = vadd.f32 %v5249, %v5289
        %5291 = vmatmul.f32.gmra.mxu0 %v5212
        %v5292 = vpop.f32.mrf.mxu0
        %v5293 = vadd.f32 %v5252, %v5292
        %5294 = vdwg.mxu0
        %v5303 = vrot.slane %v5272, 7
        %v5304 = vrot.slane %v5275, 7
        %v5305 = vsel %vm651, %v5303, %v5304
        %v5306 = vrot.slane %v5278, 7
        %v5307 = vsel %vm651, %v5304, %v5306
        %v5308 = vrot.slane %v5281, 7
        %v5309 = vsel %vm651, %v5306, %v5308
        %v5310 = vrot.slane %v5284, 7
        %v5311 = vsel %vm651, %v5308, %v5310
        %v5312 = vrot.slane %v5287, 7
        %v5313 = vsel %vm651, %v5310, %v5312
        %v5314 = vrot.slane %v5290, 7
        %v5315 = vsel %vm651, %v5312, %v5314
        %v5316 = vrot.slane %v5293, 7
        %v5317 = vsel %vm651, %v5314, %v5316
        %v5327 = vsel %vm651, 0.0, %v5303
        %v5328 = vsel %vm651, %v5316, 0.0
        %v5329 = vld [vmem:[#allocation4] sm:$0xff]
        %v5330 = vld [vmem:[#allocation4 + $0x8] sm:$0xff]
        %v5331 = vld [vmem:[#allocation4 + $0x10] sm:$0xff]
        %v5332 = vld [vmem:[#allocation4 + $0x18] sm:$0xff]
        %v5333 = vld [vmem:[#allocation4 + $0x20] sm:$0xff]
        %v5334 = vld [vmem:[#allocation4 + $0x28] sm:$0xff]
        %v5335 = vld [vmem:[#allocation4 + $0x30] sm:$0xff]
        %v5336 = vld [vmem:[#allocation4 + $0x38] sm:$0xff]
        %v5337 = vld [vmem:[%s4] sm:$0xf]
        %v5338 = vld [vmem:[%s4 + $0x4] sm:$0xf]
        %5340 = vset.pattern.permute.xlu0 0
        %5341 = vperm.xlu0 %5340, %v5329
        %v5342 = vpop.permute.xlu0 %5341
        %5345 = vset.pattern.permute.xlu0 0
        %5346 = vperm.xlu0 %5345, %v5330
        %v5347 = vpop.permute.xlu0 %5346
        %5350 = vset.pattern.permute.xlu0 0
        %5351 = vperm.xlu0 %5350, %v5331
        %v5352 = vpop.permute.xlu0 %5351
        %5355 = vset.pattern.permute.xlu0 0
        %5356 = vperm.xlu0 %5355, %v5332
        %v5357 = vpop.permute.xlu0 %5356
        %5360 = vset.pattern.permute.xlu0 0
        %5361 = vperm.xlu0 %5360, %v5333
        %v5362 = vpop.permute.xlu0 %5361
        %5365 = vset.pattern.permute.xlu0 0
        %5366 = vperm.xlu0 %5365, %v5334
        %v5367 = vpop.permute.xlu0 %5366
        %5370 = vset.pattern.permute.xlu0 0
        %5371 = vperm.xlu0 %5370, %v5335
        %v5372 = vpop.permute.xlu0 %5371
        %5375 = vset.pattern.permute.xlu0 0
        %5376 = vperm.xlu0 %5375, %v5336
        %v5377 = vpop.permute.xlu0 %5376
        %v5379 = vmul.f32 %v5342, 0.0
        %v5380 = vmul.f32 %v5327, %v5347
        %v5381 = vmul.f32 %v5305, %v5352
        %v5382 = vmul.f32 %v5307, %v5357
        %v5383 = vmul.f32 %v5309, %v5362
        %v5384 = vmul.f32 %v5311, %v5367
        %v5385 = vmul.f32 %v5313, %v5372
        %v5386 = vmul.f32 %v5315, %v5377
        %v5387 = vpack.c.bf16 %v5380, %v5379
        %v5388 = vpack.c.bf16 %v5382, %v5381
        %v5389 = vpack.c.bf16 %v5384, %v5383
        %v5390 = vpack.c.bf16 %v5386, %v5385
        %v5391 = vld [vmem:[%s4 + $0x8] sm:$0xf]
        %v5392 = vld [vmem:[%s4 + $0xc] sm:$0xf]
        %5393 = vset.pattern.permute.xlu0 1
        %5394 = vperm.xlu0 %5393, %v5329
        %v5395 = vpop.permute.xlu0 %5394
        %5396 = vset.pattern.permute.xlu0 1
        %5397 = vperm.xlu0 %5396, %v5330
        %v5398 = vpop.permute.xlu0 %5397
        %5399 = vset.pattern.permute.xlu0 1
        %5400 = vperm.xlu0 %5399, %v5331
        %v5401 = vpop.permute.xlu0 %5400
        %5402 = vset.pattern.permute.xlu0 1
        %5403 = vperm.xlu0 %5402, %v5332
        %v5404 = vpop.permute.xlu0 %5403
        %5405 = vset.pattern.permute.xlu0 1
        %5406 = vperm.xlu0 %5405, %v5333
        %v5407 = vpop.permute.xlu0 %5406
        %5408 = vset.pattern.permute.xlu0 1
        %5409 = vperm.xlu0 %5408, %v5334
        %v5410 = vpop.permute.xlu0 %5409
        %5411 = vset.pattern.permute.xlu0 1
        %5412 = vperm.xlu0 %5411, %v5335
        %v5413 = vpop.permute.xlu0 %5412
        %5414 = vset.pattern.permute.xlu0 1
        %5415 = vperm.xlu0 %5414, %v5336
        %v5416 = vpop.permute.xlu0 %5415
        %v5417 = vrot.slane %v5395, 7
        %v5418 = vrot.slane %v5398, 7
        %v5419 = vsel %vm651, %v5417, %v5418
        %v5420 = vrot.slane %v5401, 7
        %v5421 = vsel %vm651, %v5418, %v5420
        %v5422 = vrot.slane %v5404, 7
        %v5423 = vsel %vm651, %v5420, %v5422
        %v5424 = vrot.slane %v5407, 7
        %v5425 = vsel %vm651, %v5422, %v5424
        %v5426 = vrot.slane %v5410, 7
        %v5427 = vsel %vm651, %v5424, %v5426
        %v5428 = vrot.slane %v5413, 7
        %v5429 = vsel %vm651, %v5426, %v5428
        %v5430 = vrot.slane %v5416, 7
        %v5431 = vsel %vm651, %v5428, %v5430
        %v5441 = vmul.f32 %v5417, 0.0
        %v5442 = vmul.f32 %v5327, %v5419
        %v5443 = vmul.f32 %v5305, %v5421
        %v5444 = vmul.f32 %v5307, %v5423
        %v5445 = vmul.f32 %v5309, %v5425
        %v5446 = vmul.f32 %v5311, %v5427
        %v5447 = vmul.f32 %v5313, %v5429
        %v5448 = vmul.f32 %v5315, %v5431
        %v5449 = vmul.f32 %v5317, %v5430
        %v5450 = vpack.c.bf16 %v5442, %v5441
        %v5451 = vpack.c.bf16 %v5444, %v5443
        %v5452 = vpack.c.bf16 %v5446, %v5445
        %v5453 = vpack.c.bf16 %v5448, %v5447
        %v5454 = vpack.c.bf16 %v5449, %v5449
        %v5456 = vshrl.u32 %v5450, 16
        %v5458 = vshll.u32 %v5450, 16
        %v5460 = vrot.slane %v5458, 1
        %v5461 = vor.u32 %v5456, %v5460
        %v5463 = vshll.u32 %v5451, 16
        %v5465 = vrot.slane %v5463, 1
        %v5466 = vsel %vm1234, %v5461, %v5465
        %v5467 = vshrl.u32 %v5451, 16
        %v5469 = vor.u32 %v5467, %v5465
        %v5471 = vshll.u32 %v5452, 16
        %v5473 = vrot.slane %v5471, 1
        %v5474 = vsel %vm1234, %v5469, %v5473
        %v5475 = vshrl.u32 %v5452, 16
        %v5477 = vor.u32 %v5475, %v5473
        %v5479 = vshll.u32 %v5453, 16
        %v5481 = vrot.slane %v5479, 1
        %v5482 = vsel %vm1234, %v5477, %v5481
        %v5483 = vshrl.u32 %v5453, 16
        %v5485 = vor.u32 %v5483, %v5481
        %v5487 = vshll.u32 %v5454, 16
        %v5489 = vrot.slane %v5487, 1
        %v5490 = vsel %vm1234, %v5485, %v5489
        %v5493 = vunpack.c.l.b16 %v5391
        %v5494 = vunpack.c.l.b16 %v5392
        %v5495 = vpack.c.b16 %v5494, %v5493
        %vm5497 = vcmask 130048
        %v5499 = vsel %vm5497, %v5466, 0
        %v5502 = vsel %vm5497, %v5474, 0
        %v5505 = vsel %vm5497, %v5482, 0
        %v5508 = vsel %vm5497, %v5490, 0
        %5510 = vmatpush.bf16.msra.mxu0 0
        %5511 = vmatpush.bf16.msra.mxu0 0
        %5512 = vmatpush.bf16.msra.mxu0 0
        %5513 = vmatpush.bf16.msra.mxu0 0
        %5514 = vmatpush.bf16.msra.mxu0 0
        %5515 = vmatpush.bf16.msra.mxu0 0
        %5516 = vmatpush.bf16.msra.mxu0 0
        %5517 = vmatpush.bf16.msra.mxu0 %v5495
        %5518 = vmatmul.bf16.gmra.mxu0 %v5499
        %v5519 = vpop.f32.mrf.mxu0
        %v5520 = vadd.f32 0.0, %v5519
        %v5521 = vpop.f32.mrf.mxu0
        %v5522 = vadd.f32 0.0, %v5521
        %5523 = vmatmul.bf16.gmra.mxu0 %v5502
        %v5524 = vpop.f32.mrf.mxu0
        %v5525 = vadd.f32 0.0, %v5524
        %v5526 = vpop.f32.mrf.mxu0
        %v5527 = vadd.f32 0.0, %v5526
        %5528 = vmatmul.bf16.gmra.mxu0 %v5505
        %v5529 = vpop.f32.mrf.mxu0
        %v5530 = vadd.f32 0.0, %v5529
        %v5531 = vpop.f32.mrf.mxu0
        %v5532 = vadd.f32 0.0, %v5531
        %5533 = vmatmul.bf16.gmra.mxu0 %v5508
        %v5534 = vpop.f32.mrf.mxu0
        %v5535 = vadd.f32 0.0, %v5534
        %v5536 = vpop.f32.mrf.mxu0
        %v5537 = vadd.f32 0.0, %v5536
        %5538 = vdwg.mxu0
        %v5541 = vunpack.c.l.b16 %v5337
        %v5542 = vunpack.c.l.b16 %v5338
        %v5543 = vpack.c.b16 %v5542, %v5541
        %v5546 = vsel %vm5497, %v5387, 0
        %v5549 = vsel %vm5497, %v5388, 0
        %v5552 = vsel %vm5497, %v5389, 0
        %v5555 = vsel %vm5497, %v5390, 0
        %5557 = vmatpush.bf16.msra.mxu0 0
        %5558 = vmatpush.bf16.msra.mxu0 0
        %5559 = vmatpush.bf16.msra.mxu0 0
        %5560 = vmatpush.bf16.msra.mxu0 0
        %5561 = vmatpush.bf16.msra.mxu0 0
        %5562 = vmatpush.bf16.msra.mxu0 0
        %5563 = vmatpush.bf16.msra.mxu0 0
        %5564 = vmatpush.bf16.msra.mxu0 %v5543
        %5565 = vmatmul.bf16.gmra.mxu0 %v5546
        %v5566 = vpop.f32.mrf.mxu0
        %v5567 = vadd.f32 %v5520, %v5566
        %v5568 = vpop.f32.mrf.mxu0
        %v5569 = vadd.f32 %v5522, %v5568
        %5570 = vmatmul.bf16.gmra.mxu0 %v5549
        %v5571 = vpop.f32.mrf.mxu0
        %v5572 = vadd.f32 %v5525, %v5571
        %v5573 = vpop.f32.mrf.mxu0
        %v5574 = vadd.f32 %v5527, %v5573
        %5575 = vmatmul.bf16.gmra.mxu0 %v5552
        %v5576 = vpop.f32.mrf.mxu0
        %v5577 = vadd.f32 %v5530, %v5576
        %v5578 = vpop.f32.mrf.mxu0
        %v5579 = vadd.f32 %v5532, %v5578
        %5580 = vmatmul.bf16.gmra.mxu0 %v5555
        %v5581 = vpop.f32.mrf.mxu0
        %v5582 = vadd.f32 %v5535, %v5581
        %v5583 = vpop.f32.mrf.mxu0
        %v5584 = vadd.f32 %v5537, %v5583
        %5585 = vdwg.mxu0
        %v5586 = vld [vmem:[%s4 + $0x10] sm:$0xf]
        %v5587 = vld [vmem:[%s4 + $0x14] sm:$0xf]
        %5588 = vset.pattern.permute.xlu0 2
        %5589 = vperm.xlu0 %5588, %v5329
        %v5590 = vpop.permute.xlu0 %5589
        %5591 = vset.pattern.permute.xlu0 2
        %5592 = vperm.xlu0 %5591, %v5330
        %v5593 = vpop.permute.xlu0 %5592
        %5594 = vset.pattern.permute.xlu0 2
        %5595 = vperm.xlu0 %5594, %v5331
        %v5596 = vpop.permute.xlu0 %5595
        %5597 = vset.pattern.permute.xlu0 2
        %5598 = vperm.xlu0 %5597, %v5332
        %v5599 = vpop.permute.xlu0 %5598
        %5600 = vset.pattern.permute.xlu0 2
        %5601 = vperm.xlu0 %5600, %v5333
        %v5602 = vpop.permute.xlu0 %5601
        %5603 = vset.pattern.permute.xlu0 2
        %5604 = vperm.xlu0 %5603, %v5334
        %v5605 = vpop.permute.xlu0 %5604
        %5606 = vset.pattern.permute.xlu0 2
        %5607 = vperm.xlu0 %5606, %v5335
        %v5608 = vpop.permute.xlu0 %5607
        %5609 = vset.pattern.permute.xlu0 2
        %5610 = vperm.xlu0 %5609, %v5336
        %v5611 = vpop.permute.xlu0 %5610
        %v5612 = vrot.slane %v5590, 6
        %v5613 = vrot.slane %v5593, 6
        %v5614 = vsel %vm1427, %v5612, %v5613
        %v5615 = vrot.slane %v5596, 6
        %v5616 = vsel %vm1427, %v5613, %v5615
        %v5617 = vrot.slane %v5599, 6
        %v5618 = vsel %vm1427, %v5615, %v5617
        %v5619 = vrot.slane %v5602, 6
        %v5620 = vsel %vm1427, %v5617, %v5619
        %v5621 = vrot.slane %v5605, 6
        %v5622 = vsel %vm1427, %v5619, %v5621
        %v5623 = vrot.slane %v5608, 6
        %v5624 = vsel %vm1427, %v5621, %v5623
        %v5625 = vrot.slane %v5611, 6
        %v5626 = vsel %vm1427, %v5623, %v5625
        %v5636 = vmul.f32 %v5612, 0.0
        %v5637 = vmul.f32 %v5327, %v5614
        %v5638 = vmul.f32 %v5305, %v5616
        %v5639 = vmul.f32 %v5307, %v5618
        %v5640 = vmul.f32 %v5309, %v5620
        %v5641 = vmul.f32 %v5311, %v5622
        %v5642 = vmul.f32 %v5313, %v5624
        %v5643 = vmul.f32 %v5315, %v5626
        %v5644 = vmul.f32 %v5317, %v5625
        %v5645 = vpack.c.bf16 %v5637, %v5636
        %v5646 = vpack.c.bf16 %v5639, %v5638
        %v5647 = vpack.c.bf16 %v5641, %v5640
        %v5648 = vpack.c.bf16 %v5643, %v5642
        %v5649 = vpack.c.bf16 %v5644, %v5644
        %v5655 = vrot.slane %v5645, 1
        %v5656 = vrot.slane %v5646, 1
        %v5657 = vsel %vm1923, %v5655, %v5656
        %v5658 = vrot.slane %v5647, 1
        %v5659 = vsel %vm1923, %v5656, %v5658
        %v5660 = vrot.slane %v5648, 1
        %v5661 = vsel %vm1923, %v5658, %v5660
        %v5662 = vrot.slane %v5649, 1
        %v5663 = vsel %vm1923, %v5660, %v5662
        %v5666 = vunpack.c.l.b16 %v5586
        %v5667 = vunpack.c.l.b16 %v5587
        %v5668 = vpack.c.b16 %v5667, %v5666
        %v5671 = vsel %vm5497, %v5657, 0
        %v5674 = vsel %vm5497, %v5659, 0
        %v5677 = vsel %vm5497, %v5661, 0
        %v5680 = vsel %vm5497, %v5663, 0
        %5682 = vmatpush.bf16.msra.mxu0 0
        %5683 = vmatpush.bf16.msra.mxu0 0
        %5684 = vmatpush.bf16.msra.mxu0 0
        %5685 = vmatpush.bf16.msra.mxu0 0
        %5686 = vmatpush.bf16.msra.mxu0 0
        %5687 = vmatpush.bf16.msra.mxu0 0
        %5688 = vmatpush.bf16.msra.mxu0 0
        %5689 = vmatpush.bf16.msra.mxu0 %v5668
        %5690 = vmatmul.bf16.gmra.mxu0 %v5671
        %v5691 = vpop.f32.mrf.mxu0
        %v5692 = vadd.f32 0.0, %v5691
        %v5693 = vpop.f32.mrf.mxu0
        %v5694 = vadd.f32 0.0, %v5693
        %5695 = vmatmul.bf16.gmra.mxu0 %v5674
        %v5696 = vpop.f32.mrf.mxu0
        %v5697 = vadd.f32 0.0, %v5696
        %v5698 = vpop.f32.mrf.mxu0
        %v5699 = vadd.f32 0.0, %v5698
        %5700 = vmatmul.bf16.gmra.mxu0 %v5677
        %v5701 = vpop.f32.mrf.mxu0
        %v5702 = vadd.f32 0.0, %v5701
        %v5703 = vpop.f32.mrf.mxu0
        %v5704 = vadd.f32 0.0, %v5703
        %5705 = vmatmul.bf16.gmra.mxu0 %v5680
        %v5706 = vpop.f32.mrf.mxu0
        %v5707 = vadd.f32 0.0, %v5706
        %v5708 = vpop.f32.mrf.mxu0
        %v5709 = vadd.f32 0.0, %v5708
        %5710 = vdwg.mxu0
        %v5711 = vadd.f32 %v5567, %v5692
        %v5712 = vadd.f32 %v5569, %v5694
        %v5713 = vadd.f32 %v5572, %v5697
        %v5714 = vadd.f32 %v5574, %v5699
        %v5715 = vadd.f32 %v5577, %v5702
        %v5716 = vadd.f32 %v5579, %v5704
        %v5717 = vadd.f32 %v5582, %v5707
        %v5718 = vadd.f32 %v5584, %v5709
        %v5719 = vld [vmem:[%s4 + $0x18] sm:$0xf]
        %v5720 = vld [vmem:[%s4 + $0x1c] sm:$0xf]
        %5721 = vset.pattern.permute.xlu0 3
        %5722 = vperm.xlu0 %5721, %v5329
        %v5723 = vpop.permute.xlu0 %5722
        %5725 = vset.pattern.permute.xlu0 3
        %5726 = vperm.xlu0 %5725, %v5330
        %v5727 = vpop.permute.xlu0 %5726
        %5729 = vset.pattern.permute.xlu0 3
        %5730 = vperm.xlu0 %5729, %v5331
        %v5731 = vpop.permute.xlu0 %5730
        %5733 = vset.pattern.permute.xlu0 3
        %5734 = vperm.xlu0 %5733, %v5332
        %v5735 = vpop.permute.xlu0 %5734
        %5737 = vset.pattern.permute.xlu0 3
        %5738 = vperm.xlu0 %5737, %v5333
        %v5739 = vpop.permute.xlu0 %5738
        %5741 = vset.pattern.permute.xlu0 3
        %5742 = vperm.xlu0 %5741, %v5334
        %v5743 = vpop.permute.xlu0 %5742
        %5745 = vset.pattern.permute.xlu0 3
        %5746 = vperm.xlu0 %5745, %v5335
        %v5747 = vpop.permute.xlu0 %5746
        %5749 = vset.pattern.permute.xlu0 3
        %5750 = vperm.xlu0 %5749, %v5336
        %v5751 = vpop.permute.xlu0 %5750
        %v5753 = vmul.f32 %v5327, %v5723
        %v5754 = vmul.f32 %v5305, %v5727
        %v5755 = vmul.f32 %v5307, %v5731
        %v5756 = vmul.f32 %v5309, %v5735
        %v5757 = vmul.f32 %v5311, %v5739
        %v5758 = vmul.f32 %v5313, %v5743
        %v5759 = vmul.f32 %v5315, %v5747
        %v5760 = vmul.f32 %v5317, %v5751
        %v5761 = vpack.c.bf16 %v5754, %v5753
        %v5762 = vpack.c.bf16 %v5756, %v5755
        %v5763 = vpack.c.bf16 %v5758, %v5757
        %v5764 = vpack.c.bf16 %v5760, %v5759
        %v5767 = vunpack.c.l.b16 %v5719
        %v5768 = vunpack.c.l.b16 %v5720
        %v5769 = vpack.c.b16 %v5768, %v5767
        %v5772 = vsel %vm5497, %v5761, 0
        %v5775 = vsel %vm5497, %v5762, 0
        %v5778 = vsel %vm5497, %v5763, 0
        %v5781 = vsel %vm5497, %v5764, 0
        %5783 = vmatpush.bf16.msra.mxu0 0
        %5784 = vmatpush.bf16.msra.mxu0 0
        %5785 = vmatpush.bf16.msra.mxu0 0
        %5786 = vmatpush.bf16.msra.mxu0 0
        %5787 = vmatpush.bf16.msra.mxu0 0
        %5788 = vmatpush.bf16.msra.mxu0 0
        %5789 = vmatpush.bf16.msra.mxu0 0
        %5790 = vmatpush.bf16.msra.mxu0 %v5769
        %5791 = vmatmul.bf16.gmra.mxu0 %v5772
        %v5792 = vpop.f32.mrf.mxu0
        %v5793 = vadd.f32 0.0, %v5792
        %v5794 = vpop.f32.mrf.mxu0
        %v5795 = vadd.f32 0.0, %v5794
        %5796 = vmatmul.bf16.gmra.mxu0 %v5775
        %v5797 = vpop.f32.mrf.mxu0
        %v5798 = vadd.f32 0.0, %v5797
        %v5799 = vpop.f32.mrf.mxu0
        %v5800 = vadd.f32 0.0, %v5799
        %5801 = vmatmul.bf16.gmra.mxu0 %v5778
        %v5802 = vpop.f32.mrf.mxu0
        %v5803 = vadd.f32 0.0, %v5802
        %v5804 = vpop.f32.mrf.mxu0
        %v5805 = vadd.f32 0.0, %v5804
        %5806 = vmatmul.bf16.gmra.mxu0 %v5781
        %v5807 = vpop.f32.mrf.mxu0
        %v5808 = vadd.f32 0.0, %v5807
        %v5809 = vpop.f32.mrf.mxu0
        %v5810 = vadd.f32 0.0, %v5809
        %5811 = vdwg.mxu0
        %v5812 = vadd.f32 %v5711, %v5793
        %v5813 = vadd.f32 %v5712, %v5795
        %v5814 = vadd.f32 %v5713, %v5798
        %v5815 = vadd.f32 %v5714, %v5800
        %v5816 = vadd.f32 %v5715, %v5803
        %v5817 = vadd.f32 %v5716, %v5805
        %v5818 = vadd.f32 %v5717, %v5808
        %v5819 = vadd.f32 %v5718, %v5810
        %v5820 = vld [vmem:[%s4 + $0x20] sm:$0xf]
        %v5821 = vld [vmem:[%s4 + $0x24] sm:$0xf]
        %5822 = vset.pattern.permute.xlu0 4
        %5823 = vperm.xlu0 %5822, %v5329
        %v5824 = vpop.permute.xlu0 %5823
        %5825 = vset.pattern.permute.xlu0 4
        %5826 = vperm.xlu0 %5825, %v5330
        %v5827 = vpop.permute.xlu0 %5826
        %5828 = vset.pattern.permute.xlu0 4
        %5829 = vperm.xlu0 %5828, %v5331
        %v5830 = vpop.permute.xlu0 %5829
        %5831 = vset.pattern.permute.xlu0 4
        %5832 = vperm.xlu0 %5831, %v5332
        %v5833 = vpop.permute.xlu0 %5832
        %5834 = vset.pattern.permute.xlu0 4
        %5835 = vperm.xlu0 %5834, %v5333
        %v5836 = vpop.permute.xlu0 %5835
        %5837 = vset.pattern.permute.xlu0 4
        %5838 = vperm.xlu0 %5837, %v5334
        %v5839 = vpop.permute.xlu0 %5838
        %5840 = vset.pattern.permute.xlu0 4
        %5841 = vperm.xlu0 %5840, %v5335
        %v5842 = vpop.permute.xlu0 %5841
        %5843 = vset.pattern.permute.xlu0 4
        %5844 = vperm.xlu0 %5843, %v5336
        %v5845 = vpop.permute.xlu0 %5844
        %v5846 = vrot.slane %v5824, 7
        %v5847 = vrot.slane %v5827, 7
        %v5848 = vsel %vm651, %v5846, %v5847
        %v5849 = vrot.slane %v5830, 7
        %v5850 = vsel %vm651, %v5847, %v5849
        %v5851 = vrot.slane %v5833, 7
        %v5852 = vsel %vm651, %v5849, %v5851
        %v5853 = vrot.slane %v5836, 7
        %v5854 = vsel %vm651, %v5851, %v5853
        %v5855 = vrot.slane %v5839, 7
        %v5856 = vsel %vm651, %v5853, %v5855
        %v5857 = vrot.slane %v5842, 7
        %v5858 = vsel %vm651, %v5855, %v5857
        %v5859 = vrot.slane %v5845, 7
        %v5860 = vsel %vm651, %v5857, %v5859
        %v5870 = vmul.f32 %v5327, %v5846
        %v5871 = vmul.f32 %v5305, %v5848
        %v5872 = vmul.f32 %v5307, %v5850
        %v5873 = vmul.f32 %v5309, %v5852
        %v5874 = vmul.f32 %v5311, %v5854
        %v5875 = vmul.f32 %v5313, %v5856
        %v5876 = vmul.f32 %v5315, %v5858
        %v5877 = vmul.f32 %v5317, %v5860
        %v5878 = vmul.f32 %v5328, %v5859
        %v5879 = vpack.c.bf16 %v5871, %v5870
        %v5880 = vpack.c.bf16 %v5873, %v5872
        %v5881 = vpack.c.bf16 %v5875, %v5874
        %v5882 = vpack.c.bf16 %v5877, %v5876
        %v5883 = vpack.c.bf16 %v5878, %v5878
        %v5885 = vshrl.u32 %v5879, 16
        %v5887 = vshll.u32 %v5879, 16
        %v5889 = vrot.slane %v5887, 1
        %v5890 = vor.u32 %v5885, %v5889
        %v5892 = vshll.u32 %v5880, 16
        %v5894 = vrot.slane %v5892, 1
        %v5895 = vsel %vm1234, %v5890, %v5894
        %v5896 = vshrl.u32 %v5880, 16
        %v5898 = vor.u32 %v5896, %v5894
        %v5900 = vshll.u32 %v5881, 16
        %v5902 = vrot.slane %v5900, 1
        %v5903 = vsel %vm1234, %v5898, %v5902
        %v5904 = vshrl.u32 %v5881, 16
        %v5906 = vor.u32 %v5904, %v5902
        %v5908 = vshll.u32 %v5882, 16
        %v5910 = vrot.slane %v5908, 1
        %v5911 = vsel %vm1234, %v5906, %v5910
        %v5912 = vshrl.u32 %v5882, 16
        %v5914 = vor.u32 %v5912, %v5910
        %v5916 = vshll.u32 %v5883, 16
        %v5918 = vrot.slane %v5916, 1
        %v5919 = vsel %vm1234, %v5914, %v5918
        %v5922 = vunpack.c.l.b16 %v5820
        %v5923 = vunpack.c.l.b16 %v5821
        %v5924 = vpack.c.b16 %v5923, %v5922
        %v5927 = vsel %vm5497, %v5895, 0
        %v5930 = vsel %vm5497, %v5903, 0
        %v5933 = vsel %vm5497, %v5911, 0
        %v5936 = vsel %vm5497, %v5919, 0
        %5938 = vmatpush.bf16.msra.mxu0 0
        %5939 = vmatpush.bf16.msra.mxu0 0
        %5940 = vmatpush.bf16.msra.mxu0 0
        %5941 = vmatpush.bf16.msra.mxu0 0
        %5942 = vmatpush.bf16.msra.mxu0 0
        %5943 = vmatpush.bf16.msra.mxu0 0
        %5944 = vmatpush.bf16.msra.mxu0 0
        %5945 = vmatpush.bf16.msra.mxu0 %v5924
        %5946 = vmatmul.bf16.gmra.mxu0 %v5927
        %v5947 = vpop.f32.mrf.mxu0
        %v5948 = vadd.f32 0.0, %v5947
        %v5949 = vpop.f32.mrf.mxu0
        %v5950 = vadd.f32 0.0, %v5949
        %5951 = vmatmul.bf16.gmra.mxu0 %v5930
        %v5952 = vpop.f32.mrf.mxu0
        %v5953 = vadd.f32 0.0, %v5952
        %v5954 = vpop.f32.mrf.mxu0
        %v5955 = vadd.f32 0.0, %v5954
        %5956 = vmatmul.bf16.gmra.mxu0 %v5933
        %v5957 = vpop.f32.mrf.mxu0
        %v5958 = vadd.f32 0.0, %v5957
        %v5959 = vpop.f32.mrf.mxu0
        %v5960 = vadd.f32 0.0, %v5959
        %5961 = vmatmul.bf16.gmra.mxu0 %v5936
        %v5962 = vpop.f32.mrf.mxu0
        %v5963 = vadd.f32 0.0, %v5962
        %v5964 = vpop.f32.mrf.mxu0
        %v5965 = vadd.f32 0.0, %v5964
        %5966 = vdwg.mxu0
        %v5967 = vadd.f32 %v5812, %v5948
        %v5968 = vadd.f32 %v5813, %v5950
        %v5969 = vadd.f32 %v5814, %v5953
        %v5970 = vadd.f32 %v5815, %v5955
        %v5971 = vadd.f32 %v5816, %v5958
        %v5972 = vadd.f32 %v5817, %v5960
        %v5973 = vadd.f32 %v5818, %v5963
        %v5974 = vadd.f32 %v5819, %v5965
        %v5975 = vld [vmem:[%s4 + $0x28] sm:$0xf]
        %v5976 = vld [vmem:[%s4 + $0x2c] sm:$0xf]
        %5977 = vset.pattern.permute.xlu0 5
        %5978 = vperm.xlu0 %5977, %v5329
        %v5979 = vpop.permute.xlu0 %5978
        %5980 = vset.pattern.permute.xlu0 5
        %5981 = vperm.xlu0 %5980, %v5330
        %v5982 = vpop.permute.xlu0 %5981
        %5983 = vset.pattern.permute.xlu0 5
        %5984 = vperm.xlu0 %5983, %v5331
        %v5985 = vpop.permute.xlu0 %5984
        %5986 = vset.pattern.permute.xlu0 5
        %5987 = vperm.xlu0 %5986, %v5332
        %v5988 = vpop.permute.xlu0 %5987
        %5989 = vset.pattern.permute.xlu0 5
        %5990 = vperm.xlu0 %5989, %v5333
        %v5991 = vpop.permute.xlu0 %5990
        %5992 = vset.pattern.permute.xlu0 5
        %5993 = vperm.xlu0 %5992, %v5334
        %v5994 = vpop.permute.xlu0 %5993
        %5995 = vset.pattern.permute.xlu0 5
        %5996 = vperm.xlu0 %5995, %v5335
        %v5997 = vpop.permute.xlu0 %5996
        %5998 = vset.pattern.permute.xlu0 5
        %5999 = vperm.xlu0 %5998, %v5336
        %v6000 = vpop.permute.xlu0 %5999
        %v6001 = vrot.slane %v5979, 6
        %v6002 = vrot.slane %v5982, 6
        %v6003 = vsel %vm1427, %v6001, %v6002
        %v6004 = vrot.slane %v5985, 6
        %v6005 = vsel %vm1427, %v6002, %v6004
        %v6006 = vrot.slane %v5988, 6
        %v6007 = vsel %vm1427, %v6004, %v6006
        %v6008 = vrot.slane %v5991, 6
        %v6009 = vsel %vm1427, %v6006, %v6008
        %v6010 = vrot.slane %v5994, 6
        %v6011 = vsel %vm1427, %v6008, %v6010
        %v6012 = vrot.slane %v5997, 6
        %v6013 = vsel %vm1427, %v6010, %v6012
        %v6014 = vrot.slane %v6000, 6
        %v6015 = vsel %vm1427, %v6012, %v6014
        %v6025 = vmul.f32 %v5327, %v6001
        %v6026 = vmul.f32 %v5305, %v6003
        %v6027 = vmul.f32 %v5307, %v6005
        %v6028 = vmul.f32 %v5309, %v6007
        %v6029 = vmul.f32 %v5311, %v6009
        %v6030 = vmul.f32 %v5313, %v6011
        %v6031 = vmul.f32 %v5315, %v6013
        %v6032 = vmul.f32 %v5317, %v6015
        %v6033 = vmul.f32 %v5328, %v6014
        %v6034 = vpack.c.bf16 %v6026, %v6025
        %v6035 = vpack.c.bf16 %v6028, %v6027
        %v6036 = vpack.c.bf16 %v6030, %v6029
        %v6037 = vpack.c.bf16 %v6032, %v6031
        %v6038 = vpack.c.bf16 %v6033, %v6033
        %v6044 = vrot.slane %v6034, 1
        %v6045 = vrot.slane %v6035, 1
        %v6046 = vsel %vm1923, %v6044, %v6045
        %v6047 = vrot.slane %v6036, 1
        %v6048 = vsel %vm1923, %v6045, %v6047
        %v6049 = vrot.slane %v6037, 1
        %v6050 = vsel %vm1923, %v6047, %v6049
        %v6051 = vrot.slane %v6038, 1
        %v6052 = vsel %vm1923, %v6049, %v6051
        %v6055 = vunpack.c.l.b16 %v5975
        %v6056 = vunpack.c.l.b16 %v5976
        %v6057 = vpack.c.b16 %v6056, %v6055
        %v6060 = vsel %vm5497, %v6046, 0
        %v6063 = vsel %vm5497, %v6048, 0
        %v6066 = vsel %vm5497, %v6050, 0
        %v6069 = vsel %vm5497, %v6052, 0
        %6071 = vmatpush.bf16.msra.mxu0 0
        %6072 = vmatpush.bf16.msra.mxu0 0
        %6073 = vmatpush.bf16.msra.mxu0 0
        %6074 = vmatpush.bf16.msra.mxu0 0
        %6075 = vmatpush.bf16.msra.mxu0 0
        %6076 = vmatpush.bf16.msra.mxu0 0
        %6077 = vmatpush.bf16.msra.mxu0 0
        %6078 = vmatpush.bf16.msra.mxu0 %v6057
        %6079 = vmatmul.bf16.gmra.mxu0 %v6060
        %v6080 = vpop.f32.mrf.mxu0
        %v6081 = vadd.f32 0.0, %v6080
        %v6082 = vpop.f32.mrf.mxu0
        %v6083 = vadd.f32 0.0, %v6082
        %6084 = vmatmul.bf16.gmra.mxu0 %v6063
        %v6085 = vpop.f32.mrf.mxu0
        %v6086 = vadd.f32 0.0, %v6085
        %v6087 = vpop.f32.mrf.mxu0
        %v6088 = vadd.f32 0.0, %v6087
        %6089 = vmatmul.bf16.gmra.mxu0 %v6066
        %v6090 = vpop.f32.mrf.mxu0
        %v6091 = vadd.f32 0.0, %v6090
        %v6092 = vpop.f32.mrf.mxu0
        %v6093 = vadd.f32 0.0, %v6092
        %6094 = vmatmul.bf16.gmra.mxu0 %v6069
        %v6095 = vpop.f32.mrf.mxu0
        %v6096 = vadd.f32 0.0, %v6095
        %v6097 = vpop.f32.mrf.mxu0
        %v6098 = vadd.f32 0.0, %v6097
        %6099 = vdwg.mxu0
        %v6100 = vadd.f32 %v5967, %v6081
        %v6101 = vadd.f32 %v5968, %v6083
        %v6102 = vadd.f32 %v5969, %v6086
        %v6103 = vadd.f32 %v5970, %v6088
        %v6104 = vadd.f32 %v5971, %v6091
        %v6105 = vadd.f32 %v5972, %v6093
        %v6106 = vadd.f32 %v5973, %v6096
        %v6107 = vadd.f32 %v5974, %v6098
        %v6108 = vld [vmem:[%s4 + $0x30] sm:$0xf]
        %v6109 = vld [vmem:[%s4 + $0x34] sm:$0xf]
        %6110 = vset.pattern.permute.xlu0 6
        %6111 = vperm.xlu0 %6110, %v5329
        %v6112 = vpop.permute.xlu0 %6111
        %6114 = vset.pattern.permute.xlu0 6
        %6115 = vperm.xlu0 %6114, %v5330
        %v6116 = vpop.permute.xlu0 %6115
        %6118 = vset.pattern.permute.xlu0 6
        %6119 = vperm.xlu0 %6118, %v5331
        %v6120 = vpop.permute.xlu0 %6119
        %6122 = vset.pattern.permute.xlu0 6
        %6123 = vperm.xlu0 %6122, %v5332
        %v6124 = vpop.permute.xlu0 %6123
        %6126 = vset.pattern.permute.xlu0 6
        %6127 = vperm.xlu0 %6126, %v5333
        %v6128 = vpop.permute.xlu0 %6127
        %6130 = vset.pattern.permute.xlu0 6
        %6131 = vperm.xlu0 %6130, %v5334
        %v6132 = vpop.permute.xlu0 %6131
        %6134 = vset.pattern.permute.xlu0 6
        %6135 = vperm.xlu0 %6134, %v5335
        %v6136 = vpop.permute.xlu0 %6135
        %6138 = vset.pattern.permute.xlu0 6
        %6139 = vperm.xlu0 %6138, %v5336
        %v6140 = vpop.permute.xlu0 %6139
        %v6142 = vmul.f32 %v5305, %v6112
        %v6143 = vmul.f32 %v5307, %v6116
        %v6144 = vmul.f32 %v5309, %v6120
        %v6145 = vmul.f32 %v5311, %v6124
        %v6146 = vmul.f32 %v5313, %v6128
        %v6147 = vmul.f32 %v5315, %v6132
        %v6148 = vmul.f32 %v5317, %v6136
        %v6149 = vmul.f32 %v5328, %v6140
        %v6150 = vpack.c.bf16 %v6143, %v6142
        %v6151 = vpack.c.bf16 %v6145, %v6144
        %v6152 = vpack.c.bf16 %v6147, %v6146
        %v6153 = vpack.c.bf16 %v6149, %v6148
        %v6156 = vunpack.c.l.b16 %v6108
        %v6157 = vunpack.c.l.b16 %v6109
        %v6158 = vpack.c.b16 %v6157, %v6156
        %v6161 = vsel %vm5497, %v6150, 0
        %v6164 = vsel %vm5497, %v6151, 0
        %v6167 = vsel %vm5497, %v6152, 0
        %v6170 = vsel %vm5497, %v6153, 0
        %6172 = vmatpush.bf16.msra.mxu0 0
        %6173 = vmatpush.bf16.msra.mxu0 0
        %6174 = vmatpush.bf16.msra.mxu0 0
        %6175 = vmatpush.bf16.msra.mxu0 0
        %6176 = vmatpush.bf16.msra.mxu0 0
        %6177 = vmatpush.bf16.msra.mxu0 0
        %6178 = vmatpush.bf16.msra.mxu0 0
        %6179 = vmatpush.bf16.msra.mxu0 %v6158
        %6180 = vmatmul.bf16.gmra.mxu0 %v6161
        %v6181 = vpop.f32.mrf.mxu0
        %v6182 = vadd.f32 0.0, %v6181
        %v6183 = vpop.f32.mrf.mxu0
        %v6184 = vadd.f32 0.0, %v6183
        %6185 = vmatmul.bf16.gmra.mxu0 %v6164
        %v6186 = vpop.f32.mrf.mxu0
        %v6187 = vadd.f32 0.0, %v6186
        %v6188 = vpop.f32.mrf.mxu0
        %v6189 = vadd.f32 0.0, %v6188
        %6190 = vmatmul.bf16.gmra.mxu0 %v6167
        %v6191 = vpop.f32.mrf.mxu0
        %v6192 = vadd.f32 0.0, %v6191
        %v6193 = vpop.f32.mrf.mxu0
        %v6194 = vadd.f32 0.0, %v6193
        %6195 = vmatmul.bf16.gmra.mxu0 %v6170
        %v6196 = vpop.f32.mrf.mxu0
        %v6197 = vadd.f32 0.0, %v6196
        %v6198 = vpop.f32.mrf.mxu0
        %v6199 = vadd.f32 0.0, %v6198
        %6200 = vdwg.mxu0
        %v6201 = vadd.f32 %v6100, %v6182
        %v6202 = vadd.f32 %v6101, %v6184
        %v6203 = vadd.f32 %v6102, %v6187
        %v6204 = vadd.f32 %v6103, %v6189
        %v6205 = vadd.f32 %v6104, %v6192
        %v6206 = vadd.f32 %v6105, %v6194
        %v6207 = vadd.f32 %v6106, %v6197
        %v6208 = vadd.f32 %v6107, %v6199
        %v6209 = vld [vmem:[%s4 + $0x38] sm:$0xf]
        %v6210 = vld [vmem:[%s4 + $0x3c] sm:$0xf]
        %6211 = vset.pattern.permute.xlu0 7
        %6212 = vperm.xlu0 %6211, %v5329
        %v6213 = vpop.permute.xlu0 %6212
        %6214 = vset.pattern.permute.xlu0 7
        %6215 = vperm.xlu0 %6214, %v5330
        %v6216 = vpop.permute.xlu0 %6215
        %6217 = vset.pattern.permute.xlu0 7
        %6218 = vperm.xlu0 %6217, %v5331
        %v6219 = vpop.permute.xlu0 %6218
        %6220 = vset.pattern.permute.xlu0 7
        %6221 = vperm.xlu0 %6220, %v5332
        %v6222 = vpop.permute.xlu0 %6221
        %6223 = vset.pattern.permute.xlu0 7
        %6224 = vperm.xlu0 %6223, %v5333
        %v6225 = vpop.permute.xlu0 %6224
        %6226 = vset.pattern.permute.xlu0 7
        %6227 = vperm.xlu0 %6226, %v5334
        %v6228 = vpop.permute.xlu0 %6227
        %6229 = vset.pattern.permute.xlu0 7
        %6230 = vperm.xlu0 %6229, %v5335
        %v6231 = vpop.permute.xlu0 %6230
        %6232 = vset.pattern.permute.xlu0 7
        %6233 = vperm.xlu0 %6232, %v5336
        %v6234 = vpop.permute.xlu0 %6233
        %v6235 = vrot.slane %v6213, 7
        %v6236 = vrot.slane %v6216, 7
        %v6237 = vsel %vm651, %v6235, %v6236
        %v6238 = vrot.slane %v6219, 7
        %v6239 = vsel %vm651, %v6236, %v6238
        %v6240 = vrot.slane %v6222, 7
        %v6241 = vsel %vm651, %v6238, %v6240
        %v6242 = vrot.slane %v6225, 7
        %v6243 = vsel %vm651, %v6240, %v6242
        %v6244 = vrot.slane %v6228, 7
        %v6245 = vsel %vm651, %v6242, %v6244
        %v6246 = vrot.slane %v6231, 7
        %v6247 = vsel %vm651, %v6244, %v6246
        %v6248 = vrot.slane %v6234, 7
        %v6249 = vsel %vm651, %v6246, %v6248
        %v6259 = vmul.f32 %v5305, %v6235
        %v6260 = vmul.f32 %v5307, %v6237
        %v6261 = vmul.f32 %v5309, %v6239
        %v6262 = vmul.f32 %v5311, %v6241
        %v6263 = vmul.f32 %v5313, %v6243
        %v6264 = vmul.f32 %v5315, %v6245
        %v6265 = vmul.f32 %v5317, %v6247
        %v6266 = vmul.f32 %v5328, %v6249
        %v6267 = vmul.f32 %v6248, 0.0
        %v6268 = vpack.c.bf16 %v6260, %v6259
        %v6269 = vpack.c.bf16 %v6262, %v6261
        %v6270 = vpack.c.bf16 %v6264, %v6263
        %v6271 = vpack.c.bf16 %v6266, %v6265
        %v6272 = vpack.c.bf16 %v6267, %v6267
        %v6274 = vshrl.u32 %v6268, 16
        %v6276 = vshll.u32 %v6268, 16
        %v6278 = vrot.slane %v6276, 1
        %v6279 = vor.u32 %v6274, %v6278
        %v6281 = vshll.u32 %v6269, 16
        %v6283 = vrot.slane %v6281, 1
        %v6284 = vsel %vm1234, %v6279, %v6283
        %v6285 = vshrl.u32 %v6269, 16
        %v6287 = vor.u32 %v6285, %v6283
        %v6289 = vshll.u32 %v6270, 16
        %v6291 = vrot.slane %v6289, 1
        %v6292 = vsel %vm1234, %v6287, %v6291
        %v6293 = vshrl.u32 %v6270, 16
        %v6295 = vor.u32 %v6293, %v6291
        %v6297 = vshll.u32 %v6271, 16
        %v6299 = vrot.slane %v6297, 1
        %v6300 = vsel %vm1234, %v6295, %v6299
        %v6301 = vshrl.u32 %v6271, 16
        %v6303 = vor.u32 %v6301, %v6299
        %v6305 = vshll.u32 %v6272, 16
        %v6307 = vrot.slane %v6305, 1
        %v6308 = vsel %vm1234, %v6303, %v6307
        %v6311 = vunpack.c.l.b16 %v6209
        %v6312 = vunpack.c.l.b16 %v6210
        %v6313 = vpack.c.b16 %v6312, %v6311
        %v6316 = vsel %vm5497, %v6284, 0
        %v6319 = vsel %vm5497, %v6292, 0
        %v6322 = vsel %vm5497, %v6300, 0
        %v6325 = vsel %vm5497, %v6308, 0
        %6327 = vmatpush.bf16.msra.mxu0 0
        %6328 = vmatpush.bf16.msra.mxu0 0
        %6329 = vmatpush.bf16.msra.mxu0 0
        %6330 = vmatpush.bf16.msra.mxu0 0
        %6331 = vmatpush.bf16.msra.mxu0 0
        %6332 = vmatpush.bf16.msra.mxu0 0
        %6333 = vmatpush.bf16.msra.mxu0 0
        %6334 = vmatpush.bf16.msra.mxu0 %v6313
        %6335 = vmatmul.bf16.gmra.mxu0 %v6316
        %v6336 = vpop.f32.mrf.mxu0
        %v6337 = vadd.f32 0.0, %v6336
        %v6338 = vpop.f32.mrf.mxu0
        %v6339 = vadd.f32 0.0, %v6338
        %6340 = vmatmul.bf16.gmra.mxu0 %v6319
        %v6341 = vpop.f32.mrf.mxu0
        %v6342 = vadd.f32 0.0, %v6341
        %v6343 = vpop.f32.mrf.mxu0
        %v6344 = vadd.f32 0.0, %v6343
        %6345 = vmatmul.bf16.gmra.mxu0 %v6322
        %v6346 = vpop.f32.mrf.mxu0
        %v6347 = vadd.f32 0.0, %v6346
        %v6348 = vpop.f32.mrf.mxu0
        %v6349 = vadd.f32 0.0, %v6348
        %6350 = vmatmul.bf16.gmra.mxu0 %v6325
        %v6351 = vpop.f32.mrf.mxu0
        %v6352 = vadd.f32 0.0, %v6351
        %v6353 = vpop.f32.mrf.mxu0
        %v6354 = vadd.f32 0.0, %v6353
        %6355 = vdwg.mxu0
        %v6356 = vadd.f32 %v6201, %v6337
        %v6357 = vadd.f32 %v6202, %v6339
        %v6358 = vadd.f32 %v6203, %v6342
        %v6359 = vadd.f32 %v6204, %v6344
        %v6360 = vadd.f32 %v6205, %v6347
        %v6361 = vadd.f32 %v6206, %v6349
        %v6362 = vadd.f32 %v6207, %v6352
        %v6363 = vadd.f32 %v6208, %v6354
        %v6364 = vld [vmem:[%s4 + $0x40] sm:$0xf]
        %v6365 = vld [vmem:[%s4 + $0x44] sm:$0xf]
        %6366 = vset.pattern.permute.xlu0 8
        %6367 = vperm.xlu0 %6366, %v5329
        %v6368 = vpop.permute.xlu0 %6367
        %6369 = vset.pattern.permute.xlu0 8
        %6370 = vperm.xlu0 %6369, %v5330
        %v6371 = vpop.permute.xlu0 %6370
        %6372 = vset.pattern.permute.xlu0 8
        %6373 = vperm.xlu0 %6372, %v5331
        %v6374 = vpop.permute.xlu0 %6373
        %6375 = vset.pattern.permute.xlu0 8
        %6376 = vperm.xlu0 %6375, %v5332
        %v6377 = vpop.permute.xlu0 %6376
        %6378 = vset.pattern.permute.xlu0 8
        %6379 = vperm.xlu0 %6378, %v5333
        %v6380 = vpop.permute.xlu0 %6379
        %6381 = vset.pattern.permute.xlu0 8
        %6382 = vperm.xlu0 %6381, %v5334
        %v6383 = vpop.permute.xlu0 %6382
        %6384 = vset.pattern.permute.xlu0 8
        %6385 = vperm.xlu0 %6384, %v5335
        %v6386 = vpop.permute.xlu0 %6385
        %6387 = vset.pattern.permute.xlu0 8
        %6388 = vperm.xlu0 %6387, %v5336
        %v6389 = vpop.permute.xlu0 %6388
        %v6390 = vrot.slane %v6368, 6
        %v6391 = vrot.slane %v6371, 6
        %v6392 = vsel %vm1427, %v6390, %v6391
        %v6393 = vrot.slane %v6374, 6
        %v6394 = vsel %vm1427, %v6391, %v6393
        %v6395 = vrot.slane %v6377, 6
        %v6396 = vsel %vm1427, %v6393, %v6395
        %v6397 = vrot.slane %v6380, 6
        %v6398 = vsel %vm1427, %v6395, %v6397
        %v6399 = vrot.slane %v6383, 6
        %v6400 = vsel %vm1427, %v6397, %v6399
        %v6401 = vrot.slane %v6386, 6
        %v6402 = vsel %vm1427, %v6399, %v6401
        %v6403 = vrot.slane %v6389, 6
        %v6404 = vsel %vm1427, %v6401, %v6403
        %v6414 = vmul.f32 %v5305, %v6390
        %v6415 = vmul.f32 %v5307, %v6392
        %v6416 = vmul.f32 %v5309, %v6394
        %v6417 = vmul.f32 %v5311, %v6396
        %v6418 = vmul.f32 %v5313, %v6398
        %v6419 = vmul.f32 %v5315, %v6400
        %v6420 = vmul.f32 %v5317, %v6402
        %v6421 = vmul.f32 %v5328, %v6404
        %v6422 = vmul.f32 %v6403, 0.0
        %v6423 = vpack.c.bf16 %v6415, %v6414
        %v6424 = vpack.c.bf16 %v6417, %v6416
        %v6425 = vpack.c.bf16 %v6419, %v6418
        %v6426 = vpack.c.bf16 %v6421, %v6420
        %v6427 = vpack.c.bf16 %v6422, %v6422
        %v6433 = vrot.slane %v6423, 1
        %v6434 = vrot.slane %v6424, 1
        %v6435 = vsel %vm1923, %v6433, %v6434
        %v6436 = vrot.slane %v6425, 1
        %v6437 = vsel %vm1923, %v6434, %v6436
        %v6438 = vrot.slane %v6426, 1
        %v6439 = vsel %vm1923, %v6436, %v6438
        %v6440 = vrot.slane %v6427, 1
        %v6441 = vsel %vm1923, %v6438, %v6440
        %v6444 = vunpack.c.l.b16 %v6364
        %v6445 = vunpack.c.l.b16 %v6365
        %v6446 = vpack.c.b16 %v6445, %v6444
        %v6449 = vsel %vm5497, %v6435, 0
        %v6452 = vsel %vm5497, %v6437, 0
        %v6455 = vsel %vm5497, %v6439, 0
        %v6458 = vsel %vm5497, %v6441, 0
        %6460 = vmatpush.bf16.msra.mxu0 0
        %6461 = vmatpush.bf16.msra.mxu0 0
        %6462 = vmatpush.bf16.msra.mxu0 0
        %6463 = vmatpush.bf16.msra.mxu0 0
        %6464 = vmatpush.bf16.msra.mxu0 0
        %6465 = vmatpush.bf16.msra.mxu0 0
        %6466 = vmatpush.bf16.msra.mxu0 0
        %6467 = vmatpush.bf16.msra.mxu0 %v6446
        %6468 = vmatmul.bf16.gmra.mxu0 %v6449
        %v6469 = vpop.f32.mrf.mxu0
        %v6470 = vadd.f32 0.0, %v6469
        %v6471 = vpop.f32.mrf.mxu0
        %v6472 = vadd.f32 0.0, %v6471
        %6473 = vmatmul.bf16.gmra.mxu0 %v6452
        %v6474 = vpop.f32.mrf.mxu0
        %v6475 = vadd.f32 0.0, %v6474
        %v6476 = vpop.f32.mrf.mxu0
        %v6477 = vadd.f32 0.0, %v6476
        %6478 = vmatmul.bf16.gmra.mxu0 %v6455
        %v6479 = vpop.f32.mrf.mxu0
        %v6480 = vadd.f32 0.0, %v6479
        %v6481 = vpop.f32.mrf.mxu0
        %v6482 = vadd.f32 0.0, %v6481
        %6483 = vmatmul.bf16.gmra.mxu0 %v6458
        %v6484 = vpop.f32.mrf.mxu0
        %v6485 = vadd.f32 0.0, %v6484
        %v6486 = vpop.f32.mrf.mxu0
        %v6487 = vadd.f32 0.0, %v6486
        %6488 = vdwg.mxu0
        %v6489 = vadd.f32 %v6356, %v6470
        %v6490 = vadd.f32 %v6357, %v6472
        %v6491 = vadd.f32 %v6358, %v6475
        %v6492 = vadd.f32 %v6359, %v6477
        %v6493 = vadd.f32 %v6360, %v6480
        %v6494 = vadd.f32 %v6361, %v6482
        %v6495 = vadd.f32 %v6362, %v6485
        %v6496 = vadd.f32 %v6363, %v6487
        %v6497 = vld [vmem:[%s5] sm:$0x1]
        %v6499 = vperm.slane %v6497, 0
        %v6501 = vadd.f32 %v6489, %v6499
        %v6502 = vadd.f32 %v6490, %v6499
        %v6503 = vadd.f32 %v6491, %v6499
        %v6504 = vadd.f32 %v6492, %v6499
        %v6505 = vadd.f32 %v6493, %v6499
        %v6506 = vadd.f32 %v6494, %v6499
        %v6507 = vadd.f32 %v6495, %v6499
        %v6508 = vadd.f32 %v6496, %v6499
        %v6509 = vmax.f32 %v6501, 0.0
        %v6510 = vmax.f32 %v6502, 0.0
        %v6511 = vmax.f32 %v6503, 0.0
        %v6512 = vmax.f32 %v6504, 0.0
        %v6513 = vmax.f32 %v6505, 0.0
        %v6514 = vmax.f32 %v6506, 0.0
        %v6515 = vmax.f32 %v6507, 0.0
        %v6516 = vmax.f32 %v6508, 0.0
        %v6525 = vrot.slane %v6509, 1
        %v6526 = vrot.slane %v6510, 1
        %v6527 = vsel %vm5001, %v6525, %v6526
        %v6528 = vrot.slane %v6511, 1
        %v6529 = vsel %vm5001, %v6526, %v6528
        %v6530 = vrot.slane %v6512, 1
        %v6531 = vsel %vm5001, %v6528, %v6530
        %v6532 = vrot.slane %v6513, 1
        %v6533 = vsel %vm5001, %v6530, %v6532
        %v6534 = vrot.slane %v6514, 1
        %v6535 = vsel %vm5001, %v6532, %v6534
        %v6536 = vrot.slane %v6515, 1
        %v6537 = vsel %vm5001, %v6534, %v6536
        %v6538 = vrot.slane %v6516, 1
        %v6539 = vsel %vm5001, %v6536, %v6538
        %v6540 = vsel %vm5001, %v6538, %v5065
        %v6549 = vmax.f32 %v6509, %v6527
        %v6550 = vmax.f32 %v6510, %v6529
        %v6551 = vmax.f32 %v6511, %v6531
        %v6552 = vmax.f32 %v6512, %v6533
        %v6553 = vmax.f32 %v6513, %v6535
        %v6554 = vmax.f32 %v6514, %v6537
        %v6555 = vmax.f32 %v6515, %v6539
        %v6556 = vmax.f32 %v6516, %v6540
        %v6557 = vmax.f32 %v6549, %v6510
        %v6558 = vmax.f32 %v6550, %v6511
        %v6559 = vmax.f32 %v6551, %v6512
        %v6560 = vmax.f32 %v6552, %v6513
        %v6561 = vmax.f32 %v6553, %v6514
        %v6562 = vmax.f32 %v6554, %v6515
        %v6563 = vmax.f32 %v6555, %v6516
        %v6564 = vmax.f32 %v6556, 0.0
        %v6565 = vmax.f32 %v6557, %v6529
        %v6566 = vmax.f32 %v6558, %v6531
        %v6567 = vmax.f32 %v6559, %v6533
        %v6568 = vmax.f32 %v6560, %v6535
        %v6569 = vmax.f32 %v6561, %v6537
        %v6570 = vmax.f32 %v6562, %v6539
        %v6571 = vmax.f32 %v6563, %v6540
        %v6572 = vmax.f32 %v6564, %v5163
        %v6573 = vld [vmem:[%s8] sm:$0xff]
        %v6574 = vld [vmem:[%s8 + $0x8] sm:$0xff]
        %vm6575 = vcmask 523264
        %v6577 = vsel %vm6575, %v6573, 0
        %v6580 = vsel %vm6575, %v6574, 0
        %6582 = vmatpush.msra.mxu0 0.0
        %6583 = vmatpush.msra.mxu0 0.0
        %6584 = vmatpush.msra.mxu0 0.0
        %6585 = vmatpush.msra.mxu0 0.0
        %6586 = vmatpush.msra.mxu0 0.0
        %6587 = vmatpush.msra.mxu0 0.0
        %6588 = vmatpush.msra.mxu0 0.0
        %6589 = vmatpush.msra.mxu0 0.0
        %6590 = vmatpush.msra.mxu0 %v6572
        %6591 = vmatpush.msra.mxu0 %v6571
        %6592 = vmatpush.msra.mxu0 %v6570
        %6593 = vmatpush.msra.mxu0 %v6569
        %6594 = vmatpush.msra.mxu0 %v6568
        %6595 = vmatpush.msra.mxu0 %v6567
        %6596 = vmatpush.msra.mxu0 %v6566
        %6597 = vmatpush.msra.mxu0 %v6565
        %6598 = vmatmul.f32.gmra.mxu0 %v6577
        %v6599 = vpop.f32.mrf.mxu0
        %v6600 = vadd.f32 0.0, %v6599
        %6601 = vmatmul.f32.gmra.mxu0 %v6580
        %v6602 = vpop.f32.mrf.mxu0
        %v6603 = vadd.f32 0.0, %v6602
        %6604 = vdwg.mxu0
        %v6605 = vld [vmem:[%s11] sm:$0xff]
        %v6606 = vld [vmem:[%s11 + $0x8] sm:$0xff]
        %v6607 = vld [vmem:[%s11 + $0x10] sm:$0xff]
        %v6608 = vld [vmem:[%s11 + $0x18] sm:$0xff]
        %v6609 = vld [vmem:[%s11 + $0x20] sm:$0xff]
        %v6610 = vld [vmem:[%s11 + $0x28] sm:$0xff]
        %v6611 = vld [vmem:[%s11 + $0x30] sm:$0xff]
        %v6612 = vld [vmem:[%s11 + $0x38] sm:$0xff]
        %v6614 = vsel %vm5497, %v6605, 0
        %v6617 = vsel %vm5497, %v6606, 0
        %v6620 = vsel %vm5497, %v6607, 0
        %v6623 = vsel %vm5497, %v6608, 0
        %v6626 = vsel %vm5497, %v6609, 0
        %v6629 = vsel %vm5497, %v6610, 0
        %v6632 = vsel %vm5497, %v6611, 0
        %v6635 = vsel %vm5497, %v6612, 0
        %6637 = vmatpush.msra.mxu0 0.0
        %6638 = vmatpush.msra.mxu0 0.0
        %6639 = vmatpush.msra.mxu0 0.0
        %6640 = vmatpush.msra.mxu0 0.0
        %6641 = vmatpush.msra.mxu0 0.0
        %6642 = vmatpush.msra.mxu0 0.0
        %6643 = vmatpush.msra.mxu0 0.0
        %6644 = vmatpush.msra.mxu0 0.0
        %6645 = vmatpush.msra.mxu0 0.0
        %6646 = vmatpush.msra.mxu0 0.0
        %6647 = vmatpush.msra.mxu0 0.0
        %6648 = vmatpush.msra.mxu0 0.0
        %6649 = vmatpush.msra.mxu0 0.0
        %6650 = vmatpush.msra.mxu0 0.0
        %6651 = vmatpush.msra.mxu0 %v6603
        %6652 = vmatpush.msra.mxu0 %v6600
        %6653 = vmatmul.f32.gmra.mxu0 %v6614
        %v6654 = vpop.f32.mrf.mxu0
        %v6655 = vadd.f32 0.0, %v6654
        %6656 = vmatmul.f32.gmra.mxu0 %v6617
        %v6657 = vpop.f32.mrf.mxu0
        %v6658 = vadd.f32 0.0, %v6657
        %6659 = vmatmul.f32.gmra.mxu0 %v6620
        %v6660 = vpop.f32.mrf.mxu0
        %v6661 = vadd.f32 0.0, %v6660
        %6662 = vmatmul.f32.gmra.mxu0 %v6623
        %v6663 = vpop.f32.mrf.mxu0
        %v6664 = vadd.f32 0.0, %v6663
        %6665 = vmatmul.f32.gmra.mxu0 %v6626
        %v6666 = vpop.f32.mrf.mxu0
        %v6667 = vadd.f32 0.0, %v6666
        %6668 = vmatmul.f32.gmra.mxu0 %v6629
        %v6669 = vpop.f32.mrf.mxu0
        %v6670 = vadd.f32 0.0, %v6669
        %6671 = vmatmul.f32.gmra.mxu0 %v6632
        %v6672 = vpop.f32.mrf.mxu0
        %v6673 = vadd.f32 0.0, %v6672
        %6674 = vmatmul.f32.gmra.mxu0 %v6635
        %v6675 = vpop.f32.mrf.mxu0
        %v6676 = vadd.f32 0.0, %v6675
        %6677 = vdwg.mxu0
        %v6678 = vpack.c.bf16 %v6658, %v6655
        %v6679 = vpack.c.bf16 %v6664, %v6661
        %v6680 = vpack.c.bf16 %v6670, %v6667
        %v6681 = vpack.c.bf16 %v6676, %v6673
        %v6682 = vld [vmem:[%s9] sm:$0x3]
        %v6683 = vld [vmem:[%s12] sm:$0xff]
        %v6684 = vld [vmem:[%s12 + $0x8] sm:$0xff]
        %v6685 = vld [vmem:[%s12 + $0x10] sm:$0xff]
        %v6686 = vld [vmem:[%s12 + $0x18] sm:$0xff]
        %v6687 = vld [vmem:[%s12 + $0x20] sm:$0xff]
        %v6688 = vld [vmem:[%s12 + $0x28] sm:$0xff]
        %v6689 = vld [vmem:[%s12 + $0x30] sm:$0xff]
        %v6690 = vld [vmem:[%s12 + $0x38] sm:$0xff]
        %vm6691 = vcmask 31744
        %v6693 = vsel %vm6691, %v6678, 0
        %v6696 = vsel %vm6691, %v6679, 0
        %v6699 = vsel %vm6691, %v6680, 0
        %v6702 = vsel %vm6691, %v6681, 0
        %v6705 = vsel %vm1427, %v6682, 0
        %6707 = vmatpush.bf16.msra.mxu0 0
        %6708 = vmatpush.bf16.msra.mxu0 0
        %6709 = vmatpush.bf16.msra.mxu0 0
        %6710 = vmatpush.bf16.msra.mxu0 0
        %6711 = vmatpush.bf16.msra.mxu0 0
        %6712 = vmatpush.bf16.msra.mxu0 0
        %6713 = vmatpush.bf16.msra.mxu0 0
        %6714 = vmatpush.bf16.msra.mxu0 %v6705
        %6715 = vmatmul.bf16.gmra.mxu0 %v6693
        %v6716 = vpop.f32.mrf.mxu0
        %v6717 = vadd.f32 0.0, %v6716
        %v6718 = vpop.f32.mrf.mxu0
        %v6719 = vadd.f32 0.0, %v6718
        %6720 = vmatmul.bf16.gmra.mxu0 %v6696
        %v6721 = vpop.f32.mrf.mxu0
        %v6722 = vadd.f32 0.0, %v6721
        %v6723 = vpop.f32.mrf.mxu0
        %v6724 = vadd.f32 0.0, %v6723
        %6725 = vmatmul.bf16.gmra.mxu0 %v6699
        %v6726 = vpop.f32.mrf.mxu0
        %v6727 = vadd.f32 0.0, %v6726
        %v6728 = vpop.f32.mrf.mxu0
        %v6729 = vadd.f32 0.0, %v6728
        %6730 = vmatmul.bf16.gmra.mxu0 %v6702
        %v6731 = vpop.f32.mrf.mxu0
        %v6732 = vadd.f32 0.0, %v6731
        %v6733 = vpop.f32.mrf.mxu0
        %v6734 = vadd.f32 0.0, %v6733
        %6735 = vdwg.mxu0
        %6737 = vset.pattern.permute.xlu0 0
        %6738 = vperm.xlu0 %6737, %v6683
        %v6739 = vpop.permute.xlu0 %6738
        %6742 = vset.pattern.permute.xlu0 0
        %6743 = vperm.xlu0 %6742, %v6684
        %v6744 = vpop.permute.xlu0 %6743
        %6747 = vset.pattern.permute.xlu0 0
        %6748 = vperm.xlu0 %6747, %v6685
        %v6749 = vpop.permute.xlu0 %6748
        %6752 = vset.pattern.permute.xlu0 0
        %6753 = vperm.xlu0 %6752, %v6686
        %v6754 = vpop.permute.xlu0 %6753
        %6757 = vset.pattern.permute.xlu0 0
        %6758 = vperm.xlu0 %6757, %v6687
        %v6759 = vpop.permute.xlu0 %6758
        %6762 = vset.pattern.permute.xlu0 0
        %6763 = vperm.xlu0 %6762, %v6688
        %v6764 = vpop.permute.xlu0 %6763
        %6767 = vset.pattern.permute.xlu0 0
        %6768 = vperm.xlu0 %6767, %v6689
        %v6769 = vpop.permute.xlu0 %6768
        %6772 = vset.pattern.permute.xlu0 0
        %6773 = vperm.xlu0 %6772, %v6690
        %v6774 = vpop.permute.xlu0 %6773
        %v6776 = vmul.f32 %v6739, %v6717
        %v6777 = vmul.f32 %v6744, %v6719
        %v6778 = vmul.f32 %v6749, %v6722
        %v6779 = vmul.f32 %v6754, %v6724
        %v6780 = vmul.f32 %v6759, %v6727
        %v6781 = vmul.f32 %v6764, %v6729
        %v6782 = vmul.f32 %v6769, %v6732
        %v6783 = vmul.f32 %v6774, %v6734
        %v6784 = vadd.f32 %v6776, 0.0
        %v6785 = vadd.f32 %v6777, 0.0
        %v6786 = vadd.f32 %v6778, 0.0
        %v6787 = vadd.f32 %v6779, 0.0
        %v6788 = vadd.f32 %v6780, 0.0
        %v6789 = vadd.f32 %v6781, 0.0
        %v6790 = vadd.f32 %v6782, 0.0
        %v6791 = vadd.f32 %v6783, 0.0
        %v6792 = vld [vmem:[%s9] sm:$0xc]
        %v6794 = vunpack.c.l.b16 %v6792
        %v6795 = vpack.c.b16 %v6794, %v6794
        %v6796 = vrot.slane %v6795, 2
        %v6798 = vsel %vm1427, %v6796, 0
        %6800 = vmatpush.bf16.msra.mxu0 0
        %6801 = vmatpush.bf16.msra.mxu0 0
        %6802 = vmatpush.bf16.msra.mxu0 0
        %6803 = vmatpush.bf16.msra.mxu0 0
        %6804 = vmatpush.bf16.msra.mxu0 0
        %6805 = vmatpush.bf16.msra.mxu0 0
        %6806 = vmatpush.bf16.msra.mxu0 0
        %6807 = vmatpush.bf16.msra.mxu0 %v6798
        %6808 = vmatmul.bf16.gmra.mxu0 %v6693
        %v6809 = vpop.f32.mrf.mxu0
        %v6810 = vadd.f32 0.0, %v6809
        %v6811 = vpop.f32.mrf.mxu0
        %v6812 = vadd.f32 0.0, %v6811
        %6813 = vmatmul.bf16.gmra.mxu0 %v6696
        %v6814 = vpop.f32.mrf.mxu0
        %v6815 = vadd.f32 0.0, %v6814
        %v6816 = vpop.f32.mrf.mxu0
        %v6817 = vadd.f32 0.0, %v6816
        %6818 = vmatmul.bf16.gmra.mxu0 %v6699
        %v6819 = vpop.f32.mrf.mxu0
        %v6820 = vadd.f32 0.0, %v6819
        %v6821 = vpop.f32.mrf.mxu0
        %v6822 = vadd.f32 0.0, %v6821
        %6823 = vmatmul.bf16.gmra.mxu0 %v6702
        %v6824 = vpop.f32.mrf.mxu0
        %v6825 = vadd.f32 0.0, %v6824
        %v6826 = vpop.f32.mrf.mxu0
        %v6827 = vadd.f32 0.0, %v6826
        %6828 = vdwg.mxu0
        %6829 = vset.pattern.permute.xlu0 1
        %6830 = vperm.xlu0 %6829, %v6683
        %v6831 = vpop.permute.xlu0 %6830
        %6833 = vset.pattern.permute.xlu0 1
        %6834 = vperm.xlu0 %6833, %v6684
        %v6835 = vpop.permute.xlu0 %6834
        %6837 = vset.pattern.permute.xlu0 1
        %6838 = vperm.xlu0 %6837, %v6685
        %v6839 = vpop.permute.xlu0 %6838
        %6841 = vset.pattern.permute.xlu0 1
        %6842 = vperm.xlu0 %6841, %v6686
        %v6843 = vpop.permute.xlu0 %6842
        %6845 = vset.pattern.permute.xlu0 1
        %6846 = vperm.xlu0 %6845, %v6687
        %v6847 = vpop.permute.xlu0 %6846
        %6849 = vset.pattern.permute.xlu0 1
        %6850 = vperm.xlu0 %6849, %v6688
        %v6851 = vpop.permute.xlu0 %6850
        %6853 = vset.pattern.permute.xlu0 1
        %6854 = vperm.xlu0 %6853, %v6689
        %v6855 = vpop.permute.xlu0 %6854
        %6857 = vset.pattern.permute.xlu0 1
        %6858 = vperm.xlu0 %6857, %v6690
        %v6859 = vpop.permute.xlu0 %6858
        %v6861 = vmul.f32 %v6831, %v6810
        %v6862 = vmul.f32 %v6835, %v6812
        %v6863 = vmul.f32 %v6839, %v6815
        %v6864 = vmul.f32 %v6843, %v6817
        %v6865 = vmul.f32 %v6847, %v6820
        %v6866 = vmul.f32 %v6851, %v6822
        %v6867 = vmul.f32 %v6855, %v6825
        %v6868 = vmul.f32 %v6859, %v6827
        %v6869 = vadd.f32 %v6784, %v6861
        %v6870 = vadd.f32 %v6785, %v6862
        %v6871 = vadd.f32 %v6786, %v6863
        %v6872 = vadd.f32 %v6787, %v6864
        %v6873 = vadd.f32 %v6788, %v6865
        %v6874 = vadd.f32 %v6789, %v6866
        %v6875 = vadd.f32 %v6790, %v6867
        %v6876 = vadd.f32 %v6791, %v6868
        %v6877 = vld [vmem:[%s9 + $0x4] sm:$0x3]
        %v6879 = vsel %vm1427, %v6877, 0
        %6881 = vmatpush.bf16.msra.mxu0 0
        %6882 = vmatpush.bf16.msra.mxu0 0
        %6883 = vmatpush.bf16.msra.mxu0 0
        %6884 = vmatpush.bf16.msra.mxu0 0
        %6885 = vmatpush.bf16.msra.mxu0 0
        %6886 = vmatpush.bf16.msra.mxu0 0
        %6887 = vmatpush.bf16.msra.mxu0 0
        %6888 = vmatpush.bf16.msra.mxu0 %v6879
        %6889 = vmatmul.bf16.gmra.mxu0 %v6693
        %v6890 = vpop.f32.mrf.mxu0
        %v6891 = vadd.f32 0.0, %v6890
        %v6892 = vpop.f32.mrf.mxu0
        %v6893 = vadd.f32 0.0, %v6892
        %6894 = vmatmul.bf16.gmra.mxu0 %v6696
        %v6895 = vpop.f32.mrf.mxu0
        %v6896 = vadd.f32 0.0, %v6895
        %v6897 = vpop.f32.mrf.mxu0
        %v6898 = vadd.f32 0.0, %v6897
        %6899 = vmatmul.bf16.gmra.mxu0 %v6699
        %v6900 = vpop.f32.mrf.mxu0
        %v6901 = vadd.f32 0.0, %v6900
        %v6902 = vpop.f32.mrf.mxu0
        %v6903 = vadd.f32 0.0, %v6902
        %6904 = vmatmul.bf16.gmra.mxu0 %v6702
        %v6905 = vpop.f32.mrf.mxu0
        %v6906 = vadd.f32 0.0, %v6905
        %v6907 = vpop.f32.mrf.mxu0
        %v6908 = vadd.f32 0.0, %v6907
        %6909 = vdwg.mxu0
        %6910 = vset.pattern.permute.xlu0 2
        %6911 = vperm.xlu0 %6910, %v6683
        %v6912 = vpop.permute.xlu0 %6911
        %6914 = vset.pattern.permute.xlu0 2
        %6915 = vperm.xlu0 %6914, %v6684
        %v6916 = vpop.permute.xlu0 %6915
        %6918 = vset.pattern.permute.xlu0 2
        %6919 = vperm.xlu0 %6918, %v6685
        %v6920 = vpop.permute.xlu0 %6919
        %6922 = vset.pattern.permute.xlu0 2
        %6923 = vperm.xlu0 %6922, %v6686
        %v6924 = vpop.permute.xlu0 %6923
        %6926 = vset.pattern.permute.xlu0 2
        %6927 = vperm.xlu0 %6926, %v6687
        %v6928 = vpop.permute.xlu0 %6927
        %6930 = vset.pattern.permute.xlu0 2
        %6931 = vperm.xlu0 %6930, %v6688
        %v6932 = vpop.permute.xlu0 %6931
        %6934 = vset.pattern.permute.xlu0 2
        %6935 = vperm.xlu0 %6934, %v6689
        %v6936 = vpop.permute.xlu0 %6935
        %6938 = vset.pattern.permute.xlu0 2
        %6939 = vperm.xlu0 %6938, %v6690
        %v6940 = vpop.permute.xlu0 %6939
        %v6942 = vmul.f32 %v6912, %v6891
        %v6943 = vmul.f32 %v6916, %v6893
        %v6944 = vmul.f32 %v6920, %v6896
        %v6945 = vmul.f32 %v6924, %v6898
        %v6946 = vmul.f32 %v6928, %v6901
        %v6947 = vmul.f32 %v6932, %v6903
        %v6948 = vmul.f32 %v6936, %v6906
        %v6949 = vmul.f32 %v6940, %v6908
        %v6950 = vadd.f32 %v6869, %v6942
        %v6951 = vadd.f32 %v6870, %v6943
        %v6952 = vadd.f32 %v6871, %v6944
        %v6953 = vadd.f32 %v6872, %v6945
        %v6954 = vadd.f32 %v6873, %v6946
        %v6955 = vadd.f32 %v6874, %v6947
        %v6956 = vadd.f32 %v6875, %v6948
        %v6957 = vadd.f32 %v6876, %v6949
        %v6958 = vld [vmem:[%s9 + $0x4] sm:$0xc]
        %v6960 = vunpack.c.l.b16 %v6958
        %v6961 = vpack.c.b16 %v6960, %v6960
        %v6962 = vrot.slane %v6961, 2
        %v6964 = vsel %vm1427, %v6962, 0
        %6966 = vmatpush.bf16.msra.mxu0 0
        %6967 = vmatpush.bf16.msra.mxu0 0
        %6968 = vmatpush.bf16.msra.mxu0 0
        %6969 = vmatpush.bf16.msra.mxu0 0
        %6970 = vmatpush.bf16.msra.mxu0 0
        %6971 = vmatpush.bf16.msra.mxu0 0
        %6972 = vmatpush.bf16.msra.mxu0 0
        %6973 = vmatpush.bf16.msra.mxu0 %v6964
        %6974 = vmatmul.bf16.gmra.mxu0 %v6693
        %v6975 = vpop.f32.mrf.mxu0
        %v6976 = vadd.f32 0.0, %v6975
        %v6977 = vpop.f32.mrf.mxu0
        %v6978 = vadd.f32 0.0, %v6977
        %6979 = vmatmul.bf16.gmra.mxu0 %v6696
        %v6980 = vpop.f32.mrf.mxu0
        %v6981 = vadd.f32 0.0, %v6980
        %v6982 = vpop.f32.mrf.mxu0
        %v6983 = vadd.f32 0.0, %v6982
        %6984 = vmatmul.bf16.gmra.mxu0 %v6699
        %v6985 = vpop.f32.mrf.mxu0
        %v6986 = vadd.f32 0.0, %v6985
        %v6987 = vpop.f32.mrf.mxu0
        %v6988 = vadd.f32 0.0, %v6987
        %6989 = vmatmul.bf16.gmra.mxu0 %v6702
        %v6990 = vpop.f32.mrf.mxu0
        %v6991 = vadd.f32 0.0, %v6990
        %v6992 = vpop.f32.mrf.mxu0
        %v6993 = vadd.f32 0.0, %v6992
        %6994 = vdwg.mxu0
        %6995 = vset.pattern.permute.xlu0 3
        %6996 = vperm.xlu0 %6995, %v6683
        %v6997 = vpop.permute.xlu0 %6996
        %6999 = vset.pattern.permute.xlu0 3
        %7000 = vperm.xlu0 %6999, %v6684
        %v7001 = vpop.permute.xlu0 %7000
        %7003 = vset.pattern.permute.xlu0 3
        %7004 = vperm.xlu0 %7003, %v6685
        %v7005 = vpop.permute.xlu0 %7004
        %7007 = vset.pattern.permute.xlu0 3
        %7008 = vperm.xlu0 %7007, %v6686
        %v7009 = vpop.permute.xlu0 %7008
        %7011 = vset.pattern.permute.xlu0 3
        %7012 = vperm.xlu0 %7011, %v6687
        %v7013 = vpop.permute.xlu0 %7012
        %7015 = vset.pattern.permute.xlu0 3
        %7016 = vperm.xlu0 %7015, %v6688
        %v7017 = vpop.permute.xlu0 %7016
        %7019 = vset.pattern.permute.xlu0 3
        %7020 = vperm.xlu0 %7019, %v6689
        %v7021 = vpop.permute.xlu0 %7020
        %7023 = vset.pattern.permute.xlu0 3
        %7024 = vperm.xlu0 %7023, %v6690
        %v7025 = vpop.permute.xlu0 %7024
        %v7027 = vmul.f32 %v6997, %v6976
        %v7028 = vmul.f32 %v7001, %v6978
        %v7029 = vmul.f32 %v7005, %v6981
        %v7030 = vmul.f32 %v7009, %v6983
        %v7031 = vmul.f32 %v7013, %v6986
        %v7032 = vmul.f32 %v7017, %v6988
        %v7033 = vmul.f32 %v7021, %v6991
        %v7034 = vmul.f32 %v7025, %v6993
        %v7035 = vadd.f32 %v6950, %v7027
        %v7036 = vadd.f32 %v6951, %v7028
        %v7037 = vadd.f32 %v6952, %v7029
        %v7038 = vadd.f32 %v6953, %v7030
        %v7039 = vadd.f32 %v6954, %v7031
        %v7040 = vadd.f32 %v6955, %v7032
        %v7041 = vadd.f32 %v6956, %v7033
        %v7042 = vadd.f32 %v6957, %v7034
        %v7043 = vld [vmem:[%s10] sm:$0x1]
        %v7045 = vperm.slane %v7043, 0
        %v7047 = vadd.f32 %v7035, %v7045
        %v7048 = vadd.f32 %v7036, %v7045
        %v7049 = vadd.f32 %v7037, %v7045
        %v7050 = vadd.f32 %v7038, %v7045
        %v7051 = vadd.f32 %v7039, %v7045
        %v7052 = vadd.f32 %v7040, %v7045
        %v7053 = vadd.f32 %v7041, %v7045
        %v7054 = vadd.f32 %v7042, %v7045
        %v7055 = vmax.f32 %v7047, 0.0
        %v7056 = vmax.f32 %v7048, 0.0
        %v7057 = vmax.f32 %v7049, 0.0
        %v7058 = vmax.f32 %v7050, 0.0
        %v7059 = vmax.f32 %v7051, 0.0
        %v7060 = vmax.f32 %v7052, 0.0
        %v7061 = vmax.f32 %v7053, 0.0
        %v7062 = vmax.f32 %v7054, 0.0
        %v7063 = vld [vmem:[%s15] sm:$0xff]
        %v7064 = vld [vmem:[%s15 + $0x8] sm:$0xff]
        %v7065 = vld [vmem:[%s15 + $0x10] sm:$0xff]
        %v7066 = vld [vmem:[%s15 + $0x18] sm:$0xff]
        %v7067 = vld [vmem:[%s15 + $0x20] sm:$0xff]
        %v7068 = vld [vmem:[%s15 + $0x28] sm:$0xff]
        %v7069 = vld [vmem:[%s15 + $0x30] sm:$0xff]
        %v7070 = vld [vmem:[%s15 + $0x38] sm:$0xff]
        %v7071 = vld [vmem:[%s15 + $0x40] sm:$0xff]
        %v7072 = vld [vmem:[%s15 + $0x48] sm:$0xff]
        %v7073 = vld [vmem:[%s15 + $0x50] sm:$0xff]
        %v7074 = vld [vmem:[%s15 + $0x58] sm:$0xff]
        %v7075 = vld [vmem:[%s15 + $0x60] sm:$0xff]
        %v7076 = vld [vmem:[%s15 + $0x68] sm:$0xff]
        %v7077 = vld [vmem:[%s15 + $0x70] sm:$0xff]
        %v7078 = vld [vmem:[%s15 + $0x78] sm:$0xff]
        %v7079 = vld [vmem:[%s15 + $0x80] sm:$0xff]
        %v7080 = vld [vmem:[%s15 + $0x88] sm:$0xff]
        %v7081 = vld [vmem:[%s15 + $0x90] sm:$0xff]
        %v7082 = vld [vmem:[%s15 + $0x98] sm:$0xff]
        %v7083 = vld [vmem:[%s15 + $0xa0] sm:$0xff]
        %v7084 = vld [vmem:[%s15 + $0xa8] sm:$0xff]
        %v7085 = vld [vmem:[%s15 + $0xb0] sm:$0xff]
        %v7086 = vld [vmem:[%s15 + $0xb8] sm:$0xff]
        %v7087 = vld [vmem:[%s15 + $0xc0] sm:$0xff]
        %v7088 = vld [vmem:[%s15 + $0xc8] sm:$0xff]
        %v7089 = vld [vmem:[%s15 + $0xd0] sm:$0xff]
        %v7090 = vld [vmem:[%s15 + $0xd8] sm:$0xff]
        %v7091 = vld [vmem:[%s15 + $0xe0] sm:$0xff]
        %v7092 = vld [vmem:[%s15 + $0xe8] sm:$0xff]
        %v7093 = vld [vmem:[%s15 + $0xf0] sm:$0xff]
        %v7094 = vld [vmem:[%s15 + $0xf8] sm:$0xff]
        %v7096 = vsel %vm6575, %v7063, 0
        %v7099 = vsel %vm6575, %v7064, 0
        %v7102 = vsel %vm6575, %v7065, 0
        %v7105 = vsel %vm6575, %v7066, 0
        %v7108 = vsel %vm6575, %v7067, 0
        %v7111 = vsel %vm6575, %v7068, 0
        %v7114 = vsel %vm6575, %v7069, 0
        %v7117 = vsel %vm6575, %v7070, 0
        %v7120 = vsel %vm6575, %v7071, 0
        %v7123 = vsel %vm6575, %v7072, 0
        %v7126 = vsel %vm6575, %v7073, 0
        %v7129 = vsel %vm6575, %v7074, 0
        %v7132 = vsel %vm6575, %v7075, 0
        %v7135 = vsel %vm6575, %v7076, 0
        %v7138 = vsel %vm6575, %v7077, 0
        %v7141 = vsel %vm6575, %v7078, 0
        %v7144 = vsel %vm6575, %v7079, 0
        %v7147 = vsel %vm6575, %v7080, 0
        %v7150 = vsel %vm6575, %v7081, 0
        %v7153 = vsel %vm6575, %v7082, 0
        %v7156 = vsel %vm6575, %v7083, 0
        %v7159 = vsel %vm6575, %v7084, 0
        %v7162 = vsel %vm6575, %v7085, 0
        %v7165 = vsel %vm6575, %v7086, 0
        %v7168 = vsel %vm6575, %v7087, 0
        %v7171 = vsel %vm6575, %v7088, 0
        %v7174 = vsel %vm6575, %v7089, 0
        %v7177 = vsel %vm6575, %v7090, 0
        %v7180 = vsel %vm6575, %v7091, 0
        %v7183 = vsel %vm6575, %v7092, 0
        %v7186 = vsel %vm6575, %v7093, 0
        %v7189 = vsel %vm6575, %v7094, 0
        %7191 = vmatpush.msra.mxu0 0.0
        %7192 = vmatpush.msra.mxu0 0.0
        %7193 = vmatpush.msra.mxu0 0.0
        %7194 = vmatpush.msra.mxu0 0.0
        %7195 = vmatpush.msra.mxu0 0.0
        %7196 = vmatpush.msra.mxu0 0.0
        %7197 = vmatpush.msra.mxu0 0.0
        %7198 = vmatpush.msra.mxu0 0.0
        %7199 = vmatpush.msra.mxu0 %v7062
        %7200 = vmatpush.msra.mxu0 %v7061
        %7201 = vmatpush.msra.mxu0 %v7060
        %7202 = vmatpush.msra.mxu0 %v7059
        %7203 = vmatpush.msra.mxu0 %v7058
        %7204 = vmatpush.msra.mxu0 %v7057
        %7205 = vmatpush.msra.mxu0 %v7056
        %7206 = vmatpush.msra.mxu0 %v7055
        %7207 = vmatmul.f32.gmra.mxu0 %v7096
        %v7208 = vpop.f32.mrf.mxu0
        %v7209 = vadd.f32 0.0, %v7208
        %7210 = vmatmul.f32.gmra.mxu0 %v7099
        %v7211 = vpop.f32.mrf.mxu0
        %v7212 = vadd.f32 0.0, %v7211
        %7213 = vmatmul.f32.gmra.mxu0 %v7102
        %v7214 = vpop.f32.mrf.mxu0
        %v7215 = vadd.f32 0.0, %v7214
        %7216 = vmatmul.f32.gmra.mxu0 %v7105
        %v7217 = vpop.f32.mrf.mxu0
        %v7218 = vadd.f32 0.0, %v7217
        %7219 = vmatmul.f32.gmra.mxu0 %v7108
        %v7220 = vpop.f32.mrf.mxu0
        %v7221 = vadd.f32 0.0, %v7220
        %7222 = vmatmul.f32.gmra.mxu0 %v7111
        %v7223 = vpop.f32.mrf.mxu0
        %v7224 = vadd.f32 0.0, %v7223
        %7225 = vmatmul.f32.gmra.mxu0 %v7114
        %v7226 = vpop.f32.mrf.mxu0
        %v7227 = vadd.f32 0.0, %v7226
        %7228 = vmatmul.f32.gmra.mxu0 %v7117
        %v7229 = vpop.f32.mrf.mxu0
        %v7230 = vadd.f32 0.0, %v7229
        %7231 = vmatmul.f32.gmra.mxu0 %v7120
        %v7232 = vpop.f32.mrf.mxu0
        %v7233 = vadd.f32 0.0, %v7232
        %7234 = vmatmul.f32.gmra.mxu0 %v7123
        %v7235 = vpop.f32.mrf.mxu0
        %v7236 = vadd.f32 0.0, %v7235
        %7237 = vmatmul.f32.gmra.mxu0 %v7126
        %v7238 = vpop.f32.mrf.mxu0
        %v7239 = vadd.f32 0.0, %v7238
        %7240 = vmatmul.f32.gmra.mxu0 %v7129
        %v7241 = vpop.f32.mrf.mxu0
        %v7242 = vadd.f32 0.0, %v7241
        %7243 = vmatmul.f32.gmra.mxu0 %v7132
        %v7244 = vpop.f32.mrf.mxu0
        %v7245 = vadd.f32 0.0, %v7244
        %7246 = vmatmul.f32.gmra.mxu0 %v7135
        %v7247 = vpop.f32.mrf.mxu0
        %v7248 = vadd.f32 0.0, %v7247
        %7249 = vmatmul.f32.gmra.mxu0 %v7138
        %v7250 = vpop.f32.mrf.mxu0
        %v7251 = vadd.f32 0.0, %v7250
        %7252 = vmatmul.f32.gmra.mxu0 %v7141
        %v7253 = vpop.f32.mrf.mxu0
        %v7254 = vadd.f32 0.0, %v7253
        %7255 = vmatmul.f32.gmra.mxu0 %v7144
        %v7256 = vpop.f32.mrf.mxu0
        %v7257 = vadd.f32 0.0, %v7256
        %7258 = vmatmul.f32.gmra.mxu0 %v7147
        %v7259 = vpop.f32.mrf.mxu0
        %v7260 = vadd.f32 0.0, %v7259
        %7261 = vmatmul.f32.gmra.mxu0 %v7150
        %v7262 = vpop.f32.mrf.mxu0
        %v7263 = vadd.f32 0.0, %v7262
        %7264 = vmatmul.f32.gmra.mxu0 %v7153
        %v7265 = vpop.f32.mrf.mxu0
        %v7266 = vadd.f32 0.0, %v7265
        %7267 = vmatmul.f32.gmra.mxu0 %v7156
        %v7268 = vpop.f32.mrf.mxu0
        %v7269 = vadd.f32 0.0, %v7268
        %7270 = vmatmul.f32.gmra.mxu0 %v7159
        %v7271 = vpop.f32.mrf.mxu0
        %v7272 = vadd.f32 0.0, %v7271
        %7273 = vmatmul.f32.gmra.mxu0 %v7162
        %v7274 = vpop.f32.mrf.mxu0
        %v7275 = vadd.f32 0.0, %v7274
        %7276 = vmatmul.f32.gmra.mxu0 %v7165
        %v7277 = vpop.f32.mrf.mxu0
        %v7278 = vadd.f32 0.0, %v7277
        %7279 = vmatmul.f32.gmra.mxu0 %v7168
        %v7280 = vpop.f32.mrf.mxu0
        %v7281 = vadd.f32 0.0, %v7280
        %7282 = vmatmul.f32.gmra.mxu0 %v7171
        %v7283 = vpop.f32.mrf.mxu0
        %v7284 = vadd.f32 0.0, %v7283
        %7285 = vmatmul.f32.gmra.mxu0 %v7174
        %v7286 = vpop.f32.mrf.mxu0
        %v7287 = vadd.f32 0.0, %v7286
        %7288 = vmatmul.f32.gmra.mxu0 %v7177
        %v7289 = vpop.f32.mrf.mxu0
        %v7290 = vadd.f32 0.0, %v7289
        %7291 = vmatmul.f32.gmra.mxu0 %v7180
        %v7292 = vpop.f32.mrf.mxu0
        %v7293 = vadd.f32 0.0, %v7292
        %7294 = vmatmul.f32.gmra.mxu0 %v7183
        %v7295 = vpop.f32.mrf.mxu0
        %v7296 = vadd.f32 0.0, %v7295
        %7297 = vmatmul.f32.gmra.mxu0 %v7186
        %v7298 = vpop.f32.mrf.mxu0
        %v7299 = vadd.f32 0.0, %v7298
        %7300 = vmatmul.f32.gmra.mxu0 %v7189
        %v7301 = vpop.f32.mrf.mxu0
        %v7302 = vadd.f32 0.0, %v7301
        %7303 = vdwg.mxu0
        %v7304 = vpack.c.bf16 %v7212, %v7209
        %v7305 = vpack.c.bf16 %v7218, %v7215
        %v7306 = vpack.c.bf16 %v7224, %v7221
        %v7307 = vpack.c.bf16 %v7230, %v7227
        %v7308 = vpack.c.bf16 %v7236, %v7233
        %v7309 = vpack.c.bf16 %v7242, %v7239
        %v7310 = vpack.c.bf16 %v7248, %v7245
        %v7311 = vpack.c.bf16 %v7254, %v7251
        %v7312 = vpack.c.bf16 %v7260, %v7257
        %v7313 = vpack.c.bf16 %v7266, %v7263
        %v7314 = vpack.c.bf16 %v7272, %v7269
        %v7315 = vpack.c.bf16 %v7278, %v7275
        %v7316 = vpack.c.bf16 %v7284, %v7281
        %v7317 = vpack.c.bf16 %v7290, %v7287
        %v7318 = vpack.c.bf16 %v7296, %v7293
        %v7319 = vpack.c.bf16 %v7302, %v7299
        %v7320 = vld [vmem:[%s13] sm:$0xf]
        %v7321 = vld [vmem:[%s13 + $0x4] sm:$0xf]
        %v7322 = vld [vmem:[%s16] sm:$0xff]
        %v7323 = vld [vmem:[%s16 + $0x8] sm:$0xff]
        %v7324 = vld [vmem:[%s16 + $0x10] sm:$0xff]
        %v7325 = vld [vmem:[%s16 + $0x18] sm:$0xff]
        %v7326 = vld [vmem:[%s16 + $0x20] sm:$0xff]
        %v7327 = vld [vmem:[%s16 + $0x28] sm:$0xff]
        %v7328 = vld [vmem:[%s16 + $0x30] sm:$0xff]
        %v7329 = vld [vmem:[%s16 + $0x38] sm:$0xff]
        %v7330 = vld [vmem:[%s16 + $0x40] sm:$0xff]
        %v7331 = vld [vmem:[%s16 + $0x48] sm:$0xff]
        %v7332 = vld [vmem:[%s16 + $0x50] sm:$0xff]
        %v7333 = vld [vmem:[%s16 + $0x58] sm:$0xff]
        %v7334 = vld [vmem:[%s16 + $0x60] sm:$0xff]
        %v7335 = vld [vmem:[%s16 + $0x68] sm:$0xff]
        %v7336 = vld [vmem:[%s16 + $0x70] sm:$0xff]
        %v7337 = vld [vmem:[%s16 + $0x78] sm:$0xff]
        %v7338 = vld [vmem:[%s16 + $0x80] sm:$0xff]
        %v7339 = vld [vmem:[%s16 + $0x88] sm:$0xff]
        %v7340 = vld [vmem:[%s16 + $0x90] sm:$0xff]
        %v7341 = vld [vmem:[%s16 + $0x98] sm:$0xff]
        %v7342 = vld [vmem:[%s16 + $0xa0] sm:$0xff]
        %v7343 = vld [vmem:[%s16 + $0xa8] sm:$0xff]
        %v7344 = vld [vmem:[%s16 + $0xb0] sm:$0xff]
        %v7345 = vld [vmem:[%s16 + $0xb8] sm:$0xff]
        %v7346 = vld [vmem:[%s16 + $0xc0] sm:$0xff]
        %v7347 = vld [vmem:[%s16 + $0xc8] sm:$0xff]
        %v7348 = vld [vmem:[%s16 + $0xd0] sm:$0xff]
        %v7349 = vld [vmem:[%s16 + $0xd8] sm:$0xff]
        %v7350 = vld [vmem:[%s16 + $0xe0] sm:$0xff]
        %v7351 = vld [vmem:[%s16 + $0xe8] sm:$0xff]
        %v7352 = vld [vmem:[%s16 + $0xf0] sm:$0xff]
        %v7353 = vld [vmem:[%s16 + $0xf8] sm:$0xff]
        %v7356 = vunpack.c.l.b16 %v7320
        %v7357 = vunpack.c.l.b16 %v7321
        %v7358 = vpack.c.b16 %v7357, %v7356
        %v7361 = vsel %vm5497, %v7304, 0
        %v7364 = vsel %vm5497, %v7305, 0
        %v7367 = vsel %vm5497, %v7306, 0
        %v7370 = vsel %vm5497, %v7307, 0
        %v7373 = vsel %vm5497, %v7308, 0
        %v7376 = vsel %vm5497, %v7309, 0
        %v7379 = vsel %vm5497, %v7310, 0
        %v7382 = vsel %vm5497, %v7311, 0
        %v7385 = vsel %vm5497, %v7312, 0
        %v7388 = vsel %vm5497, %v7313, 0
        %v7391 = vsel %vm5497, %v7314, 0
        %v7394 = vsel %vm5497, %v7315, 0
        %v7397 = vsel %vm5497, %v7316, 0
        %v7400 = vsel %vm5497, %v7317, 0
        %v7403 = vsel %vm5497, %v7318, 0
        %v7406 = vsel %vm5497, %v7319, 0
        %7408 = vmatpush.bf16.msra.mxu0 0
        %7409 = vmatpush.bf16.msra.mxu0 0
        %7410 = vmatpush.bf16.msra.mxu0 0
        %7411 = vmatpush.bf16.msra.mxu0 0
        %7412 = vmatpush.bf16.msra.mxu0 0
        %7413 = vmatpush.bf16.msra.mxu0 0
        %7414 = vmatpush.bf16.msra.mxu0 0
        %7415 = vmatpush.bf16.msra.mxu0 %v7358
        %7416 = vmatmul.bf16.gmra.mxu0 %v7361
        %v7417 = vpop.f32.mrf.mxu0
        %v7418 = vadd.f32 0.0, %v7417
        %v7419 = vpop.f32.mrf.mxu0
        %v7420 = vadd.f32 0.0, %v7419
        %7421 = vmatmul.bf16.gmra.mxu0 %v7364
        %v7422 = vpop.f32.mrf.mxu0
        %v7423 = vadd.f32 0.0, %v7422
        %v7424 = vpop.f32.mrf.mxu0
        %v7425 = vadd.f32 0.0, %v7424
        %7426 = vmatmul.bf16.gmra.mxu0 %v7367
        %v7427 = vpop.f32.mrf.mxu0
        %v7428 = vadd.f32 0.0, %v7427
        %v7429 = vpop.f32.mrf.mxu0
        %v7430 = vadd.f32 0.0, %v7429
        %7431 = vmatmul.bf16.gmra.mxu0 %v7370
        %v7432 = vpop.f32.mrf.mxu0
        %v7433 = vadd.f32 0.0, %v7432
        %v7434 = vpop.f32.mrf.mxu0
        %v7435 = vadd.f32 0.0, %v7434
        %7436 = vmatmul.bf16.gmra.mxu0 %v7373
        %v7437 = vpop.f32.mrf.mxu0
        %v7438 = vadd.f32 0.0, %v7437
        %v7439 = vpop.f32.mrf.mxu0
        %v7440 = vadd.f32 0.0, %v7439
        %7441 = vmatmul.bf16.gmra.mxu0 %v7376
        %v7442 = vpop.f32.mrf.mxu0
        %v7443 = vadd.f32 0.0, %v7442
        %v7444 = vpop.f32.mrf.mxu0
        %v7445 = vadd.f32 0.0, %v7444
        %7446 = vmatmul.bf16.gmra.mxu0 %v7379
        %v7447 = vpop.f32.mrf.mxu0
        %v7448 = vadd.f32 0.0, %v7447
        %v7449 = vpop.f32.mrf.mxu0
        %v7450 = vadd.f32 0.0, %v7449
        %7451 = vmatmul.bf16.gmra.mxu0 %v7382
        %v7452 = vpop.f32.mrf.mxu0
        %v7453 = vadd.f32 0.0, %v7452
        %v7454 = vpop.f32.mrf.mxu0
        %v7455 = vadd.f32 0.0, %v7454
        %7456 = vmatmul.bf16.gmra.mxu0 %v7385
        %v7457 = vpop.f32.mrf.mxu0
        %v7458 = vadd.f32 0.0, %v7457
        %v7459 = vpop.f32.mrf.mxu0
        %v7460 = vadd.f32 0.0, %v7459
        %7461 = vmatmul.bf16.gmra.mxu0 %v7388
        %v7462 = vpop.f32.mrf.mxu0
        %v7463 = vadd.f32 0.0, %v7462
        %v7464 = vpop.f32.mrf.mxu0
        %v7465 = vadd.f32 0.0, %v7464
        %7466 = vmatmul.bf16.gmra.mxu0 %v7391
        %v7467 = vpop.f32.mrf.mxu0
        %v7468 = vadd.f32 0.0, %v7467
        %v7469 = vpop.f32.mrf.mxu0
        %v7470 = vadd.f32 0.0, %v7469
        %7471 = vmatmul.bf16.gmra.mxu0 %v7394
        %v7472 = vpop.f32.mrf.mxu0
        %v7473 = vadd.f32 0.0, %v7472
        %v7474 = vpop.f32.mrf.mxu0
        %v7475 = vadd.f32 0.0, %v7474
        %7476 = vmatmul.bf16.gmra.mxu0 %v7397
        %v7477 = vpop.f32.mrf.mxu0
        %v7478 = vadd.f32 0.0, %v7477
        %v7479 = vpop.f32.mrf.mxu0
        %v7480 = vadd.f32 0.0, %v7479
        %7481 = vmatmul.bf16.gmra.mxu0 %v7400
        %v7482 = vpop.f32.mrf.mxu0
        %v7483 = vadd.f32 0.0, %v7482
        %v7484 = vpop.f32.mrf.mxu0
        %v7485 = vadd.f32 0.0, %v7484
        %7486 = vmatmul.bf16.gmra.mxu0 %v7403
        %v7487 = vpop.f32.mrf.mxu0
        %v7488 = vadd.f32 0.0, %v7487
        %v7489 = vpop.f32.mrf.mxu0
        %v7490 = vadd.f32 0.0, %v7489
        %7491 = vmatmul.bf16.gmra.mxu0 %v7406
        %v7492 = vpop.f32.mrf.mxu0
        %v7493 = vadd.f32 0.0, %v7492
        %v7494 = vpop.f32.mrf.mxu0
        %v7495 = vadd.f32 0.0, %v7494
        %7496 = vdwg.mxu0
        %7498 = vset.pattern.permute.xlu0 0
        %7499 = vperm.xlu0 %7498, %v7322
        %v7500 = vpop.permute.xlu0 %7499
        %7503 = vset.pattern.permute.xlu0 0
        %7504 = vperm.xlu0 %7503, %v7323
        %v7505 = vpop.permute.xlu0 %7504
        %7508 = vset.pattern.permute.xlu0 0
        %7509 = vperm.xlu0 %7508, %v7324
        %v7510 = vpop.permute.xlu0 %7509
        %7513 = vset.pattern.permute.xlu0 0
        %7514 = vperm.xlu0 %7513, %v7325
        %v7515 = vpop.permute.xlu0 %7514
        %7518 = vset.pattern.permute.xlu0 0
        %7519 = vperm.xlu0 %7518, %v7326
        %v7520 = vpop.permute.xlu0 %7519
        %7523 = vset.pattern.permute.xlu0 0
        %7524 = vperm.xlu0 %7523, %v7327
        %v7525 = vpop.permute.xlu0 %7524
        %7528 = vset.pattern.permute.xlu0 0
        %7529 = vperm.xlu0 %7528, %v7328
        %v7530 = vpop.permute.xlu0 %7529
        %7533 = vset.pattern.permute.xlu0 0
        %7534 = vperm.xlu0 %7533, %v7329
        %v7535 = vpop.permute.xlu0 %7534
        %7538 = vset.pattern.permute.xlu0 0
        %7539 = vperm.xlu0 %7538, %v7330
        %v7540 = vpop.permute.xlu0 %7539
        %7543 = vset.pattern.permute.xlu0 0
        %7544 = vperm.xlu0 %7543, %v7331
        %v7545 = vpop.permute.xlu0 %7544
        %7548 = vset.pattern.permute.xlu0 0
        %7549 = vperm.xlu0 %7548, %v7332
        %v7550 = vpop.permute.xlu0 %7549
        %7553 = vset.pattern.permute.xlu0 0
        %7554 = vperm.xlu0 %7553, %v7333
        %v7555 = vpop.permute.xlu0 %7554
        %7558 = vset.pattern.permute.xlu0 0
        %7559 = vperm.xlu0 %7558, %v7334
        %v7560 = vpop.permute.xlu0 %7559
        %7563 = vset.pattern.permute.xlu0 0
        %7564 = vperm.xlu0 %7563, %v7335
        %v7565 = vpop.permute.xlu0 %7564
        %7568 = vset.pattern.permute.xlu0 0
        %7569 = vperm.xlu0 %7568, %v7336
        %v7570 = vpop.permute.xlu0 %7569
        %7573 = vset.pattern.permute.xlu0 0
        %7574 = vperm.xlu0 %7573, %v7337
        %v7575 = vpop.permute.xlu0 %7574
        %7578 = vset.pattern.permute.xlu0 0
        %7579 = vperm.xlu0 %7578, %v7338
        %v7580 = vpop.permute.xlu0 %7579
        %7583 = vset.pattern.permute.xlu0 0
        %7584 = vperm.xlu0 %7583, %v7339
        %v7585 = vpop.permute.xlu0 %7584
        %7588 = vset.pattern.permute.xlu0 0
        %7589 = vperm.xlu0 %7588, %v7340
        %v7590 = vpop.permute.xlu0 %7589
        %7593 = vset.pattern.permute.xlu0 0
        %7594 = vperm.xlu0 %7593, %v7341
        %v7595 = vpop.permute.xlu0 %7594
        %7598 = vset.pattern.permute.xlu0 0
        %7599 = vperm.xlu0 %7598, %v7342
        %v7600 = vpop.permute.xlu0 %7599
        %7603 = vset.pattern.permute.xlu0 0
        %7604 = vperm.xlu0 %7603, %v7343
        %v7605 = vpop.permute.xlu0 %7604
        %7608 = vset.pattern.permute.xlu0 0
        %7609 = vperm.xlu0 %7608, %v7344
        %v7610 = vpop.permute.xlu0 %7609
        %7613 = vset.pattern.permute.xlu0 0
        %7614 = vperm.xlu0 %7613, %v7345
        %v7615 = vpop.permute.xlu0 %7614
        %7618 = vset.pattern.permute.xlu0 0
        %7619 = vperm.xlu0 %7618, %v7346
        %v7620 = vpop.permute.xlu0 %7619
        %7623 = vset.pattern.permute.xlu0 0
        %7624 = vperm.xlu0 %7623, %v7347
        %v7625 = vpop.permute.xlu0 %7624
        %7628 = vset.pattern.permute.xlu0 0
        %7629 = vperm.xlu0 %7628, %v7348
        %v7630 = vpop.permute.xlu0 %7629
        %7633 = vset.pattern.permute.xlu0 0
        %7634 = vperm.xlu0 %7633, %v7349
        %v7635 = vpop.permute.xlu0 %7634
        %7638 = vset.pattern.permute.xlu0 0
        %7639 = vperm.xlu0 %7638, %v7350
        %v7640 = vpop.permute.xlu0 %7639
        %7643 = vset.pattern.permute.xlu0 0
        %7644 = vperm.xlu0 %7643, %v7351
        %v7645 = vpop.permute.xlu0 %7644
        %7648 = vset.pattern.permute.xlu0 0
        %7649 = vperm.xlu0 %7648, %v7352
        %v7650 = vpop.permute.xlu0 %7649
        %7653 = vset.pattern.permute.xlu0 0
        %7654 = vperm.xlu0 %7653, %v7353
        %v7655 = vpop.permute.xlu0 %7654
        %v7657 = vmul.f32 %v7500, %v7418
        %v7658 = vmul.f32 %v7505, %v7420
        %v7659 = vmul.f32 %v7510, %v7423
        %v7660 = vmul.f32 %v7515, %v7425
        %v7661 = vmul.f32 %v7520, %v7428
        %v7662 = vmul.f32 %v7525, %v7430
        %v7663 = vmul.f32 %v7530, %v7433
        %v7664 = vmul.f32 %v7535, %v7435
        %v7665 = vmul.f32 %v7540, %v7438
        %v7666 = vmul.f32 %v7545, %v7440
        %v7667 = vmul.f32 %v7550, %v7443
        %v7668 = vmul.f32 %v7555, %v7445
        %v7669 = vmul.f32 %v7560, %v7448
        %v7670 = vmul.f32 %v7565, %v7450
        %v7671 = vmul.f32 %v7570, %v7453
        %v7672 = vmul.f32 %v7575, %v7455
        %v7673 = vmul.f32 %v7580, %v7458
        %v7674 = vmul.f32 %v7585, %v7460
        %v7675 = vmul.f32 %v7590, %v7463
        %v7676 = vmul.f32 %v7595, %v7465
        %v7677 = vmul.f32 %v7600, %v7468
        %v7678 = vmul.f32 %v7605, %v7470
        %v7679 = vmul.f32 %v7610, %v7473
        %v7680 = vmul.f32 %v7615, %v7475
        %v7681 = vmul.f32 %v7620, %v7478
        %v7682 = vmul.f32 %v7625, %v7480
        %v7683 = vmul.f32 %v7630, %v7483
        %v7684 = vmul.f32 %v7635, %v7485
        %v7685 = vmul.f32 %v7640, %v7488
        %v7686 = vmul.f32 %v7645, %v7490
        %v7687 = vmul.f32 %v7650, %v7493
        %v7688 = vmul.f32 %v7655, %v7495
        %v7689 = vadd.f32 %v7657, 0.0
        %v7690 = vadd.f32 %v7658, 0.0
        %v7691 = vadd.f32 %v7659, 0.0
        %v7692 = vadd.f32 %v7660, 0.0
        %v7693 = vadd.f32 %v7661, 0.0
        %v7694 = vadd.f32 %v7662, 0.0
        %v7695 = vadd.f32 %v7663, 0.0
        %v7696 = vadd.f32 %v7664, 0.0
        %v7697 = vadd.f32 %v7665, 0.0
        %v7698 = vadd.f32 %v7666, 0.0
        %v7699 = vadd.f32 %v7667, 0.0
        %v7700 = vadd.f32 %v7668, 0.0
        %v7701 = vadd.f32 %v7669, 0.0
        %v7702 = vadd.f32 %v7670, 0.0
        %v7703 = vadd.f32 %v7671, 0.0
        %v7704 = vadd.f32 %v7672, 0.0
        %v7705 = vadd.f32 %v7673, 0.0
        %v7706 = vadd.f32 %v7674, 0.0
        %v7707 = vadd.f32 %v7675, 0.0
        %v7708 = vadd.f32 %v7676, 0.0
        %v7709 = vadd.f32 %v7677, 0.0
        %v7710 = vadd.f32 %v7678, 0.0
        %v7711 = vadd.f32 %v7679, 0.0
        %v7712 = vadd.f32 %v7680, 0.0
        %v7713 = vadd.f32 %v7681, 0.0
        %v7714 = vadd.f32 %v7682, 0.0
        %v7715 = vadd.f32 %v7683, 0.0
        %v7716 = vadd.f32 %v7684, 0.0
        %v7717 = vadd.f32 %v7685, 0.0
        %v7718 = vadd.f32 %v7686, 0.0
        %v7719 = vadd.f32 %v7687, 0.0
        %v7720 = vadd.f32 %v7688, 0.0
        %v7721 = vld [vmem:[%s13 + $0x8] sm:$0xf]
        %v7722 = vld [vmem:[%s13 + $0xc] sm:$0xf]
        %v7725 = vunpack.c.l.b16 %v7721
        %v7726 = vunpack.c.l.b16 %v7722
        %v7727 = vpack.c.b16 %v7726, %v7725
        %7729 = vmatpush.bf16.msra.mxu0 0
        %7730 = vmatpush.bf16.msra.mxu0 0
        %7731 = vmatpush.bf16.msra.mxu0 0
        %7732 = vmatpush.bf16.msra.mxu0 0
        %7733 = vmatpush.bf16.msra.mxu0 0
        %7734 = vmatpush.bf16.msra.mxu0 0
        %7735 = vmatpush.bf16.msra.mxu0 0
        %7736 = vmatpush.bf16.msra.mxu0 %v7727
        %7737 = vmatmul.bf16.gmra.mxu0 %v7361
        %v7738 = vpop.f32.mrf.mxu0
        %v7739 = vadd.f32 0.0, %v7738
        %v7740 = vpop.f32.mrf.mxu0
        %v7741 = vadd.f32 0.0, %v7740
        %7742 = vmatmul.bf16.gmra.mxu0 %v7364
        %v7743 = vpop.f32.mrf.mxu0
        %v7744 = vadd.f32 0.0, %v7743
        %v7745 = vpop.f32.mrf.mxu0
        %v7746 = vadd.f32 0.0, %v7745
        %7747 = vmatmul.bf16.gmra.mxu0 %v7367
        %v7748 = vpop.f32.mrf.mxu0
        %v7749 = vadd.f32 0.0, %v7748
        %v7750 = vpop.f32.mrf.mxu0
        %v7751 = vadd.f32 0.0, %v7750
        %7752 = vmatmul.bf16.gmra.mxu0 %v7370
        %v7753 = vpop.f32.mrf.mxu0
        %v7754 = vadd.f32 0.0, %v7753
        %v7755 = vpop.f32.mrf.mxu0
        %v7756 = vadd.f32 0.0, %v7755
        %7757 = vmatmul.bf16.gmra.mxu0 %v7373
        %v7758 = vpop.f32.mrf.mxu0
        %v7759 = vadd.f32 0.0, %v7758
        %v7760 = vpop.f32.mrf.mxu0
        %v7761 = vadd.f32 0.0, %v7760
        %7762 = vmatmul.bf16.gmra.mxu0 %v7376
        %v7763 = vpop.f32.mrf.mxu0
        %v7764 = vadd.f32 0.0, %v7763
        %v7765 = vpop.f32.mrf.mxu0
        %v7766 = vadd.f32 0.0, %v7765
        %7767 = vmatmul.bf16.gmra.mxu0 %v7379
        %v7768 = vpop.f32.mrf.mxu0
        %v7769 = vadd.f32 0.0, %v7768
        %v7770 = vpop.f32.mrf.mxu0
        %v7771 = vadd.f32 0.0, %v7770
        %7772 = vmatmul.bf16.gmra.mxu0 %v7382
        %v7773 = vpop.f32.mrf.mxu0
        %v7774 = vadd.f32 0.0, %v7773
        %v7775 = vpop.f32.mrf.mxu0
        %v7776 = vadd.f32 0.0, %v7775
        %7777 = vmatmul.bf16.gmra.mxu0 %v7385
        %v7778 = vpop.f32.mrf.mxu0
        %v7779 = vadd.f32 0.0, %v7778
        %v7780 = vpop.f32.mrf.mxu0
        %v7781 = vadd.f32 0.0, %v7780
        %7782 = vmatmul.bf16.gmra.mxu0 %v7388
        %v7783 = vpop.f32.mrf.mxu0
        %v7784 = vadd.f32 0.0, %v7783
        %v7785 = vpop.f32.mrf.mxu0
        %v7786 = vadd.f32 0.0, %v7785
        %7787 = vmatmul.bf16.gmra.mxu0 %v7391
        %v7788 = vpop.f32.mrf.mxu0
        %v7789 = vadd.f32 0.0, %v7788
        %v7790 = vpop.f32.mrf.mxu0
        %v7791 = vadd.f32 0.0, %v7790
        %7792 = vmatmul.bf16.gmra.mxu0 %v7394
        %v7793 = vpop.f32.mrf.mxu0
        %v7794 = vadd.f32 0.0, %v7793
        %v7795 = vpop.f32.mrf.mxu0
        %v7796 = vadd.f32 0.0, %v7795
        %7797 = vmatmul.bf16.gmra.mxu0 %v7397
        %v7798 = vpop.f32.mrf.mxu0
        %v7799 = vadd.f32 0.0, %v7798
        %v7800 = vpop.f32.mrf.mxu0
        %v7801 = vadd.f32 0.0, %v7800
        %7802 = vmatmul.bf16.gmra.mxu0 %v7400
        %v7803 = vpop.f32.mrf.mxu0
        %v7804 = vadd.f32 0.0, %v7803
        %v7805 = vpop.f32.mrf.mxu0
        %v7806 = vadd.f32 0.0, %v7805
        %7807 = vmatmul.bf16.gmra.mxu0 %v7403
        %v7808 = vpop.f32.mrf.mxu0
        %v7809 = vadd.f32 0.0, %v7808
        %v7810 = vpop.f32.mrf.mxu0
        %v7811 = vadd.f32 0.0, %v7810
        %7812 = vmatmul.bf16.gmra.mxu0 %v7406
        %v7813 = vpop.f32.mrf.mxu0
        %v7814 = vadd.f32 0.0, %v7813
        %v7815 = vpop.f32.mrf.mxu0
        %v7816 = vadd.f32 0.0, %v7815
        %7817 = vdwg.mxu0
        %7818 = vset.pattern.permute.xlu0 1
        %7819 = vperm.xlu0 %7818, %v7322
        %v7820 = vpop.permute.xlu0 %7819
        %7822 = vset.pattern.permute.xlu0 1
        %7823 = vperm.xlu0 %7822, %v7323
        %v7824 = vpop.permute.xlu0 %7823
        %7826 = vset.pattern.permute.xlu0 1
        %7827 = vperm.xlu0 %7826, %v7324
        %v7828 = vpop.permute.xlu0 %7827
        %7830 = vset.pattern.permute.xlu0 1
        %7831 = vperm.xlu0 %7830, %v7325
        %v7832 = vpop.permute.xlu0 %7831
        %7834 = vset.pattern.permute.xlu0 1
        %7835 = vperm.xlu0 %7834, %v7326
        %v7836 = vpop.permute.xlu0 %7835
        %7838 = vset.pattern.permute.xlu0 1
        %7839 = vperm.xlu0 %7838, %v7327
        %v7840 = vpop.permute.xlu0 %7839
        %7842 = vset.pattern.permute.xlu0 1
        %7843 = vperm.xlu0 %7842, %v7328
        %v7844 = vpop.permute.xlu0 %7843
        %7846 = vset.pattern.permute.xlu0 1
        %7847 = vperm.xlu0 %7846, %v7329
        %v7848 = vpop.permute.xlu0 %7847
        %7850 = vset.pattern.permute.xlu0 1
        %7851 = vperm.xlu0 %7850, %v7330
        %v7852 = vpop.permute.xlu0 %7851
        %7854 = vset.pattern.permute.xlu0 1
        %7855 = vperm.xlu0 %7854, %v7331
        %v7856 = vpop.permute.xlu0 %7855
        %7858 = vset.pattern.permute.xlu0 1
        %7859 = vperm.xlu0 %7858, %v7332
        %v7860 = vpop.permute.xlu0 %7859
        %7862 = vset.pattern.permute.xlu0 1
        %7863 = vperm.xlu0 %7862, %v7333
        %v7864 = vpop.permute.xlu0 %7863
        %7866 = vset.pattern.permute.xlu0 1
        %7867 = vperm.xlu0 %7866, %v7334
        %v7868 = vpop.permute.xlu0 %7867
        %7870 = vset.pattern.permute.xlu0 1
        %7871 = vperm.xlu0 %7870, %v7335
        %v7872 = vpop.permute.xlu0 %7871
        %7874 = vset.pattern.permute.xlu0 1
        %7875 = vperm.xlu0 %7874, %v7336
        %v7876 = vpop.permute.xlu0 %7875
        %7878 = vset.pattern.permute.xlu0 1
        %7879 = vperm.xlu0 %7878, %v7337
        %v7880 = vpop.permute.xlu0 %7879
        %7882 = vset.pattern.permute.xlu0 1
        %7883 = vperm.xlu0 %7882, %v7338
        %v7884 = vpop.permute.xlu0 %7883
        %7886 = vset.pattern.permute.xlu0 1
        %7887 = vperm.xlu0 %7886, %v7339
        %v7888 = vpop.permute.xlu0 %7887
        %7890 = vset.pattern.permute.xlu0 1
        %7891 = vperm.xlu0 %7890, %v7340
        %v7892 = vpop.permute.xlu0 %7891
        %7894 = vset.pattern.permute.xlu0 1
        %7895 = vperm.xlu0 %7894, %v7341
        %v7896 = vpop.permute.xlu0 %7895
        %7898 = vset.pattern.permute.xlu0 1
        %7899 = vperm.xlu0 %7898, %v7342
        %v7900 = vpop.permute.xlu0 %7899
        %7902 = vset.pattern.permute.xlu0 1
        %7903 = vperm.xlu0 %7902, %v7343
        %v7904 = vpop.permute.xlu0 %7903
        %7906 = vset.pattern.permute.xlu0 1
        %7907 = vperm.xlu0 %7906, %v7344
        %v7908 = vpop.permute.xlu0 %7907
        %7910 = vset.pattern.permute.xlu0 1
        %7911 = vperm.xlu0 %7910, %v7345
        %v7912 = vpop.permute.xlu0 %7911
        %7914 = vset.pattern.permute.xlu0 1
        %7915 = vperm.xlu0 %7914, %v7346
        %v7916 = vpop.permute.xlu0 %7915
        %7918 = vset.pattern.permute.xlu0 1
        %7919 = vperm.xlu0 %7918, %v7347
        %v7920 = vpop.permute.xlu0 %7919
        %7922 = vset.pattern.permute.xlu0 1
        %7923 = vperm.xlu0 %7922, %v7348
        %v7924 = vpop.permute.xlu0 %7923
        %7926 = vset.pattern.permute.xlu0 1
        %7927 = vperm.xlu0 %7926, %v7349
        %v7928 = vpop.permute.xlu0 %7927
        %7930 = vset.pattern.permute.xlu0 1
        %7931 = vperm.xlu0 %7930, %v7350
        %v7932 = vpop.permute.xlu0 %7931
        %7934 = vset.pattern.permute.xlu0 1
        %7935 = vperm.xlu0 %7934, %v7351
        %v7936 = vpop.permute.xlu0 %7935
        %7938 = vset.pattern.permute.xlu0 1
        %7939 = vperm.xlu0 %7938, %v7352
        %v7940 = vpop.permute.xlu0 %7939
        %7942 = vset.pattern.permute.xlu0 1
        %7943 = vperm.xlu0 %7942, %v7353
        %v7944 = vpop.permute.xlu0 %7943
        %v7946 = vmul.f32 %v7820, %v7739
        %v7947 = vmul.f32 %v7824, %v7741
        %v7948 = vmul.f32 %v7828, %v7744
        %v7949 = vmul.f32 %v7832, %v7746
        %v7950 = vmul.f32 %v7836, %v7749
        %v7951 = vmul.f32 %v7840, %v7751
        %v7952 = vmul.f32 %v7844, %v7754
        %v7953 = vmul.f32 %v7848, %v7756
        %v7954 = vmul.f32 %v7852, %v7759
        %v7955 = vmul.f32 %v7856, %v7761
        %v7956 = vmul.f32 %v7860, %v7764
        %v7957 = vmul.f32 %v7864, %v7766
        %v7958 = vmul.f32 %v7868, %v7769
        %v7959 = vmul.f32 %v7872, %v7771
        %v7960 = vmul.f32 %v7876, %v7774
        %v7961 = vmul.f32 %v7880, %v7776
        %v7962 = vmul.f32 %v7884, %v7779
        %v7963 = vmul.f32 %v7888, %v7781
        %v7964 = vmul.f32 %v7892, %v7784
        %v7965 = vmul.f32 %v7896, %v7786
        %v7966 = vmul.f32 %v7900, %v7789
        %v7967 = vmul.f32 %v7904, %v7791
        %v7968 = vmul.f32 %v7908, %v7794
        %v7969 = vmul.f32 %v7912, %v7796
        %v7970 = vmul.f32 %v7916, %v7799
        %v7971 = vmul.f32 %v7920, %v7801
        %v7972 = vmul.f32 %v7924, %v7804
        %v7973 = vmul.f32 %v7928, %v7806
        %v7974 = vmul.f32 %v7932, %v7809
        %v7975 = vmul.f32 %v7936, %v7811
        %v7976 = vmul.f32 %v7940, %v7814
        %v7977 = vmul.f32 %v7944, %v7816
        %v7978 = vadd.f32 %v7689, %v7946
        %v7979 = vadd.f32 %v7690, %v7947
        %v7980 = vadd.f32 %v7691, %v7948
        %v7981 = vadd.f32 %v7692, %v7949
        %v7982 = vadd.f32 %v7693, %v7950
        %v7983 = vadd.f32 %v7694, %v7951
        %v7984 = vadd.f32 %v7695, %v7952
        %v7985 = vadd.f32 %v7696, %v7953
        %v7986 = vadd.f32 %v7697, %v7954
        %v7987 = vadd.f32 %v7698, %v7955
        %v7988 = vadd.f32 %v7699, %v7956
        %v7989 = vadd.f32 %v7700, %v7957
        %v7990 = vadd.f32 %v7701, %v7958
        %v7991 = vadd.f32 %v7702, %v7959
        %v7992 = vadd.f32 %v7703, %v7960
        %v7993 = vadd.f32 %v7704, %v7961
        %v7994 = vadd.f32 %v7705, %v7962
        %v7995 = vadd.f32 %v7706, %v7963
        %v7996 = vadd.f32 %v7707, %v7964
        %v7997 = vadd.f32 %v7708, %v7965
        %v7998 = vadd.f32 %v7709, %v7966
        %v7999 = vadd.f32 %v7710, %v7967
        %v8000 = vadd.f32 %v7711, %v7968
        %v8001 = vadd.f32 %v7712, %v7969
        %v8002 = vadd.f32 %v7713, %v7970
        %v8003 = vadd.f32 %v7714, %v7971
        %v8004 = vadd.f32 %v7715, %v7972
        %v8005 = vadd.f32 %v7716, %v7973
        %v8006 = vadd.f32 %v7717, %v7974
        %v8007 = vadd.f32 %v7718, %v7975
        %v8008 = vadd.f32 %v7719, %v7976
        %v8009 = vadd.f32 %v7720, %v7977
        %v8010 = vld [vmem:[%s13 + $0x10] sm:$0xf]
        %v8011 = vld [vmem:[%s13 + $0x14] sm:$0xf]
        %v8014 = vunpack.c.l.b16 %v8010
        %v8015 = vunpack.c.l.b16 %v8011
        %v8016 = vpack.c.b16 %v8015, %v8014
        %8018 = vmatpush.bf16.msra.mxu0 0
        %8019 = vmatpush.bf16.msra.mxu0 0
        %8020 = vmatpush.bf16.msra.mxu0 0
        %8021 = vmatpush.bf16.msra.mxu0 0
        %8022 = vmatpush.bf16.msra.mxu0 0
        %8023 = vmatpush.bf16.msra.mxu0 0
        %8024 = vmatpush.bf16.msra.mxu0 0
        %8025 = vmatpush.bf16.msra.mxu0 %v8016
        %8026 = vmatmul.bf16.gmra.mxu0 %v7361
        %v8027 = vpop.f32.mrf.mxu0
        %v8028 = vadd.f32 0.0, %v8027
        %v8029 = vpop.f32.mrf.mxu0
        %v8030 = vadd.f32 0.0, %v8029
        %8031 = vmatmul.bf16.gmra.mxu0 %v7364
        %v8032 = vpop.f32.mrf.mxu0
        %v8033 = vadd.f32 0.0, %v8032
        %v8034 = vpop.f32.mrf.mxu0
        %v8035 = vadd.f32 0.0, %v8034
        %8036 = vmatmul.bf16.gmra.mxu0 %v7367
        %v8037 = vpop.f32.mrf.mxu0
        %v8038 = vadd.f32 0.0, %v8037
        %v8039 = vpop.f32.mrf.mxu0
        %v8040 = vadd.f32 0.0, %v8039
        %8041 = vmatmul.bf16.gmra.mxu0 %v7370
        %v8042 = vpop.f32.mrf.mxu0
        %v8043 = vadd.f32 0.0, %v8042
        %v8044 = vpop.f32.mrf.mxu0
        %v8045 = vadd.f32 0.0, %v8044
        %8046 = vmatmul.bf16.gmra.mxu0 %v7373
        %v8047 = vpop.f32.mrf.mxu0
        %v8048 = vadd.f32 0.0, %v8047
        %v8049 = vpop.f32.mrf.mxu0
        %v8050 = vadd.f32 0.0, %v8049
        %8051 = vmatmul.bf16.gmra.mxu0 %v7376
        %v8052 = vpop.f32.mrf.mxu0
        %v8053 = vadd.f32 0.0, %v8052
        %v8054 = vpop.f32.mrf.mxu0
        %v8055 = vadd.f32 0.0, %v8054
        %8056 = vmatmul.bf16.gmra.mxu0 %v7379
        %v8057 = vpop.f32.mrf.mxu0
        %v8058 = vadd.f32 0.0, %v8057
        %v8059 = vpop.f32.mrf.mxu0
        %v8060 = vadd.f32 0.0, %v8059
        %8061 = vmatmul.bf16.gmra.mxu0 %v7382
        %v8062 = vpop.f32.mrf.mxu0
        %v8063 = vadd.f32 0.0, %v8062
        %v8064 = vpop.f32.mrf.mxu0
        %v8065 = vadd.f32 0.0, %v8064
        %8066 = vmatmul.bf16.gmra.mxu0 %v7385
        %v8067 = vpop.f32.mrf.mxu0
        %v8068 = vadd.f32 0.0, %v8067
        %v8069 = vpop.f32.mrf.mxu0
        %v8070 = vadd.f32 0.0, %v8069
        %8071 = vmatmul.bf16.gmra.mxu0 %v7388
        %v8072 = vpop.f32.mrf.mxu0
        %v8073 = vadd.f32 0.0, %v8072
        %v8074 = vpop.f32.mrf.mxu0
        %v8075 = vadd.f32 0.0, %v8074
        %8076 = vmatmul.bf16.gmra.mxu0 %v7391
        %v8077 = vpop.f32.mrf.mxu0
        %v8078 = vadd.f32 0.0, %v8077
        %v8079 = vpop.f32.mrf.mxu0
        %v8080 = vadd.f32 0.0, %v8079
        %8081 = vmatmul.bf16.gmra.mxu0 %v7394
        %v8082 = vpop.f32.mrf.mxu0
        %v8083 = vadd.f32 0.0, %v8082
        %v8084 = vpop.f32.mrf.mxu0
        %v8085 = vadd.f32 0.0, %v8084
        %8086 = vmatmul.bf16.gmra.mxu0 %v7397
        %v8087 = vpop.f32.mrf.mxu0
        %v8088 = vadd.f32 0.0, %v8087
        %v8089 = vpop.f32.mrf.mxu0
        %v8090 = vadd.f32 0.0, %v8089
        %8091 = vmatmul.bf16.gmra.mxu0 %v7400
        %v8092 = vpop.f32.mrf.mxu0
        %v8093 = vadd.f32 0.0, %v8092
        %v8094 = vpop.f32.mrf.mxu0
        %v8095 = vadd.f32 0.0, %v8094
        %8096 = vmatmul.bf16.gmra.mxu0 %v7403
        %v8097 = vpop.f32.mrf.mxu0
        %v8098 = vadd.f32 0.0, %v8097
        %v8099 = vpop.f32.mrf.mxu0
        %v8100 = vadd.f32 0.0, %v8099
        %8101 = vmatmul.bf16.gmra.mxu0 %v7406
        %v8102 = vpop.f32.mrf.mxu0
        %v8103 = vadd.f32 0.0, %v8102
        %v8104 = vpop.f32.mrf.mxu0
        %v8105 = vadd.f32 0.0, %v8104
        %8106 = vdwg.mxu0
        %8107 = vset.pattern.permute.xlu0 2
        %8108 = vperm.xlu0 %8107, %v7322
        %v8109 = vpop.permute.xlu0 %8108
        %8111 = vset.pattern.permute.xlu0 2
        %8112 = vperm.xlu0 %8111, %v7323
        %v8113 = vpop.permute.xlu0 %8112
        %8115 = vset.pattern.permute.xlu0 2
        %8116 = vperm.xlu0 %8115, %v7324
        %v8117 = vpop.permute.xlu0 %8116
        %8119 = vset.pattern.permute.xlu0 2
        %8120 = vperm.xlu0 %8119, %v7325
        %v8121 = vpop.permute.xlu0 %8120
        %8123 = vset.pattern.permute.xlu0 2
        %8124 = vperm.xlu0 %8123, %v7326
        %v8125 = vpop.permute.xlu0 %8124
        %8127 = vset.pattern.permute.xlu0 2
        %8128 = vperm.xlu0 %8127, %v7327
        %v8129 = vpop.permute.xlu0 %8128
        %8131 = vset.pattern.permute.xlu0 2
        %8132 = vperm.xlu0 %8131, %v7328
        %v8133 = vpop.permute.xlu0 %8132
        %8135 = vset.pattern.permute.xlu0 2
        %8136 = vperm.xlu0 %8135, %v7329
        %v8137 = vpop.permute.xlu0 %8136
        %8139 = vset.pattern.permute.xlu0 2
        %8140 = vperm.xlu0 %8139, %v7330
        %v8141 = vpop.permute.xlu0 %8140
        %8143 = vset.pattern.permute.xlu0 2
        %8144 = vperm.xlu0 %8143, %v7331
        %v8145 = vpop.permute.xlu0 %8144
        %8147 = vset.pattern.permute.xlu0 2
        %8148 = vperm.xlu0 %8147, %v7332
        %v8149 = vpop.permute.xlu0 %8148
        %8151 = vset.pattern.permute.xlu0 2
        %8152 = vperm.xlu0 %8151, %v7333
        %v8153 = vpop.permute.xlu0 %8152
        %8155 = vset.pattern.permute.xlu0 2
        %8156 = vperm.xlu0 %8155, %v7334
        %v8157 = vpop.permute.xlu0 %8156
        %8159 = vset.pattern.permute.xlu0 2
        %8160 = vperm.xlu0 %8159, %v7335
        %v8161 = vpop.permute.xlu0 %8160
        %8163 = vset.pattern.permute.xlu0 2
        %8164 = vperm.xlu0 %8163, %v7336
        %v8165 = vpop.permute.xlu0 %8164
        %8167 = vset.pattern.permute.xlu0 2
        %8168 = vperm.xlu0 %8167, %v7337
        %v8169 = vpop.permute.xlu0 %8168
        %8171 = vset.pattern.permute.xlu0 2
        %8172 = vperm.xlu0 %8171, %v7338
        %v8173 = vpop.permute.xlu0 %8172
        %8175 = vset.pattern.permute.xlu0 2
        %8176 = vperm.xlu0 %8175, %v7339
        %v8177 = vpop.permute.xlu0 %8176
        %8179 = vset.pattern.permute.xlu0 2
        %8180 = vperm.xlu0 %8179, %v7340
        %v8181 = vpop.permute.xlu0 %8180
        %8183 = vset.pattern.permute.xlu0 2
        %8184 = vperm.xlu0 %8183, %v7341
        %v8185 = vpop.permute.xlu0 %8184
        %8187 = vset.pattern.permute.xlu0 2
        %8188 = vperm.xlu0 %8187, %v7342
        %v8189 = vpop.permute.xlu0 %8188
        %8191 = vset.pattern.permute.xlu0 2
        %8192 = vperm.xlu0 %8191, %v7343
        %v8193 = vpop.permute.xlu0 %8192
        %8195 = vset.pattern.permute.xlu0 2
        %8196 = vperm.xlu0 %8195, %v7344
        %v8197 = vpop.permute.xlu0 %8196
        %8199 = vset.pattern.permute.xlu0 2
        %8200 = vperm.xlu0 %8199, %v7345
        %v8201 = vpop.permute.xlu0 %8200
        %8203 = vset.pattern.permute.xlu0 2
        %8204 = vperm.xlu0 %8203, %v7346
        %v8205 = vpop.permute.xlu0 %8204
        %8207 = vset.pattern.permute.xlu0 2
        %8208 = vperm.xlu0 %8207, %v7347
        %v8209 = vpop.permute.xlu0 %8208
        %8211 = vset.pattern.permute.xlu0 2
        %8212 = vperm.xlu0 %8211, %v7348
        %v8213 = vpop.permute.xlu0 %8212
        %8215 = vset.pattern.permute.xlu0 2
        %8216 = vperm.xlu0 %8215, %v7349
        %v8217 = vpop.permute.xlu0 %8216
        %8219 = vset.pattern.permute.xlu0 2
        %8220 = vperm.xlu0 %8219, %v7350
        %v8221 = vpop.permute.xlu0 %8220
        %8223 = vset.pattern.permute.xlu0 2
        %8224 = vperm.xlu0 %8223, %v7351
        %v8225 = vpop.permute.xlu0 %8224
        %8227 = vset.pattern.permute.xlu0 2
        %8228 = vperm.xlu0 %8227, %v7352
        %v8229 = vpop.permute.xlu0 %8228
        %8231 = vset.pattern.permute.xlu0 2
        %8232 = vperm.xlu0 %8231, %v7353
        %v8233 = vpop.permute.xlu0 %8232
        %v8235 = vmul.f32 %v8109, %v8028
        %v8236 = vmul.f32 %v8113, %v8030
        %v8237 = vmul.f32 %v8117, %v8033
        %v8238 = vmul.f32 %v8121, %v8035
        %v8239 = vmul.f32 %v8125, %v8038
        %v8240 = vmul.f32 %v8129, %v8040
        %v8241 = vmul.f32 %v8133, %v8043
        %v8242 = vmul.f32 %v8137, %v8045
        %v8243 = vmul.f32 %v8141, %v8048
        %v8244 = vmul.f32 %v8145, %v8050
        %v8245 = vmul.f32 %v8149, %v8053
        %v8246 = vmul.f32 %v8153, %v8055
        %v8247 = vmul.f32 %v8157, %v8058
        %v8248 = vmul.f32 %v8161, %v8060
        %v8249 = vmul.f32 %v8165, %v8063
        %v8250 = vmul.f32 %v8169, %v8065
        %v8251 = vmul.f32 %v8173, %v8068
        %v8252 = vmul.f32 %v8177, %v8070
        %v8253 = vmul.f32 %v8181, %v8073
        %v8254 = vmul.f32 %v8185, %v8075
        %v8255 = vmul.f32 %v8189, %v8078
        %v8256 = vmul.f32 %v8193, %v8080
        %v8257 = vmul.f32 %v8197, %v8083
        %v8258 = vmul.f32 %v8201, %v8085
        %v8259 = vmul.f32 %v8205, %v8088
        %v8260 = vmul.f32 %v8209, %v8090
        %v8261 = vmul.f32 %v8213, %v8093
        %v8262 = vmul.f32 %v8217, %v8095
        %v8263 = vmul.f32 %v8221, %v8098
        %v8264 = vmul.f32 %v8225, %v8100
        %v8265 = vmul.f32 %v8229, %v8103
        %v8266 = vmul.f32 %v8233, %v8105
        %v8267 = vadd.f32 %v7978, %v8235
        %v8268 = vadd.f32 %v7979, %v8236
        %v8269 = vadd.f32 %v7980, %v8237
        %v8270 = vadd.f32 %v7981, %v8238
        %v8271 = vadd.f32 %v7982, %v8239
        %v8272 = vadd.f32 %v7983, %v8240
        %v8273 = vadd.f32 %v7984, %v8241
        %v8274 = vadd.f32 %v7985, %v8242
        %v8275 = vadd.f32 %v7986, %v8243
        %v8276 = vadd.f32 %v7987, %v8244
        %v8277 = vadd.f32 %v7988, %v8245
        %v8278 = vadd.f32 %v7989, %v8246
        %v8279 = vadd.f32 %v7990, %v8247
        %v8280 = vadd.f32 %v7991, %v8248
        %v8281 = vadd.f32 %v7992, %v8249
        %v8282 = vadd.f32 %v7993, %v8250
        %v8283 = vadd.f32 %v7994, %v8251
        %v8284 = vadd.f32 %v7995, %v8252
        %v8285 = vadd.f32 %v7996, %v8253
        %v8286 = vadd.f32 %v7997, %v8254
        %v8287 = vadd.f32 %v7998, %v8255
        %v8288 = vadd.f32 %v7999, %v8256
        %v8289 = vadd.f32 %v8000, %v8257
        %v8290 = vadd.f32 %v8001, %v8258
        %v8291 = vadd.f32 %v8002, %v8259
        %v8292 = vadd.f32 %v8003, %v8260
        %v8293 = vadd.f32 %v8004, %v8261
        %v8294 = vadd.f32 %v8005, %v8262
        %v8295 = vadd.f32 %v8006, %v8263
        %v8296 = vadd.f32 %v8007, %v8264
        %v8297 = vadd.f32 %v8008, %v8265
        %v8298 = vadd.f32 %v8009, %v8266
        %v8299 = vld [vmem:[%s13 + $0x18] sm:$0xf]
        %v8300 = vld [vmem:[%s13 + $0x1c] sm:$0xf]
        %v8303 = vunpack.c.l.b16 %v8299
        %v8304 = vunpack.c.l.b16 %v8300
        %v8305 = vpack.c.b16 %v8304, %v8303
        %8307 = vmatpush.bf16.msra.mxu0 0
        %8308 = vmatpush.bf16.msra.mxu0 0
        %8309 = vmatpush.bf16.msra.mxu0 0
        %8310 = vmatpush.bf16.msra.mxu0 0
        %8311 = vmatpush.bf16.msra.mxu0 0
        %8312 = vmatpush.bf16.msra.mxu0 0
        %8313 = vmatpush.bf16.msra.mxu0 0
        %8314 = vmatpush.bf16.msra.mxu0 %v8305
        %8315 = vmatmul.bf16.gmra.mxu0 %v7361
        %v8316 = vpop.f32.mrf.mxu0
        %v8317 = vadd.f32 0.0, %v8316
        %v8318 = vpop.f32.mrf.mxu0
        %v8319 = vadd.f32 0.0, %v8318
        %8320 = vmatmul.bf16.gmra.mxu0 %v7364
        %v8321 = vpop.f32.mrf.mxu0
        %v8322 = vadd.f32 0.0, %v8321
        %v8323 = vpop.f32.mrf.mxu0
        %v8324 = vadd.f32 0.0, %v8323
        %8325 = vmatmul.bf16.gmra.mxu0 %v7367
        %v8326 = vpop.f32.mrf.mxu0
        %v8327 = vadd.f32 0.0, %v8326
        %v8328 = vpop.f32.mrf.mxu0
        %v8329 = vadd.f32 0.0, %v8328
        %8330 = vmatmul.bf16.gmra.mxu0 %v7370
        %v8331 = vpop.f32.mrf.mxu0
        %v8332 = vadd.f32 0.0, %v8331
        %v8333 = vpop.f32.mrf.mxu0
        %v8334 = vadd.f32 0.0, %v8333
        %8335 = vmatmul.bf16.gmra.mxu0 %v7373
        %v8336 = vpop.f32.mrf.mxu0
        %v8337 = vadd.f32 0.0, %v8336
        %v8338 = vpop.f32.mrf.mxu0
        %v8339 = vadd.f32 0.0, %v8338
        %8340 = vmatmul.bf16.gmra.mxu0 %v7376
        %v8341 = vpop.f32.mrf.mxu0
        %v8342 = vadd.f32 0.0, %v8341
        %v8343 = vpop.f32.mrf.mxu0
        %v8344 = vadd.f32 0.0, %v8343
        %8345 = vmatmul.bf16.gmra.mxu0 %v7379
        %v8346 = vpop.f32.mrf.mxu0
        %v8347 = vadd.f32 0.0, %v8346
        %v8348 = vpop.f32.mrf.mxu0
        %v8349 = vadd.f32 0.0, %v8348
        %8350 = vmatmul.bf16.gmra.mxu0 %v7382
        %v8351 = vpop.f32.mrf.mxu0
        %v8352 = vadd.f32 0.0, %v8351
        %v8353 = vpop.f32.mrf.mxu0
        %v8354 = vadd.f32 0.0, %v8353
        %8355 = vmatmul.bf16.gmra.mxu0 %v7385
        %v8356 = vpop.f32.mrf.mxu0
        %v8357 = vadd.f32 0.0, %v8356
        %v8358 = vpop.f32.mrf.mxu0
        %v8359 = vadd.f32 0.0, %v8358
        %8360 = vmatmul.bf16.gmra.mxu0 %v7388
        %v8361 = vpop.f32.mrf.mxu0
        %v8362 = vadd.f32 0.0, %v8361
        %v8363 = vpop.f32.mrf.mxu0
        %v8364 = vadd.f32 0.0, %v8363
        %8365 = vmatmul.bf16.gmra.mxu0 %v7391
        %v8366 = vpop.f32.mrf.mxu0
        %v8367 = vadd.f32 0.0, %v8366
        %v8368 = vpop.f32.mrf.mxu0
        %v8369 = vadd.f32 0.0, %v8368
        %8370 = vmatmul.bf16.gmra.mxu0 %v7394
        %v8371 = vpop.f32.mrf.mxu0
        %v8372 = vadd.f32 0.0, %v8371
        %v8373 = vpop.f32.mrf.mxu0
        %v8374 = vadd.f32 0.0, %v8373
        %8375 = vmatmul.bf16.gmra.mxu0 %v7397
        %v8376 = vpop.f32.mrf.mxu0
        %v8377 = vadd.f32 0.0, %v8376
        %v8378 = vpop.f32.mrf.mxu0
        %v8379 = vadd.f32 0.0, %v8378
        %8380 = vmatmul.bf16.gmra.mxu0 %v7400
        %v8381 = vpop.f32.mrf.mxu0
        %v8382 = vadd.f32 0.0, %v8381
        %v8383 = vpop.f32.mrf.mxu0
        %v8384 = vadd.f32 0.0, %v8383
        %8385 = vmatmul.bf16.gmra.mxu0 %v7403
        %v8386 = vpop.f32.mrf.mxu0
        %v8387 = vadd.f32 0.0, %v8386
        %v8388 = vpop.f32.mrf.mxu0
        %v8389 = vadd.f32 0.0, %v8388
        %8390 = vmatmul.bf16.gmra.mxu0 %v7406
        %v8391 = vpop.f32.mrf.mxu0
        %v8392 = vadd.f32 0.0, %v8391
        %v8393 = vpop.f32.mrf.mxu0
        %v8394 = vadd.f32 0.0, %v8393
        %8395 = vdwg.mxu0
        %8396 = vset.pattern.permute.xlu0 3
        %8397 = vperm.xlu0 %8396, %v7322
        %v8398 = vpop.permute.xlu0 %8397
        %8400 = vset.pattern.permute.xlu0 3
        %8401 = vperm.xlu0 %8400, %v7323
        %v8402 = vpop.permute.xlu0 %8401
        %8404 = vset.pattern.permute.xlu0 3
        %8405 = vperm.xlu0 %8404, %v7324
        %v8406 = vpop.permute.xlu0 %8405
        %8408 = vset.pattern.permute.xlu0 3
        %8409 = vperm.xlu0 %8408, %v7325
        %v8410 = vpop.permute.xlu0 %8409
        %8412 = vset.pattern.permute.xlu0 3
        %8413 = vperm.xlu0 %8412, %v7326
        %v8414 = vpop.permute.xlu0 %8413
        %8416 = vset.pattern.permute.xlu0 3
        %8417 = vperm.xlu0 %8416, %v7327
        %v8418 = vpop.permute.xlu0 %8417
        %8420 = vset.pattern.permute.xlu0 3
        %8421 = vperm.xlu0 %8420, %v7328
        %v8422 = vpop.permute.xlu0 %8421
        %8424 = vset.pattern.permute.xlu0 3
        %8425 = vperm.xlu0 %8424, %v7329
        %v8426 = vpop.permute.xlu0 %8425
        %8428 = vset.pattern.permute.xlu0 3
        %8429 = vperm.xlu0 %8428, %v7330
        %v8430 = vpop.permute.xlu0 %8429
        %8432 = vset.pattern.permute.xlu0 3
        %8433 = vperm.xlu0 %8432, %v7331
        %v8434 = vpop.permute.xlu0 %8433
        %8436 = vset.pattern.permute.xlu0 3
        %8437 = vperm.xlu0 %8436, %v7332
        %v8438 = vpop.permute.xlu0 %8437
        %8440 = vset.pattern.permute.xlu0 3
        %8441 = vperm.xlu0 %8440, %v7333
        %v8442 = vpop.permute.xlu0 %8441
        %8444 = vset.pattern.permute.xlu0 3
        %8445 = vperm.xlu0 %8444, %v7334
        %v8446 = vpop.permute.xlu0 %8445
        %8448 = vset.pattern.permute.xlu0 3
        %8449 = vperm.xlu0 %8448, %v7335
        %v8450 = vpop.permute.xlu0 %8449
        %8452 = vset.pattern.permute.xlu0 3
        %8453 = vperm.xlu0 %8452, %v7336
        %v8454 = vpop.permute.xlu0 %8453
        %8456 = vset.pattern.permute.xlu0 3
        %8457 = vperm.xlu0 %8456, %v7337
        %v8458 = vpop.permute.xlu0 %8457
        %8460 = vset.pattern.permute.xlu0 3
        %8461 = vperm.xlu0 %8460, %v7338
        %v8462 = vpop.permute.xlu0 %8461
        %8464 = vset.pattern.permute.xlu0 3
        %8465 = vperm.xlu0 %8464, %v7339
        %v8466 = vpop.permute.xlu0 %8465
        %8468 = vset.pattern.permute.xlu0 3
        %8469 = vperm.xlu0 %8468, %v7340
        %v8470 = vpop.permute.xlu0 %8469
        %8472 = vset.pattern.permute.xlu0 3
        %8473 = vperm.xlu0 %8472, %v7341
        %v8474 = vpop.permute.xlu0 %8473
        %8476 = vset.pattern.permute.xlu0 3
        %8477 = vperm.xlu0 %8476, %v7342
        %v8478 = vpop.permute.xlu0 %8477
        %8480 = vset.pattern.permute.xlu0 3
        %8481 = vperm.xlu0 %8480, %v7343
        %v8482 = vpop.permute.xlu0 %8481
        %8484 = vset.pattern.permute.xlu0 3
        %8485 = vperm.xlu0 %8484, %v7344
        %v8486 = vpop.permute.xlu0 %8485
        %8488 = vset.pattern.permute.xlu0 3
        %8489 = vperm.xlu0 %8488, %v7345
        %v8490 = vpop.permute.xlu0 %8489
        %8492 = vset.pattern.permute.xlu0 3
        %8493 = vperm.xlu0 %8492, %v7346
        %v8494 = vpop.permute.xlu0 %8493
        %8496 = vset.pattern.permute.xlu0 3
        %8497 = vperm.xlu0 %8496, %v7347
        %v8498 = vpop.permute.xlu0 %8497
        %8500 = vset.pattern.permute.xlu0 3
        %8501 = vperm.xlu0 %8500, %v7348
        %v8502 = vpop.permute.xlu0 %8501
        %8504 = vset.pattern.permute.xlu0 3
        %8505 = vperm.xlu0 %8504, %v7349
        %v8506 = vpop.permute.xlu0 %8505
        %8508 = vset.pattern.permute.xlu0 3
        %8509 = vperm.xlu0 %8508, %v7350
        %v8510 = vpop.permute.xlu0 %8509
        %8512 = vset.pattern.permute.xlu0 3
        %8513 = vperm.xlu0 %8512, %v7351
        %v8514 = vpop.permute.xlu0 %8513
        %8516 = vset.pattern.permute.xlu0 3
        %8517 = vperm.xlu0 %8516, %v7352
        %v8518 = vpop.permute.xlu0 %8517
        %8520 = vset.pattern.permute.xlu0 3
        %8521 = vperm.xlu0 %8520, %v7353
        %v8522 = vpop.permute.xlu0 %8521
        %v8524 = vmul.f32 %v8398, %v8317
        %v8525 = vmul.f32 %v8402, %v8319
        %v8526 = vmul.f32 %v8406, %v8322
        %v8527 = vmul.f32 %v8410, %v8324
        %v8528 = vmul.f32 %v8414, %v8327
        %v8529 = vmul.f32 %v8418, %v8329
        %v8530 = vmul.f32 %v8422, %v8332
        %v8531 = vmul.f32 %v8426, %v8334
        %v8532 = vmul.f32 %v8430, %v8337
        %v8533 = vmul.f32 %v8434, %v8339
        %v8534 = vmul.f32 %v8438, %v8342
        %v8535 = vmul.f32 %v8442, %v8344
        %v8536 = vmul.f32 %v8446, %v8347
        %v8537 = vmul.f32 %v8450, %v8349
        %v8538 = vmul.f32 %v8454, %v8352
        %v8539 = vmul.f32 %v8458, %v8354
        %v8540 = vmul.f32 %v8462, %v8357
        %v8541 = vmul.f32 %v8466, %v8359
        %v8542 = vmul.f32 %v8470, %v8362
        %v8543 = vmul.f32 %v8474, %v8364
        %v8544 = vmul.f32 %v8478, %v8367
        %v8545 = vmul.f32 %v8482, %v8369
        %v8546 = vmul.f32 %v8486, %v8372
        %v8547 = vmul.f32 %v8490, %v8374
        %v8548 = vmul.f32 %v8494, %v8377
        %v8549 = vmul.f32 %v8498, %v8379
        %v8550 = vmul.f32 %v8502, %v8382
        %v8551 = vmul.f32 %v8506, %v8384
        %v8552 = vmul.f32 %v8510, %v8387
        %v8553 = vmul.f32 %v8514, %v8389
        %v8554 = vmul.f32 %v8518, %v8392
        %v8555 = vmul.f32 %v8522, %v8394
        %v8556 = vadd.f32 %v8267, %v8524
        %v8557 = vadd.f32 %v8268, %v8525
        %v8558 = vadd.f32 %v8269, %v8526
        %v8559 = vadd.f32 %v8270, %v8527
        %v8560 = vadd.f32 %v8271, %v8528
        %v8561 = vadd.f32 %v8272, %v8529
        %v8562 = vadd.f32 %v8273, %v8530
        %v8563 = vadd.f32 %v8274, %v8531
        %v8564 = vadd.f32 %v8275, %v8532
        %v8565 = vadd.f32 %v8276, %v8533
        %v8566 = vadd.f32 %v8277, %v8534
        %v8567 = vadd.f32 %v8278, %v8535
        %v8568 = vadd.f32 %v8279, %v8536
        %v8569 = vadd.f32 %v8280, %v8537
        %v8570 = vadd.f32 %v8281, %v8538
        %v8571 = vadd.f32 %v8282, %v8539
        %v8572 = vadd.f32 %v8283, %v8540
        %v8573 = vadd.f32 %v8284, %v8541
        %v8574 = vadd.f32 %v8285, %v8542
        %v8575 = vadd.f32 %v8286, %v8543
        %v8576 = vadd.f32 %v8287, %v8544
        %v8577 = vadd.f32 %v8288, %v8545
        %v8578 = vadd.f32 %v8289, %v8546
        %v8579 = vadd.f32 %v8290, %v8547
        %v8580 = vadd.f32 %v8291, %v8548
        %v8581 = vadd.f32 %v8292, %v8549
        %v8582 = vadd.f32 %v8293, %v8550
        %v8583 = vadd.f32 %v8294, %v8551
        %v8584 = vadd.f32 %v8295, %v8552
        %v8585 = vadd.f32 %v8296, %v8553
        %v8586 = vadd.f32 %v8297, %v8554
        %v8587 = vadd.f32 %v8298, %v8555
        %v8588 = vld [vmem:[%s14] sm:$0x1]
        %v8590 = vperm.slane %v8588, 0
        %v8592 = vadd.f32 %v8556, %v8590
        %v8593 = vadd.f32 %v8557, %v8590
        %v8594 = vadd.f32 %v8558, %v8590
        %v8595 = vadd.f32 %v8559, %v8590
        %v8596 = vadd.f32 %v8560, %v8590
        %v8597 = vadd.f32 %v8561, %v8590
        %v8598 = vadd.f32 %v8562, %v8590
        %v8599 = vadd.f32 %v8563, %v8590
        %v8600 = vadd.f32 %v8564, %v8590
        %v8601 = vadd.f32 %v8565, %v8590
        %v8602 = vadd.f32 %v8566, %v8590
        %v8603 = vadd.f32 %v8567, %v8590
        %v8604 = vadd.f32 %v8568, %v8590
        %v8605 = vadd.f32 %v8569, %v8590
        %v8606 = vadd.f32 %v8570, %v8590
        %v8607 = vadd.f32 %v8571, %v8590
        %v8608 = vadd.f32 %v8572, %v8590
        %v8609 = vadd.f32 %v8573, %v8590
        %v8610 = vadd.f32 %v8574, %v8590
        %v8611 = vadd.f32 %v8575, %v8590
        %v8612 = vadd.f32 %v8576, %v8590
        %v8613 = vadd.f32 %v8577, %v8590
        %v8614 = vadd.f32 %v8578, %v8590
        %v8615 = vadd.f32 %v8579, %v8590
        %v8616 = vadd.f32 %v8580, %v8590
        %v8617 = vadd.f32 %v8581, %v8590
        %v8618 = vadd.f32 %v8582, %v8590
        %v8619 = vadd.f32 %v8583, %v8590
        %v8620 = vadd.f32 %v8584, %v8590
        %v8621 = vadd.f32 %v8585, %v8590
        %v8622 = vadd.f32 %v8586, %v8590
        %v8623 = vadd.f32 %v8587, %v8590
        %v8624 = vsub.f32 0.0, %v8592
        %v8625 = vsub.f32 0.0, %v8593
        %v8626 = vsub.f32 0.0, %v8594
        %v8627 = vsub.f32 0.0, %v8595
        %v8628 = vsub.f32 0.0, %v8596
        %v8629 = vsub.f32 0.0, %v8597
        %v8630 = vsub.f32 0.0, %v8598
        %v8631 = vsub.f32 0.0, %v8599
        %v8632 = vsub.f32 0.0, %v8600
        %v8633 = vsub.f32 0.0, %v8601
        %v8634 = vsub.f32 0.0, %v8602
        %v8635 = vsub.f32 0.0, %v8603
        %v8636 = vsub.f32 0.0, %v8604
        %v8637 = vsub.f32 0.0, %v8605
        %v8638 = vsub.f32 0.0, %v8606
        %v8639 = vsub.f32 0.0, %v8607
        %v8640 = vsub.f32 0.0, %v8608
        %v8641 = vsub.f32 0.0, %v8609
        %v8642 = vsub.f32 0.0, %v8610
        %v8643 = vsub.f32 0.0, %v8611
        %v8644 = vsub.f32 0.0, %v8612
        %v8645 = vsub.f32 0.0, %v8613
        %v8646 = vsub.f32 0.0, %v8614
        %v8647 = vsub.f32 0.0, %v8615
        %v8648 = vsub.f32 0.0, %v8616
        %v8649 = vsub.f32 0.0, %v8617
        %v8650 = vsub.f32 0.0, %v8618
        %v8651 = vsub.f32 0.0, %v8619
        %v8652 = vsub.f32 0.0, %v8620
        %v8653 = vsub.f32 0.0, %v8621
        %v8654 = vsub.f32 0.0, %v8622
        %v8655 = vsub.f32 0.0, %v8623
        %v8656 = vmul.f32 %v8624, 1.442695
        %v8657 = vpow.pop %v8656
        %v8658 = vmul.f32 %v8625, 1.442695
        %v8659 = vpow.pop %v8658
        %v8660 = vmul.f32 %v8626, 1.442695
        %v8661 = vpow.pop %v8660
        %v8662 = vmul.f32 %v8627, 1.442695
        %v8663 = vpow.pop %v8662
        %v8664 = vmul.f32 %v8628, 1.442695
        %v8665 = vpow.pop %v8664
        %v8666 = vmul.f32 %v8629, 1.442695
        %v8667 = vpow.pop %v8666
        %v8668 = vmul.f32 %v8630, 1.442695
        %v8669 = vpow.pop %v8668
        %v8670 = vmul.f32 %v8631, 1.442695
        %v8671 = vpow.pop %v8670
        %v8672 = vmul.f32 %v8632, 1.442695
        %v8673 = vpow.pop %v8672
        %v8674 = vmul.f32 %v8633, 1.442695
        %v8675 = vpow.pop %v8674
        %v8676 = vmul.f32 %v8634, 1.442695
        %v8677 = vpow.pop %v8676
        %v8678 = vmul.f32 %v8635, 1.442695
        %v8679 = vpow.pop %v8678
        %v8680 = vmul.f32 %v8636, 1.442695
        %v8681 = vpow.pop %v8680
        %v8682 = vmul.f32 %v8637, 1.442695
        %v8683 = vpow.pop %v8682
        %v8684 = vmul.f32 %v8638, 1.442695
        %v8685 = vpow.pop %v8684
        %v8686 = vmul.f32 %v8639, 1.442695
        %v8687 = vpow.pop %v8686
        %v8688 = vmul.f32 %v8640, 1.442695
        %v8689 = vpow.pop %v8688
        %v8690 = vmul.f32 %v8641, 1.442695
        %v8691 = vpow.pop %v8690
        %v8692 = vmul.f32 %v8642, 1.442695
        %v8693 = vpow.pop %v8692
        %v8694 = vmul.f32 %v8643, 1.442695
        %v8695 = vpow.pop %v8694
        %v8696 = vmul.f32 %v8644, 1.442695
        %v8697 = vpow.pop %v8696
        %v8698 = vmul.f32 %v8645, 1.442695
        %v8699 = vpow.pop %v8698
        %v8700 = vmul.f32 %v8646, 1.442695
        %v8701 = vpow.pop %v8700
        %v8702 = vmul.f32 %v8647, 1.442695
        %v8703 = vpow.pop %v8702
        %v8704 = vmul.f32 %v8648, 1.442695
        %v8705 = vpow.pop %v8704
        %v8706 = vmul.f32 %v8649, 1.442695
        %v8707 = vpow.pop %v8706
        %v8708 = vmul.f32 %v8650, 1.442695
        %v8709 = vpow.pop %v8708
        %v8710 = vmul.f32 %v8651, 1.442695
        %v8711 = vpow.pop %v8710
        %v8712 = vmul.f32 %v8652, 1.442695
        %v8713 = vpow.pop %v8712
        %v8714 = vmul.f32 %v8653, 1.442695
        %v8715 = vpow.pop %v8714
        %v8716 = vmul.f32 %v8654, 1.442695
        %v8717 = vpow.pop %v8716
        %v8718 = vmul.f32 %v8655, 1.442695
        %v8719 = vpow.pop %v8718
        %v8720 = vadd.f32 %v8657, 1.0
        %v8721 = vadd.f32 %v8659, 1.0
        %v8722 = vadd.f32 %v8661, 1.0
        %v8723 = vadd.f32 %v8663, 1.0
        %v8724 = vadd.f32 %v8665, 1.0
        %v8725 = vadd.f32 %v8667, 1.0
        %v8726 = vadd.f32 %v8669, 1.0
        %v8727 = vadd.f32 %v8671, 1.0
        %v8728 = vadd.f32 %v8673, 1.0
        %v8729 = vadd.f32 %v8675, 1.0
        %v8730 = vadd.f32 %v8677, 1.0
        %v8731 = vadd.f32 %v8679, 1.0
        %v8732 = vadd.f32 %v8681, 1.0
        %v8733 = vadd.f32 %v8683, 1.0
        %v8734 = vadd.f32 %v8685, 1.0
        %v8735 = vadd.f32 %v8687, 1.0
        %v8736 = vadd.f32 %v8689, 1.0
        %v8737 = vadd.f32 %v8691, 1.0
        %v8738 = vadd.f32 %v8693, 1.0
        %v8739 = vadd.f32 %v8695, 1.0
        %v8740 = vadd.f32 %v8697, 1.0
        %v8741 = vadd.f32 %v8699, 1.0
        %v8742 = vadd.f32 %v8701, 1.0
        %v8743 = vadd.f32 %v8703, 1.0
        %v8744 = vadd.f32 %v8705, 1.0
        %v8745 = vadd.f32 %v8707, 1.0
        %v8746 = vadd.f32 %v8709, 1.0
        %v8747 = vadd.f32 %v8711, 1.0
        %v8748 = vadd.f32 %v8713, 1.0
        %v8749 = vadd.f32 %v8715, 1.0
        %v8750 = vadd.f32 %v8717, 1.0
        %v8751 = vadd.f32 %v8719, 1.0
        %v8752 = vrcp.pop %v8720
        %v8753 = vrcp.pop %v8721
        %v8754 = vrcp.pop %v8722
        %v8755 = vrcp.pop %v8723
        %v8756 = vrcp.pop %v8724
        %v8757 = vrcp.pop %v8725
        %v8758 = vrcp.pop %v8726
        %v8759 = vrcp.pop %v8727
        %v8760 = vrcp.pop %v8728
        %v8761 = vrcp.pop %v8729
        %v8762 = vrcp.pop %v8730
        %v8763 = vrcp.pop %v8731
        %v8764 = vrcp.pop %v8732
        %v8765 = vrcp.pop %v8733
        %v8766 = vrcp.pop %v8734
        %v8767 = vrcp.pop %v8735
        %v8768 = vrcp.pop %v8736
        %v8769 = vrcp.pop %v8737
        %v8770 = vrcp.pop %v8738
        %v8771 = vrcp.pop %v8739
        %v8772 = vrcp.pop %v8740
        %v8773 = vrcp.pop %v8741
        %v8774 = vrcp.pop %v8742
        %v8775 = vrcp.pop %v8743
        %v8776 = vrcp.pop %v8744
        %v8777 = vrcp.pop %v8745
        %v8778 = vrcp.pop %v8746
        %v8779 = vrcp.pop %v8747
        %v8780 = vrcp.pop %v8748
        %v8781 = vrcp.pop %v8749
        %v8782 = vrcp.pop %v8750
        %v8783 = vrcp.pop %v8751
        %8784 = vst.msk [vmem:[%s584] sm:$0xff] %vm1378, %v8752
        %8785 = vst.msk [vmem:[%s584 + $0x8] sm:$0xff] %vm1378, %v8753
        %8786 = vst.msk [vmem:[%s584 + $0x10] sm:$0xff] %vm1378, %v8754
        %8787 = vst.msk [vmem:[%s584 + $0x18] sm:$0xff] %vm1378, %v8755
        %8788 = vst.msk [vmem:[%s584 + $0x20] sm:$0xff] %vm1378, %v8756
        %8789 = vst.msk [vmem:[%s584 + $0x28] sm:$0xff] %vm1378, %v8757
        %8790 = vst.msk [vmem:[%s584 + $0x30] sm:$0xff] %vm1378, %v8758
        %8791 = vst.msk [vmem:[%s584 + $0x38] sm:$0xff] %vm1378, %v8759
        %8792 = vst.msk [vmem:[%s584 + $0x40] sm:$0xff] %vm1378, %v8760
        %8793 = vst.msk [vmem:[%s584 + $0x48] sm:$0xff] %vm1378, %v8761
        %8794 = vst.msk [vmem:[%s584 + $0x50] sm:$0xff] %vm1378, %v8762
        %8795 = vst.msk [vmem:[%s584 + $0x58] sm:$0xff] %vm1378, %v8763
        %8796 = vst.msk [vmem:[%s584 + $0x60] sm:$0xff] %vm1378, %v8764
        %8797 = vst.msk [vmem:[%s584 + $0x68] sm:$0xff] %vm1378, %v8765
        %8798 = vst.msk [vmem:[%s584 + $0x70] sm:$0xff] %vm1378, %v8766
        %8799 = vst.msk [vmem:[%s584 + $0x78] sm:$0xff] %vm1378, %v8767
        %8800 = vst.msk [vmem:[%s584 + $0x80] sm:$0xff] %vm1378, %v8768
        %8801 = vst.msk [vmem:[%s584 + $0x88] sm:$0xff] %vm1378, %v8769
        %8802 = vst.msk [vmem:[%s584 + $0x90] sm:$0xff] %vm1378, %v8770
        %8803 = vst.msk [vmem:[%s584 + $0x98] sm:$0xff] %vm1378, %v8771
        %8804 = vst.msk [vmem:[%s584 + $0xa0] sm:$0xff] %vm1378, %v8772
        %8805 = vst.msk [vmem:[%s584 + $0xa8] sm:$0xff] %vm1378, %v8773
        %8806 = vst.msk [vmem:[%s584 + $0xb0] sm:$0xff] %vm1378, %v8774
        %8807 = vst.msk [vmem:[%s584 + $0xb8] sm:$0xff] %vm1378, %v8775
        %8808 = vst.msk [vmem:[%s584 + $0xc0] sm:$0xff] %vm1378, %v8776
        %8809 = vst.msk [vmem:[%s584 + $0xc8] sm:$0xff] %vm1378, %v8777
        %8810 = vst.msk [vmem:[%s584 + $0xd0] sm:$0xff] %vm1378, %v8778
        %8811 = vst.msk [vmem:[%s584 + $0xd8] sm:$0xff] %vm1378, %v8779
        %8812 = vst.msk [vmem:[%s584 + $0xe0] sm:$0xff] %vm1378, %v8780
        %8813 = vst.msk [vmem:[%s584 + $0xe8] sm:$0xff] %vm1378, %v8781
        %8814 = vst.msk [vmem:[%s584 + $0xf0] sm:$0xff] %vm1378, %v8782
        %8815 = vst.msk [vmem:[%s584 + $0xf8] sm:$0xff] %vm1378, %v8783
        %s8816 = smul.u32 32, %s30
        %p8817 = scmp.lt.s32.totalorder %s8816, 63
        %s8818 = scalar_select %p8817, %s8816, 63
        %s8819 = smul.addr %s8818, 8
        %s8820 = scalar_lea.vmem %s17, %s8819
        // Predicated region
        $region97: #{conv_autoencoder_forward.1} parent=87 // pred_check
          %p8821 = pneg %p410
        $region98: #{conv_autoencoder_forward.1} parent=87 // pred_check_branch
          %8823 = sbr.rel (%p8821) target = $region100
        $region99: #{conv_autoencoder_forward.1} parent=87 // pred_region
          %s8824 = smul.u32 32, %s30
        $region100: #{conv_autoencoder_forward.1} parent=87 // pred_fallthru
          _
      $region88: #{conv_autoencoder_forward.1} parent=5 // pred_fallthru
        _
      %p8825 = scmp.le.s32.totalorder 2, %s25
      // Predicated region
      $region101: #{conv_autoencoder_forward.1} parent=5 // pred_check
        %p8826 = pneg %p8825
      $region102: #{conv_autoencoder_forward.1} parent=5 // pred_check_branch
        %8828 = sbr.rel (%p8826) target = $region104
      $region103: #{conv_autoencoder_forward.1} parent=5 // pred_region
        %s8829 = ssub.s32 %s25, 2
        // Predicated region
        $region105: #{conv_autoencoder_forward.1} parent=103 // pred_check
          %p8830 = pneg %p416
        $region106: #{conv_autoencoder_forward.1} parent=103 // pred_check_branch
          %8832 = sbr.rel (%p8830) target = $region108
        $region107: #{conv_autoencoder_forward.1} parent=103 // pred_region
          %s8833 = smul.u32 32, %s31
          %p8834 = scmp.lt.s32.totalorder %s8833, 63
          %s8835 = scalar_select %p8834, %s8833, 63
          %s8836 = smul.addr %s8835, 8
          %s8837 = scalar_lea.vmem %s17, %s8836
        $region108: #{conv_autoencoder_forward.1} parent=103 // pred_fallthru
          _
      $region104: #{conv_autoencoder_forward.1} parent=5 // pred_fallthru
        _
    $region6: #{conv_autoencoder_forward.1} parent=1 // loop_footer
      %s29 = sadd.s32 1, %s25
    $region7: #{conv_autoencoder_forward.1} parent=1 // loop_footer_branch
      %24 = sbr.rel target = $region3
    $region8: #{conv_autoencoder_forward.1} parent=1 // loop_exit
      _
    %8838 = vsyncpa [#allocation3], 1
    %s8839 = scalar_lea.sflag [#allocation3], 1
    %8840 = vsyncpa %s8839, 1
    %8841 = vsyncpa [#allocation5], 1

</llo_original>
